<compile_context>
chip_gen: v5e
topology: v5e:2x2
jax: 0.10.0
libtpu: 0.0.40
codegen_flags: <defaults>
</compile_context>

<pallas_src>
import functools

import jax
import jax.numpy as jnp
from jax import lax
from jax.experimental import pallas as pl
from jax.experimental.pallas import tpu as pltpu

NUM_PTS = 128   # num_pts (points per cloud)
BATCH = 2
AVG_CH = 2368 - 64 - 1024   # = 1280, channel count of other_input1

BIAS_WIDTHS = (64, 64, 64, 128, 1024, 512, 256, 128)   # b1..b8 widths
BIAS_PAD = 1024                                        # bias rows padded to this

# Row ranges of the packed small-weight block (width 128, bf16).
_SP_W1 = (0, 3)        # (3, 64)
_SP_W2 = (16, 80)      # (64, 64)
_SP_W3 = (80, 144)     # (64, 64)
_SP_W4 = (144, 208)    # (64, 128)
_SP_W9T = (208, 211)   # (3, 128)  == W9^T
_SP_ROWS = 224


def mlp_for_kernel(x_ref, avg_ref, small_ref, w5_ref, w6a_ref,
                   w6bc_hbm, w7_hbm, w8_ref, b9t_ref, bias_ref,
                   o_ref, w6bc_buf, w7_buf, sem, *, batch, num_pts):
    f32 = jnp.float32
    bf16 = jnp.bfloat16

    # Kick off the big-weight streams immediately; they overlap layers 1-5.
    cp_w6bc = pltpu.make_async_copy(w6bc_hbm, w6bc_buf, sem.at[0])
    cp_w7 = pltpu.make_async_copy(w7_hbm, w7_buf, sem.at[1])
    cp_w6bc.start()
    cp_w7.start()

    def bias(i):
        # Row i of the packed bias array, trimmed to this layer's width.
        return bias_ref[i:i + 1, :BIAS_WIDTHS[i]]          # (1, C_out)

    def lin_relu(h, w, i):
        y = jnp.dot(h.astype(bf16), w, preferred_element_type=f32)
        return jnp.maximum(y + bias(i), 0.0)

    # Static slices out of the packed small-weight block.
    w1 = small_ref[_SP_W1[0]:_SP_W1[1], 0:64]              # (3, 64)
    w2 = small_ref[_SP_W2[0]:_SP_W2[1], 0:64]              # (64, 64)
    w3 = small_ref[_SP_W3[0]:_SP_W3[1], 0:64]              # (64, 64)
    w4 = small_ref[_SP_W4[0]:_SP_W4[1], :]                 # (64, 128)
    w9t = small_ref[_SP_W9T[0]:_SP_W9T[1], :]              # (3, 128)

    # Layer 1: x arrives lane-dense as (3, B*N); contract dim 0 with dim 0.
    x = x_ref[...].astype(bf16)                            # (3, B*N)
    h1 = jnp.maximum(
        lax.dot_general(x, w1, (((0,), (0,)), ((), ())),
                        preferred_element_type=f32) + bias(0), 0.0)
    h2 = lin_relu(h1, w2, 1)                               # point_features
    h3 = lin_relu(h2, w3, 2)
    h4 = lin_relu(h3, w4, 3)                               # (B*N, 128)
    h5 = lin_relu(h4, w5_ref[...], 4)                      # (B*N, 1024)

    # MaxPool1d(num_pts): per-batch global max over the point axis.
    g = jnp.max(h5.reshape(batch, num_pts, -1), axis=1)    # (B, 1024)

    # concat([pf, g.repeat, avg.repeat], ch) @ W6
    #   == h2 @ W6a + per-batch broadcast of concat([g, avg]) @ W6bc
    ga = jnp.concatenate([g, avg_ref[...]], axis=1)        # (B, 2304)
    cp_w6bc.wait()                                         # W6bc needed now
    row6 = (jnp.dot(ga.astype(bf16), w6bc_buf[...],
                    preferred_element_type=f32) + bias(5)) # (B, 512)
    p6 = jnp.dot(h2.astype(bf16), w6a_ref[...],
                 preferred_element_type=f32)               # (B*N, 512)
    h6 = jnp.maximum(
        p6.reshape(batch, num_pts, -1) + row6.reshape(batch, 1, -1), 0.0)
    h6 = h6.reshape(batch * num_pts, -1)                   # (B*N, 512)

    cp_w7.wait()                                           # W7 needed now
    h7 = lin_relu(h6, w7_buf[...], 6)                      # (B*N, 256)
    h8 = lin_relu(h7, w8_ref[...], 7)                      # (B*N, 128)

    # Final 128->3 layer in transposed (lane-dense) form; contracting dim 1
    # of both operands folds the h8 transpose into the matmul itself.
    logits_t = lax.dot_general(
        w9t, h8.astype(bf16), (((1,), (1,)), ((), ())),
        preferred_element_type=f32) + b9t_ref[...]         # (3, B*N)
    y_t = jax.nn.sigmoid(logits_t)
    for b in range(batch):
        o_ref[b] = y_t[:, b * num_pts:(b + 1) * num_pts]   # (3, N) per batch


def _pack_small(params):
    """Pack w1..w4 and w9^T into one (224, 128) bf16 block."""
    blk = jnp.zeros((_SP_ROWS, 128), jnp.float32)
    blk = blk.at[_SP_W1[0]:_SP_W1[1], 0:64].set(params["w1"])
    blk = blk.at[_SP_W2[0]:_SP_W2[1], 0:64].set(params["w2"])
    blk = blk.at[_SP_W3[0]:_SP_W3[1], 0:64].set(params["w3"])
    blk = blk.at[_SP_W4[0]:_SP_W4[1], 0:128].set(params["w4"])
    blk = blk.at[_SP_W9T[0]:_SP_W9T[1], 0:128].set(params["w9"].T)
    return blk.astype(jnp.bfloat16)


def mlp_for_forward(x_nchw, other_input1, params):
    """x_nchw: (B, 3, N) float32 (PyTorch NCW layout). other_input1: (B, 1280).

    Returns (B, 3, N) float32 (same layout as the PyTorch module)."""
    B, C, N = x_nchw.shape
    bf16 = jnp.bfloat16

    # Lane-dense input: (3, B*N), column index = b*N + n.
    x_t = jnp.transpose(x_nchw, (1, 0, 2)).reshape(C, B * N).astype(jnp.float32)
    avg = other_input1.astype(jnp.float32)

    small_pack = _pack_small(params)                       # (224, 128) bf16
    w5 = params["w5"].astype(bf16)                         # (128, 1024)
    w6 = params["w6"]                                      # (2368, 512)
    w6a = w6[:64].astype(bf16)                             # (64, 512)
    w6bc = w6[64:].astype(bf16)                            # (2304, 512), streamed
    w7 = params["w7"].astype(bf16)                         # (512, 256), streamed
    w8 = params["w8"].astype(bf16)                         # (256, 128)
    b9t = params["b9"].reshape(-1, 1).astype(jnp.float32)  # (3, 1)

    rows = []
    for i, w in enumerate(BIAS_WIDTHS, start=1):
        b = params[f"b{i}"].reshape(-1).astype(jnp.float32)
        rows.append(jnp.pad(b, (0, BIAS_PAD - w)))
    bias_pack = jnp.stack(rows, axis=0)                    # (8, 1024) f32

    kernel = functools.partial(mlp_for_kernel, batch=B, num_pts=N)
    vmem = pltpu.MemorySpace.VMEM
    out = pl.pallas_call(
        kernel,
        out_shape=jax.ShapeDtypeStruct((B, 3, N), jnp.float32),
        in_specs=[
            pl.BlockSpec(memory_space=vmem),     # x_t
            pl.BlockSpec(memory_space=vmem),     # avg
            pl.BlockSpec(memory_space=vmem),     # small_pack
            pl.BlockSpec(memory_space=vmem),     # w5
            pl.BlockSpec(memory_space=vmem),     # w6a
            pl.BlockSpec(memory_space=pl.ANY),   # w6bc  (stays in HBM)
            pl.BlockSpec(memory_space=pl.ANY),   # w7    (stays in HBM)
            pl.BlockSpec(memory_space=vmem),     # w8
            pl.BlockSpec(memory_space=vmem),     # b9t
            pl.BlockSpec(memory_space=vmem),     # bias_pack
        ],
        out_specs=pl.BlockSpec(memory_space=vmem),
        scratch_shapes=[
            pltpu.VMEM(w6bc.shape, bf16),        # streaming buffer for W6bc
            pltpu.VMEM(w7.shape, bf16),          # streaming buffer for W7
            pltpu.SemaphoreType.DMA((2,)),
        ],
        compiler_params=pltpu.CompilerParams(
            vmem_limit_bytes=32 * 1024 * 1024),
    )(x_t, avg, small_pack, w5, w6a, w6bc, w7, w8, b9t, bias_pack)
    return out   # already (B, 3, N)


def make_folded_params(key):
    """Deterministic conv+BN params; BN (eval mode) folded into conv affine."""
    dims = [(3, 64), (64, 64), (64, 64), (64, 128), (128, 1024),
            (2368, 512), (512, 256), (256, 128), (128, 3)]
    eps = 1e-5
    params = {}
    for i, (cin, cout) in enumerate(dims, start=1):
        key, kw, kb, kg, kbe, km, kv = jax.random.split(key, 7)
        bound = 1.0 / (cin ** 0.5)
        w = jax.random.uniform(kw, (cin, cout), jnp.float32, -bound, bound)
        b = jax.random.uniform(kb, (cout,), jnp.float32, -bound, bound)
        gamma = jax.random.uniform(kg, (cout,), jnp.float32, 0.5, 1.5)
        beta = jax.random.uniform(kbe, (cout,), jnp.float32, -0.1, 0.1)
        r_mean = jax.random.uniform(km, (cout,), jnp.float32, -0.1, 0.1)
        r_var = jax.random.uniform(kv, (cout,), jnp.float32, 0.5, 1.5)
        scale = gamma / jnp.sqrt(r_var + eps)
        params[f"w{i}"] = w * scale[None, :]
        params[f"b{i}"] = ((b - r_mean) * scale + beta).reshape(1, cout)
    return params


def ref_forward(x_nchw, other_input1, params):
    """Pure-JAX reference (concat form, same bf16 weight/activation quant)."""
    f32, bf16 = jnp.float32, jnp.bfloat16
    B, C, N = x_nchw.shape
    x = jnp.transpose(x_nchw, (0, 2, 1)).reshape(B * N, C).astype(f32)

    def lin(h, w, b, relu=True):
        y = jnp.dot(h.astype(bf16), w.astype(bf16),
                    preferred_element_type=f32) + b
        return jnp.maximum(y, 0.0) if relu else y

    h1 = lin(x, params["w1"], params["b1"])
    h2 = lin(h1, params["w2"], params["b2"])       # point_features
    h3 = lin(h2, params["w3"], params["b3"])
    h4 = lin(h3, params["w4"], params["b4"])
    h5 = lin(h4, params["w5"], params["b5"])       # (B*N, 1024)
    g = jnp.max(h5.reshape(B, N, -1), axis=1)      # (B, 1024) MaxPool1d(N)
    cat = jnp.concatenate(
        [h2.reshape(B, N, -1),
         jnp.broadcast_to(g[:, None, :], (B, N, g.shape[-1])),
         jnp.broadcast_to(other_input1[:, None, :].astype(f32),
                          (B, N, AVG_CH))],
        axis=-1).reshape(B * N, -1)                # (B*N, 2368)
    h6 = lin(cat, params["w6"], params["b6"])
    h7 = lin(h6, params["w7"], params["b7"])
    h8 = lin(h7, params["w8"], params["b8"])
    out = jax.nn.sigmoid(lin(h8, params["w9"], params["b9"], relu=False))
    return jnp.transpose(out.reshape(B, N, 3), (0, 2, 1))   # (B, 3, N)


if __name__ == "__main__":
    key = jax.random.PRNGKey(0)
    kx, kavg, kp = jax.random.split(key, 3)

    x = jax.random.normal(kx, (BATCH, 3, NUM_PTS), jnp.float32)        # NCW
    other_input1 = jax.random.normal(kavg, (BATCH, AVG_CH), jnp.float32)
    params = make_folded_params(kp)

    fwd = jax.jit(mlp_for_forward)
    out = jax.block_until_ready(fwd(x, other_input1, params))

    ref = ref_forward(x, other_input1, params)
    assert out.shape == (BATCH, 3, NUM_PTS), out.shape
    max_err = float(jnp.max(jnp.abs(out - ref)))
    assert jnp.allclose(out, ref, atol=5e-3, rtol=5e-3), max_err

    print("KERNEL_OK")
</pallas_src>

<mosaic_0001>
module attributes {stable_mosaic.version = 11 : i64} {
  func.func @mlp_for_kernel(%arg0: memref<3x256xf32, #tpu.memory_space<vmem>>, %arg1: memref<2x1280xf32, #tpu.memory_space<vmem>>, %arg2: memref<224x128xbf16, #tpu.memory_space<vmem>>, %arg3: memref<128x1024xbf16, #tpu.memory_space<vmem>>, %arg4: memref<64x512xbf16, #tpu.memory_space<vmem>>, %arg5: memref<2304x512xbf16, #tpu.memory_space<any>>, %arg6: memref<512x256xbf16, #tpu.memory_space<any>>, %arg7: memref<256x128xbf16, #tpu.memory_space<vmem>>, %arg8: memref<3x1xf32, #tpu.memory_space<vmem>>, %arg9: memref<8x1024xf32, #tpu.memory_space<vmem>>, %arg10: memref<2x3x128xf32, #tpu.memory_space<vmem>>, %arg11: memref<2304x512xbf16, #tpu.memory_space<vmem>>, %arg12: memref<512x256xbf16, #tpu.memory_space<vmem>>, %arg13: memref<2x!tpu.dma_semaphore, #tpu.memory_space<semaphore_mem>>) attributes {dimension_semantics = [], scalar_prefetch = 0 : i64, scratch_operands = 3 : i64, tpu.core_type = #tpu.core_type<tc>} {
    %c0_i32 = arith.constant 0 : i32
    %0 = tpu.memref_slice %arg13[%c0_i32] : memref<2x!tpu.dma_semaphore, #tpu.memory_space<semaphore_mem>> -> memref<1x!tpu.dma_semaphore, #tpu.memory_space<semaphore_mem>>
    %1 = tpu.memref_squeeze %0 : memref<1x!tpu.dma_semaphore, #tpu.memory_space<semaphore_mem>> -> memref<!tpu.dma_semaphore, #tpu.memory_space<semaphore_mem>>
    tpu.enqueue_dma source(%arg5 : memref<2304x512xbf16, #tpu.memory_space<any>>) target(%arg11 : memref<2304x512xbf16, #tpu.memory_space<vmem>>) target_semaphore(%1 : memref<!tpu.dma_semaphore, #tpu.memory_space<semaphore_mem>>)
    %c1_i32 = arith.constant 1 : i32
    %2 = tpu.memref_slice %arg13[%c1_i32] : memref<2x!tpu.dma_semaphore, #tpu.memory_space<semaphore_mem>> -> memref<1x!tpu.dma_semaphore, #tpu.memory_space<semaphore_mem>>
    %3 = tpu.memref_squeeze %2 : memref<1x!tpu.dma_semaphore, #tpu.memory_space<semaphore_mem>> -> memref<!tpu.dma_semaphore, #tpu.memory_space<semaphore_mem>>
    tpu.enqueue_dma source(%arg6 : memref<512x256xbf16, #tpu.memory_space<any>>) target(%arg12 : memref<512x256xbf16, #tpu.memory_space<vmem>>) target_semaphore(%3 : memref<!tpu.dma_semaphore, #tpu.memory_space<semaphore_mem>>)
    %c0 = arith.constant 0 : index
    %c0_0 = arith.constant 0 : index
    %4 = vector.load %arg2[%c0, %c0_0] : memref<224x128xbf16, #tpu.memory_space<vmem>>, vector<3x64xbf16>
    %c16 = arith.constant 16 : index
    %c0_1 = arith.constant 0 : index
    %5 = vector.load %arg2[%c16, %c0_1] : memref<224x128xbf16, #tpu.memory_space<vmem>>, vector<64x64xbf16>
    %c80 = arith.constant 80 : index
    %c0_2 = arith.constant 0 : index
    %6 = vector.load %arg2[%c80, %c0_2] : memref<224x128xbf16, #tpu.memory_space<vmem>>, vector<64x64xbf16>
    %c144 = arith.constant 144 : index
    %c0_3 = arith.constant 0 : index
    %7 = vector.load %arg2[%c144, %c0_3] : memref<224x128xbf16, #tpu.memory_space<vmem>>, vector<64x128xbf16>
    %c208 = arith.constant 208 : index
    %c0_4 = arith.constant 0 : index
    %8 = vector.load %arg2[%c208, %c0_4] : memref<224x128xbf16, #tpu.memory_space<vmem>>, vector<3x128xbf16>
    %c0_5 = arith.constant 0 : index
    %c0_6 = arith.constant 0 : index
    %9 = vector.load %arg0[%c0_5, %c0_6] : memref<3x256xf32, #tpu.memory_space<vmem>>, vector<3x256xf32>
    %10 = arith.truncf %9 : vector<3x256xf32> to vector<3x256xbf16>
    %cst = arith.constant dense<0.000000e+00> : vector<256x64xf32>
    %11 = tpu.matmul %10, %4, %cst {dimension_numbers = #tpu.dot_dimension_numbers<[0], [0], [1], [1], [0, 1, 1, 1], [], []>} : vector<3x256xbf16>, vector<3x64xbf16>, vector<256x64xf32> -> vector<256x64xf32>
    %c0_7 = arith.constant 0 : index
    %c0_8 = arith.constant 0 : index
    %12 = vector.load %arg9[%c0_7, %c0_8] : memref<8x1024xf32, #tpu.memory_space<vmem>>, vector<1x64xf32>
    %13 = vector.broadcast %12 : vector<1x64xf32> to vector<256x64xf32>
    %14 = arith.addf %11, %13 : vector<256x64xf32>
    %cst_9 = arith.constant 0.000000e+00 : f32
    %15 = vector.broadcast %cst_9 : f32 to vector<256x64xf32>
    %16 = arith.maximumf %14, %15 : vector<256x64xf32>
    %17 = arith.truncf %16 : vector<256x64xf32> to vector<256x64xbf16>
    %cst_10 = arith.constant dense<0.000000e+00> : vector<256x64xf32>
    %18 = tpu.matmul %17, %5, %cst_10 {dimension_numbers = #tpu.dot_dimension_numbers<[1], [0], [0], [1], [0, 0, 1, 1], [], []>} : vector<256x64xbf16>, vector<64x64xbf16>, vector<256x64xf32> -> vector<256x64xf32>
    %c1 = arith.constant 1 : index
    %c0_11 = arith.constant 0 : index
    %19 = vector.load %arg9[%c1, %c0_11] : memref<8x1024xf32, #tpu.memory_space<vmem>>, vector<1x64xf32>
    %20 = vector.broadcast %19 : vector<1x64xf32> to vector<256x64xf32>
    %21 = arith.addf %18, %20 : vector<256x64xf32>
    %cst_12 = arith.constant 0.000000e+00 : f32
    %22 = vector.broadcast %cst_12 : f32 to vector<256x64xf32>
    %23 = arith.maximumf %21, %22 : vector<256x64xf32>
    %24 = arith.truncf %23 : vector<256x64xf32> to vector<256x64xbf16>
    %cst_13 = arith.constant dense<0.000000e+00> : vector<256x64xf32>
    %25 = tpu.matmul %24, %6, %cst_13 {dimension_numbers = #tpu.dot_dimension_numbers<[1], [0], [0], [1], [0, 0, 1, 1], [], []>} : vector<256x64xbf16>, vector<64x64xbf16>, vector<256x64xf32> -> vector<256x64xf32>
    %c2 = arith.constant 2 : index
    %c0_14 = arith.constant 0 : index
    %26 = vector.load %arg9[%c2, %c0_14] : memref<8x1024xf32, #tpu.memory_space<vmem>>, vector<1x64xf32>
    %27 = vector.broadcast %26 : vector<1x64xf32> to vector<256x64xf32>
    %28 = arith.addf %25, %27 : vector<256x64xf32>
    %cst_15 = arith.constant 0.000000e+00 : f32
    %29 = vector.broadcast %cst_15 : f32 to vector<256x64xf32>
    %30 = arith.maximumf %28, %29 : vector<256x64xf32>
    %31 = arith.truncf %30 : vector<256x64xf32> to vector<256x64xbf16>
    %cst_16 = arith.constant dense<0.000000e+00> : vector<256x128xf32>
    %32 = tpu.matmul %31, %7, %cst_16 {dimension_numbers = #tpu.dot_dimension_numbers<[1], [0], [0], [1], [0, 0, 1, 1], [], []>} : vector<256x64xbf16>, vector<64x128xbf16>, vector<256x128xf32> -> vector<256x128xf32>
    %c3 = arith.constant 3 : index
    %c0_17 = arith.constant 0 : index
    %33 = vector.load %arg9[%c3, %c0_17] : memref<8x1024xf32, #tpu.memory_space<vmem>>, vector<1x128xf32>
    %34 = vector.broadcast %33 : vector<1x128xf32> to vector<256x128xf32>
    %35 = arith.addf %32, %34 : vector<256x128xf32>
    %cst_18 = arith.constant 0.000000e+00 : f32
    %36 = vector.broadcast %cst_18 : f32 to vector<256x128xf32>
    %37 = arith.maximumf %35, %36 : vector<256x128xf32>
    %c0_19 = arith.constant 0 : index
    %c0_20 = arith.constant 0 : index
    %38 = vector.load %arg3[%c0_19, %c0_20] : memref<128x1024xbf16, #tpu.memory_space<vmem>>, vector<128x1024xbf16>
    %39 = arith.truncf %37 : vector<256x128xf32> to vector<256x128xbf16>
    %cst_21 = arith.constant dense<0.000000e+00> : vector<256x1024xf32>
    %40 = tpu.matmul %39, %38, %cst_21 {dimension_numbers = #tpu.dot_dimension_numbers<[1], [0], [0], [1], [0, 0, 1, 1], [], []>} : vector<256x128xbf16>, vector<128x1024xbf16>, vector<256x1024xf32> -> vector<256x1024xf32>
    %c4 = arith.constant 4 : index
    %c0_22 = arith.constant 0 : index
    %41 = vector.load %arg9[%c4, %c0_22] : memref<8x1024xf32, #tpu.memory_space<vmem>>, vector<1x1024xf32>
    %42 = vector.broadcast %41 : vector<1x1024xf32> to vector<256x1024xf32>
    %43 = arith.addf %40, %42 : vector<256x1024xf32>
    %cst_23 = arith.constant 0.000000e+00 : f32
    %44 = vector.broadcast %cst_23 : f32 to vector<256x1024xf32>
    %45 = arith.maximumf %43, %44 : vector<256x1024xf32>
    %46 = vector.shape_cast %45 : vector<256x1024xf32> to vector<2x128x1024xf32>
    %cst_24 = arith.constant dense<0xFF800000> : vector<2x1024xf32>
    %47 = vector.multi_reduction <maximumf>, %46, %cst_24 [1] : vector<2x128x1024xf32> to vector<2x1024xf32>
    %c0_25 = arith.constant 0 : index
    %c0_26 = arith.constant 0 : index
    %48 = vector.load %arg1[%c0_25, %c0_26] : memref<2x1280xf32, #tpu.memory_space<vmem>>, vector<2x1280xf32>
    %49 = tpu.concatenate %47, %48 in 1 : vector<2x1024xf32>, vector<2x1280xf32> -> vector<2x2304xf32>
    %c0_i32_27 = arith.constant 0 : i32
    %50 = tpu.memref_slice %arg13[%c0_i32_27] : memref<2x!tpu.dma_semaphore, #tpu.memory_space<semaphore_mem>> -> memref<1x!tpu.dma_semaphore, #tpu.memory_space<semaphore_mem>>
    %51 = tpu.memref_squeeze %50 : memref<1x!tpu.dma_semaphore, #tpu.memory_space<semaphore_mem>> -> memref<!tpu.dma_semaphore, #tpu.memory_space<semaphore_mem>>
    tpu.wait_dma2 semaphore(%51 : memref<!tpu.dma_semaphore, #tpu.memory_space<semaphore_mem>>) src(%arg5 : memref<2304x512xbf16, #tpu.memory_space<any>>) dst(%arg11 : memref<2304x512xbf16, #tpu.memory_space<vmem>>)
    %52 = arith.truncf %49 : vector<2x2304xf32> to vector<2x2304xbf16>
    %c0_28 = arith.constant 0 : index
    %c0_29 = arith.constant 0 : index
    %53 = vector.load %arg11[%c0_28, %c0_29] : memref<2304x512xbf16, #tpu.memory_space<vmem>>, vector<2304x512xbf16>
    %cst_30 = arith.constant dense<0.000000e+00> : vector<2x512xf32>
    %54 = tpu.matmul %52, %53, %cst_30 {dimension_numbers = #tpu.dot_dimension_numbers<[1], [0], [0], [1], [0, 0, 1, 1], [], []>} : vector<2x2304xbf16>, vector<2304x512xbf16>, vector<2x512xf32> -> vector<2x512xf32>
    %c5 = arith.constant 5 : index
    %c0_31 = arith.constant 0 : index
    %55 = vector.load %arg9[%c5, %c0_31] : memref<8x1024xf32, #tpu.memory_space<vmem>>, vector<1x512xf32>
    %56 = vector.broadcast %55 : vector<1x512xf32> to vector<2x512xf32>
    %57 = arith.addf %54, %56 : vector<2x512xf32>
    %58 = arith.truncf %23 : vector<256x64xf32> to vector<256x64xbf16>
    %c0_32 = arith.constant 0 : index
    %c0_33 = arith.constant 0 : index
    %59 = vector.load %arg4[%c0_32, %c0_33] : memref<64x512xbf16, #tpu.memory_space<vmem>>, vector<64x512xbf16>
    %cst_34 = arith.constant dense<0.000000e+00> : vector<256x512xf32>
    %60 = tpu.matmul %58, %59, %cst_34 {dimension_numbers = #tpu.dot_dimension_numbers<[1], [0], [0], [1], [0, 0, 1, 1], [], []>} : vector<256x64xbf16>, vector<64x512xbf16>, vector<256x512xf32> -> vector<256x512xf32>
    %61 = vector.shape_cast %60 : vector<256x512xf32> to vector<2x128x512xf32>
    %62 = vector.shape_cast %57 : vector<2x512xf32> to vector<2x1x512xf32>
    %63 = vector.broadcast %62 : vector<2x1x512xf32> to vector<2x128x512xf32>
    %64 = arith.addf %61, %63 : vector<2x128x512xf32>
    %cst_35 = arith.constant 0.000000e+00 : f32
    %65 = vector.broadcast %cst_35 : f32 to vector<2x128x512xf32>
    %66 = arith.maximumf %64, %65 : vector<2x128x512xf32>
    %67 = vector.shape_cast %66 : vector<2x128x512xf32> to vector<256x512xf32>
    %c1_i32_36 = arith.constant 1 : i32
    %68 = tpu.memref_slice %arg13[%c1_i32_36] : memref<2x!tpu.dma_semaphore, #tpu.memory_space<semaphore_mem>> -> memref<1x!tpu.dma_semaphore, #tpu.memory_space<semaphore_mem>>
    %69 = tpu.memref_squeeze %68 : memref<1x!tpu.dma_semaphore, #tpu.memory_space<semaphore_mem>> -> memref<!tpu.dma_semaphore, #tpu.memory_space<semaphore_mem>>
    tpu.wait_dma2 semaphore(%69 : memref<!tpu.dma_semaphore, #tpu.memory_space<semaphore_mem>>) src(%arg6 : memref<512x256xbf16, #tpu.memory_space<any>>) dst(%arg12 : memref<512x256xbf16, #tpu.memory_space<vmem>>)
    %c0_37 = arith.constant 0 : index
    %c0_38 = arith.constant 0 : index
    %70 = vector.load %arg12[%c0_37, %c0_38] : memref<512x256xbf16, #tpu.memory_space<vmem>>, vector<512x256xbf16>
    %71 = arith.truncf %67 : vector<256x512xf32> to vector<256x512xbf16>
    %cst_39 = arith.constant dense<0.000000e+00> : vector<256x256xf32>
    %72 = tpu.matmul %71, %70, %cst_39 {dimension_numbers = #tpu.dot_dimension_numbers<[1], [0], [0], [1], [0, 0, 1, 1], [], []>} : vector<256x512xbf16>, vector<512x256xbf16>, vector<256x256xf32> -> vector<256x256xf32>
    %c6 = arith.constant 6 : index
    %c0_40 = arith.constant 0 : index
    %73 = vector.load %arg9[%c6, %c0_40] : memref<8x1024xf32, #tpu.memory_space<vmem>>, vector<1x256xf32>
    %74 = vector.broadcast %73 : vector<1x256xf32> to vector<256x256xf32>
    %75 = arith.addf %72, %74 : vector<256x256xf32>
    %cst_41 = arith.constant 0.000000e+00 : f32
    %76 = vector.broadcast %cst_41 : f32 to vector<256x256xf32>
    %77 = arith.maximumf %75, %76 : vector<256x256xf32>
    %c0_42 = arith.constant 0 : index
    %c0_43 = arith.constant 0 : index
    %78 = vector.load %arg7[%c0_42, %c0_43] : memref<256x128xbf16, #tpu.memory_space<vmem>>, vector<256x128xbf16>
    %79 = arith.truncf %77 : vector<256x256xf32> to vector<256x256xbf16>
    %cst_44 = arith.constant dense<0.000000e+00> : vector<256x128xf32>
    %80 = tpu.matmul %79, %78, %cst_44 {dimension_numbers = #tpu.dot_dimension_numbers<[1], [0], [0], [1], [0, 0, 1, 1], [], []>} : vector<256x256xbf16>, vector<256x128xbf16>, vector<256x128xf32> -> vector<256x128xf32>
    %c7 = arith.constant 7 : index
    %c0_45 = arith.constant 0 : index
    %81 = vector.load %arg9[%c7, %c0_45] : memref<8x1024xf32, #tpu.memory_space<vmem>>, vector<1x128xf32>
    %82 = vector.broadcast %81 : vector<1x128xf32> to vector<256x128xf32>
    %83 = arith.addf %80, %82 : vector<256x128xf32>
    %cst_46 = arith.constant 0.000000e+00 : f32
    %84 = vector.broadcast %cst_46 : f32 to vector<256x128xf32>
    %85 = arith.maximumf %83, %84 : vector<256x128xf32>
    %86 = arith.truncf %85 : vector<256x128xf32> to vector<256x128xbf16>
    %cst_47 = arith.constant dense<0.000000e+00> : vector<3x256xf32>
    %87 = tpu.matmul %8, %86, %cst_47 {dimension_numbers = #tpu.dot_dimension_numbers<[1], [1], [0], [0], [0, 0, 1, 0], [], []>} : vector<3x128xbf16>, vector<256x128xbf16>, vector<3x256xf32> -> vector<3x256xf32>
    %c0_48 = arith.constant 0 : index
    %c0_49 = arith.constant 0 : index
    %88 = vector.load %arg8[%c0_48, %c0_49] : memref<3x1xf32, #tpu.memory_space<vmem>>, vector<3x1xf32>
    %89 = vector.broadcast %88 : vector<3x1xf32> to vector<3x256xf32>
    %90 = arith.addf %87, %89 : vector<3x256xf32>
    %91 = arith.negf %90 : vector<3x256xf32>
    %92 = math.exp %91 : vector<3x256xf32>
    %cst_50 = arith.constant 1.000000e+00 : f32
    %93 = vector.broadcast %cst_50 : f32 to vector<3x256xf32>
    %94 = arith.addf %93, %92 : vector<3x256xf32>
    %95 = arith.divf %93, %94 : vector<3x256xf32>
    %96 = vector.extract_strided_slice %95 {offsets = [0, 0], sizes = [3, 128], strides = [1, 1]} : vector<3x256xf32> to vector<3x128xf32>
    %c0_51 = arith.constant 0 : index
    %c0_52 = arith.constant 0 : index
    %c0_53 = arith.constant 0 : index
    %97 = vector.load %arg10[%c0_51, %c0_52, %c0_53] : memref<2x3x128xf32, #tpu.memory_space<vmem>>, vector<1x3x128xf32>
    %98 = vector.shape_cast %97 : vector<1x3x128xf32> to vector<3x128xf32>
    %99 = vector.shape_cast %96 : vector<3x128xf32> to vector<1x3x128xf32>
    tpu.vector_store %arg10[%c0_51, %c0_52, %c0_53], %99 {strides = array<i32>} : memref<2x3x128xf32, #tpu.memory_space<vmem>>, vector<1x3x128xf32>,
    %100 = vector.extract_strided_slice %95 {offsets = [0, 128], sizes = [3, 128], strides = [1, 1]} : vector<3x256xf32> to vector<3x128xf32>
    %c1_54 = arith.constant 1 : index
    %c0_55 = arith.constant 0 : index
    %c0_56 = arith.constant 0 : index
    %101 = vector.load %arg10[%c1_54, %c0_55, %c0_56] : memref<2x3x128xf32, #tpu.memory_space<vmem>>, vector<1x3x128xf32>
    %102 = vector.shape_cast %101 : vector<1x3x128xf32> to vector<3x128xf32>
    %103 = vector.shape_cast %100 : vector<3x128xf32> to vector<1x3x128xf32>
    tpu.vector_store %arg10[%c1_54, %c0_55, %c0_56], %103 {strides = array<i32>} : memref<2x3x128xf32, #tpu.memory_space<vmem>>, vector<1x3x128xf32>,
    return
  }
}

</mosaic_0001>

<llo_original>
// kernel: mlp_for_forward.1
$region0: #{mlp_for_forward.1}
  #allocation0 [shape = 'u32[]', space=smem, size = 0x4, offset = 0x4, fixed_abs, tag = 'smem constant byte address 0x4 - core index']
  #allocation1 [shape = 'u32[72,128]{1,0:T(1,128)}', space=vmem, size = 0x9000, scoped, tag = 'internal scratch']
  #allocation2 [shape = 'bf16[2304,512]{1,0:T(8,128)(2,1)}', space=vmem, size = 0x240000, scoped, tag = 'scratch operand']
  #allocation3 [shape = 'bf16[512,256]{1,0:T(8,128)(2,1)}', space=vmem, size = 0x40000, scoped, tag = 'scratch operand']
  #allocation4 [shape = 's32[2]{0}', space=sflag, size = 0x8, scoped, tag = 'scratch operand']
  #allocation5 [shape = 's32[]', space=sflag, size = 0x4, offset = 0, fixed_abs, tag = 'sflag constant byte address 0x0 - dummy sync flag']
  #allocation6 [shape = 's32[]', space=sflag, size = 0x4, offset = 0, fixed_abs, tag = 'sflag constant byte address 0x0 - dummy sync flag']
  %s0 = inlined_call_operand.vmem [shape: f32[3,256], index: 0, kind: input, shape index: {}]
  %s1 = inlined_call_operand.vmem [shape: f32[2,1280], index: 1, kind: input, shape index: {}]
  %s2 = inlined_call_operand.vmem [shape: bf16[224,128], index: 2, kind: input, shape index: {}]
  %s3 = inlined_call_operand.vmem [shape: bf16[128,1024], index: 3, kind: input, shape index: {}]
  %s4 = inlined_call_operand.vmem [shape: bf16[64,512], index: 4, kind: input, shape index: {}]
  %s5 = inlined_call_operand.vmem [shape: bf16[2304,512], index: 5, kind: input, shape index: {}]
  %s6 = inlined_call_operand.vmem [shape: bf16[512,256], index: 6, kind: input, shape index: {}]
  %s7 = inlined_call_operand.vmem [shape: bf16[256,128], index: 7, kind: input, shape index: {}]
  %s8 = inlined_call_operand.vmem [shape: f32[3,1], index: 8, kind: input, shape index: {}]
  %s9 = inlined_call_operand.vmem [shape: f32[8,1024], index: 9, kind: input, shape index: {}]
  %s10 = inlined_call_operand.vmem [shape: f32[2,3,128], index: 10, kind: output, shape index: {}]
  %s11 = sld [smem:[#allocation0]]
  $region80: #{mlp_for_forward.1} parent=0
    _
  %s13 = ssub.s32 1, %s11
  %s14 = scalar_select 0, %s13, %s11
  // Predicated region
  $region2: #{mlp_for_forward.1} parent=0 // pred_check
    _
  $region3: #{mlp_for_forward.1} parent=0 // pred_check_branch
    %16 = sbr.rel (0) target = $region5
  $region4: #{mlp_for_forward.1} parent=0 // pred_region
    _
  $region5: #{mlp_for_forward.1} parent=0 // pred_fallthru
    _
  // Predicated region
  $region6: #{mlp_for_forward.1} parent=0 // pred_check
    _
  $region7: #{mlp_for_forward.1} parent=0 // pred_check_branch
    %18 = sbr.rel (0) target = $region9
  $region8: #{mlp_for_forward.1} parent=0 // pred_region
    _
  $region9: #{mlp_for_forward.1} parent=0 // pred_fallthru
    _
  // Predicated region
  $region10: #{mlp_for_forward.1} parent=0 // pred_check
    _
  $region11: #{mlp_for_forward.1} parent=0 // pred_check_branch
    %20 = sbr.rel (0) target = $region13
  $region12: #{mlp_for_forward.1} parent=0 // pred_region
    _
  $region13: #{mlp_for_forward.1} parent=0 // pred_fallthru
    _
  // Predicated region
  $region14: #{mlp_for_forward.1} parent=0 // pred_check
    _
  $region15: #{mlp_for_forward.1} parent=0 // pred_check_branch
    %22 = sbr.rel (0) target = $region17
  $region16: #{mlp_for_forward.1} parent=0 // pred_region
    _
  $region17: #{mlp_for_forward.1} parent=0 // pred_fallthru
    _
  // Predicated region
  $region18: #{mlp_for_forward.1} parent=0 // pred_check
    _
  $region19: #{mlp_for_forward.1} parent=0 // pred_check_branch
    %24 = sbr.rel (0) target = $region21
  $region20: #{mlp_for_forward.1} parent=0 // pred_region
    _
  $region21: #{mlp_for_forward.1} parent=0 // pred_fallthru
    _
  // Predicated region
  $region22: #{mlp_for_forward.1} parent=0 // pred_check
    _
  $region23: #{mlp_for_forward.1} parent=0 // pred_check_branch
    %26 = sbr.rel (0) target = $region25
  $region24: #{mlp_for_forward.1} parent=0 // pred_region
    _
  $region25: #{mlp_for_forward.1} parent=0 // pred_fallthru
    _
  // Predicated region
  $region26: #{mlp_for_forward.1} parent=0 // pred_check
    _
  $region27: #{mlp_for_forward.1} parent=0 // pred_check_branch
    %28 = sbr.rel (0) target = $region29
  $region28: #{mlp_for_forward.1} parent=0 // pred_region
    _
  $region29: #{mlp_for_forward.1} parent=0 // pred_fallthru
    _
  // Predicated region
  $region30: #{mlp_for_forward.1} parent=0 // pred_check
    _
  $region31: #{mlp_for_forward.1} parent=0 // pred_check_branch
    %30 = sbr.rel (0) target = $region33
  $region32: #{mlp_for_forward.1} parent=0 // pred_region
    _
  $region33: #{mlp_for_forward.1} parent=0 // pred_fallthru
    _
  // Predicated region
  $region34: #{mlp_for_forward.1} parent=0 // pred_check
    _
  $region35: #{mlp_for_forward.1} parent=0 // pred_check_branch
    %33 = sbr.rel (0) target = $region37
  $region36: #{mlp_for_forward.1} parent=0 // pred_region
    loop: start=0, step=1, limit=1
    $region38: #{mlp_for_forward.1} parent=36 // loop_pre_header
      _
    $region39: #{mlp_for_forward.1} parent=36 // loop_header
      %s35 = sphi 0, %s39
      %p36 = scmp.ge.s32.totalorder %s35, 1
      %s40 = sphi %s5, %s5
      %s41 = sphi [#allocation2], [#allocation2]
    $region40: #{mlp_for_forward.1} parent=36 // loop_header_branch
      %38 = sbr.rel (%p36) target = $region44
    $region41: #{mlp_for_forward.1} parent=36 // loop_body
      %v42 = vld [vmem:[%s40] sm:$0xff]
      %43 = vst [vmem:[%s41] sm:$0xff] %v42
      %v44 = vld [vmem:[%s40 + $0x8] sm:$0xff]
      %45 = vst [vmem:[%s41 + $0x8] sm:$0xff] %v44
      %v46 = vld [vmem:[%s40 + $0x10] sm:$0xff]
      %47 = vst [vmem:[%s41 + $0x10] sm:$0xff] %v46
      %v48 = vld [vmem:[%s40 + $0x18] sm:$0xff]
      %49 = vst [vmem:[%s41 + $0x18] sm:$0xff] %v48
      %v50 = vld [vmem:[%s40 + $0x20] sm:$0xff]
      %51 = vst [vmem:[%s41 + $0x20] sm:$0xff] %v50
      %v52 = vld [vmem:[%s40 + $0x28] sm:$0xff]
      %53 = vst [vmem:[%s41 + $0x28] sm:$0xff] %v52
      %v54 = vld [vmem:[%s40 + $0x30] sm:$0xff]
      %55 = vst [vmem:[%s41 + $0x30] sm:$0xff] %v54
      %v56 = vld [vmem:[%s40 + $0x38] sm:$0xff]
      %57 = vst [vmem:[%s41 + $0x38] sm:$0xff] %v56
      %v58 = vld [vmem:[%s40 + $0x40] sm:$0xff]
      %59 = vst [vmem:[%s41 + $0x40] sm:$0xff] %v58
      %v60 = vld [vmem:[%s40 + $0x48] sm:$0xff]
      %61 = vst [vmem:[%s41 + $0x48] sm:$0xff] %v60
      %v62 = vld [vmem:[%s40 + $0x50] sm:$0xff]
      %63 = vst [vmem:[%s41 + $0x50] sm:$0xff] %v62
      %v64 = vld [vmem:[%s40 + $0x58] sm:$0xff]
      %65 = vst [vmem:[%s41 + $0x58] sm:$0xff] %v64
      %v66 = vld [vmem:[%s40 + $0x60] sm:$0xff]
      %67 = vst [vmem:[%s41 + $0x60] sm:$0xff] %v66
      %v68 = vld [vmem:[%s40 + $0x68] sm:$0xff]
      %69 = vst [vmem:[%s41 + $0x68] sm:$0xff] %v68
      %v70 = vld [vmem:[%s40 + $0x70] sm:$0xff]
      %71 = vst [vmem:[%s41 + $0x70] sm:$0xff] %v70
      %v72 = vld [vmem:[%s40 + $0x78] sm:$0xff]
      %73 = vst [vmem:[%s41 + $0x78] sm:$0xff] %v72
      %v74 = vld [vmem:[%s40 + $0x80] sm:$0xff]
      %75 = vst [vmem:[%s41 + $0x80] sm:$0xff] %v74
      %v76 = vld [vmem:[%s40 + $0x88] sm:$0xff]
      %77 = vst [vmem:[%s41 + $0x88] sm:$0xff] %v76
      %v78 = vld [vmem:[%s40 + $0x90] sm:$0xff]
      %79 = vst [vmem:[%s41 + $0x90] sm:$0xff] %v78
      %v80 = vld [vmem:[%s40 + $0x98] sm:$0xff]
      %81 = vst [vmem:[%s41 + $0x98] sm:$0xff] %v80
      %v82 = vld [vmem:[%s40 + $0xa0] sm:$0xff]
      %83 = vst [vmem:[%s41 + $0xa0] sm:$0xff] %v82
      %v84 = vld [vmem:[%s40 + $0xa8] sm:$0xff]
      %85 = vst [vmem:[%s41 + $0xa8] sm:$0xff] %v84
      %v86 = vld [vmem:[%s40 + $0xb0] sm:$0xff]
      %87 = vst [vmem:[%s41 + $0xb0] sm:$0xff] %v86
      %v88 = vld [vmem:[%s40 + $0xb8] sm:$0xff]
      %89 = vst [vmem:[%s41 + $0xb8] sm:$0xff] %v88
      %v90 = vld [vmem:[%s40 + $0xc0] sm:$0xff]
      %91 = vst [vmem:[%s41 + $0xc0] sm:$0xff] %v90
      %v92 = vld [vmem:[%s40 + $0xc8] sm:$0xff]
      %93 = vst [vmem:[%s41 + $0xc8] sm:$0xff] %v92
      %v94 = vld [vmem:[%s40 + $0xd0] sm:$0xff]
      %95 = vst [vmem:[%s41 + $0xd0] sm:$0xff] %v94
      %v96 = vld [vmem:[%s40 + $0xd8] sm:$0xff]
      %97 = vst [vmem:[%s41 + $0xd8] sm:$0xff] %v96
      %v98 = vld [vmem:[%s40 + $0xe0] sm:$0xff]
      %99 = vst [vmem:[%s41 + $0xe0] sm:$0xff] %v98
      %v100 = vld [vmem:[%s40 + $0xe8] sm:$0xff]
      %101 = vst [vmem:[%s41 + $0xe8] sm:$0xff] %v100
      %v102 = vld [vmem:[%s40 + $0xf0] sm:$0xff]
      %103 = vst [vmem:[%s41 + $0xf0] sm:$0xff] %v102
      %v104 = vld [vmem:[%s40 + $0xf8] sm:$0xff]
      %105 = vst [vmem:[%s41 + $0xf8] sm:$0xff] %v104
      %v106 = vld [vmem:[%s40 + $0x100] sm:$0xff]
      %107 = vst [vmem:[%s41 + $0x100] sm:$0xff] %v106
      %v108 = vld [vmem:[%s40 + $0x108] sm:$0xff]
      %109 = vst [vmem:[%s41 + $0x108] sm:$0xff] %v108
      %v110 = vld [vmem:[%s40 + $0x110] sm:$0xff]
      %111 = vst [vmem:[%s41 + $0x110] sm:$0xff] %v110
      %v112 = vld [vmem:[%s40 + $0x118] sm:$0xff]
      %113 = vst [vmem:[%s41 + $0x118] sm:$0xff] %v112
      %v114 = vld [vmem:[%s40 + $0x120] sm:$0xff]
      %115 = vst [vmem:[%s41 + $0x120] sm:$0xff] %v114
      %v116 = vld [vmem:[%s40 + $0x128] sm:$0xff]
      %117 = vst [vmem:[%s41 + $0x128] sm:$0xff] %v116
      %v118 = vld [vmem:[%s40 + $0x130] sm:$0xff]
      %119 = vst [vmem:[%s41 + $0x130] sm:$0xff] %v118
      %v120 = vld [vmem:[%s40 + $0x138] sm:$0xff]
      %121 = vst [vmem:[%s41 + $0x138] sm:$0xff] %v120
      %v122 = vld [vmem:[%s40 + $0x140] sm:$0xff]
      %123 = vst [vmem:[%s41 + $0x140] sm:$0xff] %v122
      %v124 = vld [vmem:[%s40 + $0x148] sm:$0xff]
      %125 = vst [vmem:[%s41 + $0x148] sm:$0xff] %v124
      %v126 = vld [vmem:[%s40 + $0x150] sm:$0xff]
      %127 = vst [vmem:[%s41 + $0x150] sm:$0xff] %v126
      %v128 = vld [vmem:[%s40 + $0x158] sm:$0xff]
      %129 = vst [vmem:[%s41 + $0x158] sm:$0xff] %v128
      %v130 = vld [vmem:[%s40 + $0x160] sm:$0xff]
      %131 = vst [vmem:[%s41 + $0x160] sm:$0xff] %v130
      %v132 = vld [vmem:[%s40 + $0x168] sm:$0xff]
      %133 = vst [vmem:[%s41 + $0x168] sm:$0xff] %v132
      %v134 = vld [vmem:[%s40 + $0x170] sm:$0xff]
      %135 = vst [vmem:[%s41 + $0x170] sm:$0xff] %v134
      %v136 = vld [vmem:[%s40 + $0x178] sm:$0xff]
      %137 = vst [vmem:[%s41 + $0x178] sm:$0xff] %v136
      %v138 = vld [vmem:[%s40 + $0x180] sm:$0xff]
      %139 = vst [vmem:[%s41 + $0x180] sm:$0xff] %v138
      %v140 = vld [vmem:[%s40 + $0x188] sm:$0xff]
      %141 = vst [vmem:[%s41 + $0x188] sm:$0xff] %v140
      %v142 = vld [vmem:[%s40 + $0x190] sm:$0xff]
      %143 = vst [vmem:[%s41 + $0x190] sm:$0xff] %v142
      %v144 = vld [vmem:[%s40 + $0x198] sm:$0xff]
      %145 = vst [vmem:[%s41 + $0x198] sm:$0xff] %v144
      %v146 = vld [vmem:[%s40 + $0x1a0] sm:$0xff]
      %147 = vst [vmem:[%s41 + $0x1a0] sm:$0xff] %v146
      %v148 = vld [vmem:[%s40 + $0x1a8] sm:$0xff]
      %149 = vst [vmem:[%s41 + $0x1a8] sm:$0xff] %v148
      %v150 = vld [vmem:[%s40 + $0x1b0] sm:$0xff]
      %151 = vst [vmem:[%s41 + $0x1b0] sm:$0xff] %v150
      %v152 = vld [vmem:[%s40 + $0x1b8] sm:$0xff]
      %153 = vst [vmem:[%s41 + $0x1b8] sm:$0xff] %v152
      %v154 = vld [vmem:[%s40 + $0x1c0] sm:$0xff]
      %155 = vst [vmem:[%s41 + $0x1c0] sm:$0xff] %v154
      %v156 = vld [vmem:[%s40 + $0x1c8] sm:$0xff]
      %157 = vst [vmem:[%s41 + $0x1c8] sm:$0xff] %v156
      %v158 = vld [vmem:[%s40 + $0x1d0] sm:$0xff]
      %159 = vst [vmem:[%s41 + $0x1d0] sm:$0xff] %v158
      %v160 = vld [vmem:[%s40 + $0x1d8] sm:$0xff]
      %161 = vst [vmem:[%s41 + $0x1d8] sm:$0xff] %v160
      %v162 = vld [vmem:[%s40 + $0x1e0] sm:$0xff]
      %163 = vst [vmem:[%s41 + $0x1e0] sm:$0xff] %v162
      %v164 = vld [vmem:[%s40 + $0x1e8] sm:$0xff]
      %165 = vst [vmem:[%s41 + $0x1e8] sm:$0xff] %v164
      %v166 = vld [vmem:[%s40 + $0x1f0] sm:$0xff]
      %167 = vst [vmem:[%s41 + $0x1f0] sm:$0xff] %v166
      %v168 = vld [vmem:[%s40 + $0x1f8] sm:$0xff]
      %169 = vst [vmem:[%s41 + $0x1f8] sm:$0xff] %v168
      %v170 = vld [vmem:[%s40 + $0x200] sm:$0xff]
      %171 = vst [vmem:[%s41 + $0x200] sm:$0xff] %v170
      %v172 = vld [vmem:[%s40 + $0x208] sm:$0xff]
      %173 = vst [vmem:[%s41 + $0x208] sm:$0xff] %v172
      %v174 = vld [vmem:[%s40 + $0x210] sm:$0xff]
      %175 = vst [vmem:[%s41 + $0x210] sm:$0xff] %v174
      %v176 = vld [vmem:[%s40 + $0x218] sm:$0xff]
      %177 = vst [vmem:[%s41 + $0x218] sm:$0xff] %v176
      %v178 = vld [vmem:[%s40 + $0x220] sm:$0xff]
      %179 = vst [vmem:[%s41 + $0x220] sm:$0xff] %v178
      %v180 = vld [vmem:[%s40 + $0x228] sm:$0xff]
      %181 = vst [vmem:[%s41 + $0x228] sm:$0xff] %v180
      %v182 = vld [vmem:[%s40 + $0x230] sm:$0xff]
      %183 = vst [vmem:[%s41 + $0x230] sm:$0xff] %v182
      %v184 = vld [vmem:[%s40 + $0x238] sm:$0xff]
      %185 = vst [vmem:[%s41 + $0x238] sm:$0xff] %v184
      %v186 = vld [vmem:[%s40 + $0x240] sm:$0xff]
      %187 = vst [vmem:[%s41 + $0x240] sm:$0xff] %v186
      %v188 = vld [vmem:[%s40 + $0x248] sm:$0xff]
      %189 = vst [vmem:[%s41 + $0x248] sm:$0xff] %v188
      %v190 = vld [vmem:[%s40 + $0x250] sm:$0xff]
      %191 = vst [vmem:[%s41 + $0x250] sm:$0xff] %v190
      %v192 = vld [vmem:[%s40 + $0x258] sm:$0xff]
      %193 = vst [vmem:[%s41 + $0x258] sm:$0xff] %v192
      %v194 = vld [vmem:[%s40 + $0x260] sm:$0xff]
      %195 = vst [vmem:[%s41 + $0x260] sm:$0xff] %v194
      %v196 = vld [vmem:[%s40 + $0x268] sm:$0xff]
      %197 = vst [vmem:[%s41 + $0x268] sm:$0xff] %v196
      %v198 = vld [vmem:[%s40 + $0x270] sm:$0xff]
      %199 = vst [vmem:[%s41 + $0x270] sm:$0xff] %v198
      %v200 = vld [vmem:[%s40 + $0x278] sm:$0xff]
      %201 = vst [vmem:[%s41 + $0x278] sm:$0xff] %v200
      %v202 = vld [vmem:[%s40 + $0x280] sm:$0xff]
      %203 = vst [vmem:[%s41 + $0x280] sm:$0xff] %v202
      %v204 = vld [vmem:[%s40 + $0x288] sm:$0xff]
      %205 = vst [vmem:[%s41 + $0x288] sm:$0xff] %v204
      %v206 = vld [vmem:[%s40 + $0x290] sm:$0xff]
      %207 = vst [vmem:[%s41 + $0x290] sm:$0xff] %v206
      %v208 = vld [vmem:[%s40 + $0x298] sm:$0xff]
      %209 = vst [vmem:[%s41 + $0x298] sm:$0xff] %v208
      %v210 = vld [vmem:[%s40 + $0x2a0] sm:$0xff]
      %211 = vst [vmem:[%s41 + $0x2a0] sm:$0xff] %v210
      %v212 = vld [vmem:[%s40 + $0x2a8] sm:$0xff]
      %213 = vst [vmem:[%s41 + $0x2a8] sm:$0xff] %v212
      %v214 = vld [vmem:[%s40 + $0x2b0] sm:$0xff]
      %215 = vst [vmem:[%s41 + $0x2b0] sm:$0xff] %v214
      %v216 = vld [vmem:[%s40 + $0x2b8] sm:$0xff]
      %217 = vst [vmem:[%s41 + $0x2b8] sm:$0xff] %v216
      %v218 = vld [vmem:[%s40 + $0x2c0] sm:$0xff]
      %219 = vst [vmem:[%s41 + $0x2c0] sm:$0xff] %v218
      %v220 = vld [vmem:[%s40 + $0x2c8] sm:$0xff]
      %221 = vst [vmem:[%s41 + $0x2c8] sm:$0xff] %v220
      %v222 = vld [vmem:[%s40 + $0x2d0] sm:$0xff]
      %223 = vst [vmem:[%s41 + $0x2d0] sm:$0xff] %v222
      %v224 = vld [vmem:[%s40 + $0x2d8] sm:$0xff]
      %225 = vst [vmem:[%s41 + $0x2d8] sm:$0xff] %v224
      %v226 = vld [vmem:[%s40 + $0x2e0] sm:$0xff]
      %227 = vst [vmem:[%s41 + $0x2e0] sm:$0xff] %v226
      %v228 = vld [vmem:[%s40 + $0x2e8] sm:$0xff]
      %229 = vst [vmem:[%s41 + $0x2e8] sm:$0xff] %v228
      %v230 = vld [vmem:[%s40 + $0x2f0] sm:$0xff]
      %231 = vst [vmem:[%s41 + $0x2f0] sm:$0xff] %v230
      %v232 = vld [vmem:[%s40 + $0x2f8] sm:$0xff]
      %233 = vst [vmem:[%s41 + $0x2f8] sm:$0xff] %v232
      %v234 = vld [vmem:[%s40 + $0x300] sm:$0xff]
      %235 = vst [vmem:[%s41 + $0x300] sm:$0xff] %v234
      %v236 = vld [vmem:[%s40 + $0x308] sm:$0xff]
      %237 = vst [vmem:[%s41 + $0x308] sm:$0xff] %v236
      %v238 = vld [vmem:[%s40 + $0x310] sm:$0xff]
      %239 = vst [vmem:[%s41 + $0x310] sm:$0xff] %v238
      %v240 = vld [vmem:[%s40 + $0x318] sm:$0xff]
      %241 = vst [vmem:[%s41 + $0x318] sm:$0xff] %v240
      %v242 = vld [vmem:[%s40 + $0x320] sm:$0xff]
      %243 = vst [vmem:[%s41 + $0x320] sm:$0xff] %v242
      %v244 = vld [vmem:[%s40 + $0x328] sm:$0xff]
      %245 = vst [vmem:[%s41 + $0x328] sm:$0xff] %v244
      %v246 = vld [vmem:[%s40 + $0x330] sm:$0xff]
      %247 = vst [vmem:[%s41 + $0x330] sm:$0xff] %v246
      %v248 = vld [vmem:[%s40 + $0x338] sm:$0xff]
      %249 = vst [vmem:[%s41 + $0x338] sm:$0xff] %v248
      %v250 = vld [vmem:[%s40 + $0x340] sm:$0xff]
      %251 = vst [vmem:[%s41 + $0x340] sm:$0xff] %v250
      %v252 = vld [vmem:[%s40 + $0x348] sm:$0xff]
      %253 = vst [vmem:[%s41 + $0x348] sm:$0xff] %v252
      %v254 = vld [vmem:[%s40 + $0x350] sm:$0xff]
      %255 = vst [vmem:[%s41 + $0x350] sm:$0xff] %v254
      %v256 = vld [vmem:[%s40 + $0x358] sm:$0xff]
      %257 = vst [vmem:[%s41 + $0x358] sm:$0xff] %v256
      %v258 = vld [vmem:[%s40 + $0x360] sm:$0xff]
      %259 = vst [vmem:[%s41 + $0x360] sm:$0xff] %v258
      %v260 = vld [vmem:[%s40 + $0x368] sm:$0xff]
      %261 = vst [vmem:[%s41 + $0x368] sm:$0xff] %v260
      %v262 = vld [vmem:[%s40 + $0x370] sm:$0xff]
      %263 = vst [vmem:[%s41 + $0x370] sm:$0xff] %v262
      %v264 = vld [vmem:[%s40 + $0x378] sm:$0xff]
      %265 = vst [vmem:[%s41 + $0x378] sm:$0xff] %v264
      %v266 = vld [vmem:[%s40 + $0x380] sm:$0xff]
      %267 = vst [vmem:[%s41 + $0x380] sm:$0xff] %v266
      %v268 = vld [vmem:[%s40 + $0x388] sm:$0xff]
      %269 = vst [vmem:[%s41 + $0x388] sm:$0xff] %v268
      %v270 = vld [vmem:[%s40 + $0x390] sm:$0xff]
      %271 = vst [vmem:[%s41 + $0x390] sm:$0xff] %v270
      %v272 = vld [vmem:[%s40 + $0x398] sm:$0xff]
      %273 = vst [vmem:[%s41 + $0x398] sm:$0xff] %v272
      %v274 = vld [vmem:[%s40 + $0x3a0] sm:$0xff]
      %275 = vst [vmem:[%s41 + $0x3a0] sm:$0xff] %v274
      %v276 = vld [vmem:[%s40 + $0x3a8] sm:$0xff]
      %277 = vst [vmem:[%s41 + $0x3a8] sm:$0xff] %v276
      %v278 = vld [vmem:[%s40 + $0x3b0] sm:$0xff]
      %279 = vst [vmem:[%s41 + $0x3b0] sm:$0xff] %v278
      %v280 = vld [vmem:[%s40 + $0x3b8] sm:$0xff]
      %281 = vst [vmem:[%s41 + $0x3b8] sm:$0xff] %v280
      %v282 = vld [vmem:[%s40 + $0x3c0] sm:$0xff]
      %283 = vst [vmem:[%s41 + $0x3c0] sm:$0xff] %v282
      %v284 = vld [vmem:[%s40 + $0x3c8] sm:$0xff]
      %285 = vst [vmem:[%s41 + $0x3c8] sm:$0xff] %v284
      %v286 = vld [vmem:[%s40 + $0x3d0] sm:$0xff]
      %287 = vst [vmem:[%s41 + $0x3d0] sm:$0xff] %v286
      %v288 = vld [vmem:[%s40 + $0x3d8] sm:$0xff]
      %289 = vst [vmem:[%s41 + $0x3d8] sm:$0xff] %v288
      %v290 = vld [vmem:[%s40 + $0x3e0] sm:$0xff]
      %291 = vst [vmem:[%s41 + $0x3e0] sm:$0xff] %v290
      %v292 = vld [vmem:[%s40 + $0x3e8] sm:$0xff]
      %293 = vst [vmem:[%s41 + $0x3e8] sm:$0xff] %v292
      %v294 = vld [vmem:[%s40 + $0x3f0] sm:$0xff]
      %295 = vst [vmem:[%s41 + $0x3f0] sm:$0xff] %v294
      %v296 = vld [vmem:[%s40 + $0x3f8] sm:$0xff]
      %297 = vst [vmem:[%s41 + $0x3f8] sm:$0xff] %v296
      %v298 = vld [vmem:[%s40 + $0x400] sm:$0xff]
      %299 = vst [vmem:[%s41 + $0x400] sm:$0xff] %v298
      %v300 = vld [vmem:[%s40 + $0x408] sm:$0xff]
      %301 = vst [vmem:[%s41 + $0x408] sm:$0xff] %v300
      %v302 = vld [vmem:[%s40 + $0x410] sm:$0xff]
      %303 = vst [vmem:[%s41 + $0x410] sm:$0xff] %v302
      %v304 = vld [vmem:[%s40 + $0x418] sm:$0xff]
      %305 = vst [vmem:[%s41 + $0x418] sm:$0xff] %v304
      %v306 = vld [vmem:[%s40 + $0x420] sm:$0xff]
      %307 = vst [vmem:[%s41 + $0x420] sm:$0xff] %v306
      %v308 = vld [vmem:[%s40 + $0x428] sm:$0xff]
      %309 = vst [vmem:[%s41 + $0x428] sm:$0xff] %v308
      %v310 = vld [vmem:[%s40 + $0x430] sm:$0xff]
      %311 = vst [vmem:[%s41 + $0x430] sm:$0xff] %v310
      %v312 = vld [vmem:[%s40 + $0x438] sm:$0xff]
      %313 = vst [vmem:[%s41 + $0x438] sm:$0xff] %v312
      %v314 = vld [vmem:[%s40 + $0x440] sm:$0xff]
      %315 = vst [vmem:[%s41 + $0x440] sm:$0xff] %v314
      %v316 = vld [vmem:[%s40 + $0x448] sm:$0xff]
      %317 = vst [vmem:[%s41 + $0x448] sm:$0xff] %v316
      %v318 = vld [vmem:[%s40 + $0x450] sm:$0xff]
      %319 = vst [vmem:[%s41 + $0x450] sm:$0xff] %v318
      %v320 = vld [vmem:[%s40 + $0x458] sm:$0xff]
      %321 = vst [vmem:[%s41 + $0x458] sm:$0xff] %v320
      %v322 = vld [vmem:[%s40 + $0x460] sm:$0xff]
      %323 = vst [vmem:[%s41 + $0x460] sm:$0xff] %v322
      %v324 = vld [vmem:[%s40 + $0x468] sm:$0xff]
      %325 = vst [vmem:[%s41 + $0x468] sm:$0xff] %v324
      %v326 = vld [vmem:[%s40 + $0x470] sm:$0xff]
      %327 = vst [vmem:[%s41 + $0x470] sm:$0xff] %v326
      %v328 = vld [vmem:[%s40 + $0x478] sm:$0xff]
      %329 = vst [vmem:[%s41 + $0x478] sm:$0xff] %v328
      %v330 = vld [vmem:[%s40 + $0x480] sm:$0xff]
      %331 = vst [vmem:[%s41 + $0x480] sm:$0xff] %v330
      %v332 = vld [vmem:[%s40 + $0x488] sm:$0xff]
      %333 = vst [vmem:[%s41 + $0x488] sm:$0xff] %v332
      %v334 = vld [vmem:[%s40 + $0x490] sm:$0xff]
      %335 = vst [vmem:[%s41 + $0x490] sm:$0xff] %v334
      %v336 = vld [vmem:[%s40 + $0x498] sm:$0xff]
      %337 = vst [vmem:[%s41 + $0x498] sm:$0xff] %v336
      %v338 = vld [vmem:[%s40 + $0x4a0] sm:$0xff]
      %339 = vst [vmem:[%s41 + $0x4a0] sm:$0xff] %v338
      %v340 = vld [vmem:[%s40 + $0x4a8] sm:$0xff]
      %341 = vst [vmem:[%s41 + $0x4a8] sm:$0xff] %v340
      %v342 = vld [vmem:[%s40 + $0x4b0] sm:$0xff]
      %343 = vst [vmem:[%s41 + $0x4b0] sm:$0xff] %v342
      %v344 = vld [vmem:[%s40 + $0x4b8] sm:$0xff]
      %345 = vst [vmem:[%s41 + $0x4b8] sm:$0xff] %v344
      %v346 = vld [vmem:[%s40 + $0x4c0] sm:$0xff]
      %347 = vst [vmem:[%s41 + $0x4c0] sm:$0xff] %v346
      %v348 = vld [vmem:[%s40 + $0x4c8] sm:$0xff]
      %349 = vst [vmem:[%s41 + $0x4c8] sm:$0xff] %v348
      %v350 = vld [vmem:[%s40 + $0x4d0] sm:$0xff]
      %351 = vst [vmem:[%s41 + $0x4d0] sm:$0xff] %v350
      %v352 = vld [vmem:[%s40 + $0x4d8] sm:$0xff]
      %353 = vst [vmem:[%s41 + $0x4d8] sm:$0xff] %v352
      %v354 = vld [vmem:[%s40 + $0x4e0] sm:$0xff]
      %355 = vst [vmem:[%s41 + $0x4e0] sm:$0xff] %v354
      %v356 = vld [vmem:[%s40 + $0x4e8] sm:$0xff]
      %357 = vst [vmem:[%s41 + $0x4e8] sm:$0xff] %v356
      %v358 = vld [vmem:[%s40 + $0x4f0] sm:$0xff]
      %359 = vst [vmem:[%s41 + $0x4f0] sm:$0xff] %v358
      %v360 = vld [vmem:[%s40 + $0x4f8] sm:$0xff]
      %361 = vst [vmem:[%s41 + $0x4f8] sm:$0xff] %v360
      %v362 = vld [vmem:[%s40 + $0x500] sm:$0xff]
      %363 = vst [vmem:[%s41 + $0x500] sm:$0xff] %v362
      %v364 = vld [vmem:[%s40 + $0x508] sm:$0xff]
      %365 = vst [vmem:[%s41 + $0x508] sm:$0xff] %v364
      %v366 = vld [vmem:[%s40 + $0x510] sm:$0xff]
      %367 = vst [vmem:[%s41 + $0x510] sm:$0xff] %v366
      %v368 = vld [vmem:[%s40 + $0x518] sm:$0xff]
      %369 = vst [vmem:[%s41 + $0x518] sm:$0xff] %v368
      %v370 = vld [vmem:[%s40 + $0x520] sm:$0xff]
      %371 = vst [vmem:[%s41 + $0x520] sm:$0xff] %v370
      %v372 = vld [vmem:[%s40 + $0x528] sm:$0xff]
      %373 = vst [vmem:[%s41 + $0x528] sm:$0xff] %v372
      %v374 = vld [vmem:[%s40 + $0x530] sm:$0xff]
      %375 = vst [vmem:[%s41 + $0x530] sm:$0xff] %v374
      %v376 = vld [vmem:[%s40 + $0x538] sm:$0xff]
      %377 = vst [vmem:[%s41 + $0x538] sm:$0xff] %v376
      %v378 = vld [vmem:[%s40 + $0x540] sm:$0xff]
      %379 = vst [vmem:[%s41 + $0x540] sm:$0xff] %v378
      %v380 = vld [vmem:[%s40 + $0x548] sm:$0xff]
      %381 = vst [vmem:[%s41 + $0x548] sm:$0xff] %v380
      %v382 = vld [vmem:[%s40 + $0x550] sm:$0xff]
      %383 = vst [vmem:[%s41 + $0x550] sm:$0xff] %v382
      %v384 = vld [vmem:[%s40 + $0x558] sm:$0xff]
      %385 = vst [vmem:[%s41 + $0x558] sm:$0xff] %v384
      %v386 = vld [vmem:[%s40 + $0x560] sm:$0xff]
      %387 = vst [vmem:[%s41 + $0x560] sm:$0xff] %v386
      %v388 = vld [vmem:[%s40 + $0x568] sm:$0xff]
      %389 = vst [vmem:[%s41 + $0x568] sm:$0xff] %v388
      %v390 = vld [vmem:[%s40 + $0x570] sm:$0xff]
      %391 = vst [vmem:[%s41 + $0x570] sm:$0xff] %v390
      %v392 = vld [vmem:[%s40 + $0x578] sm:$0xff]
      %393 = vst [vmem:[%s41 + $0x578] sm:$0xff] %v392
      %v394 = vld [vmem:[%s40 + $0x580] sm:$0xff]
      %395 = vst [vmem:[%s41 + $0x580] sm:$0xff] %v394
      %v396 = vld [vmem:[%s40 + $0x588] sm:$0xff]
      %397 = vst [vmem:[%s41 + $0x588] sm:$0xff] %v396
      %v398 = vld [vmem:[%s40 + $0x590] sm:$0xff]
      %399 = vst [vmem:[%s41 + $0x590] sm:$0xff] %v398
      %v400 = vld [vmem:[%s40 + $0x598] sm:$0xff]
      %401 = vst [vmem:[%s41 + $0x598] sm:$0xff] %v400
      %v402 = vld [vmem:[%s40 + $0x5a0] sm:$0xff]
      %403 = vst [vmem:[%s41 + $0x5a0] sm:$0xff] %v402
      %v404 = vld [vmem:[%s40 + $0x5a8] sm:$0xff]
      %405 = vst [vmem:[%s41 + $0x5a8] sm:$0xff] %v404
      %v406 = vld [vmem:[%s40 + $0x5b0] sm:$0xff]
      %407 = vst [vmem:[%s41 + $0x5b0] sm:$0xff] %v406
      %v408 = vld [vmem:[%s40 + $0x5b8] sm:$0xff]
      %409 = vst [vmem:[%s41 + $0x5b8] sm:$0xff] %v408
      %v410 = vld [vmem:[%s40 + $0x5c0] sm:$0xff]
      %411 = vst [vmem:[%s41 + $0x5c0] sm:$0xff] %v410
      %v412 = vld [vmem:[%s40 + $0x5c8] sm:$0xff]
      %413 = vst [vmem:[%s41 + $0x5c8] sm:$0xff] %v412
      %v414 = vld [vmem:[%s40 + $0x5d0] sm:$0xff]
      %415 = vst [vmem:[%s41 + $0x5d0] sm:$0xff] %v414
      %v416 = vld [vmem:[%s40 + $0x5d8] sm:$0xff]
      %417 = vst [vmem:[%s41 + $0x5d8] sm:$0xff] %v416
      %v418 = vld [vmem:[%s40 + $0x5e0] sm:$0xff]
      %419 = vst [vmem:[%s41 + $0x5e0] sm:$0xff] %v418
      %v420 = vld [vmem:[%s40 + $0x5e8] sm:$0xff]
      %421 = vst [vmem:[%s41 + $0x5e8] sm:$0xff] %v420
      %v422 = vld [vmem:[%s40 + $0x5f0] sm:$0xff]
      %423 = vst [vmem:[%s41 + $0x5f0] sm:$0xff] %v422
      %v424 = vld [vmem:[%s40 + $0x5f8] sm:$0xff]
      %425 = vst [vmem:[%s41 + $0x5f8] sm:$0xff] %v424
      %v426 = vld [vmem:[%s40 + $0x600] sm:$0xff]
      %427 = vst [vmem:[%s41 + $0x600] sm:$0xff] %v426
      %v428 = vld [vmem:[%s40 + $0x608] sm:$0xff]
      %429 = vst [vmem:[%s41 + $0x608] sm:$0xff] %v428
      %v430 = vld [vmem:[%s40 + $0x610] sm:$0xff]
      %431 = vst [vmem:[%s41 + $0x610] sm:$0xff] %v430
      %v432 = vld [vmem:[%s40 + $0x618] sm:$0xff]
      %433 = vst [vmem:[%s41 + $0x618] sm:$0xff] %v432
      %v434 = vld [vmem:[%s40 + $0x620] sm:$0xff]
      %435 = vst [vmem:[%s41 + $0x620] sm:$0xff] %v434
      %v436 = vld [vmem:[%s40 + $0x628] sm:$0xff]
      %437 = vst [vmem:[%s41 + $0x628] sm:$0xff] %v436
      %v438 = vld [vmem:[%s40 + $0x630] sm:$0xff]
      %439 = vst [vmem:[%s41 + $0x630] sm:$0xff] %v438
      %v440 = vld [vmem:[%s40 + $0x638] sm:$0xff]
      %441 = vst [vmem:[%s41 + $0x638] sm:$0xff] %v440
      %v442 = vld [vmem:[%s40 + $0x640] sm:$0xff]
      %443 = vst [vmem:[%s41 + $0x640] sm:$0xff] %v442
      %v444 = vld [vmem:[%s40 + $0x648] sm:$0xff]
      %445 = vst [vmem:[%s41 + $0x648] sm:$0xff] %v444
      %v446 = vld [vmem:[%s40 + $0x650] sm:$0xff]
      %447 = vst [vmem:[%s41 + $0x650] sm:$0xff] %v446
      %v448 = vld [vmem:[%s40 + $0x658] sm:$0xff]
      %449 = vst [vmem:[%s41 + $0x658] sm:$0xff] %v448
      %v450 = vld [vmem:[%s40 + $0x660] sm:$0xff]
      %451 = vst [vmem:[%s41 + $0x660] sm:$0xff] %v450
      %v452 = vld [vmem:[%s40 + $0x668] sm:$0xff]
      %453 = vst [vmem:[%s41 + $0x668] sm:$0xff] %v452
      %v454 = vld [vmem:[%s40 + $0x670] sm:$0xff]
      %455 = vst [vmem:[%s41 + $0x670] sm:$0xff] %v454
      %v456 = vld [vmem:[%s40 + $0x678] sm:$0xff]
      %457 = vst [vmem:[%s41 + $0x678] sm:$0xff] %v456
      %v458 = vld [vmem:[%s40 + $0x680] sm:$0xff]
      %459 = vst [vmem:[%s41 + $0x680] sm:$0xff] %v458
      %v460 = vld [vmem:[%s40 + $0x688] sm:$0xff]
      %461 = vst [vmem:[%s41 + $0x688] sm:$0xff] %v460
      %v462 = vld [vmem:[%s40 + $0x690] sm:$0xff]
      %463 = vst [vmem:[%s41 + $0x690] sm:$0xff] %v462
      %v464 = vld [vmem:[%s40 + $0x698] sm:$0xff]
      %465 = vst [vmem:[%s41 + $0x698] sm:$0xff] %v464
      %v466 = vld [vmem:[%s40 + $0x6a0] sm:$0xff]
      %467 = vst [vmem:[%s41 + $0x6a0] sm:$0xff] %v466
      %v468 = vld [vmem:[%s40 + $0x6a8] sm:$0xff]
      %469 = vst [vmem:[%s41 + $0x6a8] sm:$0xff] %v468
      %v470 = vld [vmem:[%s40 + $0x6b0] sm:$0xff]
      %471 = vst [vmem:[%s41 + $0x6b0] sm:$0xff] %v470
      %v472 = vld [vmem:[%s40 + $0x6b8] sm:$0xff]
      %473 = vst [vmem:[%s41 + $0x6b8] sm:$0xff] %v472
      %v474 = vld [vmem:[%s40 + $0x6c0] sm:$0xff]
      %475 = vst [vmem:[%s41 + $0x6c0] sm:$0xff] %v474
      %v476 = vld [vmem:[%s40 + $0x6c8] sm:$0xff]
      %477 = vst [vmem:[%s41 + $0x6c8] sm:$0xff] %v476
      %v478 = vld [vmem:[%s40 + $0x6d0] sm:$0xff]
      %479 = vst [vmem:[%s41 + $0x6d0] sm:$0xff] %v478
      %v480 = vld [vmem:[%s40 + $0x6d8] sm:$0xff]
      %481 = vst [vmem:[%s41 + $0x6d8] sm:$0xff] %v480
      %v482 = vld [vmem:[%s40 + $0x6e0] sm:$0xff]
      %483 = vst [vmem:[%s41 + $0x6e0] sm:$0xff] %v482
      %v484 = vld [vmem:[%s40 + $0x6e8] sm:$0xff]
      %485 = vst [vmem:[%s41 + $0x6e8] sm:$0xff] %v484
      %v486 = vld [vmem:[%s40 + $0x6f0] sm:$0xff]
      %487 = vst [vmem:[%s41 + $0x6f0] sm:$0xff] %v486
      %v488 = vld [vmem:[%s40 + $0x6f8] sm:$0xff]
      %489 = vst [vmem:[%s41 + $0x6f8] sm:$0xff] %v488
      %v490 = vld [vmem:[%s40 + $0x700] sm:$0xff]
      %491 = vst [vmem:[%s41 + $0x700] sm:$0xff] %v490
      %v492 = vld [vmem:[%s40 + $0x708] sm:$0xff]
      %493 = vst [vmem:[%s41 + $0x708] sm:$0xff] %v492
      %v494 = vld [vmem:[%s40 + $0x710] sm:$0xff]
      %495 = vst [vmem:[%s41 + $0x710] sm:$0xff] %v494
      %v496 = vld [vmem:[%s40 + $0x718] sm:$0xff]
      %497 = vst [vmem:[%s41 + $0x718] sm:$0xff] %v496
      %v498 = vld [vmem:[%s40 + $0x720] sm:$0xff]
      %499 = vst [vmem:[%s41 + $0x720] sm:$0xff] %v498
      %v500 = vld [vmem:[%s40 + $0x728] sm:$0xff]
      %501 = vst [vmem:[%s41 + $0x728] sm:$0xff] %v500
      %v502 = vld [vmem:[%s40 + $0x730] sm:$0xff]
      %503 = vst [vmem:[%s41 + $0x730] sm:$0xff] %v502
      %v504 = vld [vmem:[%s40 + $0x738] sm:$0xff]
      %505 = vst [vmem:[%s41 + $0x738] sm:$0xff] %v504
      %v506 = vld [vmem:[%s40 + $0x740] sm:$0xff]
      %507 = vst [vmem:[%s41 + $0x740] sm:$0xff] %v506
      %v508 = vld [vmem:[%s40 + $0x748] sm:$0xff]
      %509 = vst [vmem:[%s41 + $0x748] sm:$0xff] %v508
      %v510 = vld [vmem:[%s40 + $0x750] sm:$0xff]
      %511 = vst [vmem:[%s41 + $0x750] sm:$0xff] %v510
      %v512 = vld [vmem:[%s40 + $0x758] sm:$0xff]
      %513 = vst [vmem:[%s41 + $0x758] sm:$0xff] %v512
      %v514 = vld [vmem:[%s40 + $0x760] sm:$0xff]
      %515 = vst [vmem:[%s41 + $0x760] sm:$0xff] %v514
      %v516 = vld [vmem:[%s40 + $0x768] sm:$0xff]
      %517 = vst [vmem:[%s41 + $0x768] sm:$0xff] %v516
      %v518 = vld [vmem:[%s40 + $0x770] sm:$0xff]
      %519 = vst [vmem:[%s41 + $0x770] sm:$0xff] %v518
      %v520 = vld [vmem:[%s40 + $0x778] sm:$0xff]
      %521 = vst [vmem:[%s41 + $0x778] sm:$0xff] %v520
      %v522 = vld [vmem:[%s40 + $0x780] sm:$0xff]
      %523 = vst [vmem:[%s41 + $0x780] sm:$0xff] %v522
      %v524 = vld [vmem:[%s40 + $0x788] sm:$0xff]
      %525 = vst [vmem:[%s41 + $0x788] sm:$0xff] %v524
      %v526 = vld [vmem:[%s40 + $0x790] sm:$0xff]
      %527 = vst [vmem:[%s41 + $0x790] sm:$0xff] %v526
      %v528 = vld [vmem:[%s40 + $0x798] sm:$0xff]
      %529 = vst [vmem:[%s41 + $0x798] sm:$0xff] %v528
      %v530 = vld [vmem:[%s40 + $0x7a0] sm:$0xff]
      %531 = vst [vmem:[%s41 + $0x7a0] sm:$0xff] %v530
      %v532 = vld [vmem:[%s40 + $0x7a8] sm:$0xff]
      %533 = vst [vmem:[%s41 + $0x7a8] sm:$0xff] %v532
      %v534 = vld [vmem:[%s40 + $0x7b0] sm:$0xff]
      %535 = vst [vmem:[%s41 + $0x7b0] sm:$0xff] %v534
      %v536 = vld [vmem:[%s40 + $0x7b8] sm:$0xff]
      %537 = vst [vmem:[%s41 + $0x7b8] sm:$0xff] %v536
      %v538 = vld [vmem:[%s40 + $0x7c0] sm:$0xff]
      %539 = vst [vmem:[%s41 + $0x7c0] sm:$0xff] %v538
      %v540 = vld [vmem:[%s40 + $0x7c8] sm:$0xff]
      %541 = vst [vmem:[%s41 + $0x7c8] sm:$0xff] %v540
      %v542 = vld [vmem:[%s40 + $0x7d0] sm:$0xff]
      %543 = vst [vmem:[%s41 + $0x7d0] sm:$0xff] %v542
      %v544 = vld [vmem:[%s40 + $0x7d8] sm:$0xff]
      %545 = vst [vmem:[%s41 + $0x7d8] sm:$0xff] %v544
      %v546 = vld [vmem:[%s40 + $0x7e0] sm:$0xff]
      %547 = vst [vmem:[%s41 + $0x7e0] sm:$0xff] %v546
      %v548 = vld [vmem:[%s40 + $0x7e8] sm:$0xff]
      %549 = vst [vmem:[%s41 + $0x7e8] sm:$0xff] %v548
      %v550 = vld [vmem:[%s40 + $0x7f0] sm:$0xff]
      %551 = vst [vmem:[%s41 + $0x7f0] sm:$0xff] %v550
      %v552 = vld [vmem:[%s40 + $0x7f8] sm:$0xff]
      %553 = vst [vmem:[%s41 + $0x7f8] sm:$0xff] %v552
      %v554 = vld [vmem:[%s40 + $0x800] sm:$0xff]
      %555 = vst [vmem:[%s41 + $0x800] sm:$0xff] %v554
      %v556 = vld [vmem:[%s40 + $0x808] sm:$0xff]
      %557 = vst [vmem:[%s41 + $0x808] sm:$0xff] %v556
      %v558 = vld [vmem:[%s40 + $0x810] sm:$0xff]
      %559 = vst [vmem:[%s41 + $0x810] sm:$0xff] %v558
      %v560 = vld [vmem:[%s40 + $0x818] sm:$0xff]
      %561 = vst [vmem:[%s41 + $0x818] sm:$0xff] %v560
      %v562 = vld [vmem:[%s40 + $0x820] sm:$0xff]
      %563 = vst [vmem:[%s41 + $0x820] sm:$0xff] %v562
      %v564 = vld [vmem:[%s40 + $0x828] sm:$0xff]
      %565 = vst [vmem:[%s41 + $0x828] sm:$0xff] %v564
      %v566 = vld [vmem:[%s40 + $0x830] sm:$0xff]
      %567 = vst [vmem:[%s41 + $0x830] sm:$0xff] %v566
      %v568 = vld [vmem:[%s40 + $0x838] sm:$0xff]
      %569 = vst [vmem:[%s41 + $0x838] sm:$0xff] %v568
      %v570 = vld [vmem:[%s40 + $0x840] sm:$0xff]
      %571 = vst [vmem:[%s41 + $0x840] sm:$0xff] %v570
      %v572 = vld [vmem:[%s40 + $0x848] sm:$0xff]
      %573 = vst [vmem:[%s41 + $0x848] sm:$0xff] %v572
      %v574 = vld [vmem:[%s40 + $0x850] sm:$0xff]
      %575 = vst [vmem:[%s41 + $0x850] sm:$0xff] %v574
      %v576 = vld [vmem:[%s40 + $0x858] sm:$0xff]
      %577 = vst [vmem:[%s41 + $0x858] sm:$0xff] %v576
      %v578 = vld [vmem:[%s40 + $0x860] sm:$0xff]
      %579 = vst [vmem:[%s41 + $0x860] sm:$0xff] %v578
      %v580 = vld [vmem:[%s40 + $0x868] sm:$0xff]
      %581 = vst [vmem:[%s41 + $0x868] sm:$0xff] %v580
      %v582 = vld [vmem:[%s40 + $0x870] sm:$0xff]
      %583 = vst [vmem:[%s41 + $0x870] sm:$0xff] %v582
      %v584 = vld [vmem:[%s40 + $0x878] sm:$0xff]
      %585 = vst [vmem:[%s41 + $0x878] sm:$0xff] %v584
      %v586 = vld [vmem:[%s40 + $0x880] sm:$0xff]
      %587 = vst [vmem:[%s41 + $0x880] sm:$0xff] %v586
      %v588 = vld [vmem:[%s40 + $0x888] sm:$0xff]
      %589 = vst [vmem:[%s41 + $0x888] sm:$0xff] %v588
      %v590 = vld [vmem:[%s40 + $0x890] sm:$0xff]
      %591 = vst [vmem:[%s41 + $0x890] sm:$0xff] %v590
      %v592 = vld [vmem:[%s40 + $0x898] sm:$0xff]
      %593 = vst [vmem:[%s41 + $0x898] sm:$0xff] %v592
      %v594 = vld [vmem:[%s40 + $0x8a0] sm:$0xff]
      %595 = vst [vmem:[%s41 + $0x8a0] sm:$0xff] %v594
      %v596 = vld [vmem:[%s40 + $0x8a8] sm:$0xff]
      %597 = vst [vmem:[%s41 + $0x8a8] sm:$0xff] %v596
      %v598 = vld [vmem:[%s40 + $0x8b0] sm:$0xff]
      %599 = vst [vmem:[%s41 + $0x8b0] sm:$0xff] %v598
      %v600 = vld [vmem:[%s40 + $0x8b8] sm:$0xff]
      %601 = vst [vmem:[%s41 + $0x8b8] sm:$0xff] %v600
      %v602 = vld [vmem:[%s40 + $0x8c0] sm:$0xff]
      %603 = vst [vmem:[%s41 + $0x8c0] sm:$0xff] %v602
      %v604 = vld [vmem:[%s40 + $0x8c8] sm:$0xff]
      %605 = vst [vmem:[%s41 + $0x8c8] sm:$0xff] %v604
      %v606 = vld [vmem:[%s40 + $0x8d0] sm:$0xff]
      %607 = vst [vmem:[%s41 + $0x8d0] sm:$0xff] %v606
      %v608 = vld [vmem:[%s40 + $0x8d8] sm:$0xff]
      %609 = vst [vmem:[%s41 + $0x8d8] sm:$0xff] %v608
      %v610 = vld [vmem:[%s40 + $0x8e0] sm:$0xff]
      %611 = vst [vmem:[%s41 + $0x8e0] sm:$0xff] %v610
      %v612 = vld [vmem:[%s40 + $0x8e8] sm:$0xff]
      %613 = vst [vmem:[%s41 + $0x8e8] sm:$0xff] %v612
      %v614 = vld [vmem:[%s40 + $0x8f0] sm:$0xff]
      %615 = vst [vmem:[%s41 + $0x8f0] sm:$0xff] %v614
      %v616 = vld [vmem:[%s40 + $0x8f8] sm:$0xff]
      %617 = vst [vmem:[%s41 + $0x8f8] sm:$0xff] %v616
      %v618 = vld [vmem:[%s40 + $0x900] sm:$0xff]
      %619 = vst [vmem:[%s41 + $0x900] sm:$0xff] %v618
      %v620 = vld [vmem:[%s40 + $0x908] sm:$0xff]
      %621 = vst [vmem:[%s41 + $0x908] sm:$0xff] %v620
      %v622 = vld [vmem:[%s40 + $0x910] sm:$0xff]
      %623 = vst [vmem:[%s41 + $0x910] sm:$0xff] %v622
      %v624 = vld [vmem:[%s40 + $0x918] sm:$0xff]
      %625 = vst [vmem:[%s41 + $0x918] sm:$0xff] %v624
      %v626 = vld [vmem:[%s40 + $0x920] sm:$0xff]
      %627 = vst [vmem:[%s41 + $0x920] sm:$0xff] %v626
      %v628 = vld [vmem:[%s40 + $0x928] sm:$0xff]
      %629 = vst [vmem:[%s41 + $0x928] sm:$0xff] %v628
      %v630 = vld [vmem:[%s40 + $0x930] sm:$0xff]
      %631 = vst [vmem:[%s41 + $0x930] sm:$0xff] %v630
      %v632 = vld [vmem:[%s40 + $0x938] sm:$0xff]
      %633 = vst [vmem:[%s41 + $0x938] sm:$0xff] %v632
      %v634 = vld [vmem:[%s40 + $0x940] sm:$0xff]
      %635 = vst [vmem:[%s41 + $0x940] sm:$0xff] %v634
      %v636 = vld [vmem:[%s40 + $0x948] sm:$0xff]
      %637 = vst [vmem:[%s41 + $0x948] sm:$0xff] %v636
      %v638 = vld [vmem:[%s40 + $0x950] sm:$0xff]
      %639 = vst [vmem:[%s41 + $0x950] sm:$0xff] %v638
      %v640 = vld [vmem:[%s40 + $0x958] sm:$0xff]
      %641 = vst [vmem:[%s41 + $0x958] sm:$0xff] %v640
      %v642 = vld [vmem:[%s40 + $0x960] sm:$0xff]
      %643 = vst [vmem:[%s41 + $0x960] sm:$0xff] %v642
      %v644 = vld [vmem:[%s40 + $0x968] sm:$0xff]
      %645 = vst [vmem:[%s41 + $0x968] sm:$0xff] %v644
      %v646 = vld [vmem:[%s40 + $0x970] sm:$0xff]
      %647 = vst [vmem:[%s41 + $0x970] sm:$0xff] %v646
      %v648 = vld [vmem:[%s40 + $0x978] sm:$0xff]
      %649 = vst [vmem:[%s41 + $0x978] sm:$0xff] %v648
      %v650 = vld [vmem:[%s40 + $0x980] sm:$0xff]
      %651 = vst [vmem:[%s41 + $0x980] sm:$0xff] %v650
      %v652 = vld [vmem:[%s40 + $0x988] sm:$0xff]
      %653 = vst [vmem:[%s41 + $0x988] sm:$0xff] %v652
      %v654 = vld [vmem:[%s40 + $0x990] sm:$0xff]
      %655 = vst [vmem:[%s41 + $0x990] sm:$0xff] %v654
      %v656 = vld [vmem:[%s40 + $0x998] sm:$0xff]
      %657 = vst [vmem:[%s41 + $0x998] sm:$0xff] %v656
      %v658 = vld [vmem:[%s40 + $0x9a0] sm:$0xff]
      %659 = vst [vmem:[%s41 + $0x9a0] sm:$0xff] %v658
      %v660 = vld [vmem:[%s40 + $0x9a8] sm:$0xff]
      %661 = vst [vmem:[%s41 + $0x9a8] sm:$0xff] %v660
      %v662 = vld [vmem:[%s40 + $0x9b0] sm:$0xff]
      %663 = vst [vmem:[%s41 + $0x9b0] sm:$0xff] %v662
      %v664 = vld [vmem:[%s40 + $0x9b8] sm:$0xff]
      %665 = vst [vmem:[%s41 + $0x9b8] sm:$0xff] %v664
      %v666 = vld [vmem:[%s40 + $0x9c0] sm:$0xff]
      %667 = vst [vmem:[%s41 + $0x9c0] sm:$0xff] %v666
      %v668 = vld [vmem:[%s40 + $0x9c8] sm:$0xff]
      %669 = vst [vmem:[%s41 + $0x9c8] sm:$0xff] %v668
      %v670 = vld [vmem:[%s40 + $0x9d0] sm:$0xff]
      %671 = vst [vmem:[%s41 + $0x9d0] sm:$0xff] %v670
      %v672 = vld [vmem:[%s40 + $0x9d8] sm:$0xff]
      %673 = vst [vmem:[%s41 + $0x9d8] sm:$0xff] %v672
      %v674 = vld [vmem:[%s40 + $0x9e0] sm:$0xff]
      %675 = vst [vmem:[%s41 + $0x9e0] sm:$0xff] %v674
      %v676 = vld [vmem:[%s40 + $0x9e8] sm:$0xff]
      %677 = vst [vmem:[%s41 + $0x9e8] sm:$0xff] %v676
      %v678 = vld [vmem:[%s40 + $0x9f0] sm:$0xff]
      %679 = vst [vmem:[%s41 + $0x9f0] sm:$0xff] %v678
      %v680 = vld [vmem:[%s40 + $0x9f8] sm:$0xff]
      %681 = vst [vmem:[%s41 + $0x9f8] sm:$0xff] %v680
      %v682 = vld [vmem:[%s40 + $0xa00] sm:$0xff]
      %683 = vst [vmem:[%s41 + $0xa00] sm:$0xff] %v682
      %v684 = vld [vmem:[%s40 + $0xa08] sm:$0xff]
      %685 = vst [vmem:[%s41 + $0xa08] sm:$0xff] %v684
      %v686 = vld [vmem:[%s40 + $0xa10] sm:$0xff]
      %687 = vst [vmem:[%s41 + $0xa10] sm:$0xff] %v686
      %v688 = vld [vmem:[%s40 + $0xa18] sm:$0xff]
      %689 = vst [vmem:[%s41 + $0xa18] sm:$0xff] %v688
      %v690 = vld [vmem:[%s40 + $0xa20] sm:$0xff]
      %691 = vst [vmem:[%s41 + $0xa20] sm:$0xff] %v690
      %v692 = vld [vmem:[%s40 + $0xa28] sm:$0xff]
      %693 = vst [vmem:[%s41 + $0xa28] sm:$0xff] %v692
      %v694 = vld [vmem:[%s40 + $0xa30] sm:$0xff]
      %695 = vst [vmem:[%s41 + $0xa30] sm:$0xff] %v694
      %v696 = vld [vmem:[%s40 + $0xa38] sm:$0xff]
      %697 = vst [vmem:[%s41 + $0xa38] sm:$0xff] %v696
      %v698 = vld [vmem:[%s40 + $0xa40] sm:$0xff]
      %699 = vst [vmem:[%s41 + $0xa40] sm:$0xff] %v698
      %v700 = vld [vmem:[%s40 + $0xa48] sm:$0xff]
      %701 = vst [vmem:[%s41 + $0xa48] sm:$0xff] %v700
      %v702 = vld [vmem:[%s40 + $0xa50] sm:$0xff]
      %703 = vst [vmem:[%s41 + $0xa50] sm:$0xff] %v702
      %v704 = vld [vmem:[%s40 + $0xa58] sm:$0xff]
      %705 = vst [vmem:[%s41 + $0xa58] sm:$0xff] %v704
      %v706 = vld [vmem:[%s40 + $0xa60] sm:$0xff]
      %707 = vst [vmem:[%s41 + $0xa60] sm:$0xff] %v706
      %v708 = vld [vmem:[%s40 + $0xa68] sm:$0xff]
      %709 = vst [vmem:[%s41 + $0xa68] sm:$0xff] %v708
      %v710 = vld [vmem:[%s40 + $0xa70] sm:$0xff]
      %711 = vst [vmem:[%s41 + $0xa70] sm:$0xff] %v710
      %v712 = vld [vmem:[%s40 + $0xa78] sm:$0xff]
      %713 = vst [vmem:[%s41 + $0xa78] sm:$0xff] %v712
      %v714 = vld [vmem:[%s40 + $0xa80] sm:$0xff]
      %715 = vst [vmem:[%s41 + $0xa80] sm:$0xff] %v714
      %v716 = vld [vmem:[%s40 + $0xa88] sm:$0xff]
      %717 = vst [vmem:[%s41 + $0xa88] sm:$0xff] %v716
      %v718 = vld [vmem:[%s40 + $0xa90] sm:$0xff]
      %719 = vst [vmem:[%s41 + $0xa90] sm:$0xff] %v718
      %v720 = vld [vmem:[%s40 + $0xa98] sm:$0xff]
      %721 = vst [vmem:[%s41 + $0xa98] sm:$0xff] %v720
      %v722 = vld [vmem:[%s40 + $0xaa0] sm:$0xff]
      %723 = vst [vmem:[%s41 + $0xaa0] sm:$0xff] %v722
      %v724 = vld [vmem:[%s40 + $0xaa8] sm:$0xff]
      %725 = vst [vmem:[%s41 + $0xaa8] sm:$0xff] %v724
      %v726 = vld [vmem:[%s40 + $0xab0] sm:$0xff]
      %727 = vst [vmem:[%s41 + $0xab0] sm:$0xff] %v726
      %v728 = vld [vmem:[%s40 + $0xab8] sm:$0xff]
      %729 = vst [vmem:[%s41 + $0xab8] sm:$0xff] %v728
      %v730 = vld [vmem:[%s40 + $0xac0] sm:$0xff]
      %731 = vst [vmem:[%s41 + $0xac0] sm:$0xff] %v730
      %v732 = vld [vmem:[%s40 + $0xac8] sm:$0xff]
      %733 = vst [vmem:[%s41 + $0xac8] sm:$0xff] %v732
      %v734 = vld [vmem:[%s40 + $0xad0] sm:$0xff]
      %735 = vst [vmem:[%s41 + $0xad0] sm:$0xff] %v734
      %v736 = vld [vmem:[%s40 + $0xad8] sm:$0xff]
      %737 = vst [vmem:[%s41 + $0xad8] sm:$0xff] %v736
      %v738 = vld [vmem:[%s40 + $0xae0] sm:$0xff]
      %739 = vst [vmem:[%s41 + $0xae0] sm:$0xff] %v738
      %v740 = vld [vmem:[%s40 + $0xae8] sm:$0xff]
      %741 = vst [vmem:[%s41 + $0xae8] sm:$0xff] %v740
      %v742 = vld [vmem:[%s40 + $0xaf0] sm:$0xff]
      %743 = vst [vmem:[%s41 + $0xaf0] sm:$0xff] %v742
      %v744 = vld [vmem:[%s40 + $0xaf8] sm:$0xff]
      %745 = vst [vmem:[%s41 + $0xaf8] sm:$0xff] %v744
      %v746 = vld [vmem:[%s40 + $0xb00] sm:$0xff]
      %747 = vst [vmem:[%s41 + $0xb00] sm:$0xff] %v746
      %v748 = vld [vmem:[%s40 + $0xb08] sm:$0xff]
      %749 = vst [vmem:[%s41 + $0xb08] sm:$0xff] %v748
      %v750 = vld [vmem:[%s40 + $0xb10] sm:$0xff]
      %751 = vst [vmem:[%s41 + $0xb10] sm:$0xff] %v750
      %v752 = vld [vmem:[%s40 + $0xb18] sm:$0xff]
      %753 = vst [vmem:[%s41 + $0xb18] sm:$0xff] %v752
      %v754 = vld [vmem:[%s40 + $0xb20] sm:$0xff]
      %755 = vst [vmem:[%s41 + $0xb20] sm:$0xff] %v754
      %v756 = vld [vmem:[%s40 + $0xb28] sm:$0xff]
      %757 = vst [vmem:[%s41 + $0xb28] sm:$0xff] %v756
      %v758 = vld [vmem:[%s40 + $0xb30] sm:$0xff]
      %759 = vst [vmem:[%s41 + $0xb30] sm:$0xff] %v758
      %v760 = vld [vmem:[%s40 + $0xb38] sm:$0xff]
      %761 = vst [vmem:[%s41 + $0xb38] sm:$0xff] %v760
      %v762 = vld [vmem:[%s40 + $0xb40] sm:$0xff]
      %763 = vst [vmem:[%s41 + $0xb40] sm:$0xff] %v762
      %v764 = vld [vmem:[%s40 + $0xb48] sm:$0xff]
      %765 = vst [vmem:[%s41 + $0xb48] sm:$0xff] %v764
      %v766 = vld [vmem:[%s40 + $0xb50] sm:$0xff]
      %767 = vst [vmem:[%s41 + $0xb50] sm:$0xff] %v766
      %v768 = vld [vmem:[%s40 + $0xb58] sm:$0xff]
      %769 = vst [vmem:[%s41 + $0xb58] sm:$0xff] %v768
      %v770 = vld [vmem:[%s40 + $0xb60] sm:$0xff]
      %771 = vst [vmem:[%s41 + $0xb60] sm:$0xff] %v770
      %v772 = vld [vmem:[%s40 + $0xb68] sm:$0xff]
      %773 = vst [vmem:[%s41 + $0xb68] sm:$0xff] %v772
      %v774 = vld [vmem:[%s40 + $0xb70] sm:$0xff]
      %775 = vst [vmem:[%s41 + $0xb70] sm:$0xff] %v774
      %v776 = vld [vmem:[%s40 + $0xb78] sm:$0xff]
      %777 = vst [vmem:[%s41 + $0xb78] sm:$0xff] %v776
      %v778 = vld [vmem:[%s40 + $0xb80] sm:$0xff]
      %779 = vst [vmem:[%s41 + $0xb80] sm:$0xff] %v778
      %v780 = vld [vmem:[%s40 + $0xb88] sm:$0xff]
      %781 = vst [vmem:[%s41 + $0xb88] sm:$0xff] %v780
      %v782 = vld [vmem:[%s40 + $0xb90] sm:$0xff]
      %783 = vst [vmem:[%s41 + $0xb90] sm:$0xff] %v782
      %v784 = vld [vmem:[%s40 + $0xb98] sm:$0xff]
      %785 = vst [vmem:[%s41 + $0xb98] sm:$0xff] %v784
      %v786 = vld [vmem:[%s40 + $0xba0] sm:$0xff]
      %787 = vst [vmem:[%s41 + $0xba0] sm:$0xff] %v786
      %v788 = vld [vmem:[%s40 + $0xba8] sm:$0xff]
      %789 = vst [vmem:[%s41 + $0xba8] sm:$0xff] %v788
      %v790 = vld [vmem:[%s40 + $0xbb0] sm:$0xff]
      %791 = vst [vmem:[%s41 + $0xbb0] sm:$0xff] %v790
      %v792 = vld [vmem:[%s40 + $0xbb8] sm:$0xff]
      %793 = vst [vmem:[%s41 + $0xbb8] sm:$0xff] %v792
      %v794 = vld [vmem:[%s40 + $0xbc0] sm:$0xff]
      %795 = vst [vmem:[%s41 + $0xbc0] sm:$0xff] %v794
      %v796 = vld [vmem:[%s40 + $0xbc8] sm:$0xff]
      %797 = vst [vmem:[%s41 + $0xbc8] sm:$0xff] %v796
      %v798 = vld [vmem:[%s40 + $0xbd0] sm:$0xff]
      %799 = vst [vmem:[%s41 + $0xbd0] sm:$0xff] %v798
      %v800 = vld [vmem:[%s40 + $0xbd8] sm:$0xff]
      %801 = vst [vmem:[%s41 + $0xbd8] sm:$0xff] %v800
      %v802 = vld [vmem:[%s40 + $0xbe0] sm:$0xff]
      %803 = vst [vmem:[%s41 + $0xbe0] sm:$0xff] %v802
      %v804 = vld [vmem:[%s40 + $0xbe8] sm:$0xff]
      %805 = vst [vmem:[%s41 + $0xbe8] sm:$0xff] %v804
      %v806 = vld [vmem:[%s40 + $0xbf0] sm:$0xff]
      %807 = vst [vmem:[%s41 + $0xbf0] sm:$0xff] %v806
      %v808 = vld [vmem:[%s40 + $0xbf8] sm:$0xff]
      %809 = vst [vmem:[%s41 + $0xbf8] sm:$0xff] %v808
      %v810 = vld [vmem:[%s40 + $0xc00] sm:$0xff]
      %811 = vst [vmem:[%s41 + $0xc00] sm:$0xff] %v810
      %v812 = vld [vmem:[%s40 + $0xc08] sm:$0xff]
      %813 = vst [vmem:[%s41 + $0xc08] sm:$0xff] %v812
      %v814 = vld [vmem:[%s40 + $0xc10] sm:$0xff]
      %815 = vst [vmem:[%s41 + $0xc10] sm:$0xff] %v814
      %v816 = vld [vmem:[%s40 + $0xc18] sm:$0xff]
      %817 = vst [vmem:[%s41 + $0xc18] sm:$0xff] %v816
      %v818 = vld [vmem:[%s40 + $0xc20] sm:$0xff]
      %819 = vst [vmem:[%s41 + $0xc20] sm:$0xff] %v818
      %v820 = vld [vmem:[%s40 + $0xc28] sm:$0xff]
      %821 = vst [vmem:[%s41 + $0xc28] sm:$0xff] %v820
      %v822 = vld [vmem:[%s40 + $0xc30] sm:$0xff]
      %823 = vst [vmem:[%s41 + $0xc30] sm:$0xff] %v822
      %v824 = vld [vmem:[%s40 + $0xc38] sm:$0xff]
      %825 = vst [vmem:[%s41 + $0xc38] sm:$0xff] %v824
      %v826 = vld [vmem:[%s40 + $0xc40] sm:$0xff]
      %827 = vst [vmem:[%s41 + $0xc40] sm:$0xff] %v826
      %v828 = vld [vmem:[%s40 + $0xc48] sm:$0xff]
      %829 = vst [vmem:[%s41 + $0xc48] sm:$0xff] %v828
      %v830 = vld [vmem:[%s40 + $0xc50] sm:$0xff]
      %831 = vst [vmem:[%s41 + $0xc50] sm:$0xff] %v830
      %v832 = vld [vmem:[%s40 + $0xc58] sm:$0xff]
      %833 = vst [vmem:[%s41 + $0xc58] sm:$0xff] %v832
      %v834 = vld [vmem:[%s40 + $0xc60] sm:$0xff]
      %835 = vst [vmem:[%s41 + $0xc60] sm:$0xff] %v834
      %v836 = vld [vmem:[%s40 + $0xc68] sm:$0xff]
      %837 = vst [vmem:[%s41 + $0xc68] sm:$0xff] %v836
      %v838 = vld [vmem:[%s40 + $0xc70] sm:$0xff]
      %839 = vst [vmem:[%s41 + $0xc70] sm:$0xff] %v838
      %v840 = vld [vmem:[%s40 + $0xc78] sm:$0xff]
      %841 = vst [vmem:[%s41 + $0xc78] sm:$0xff] %v840
      %v842 = vld [vmem:[%s40 + $0xc80] sm:$0xff]
      %843 = vst [vmem:[%s41 + $0xc80] sm:$0xff] %v842
      %v844 = vld [vmem:[%s40 + $0xc88] sm:$0xff]
      %845 = vst [vmem:[%s41 + $0xc88] sm:$0xff] %v844
      %v846 = vld [vmem:[%s40 + $0xc90] sm:$0xff]
      %847 = vst [vmem:[%s41 + $0xc90] sm:$0xff] %v846
      %v848 = vld [vmem:[%s40 + $0xc98] sm:$0xff]
      %849 = vst [vmem:[%s41 + $0xc98] sm:$0xff] %v848
      %v850 = vld [vmem:[%s40 + $0xca0] sm:$0xff]
      %851 = vst [vmem:[%s41 + $0xca0] sm:$0xff] %v850
      %v852 = vld [vmem:[%s40 + $0xca8] sm:$0xff]
      %853 = vst [vmem:[%s41 + $0xca8] sm:$0xff] %v852
      %v854 = vld [vmem:[%s40 + $0xcb0] sm:$0xff]
      %855 = vst [vmem:[%s41 + $0xcb0] sm:$0xff] %v854
      %v856 = vld [vmem:[%s40 + $0xcb8] sm:$0xff]
      %857 = vst [vmem:[%s41 + $0xcb8] sm:$0xff] %v856
      %v858 = vld [vmem:[%s40 + $0xcc0] sm:$0xff]
      %859 = vst [vmem:[%s41 + $0xcc0] sm:$0xff] %v858
      %v860 = vld [vmem:[%s40 + $0xcc8] sm:$0xff]
      %861 = vst [vmem:[%s41 + $0xcc8] sm:$0xff] %v860
      %v862 = vld [vmem:[%s40 + $0xcd0] sm:$0xff]
      %863 = vst [vmem:[%s41 + $0xcd0] sm:$0xff] %v862
      %v864 = vld [vmem:[%s40 + $0xcd8] sm:$0xff]
      %865 = vst [vmem:[%s41 + $0xcd8] sm:$0xff] %v864
      %v866 = vld [vmem:[%s40 + $0xce0] sm:$0xff]
      %867 = vst [vmem:[%s41 + $0xce0] sm:$0xff] %v866
      %v868 = vld [vmem:[%s40 + $0xce8] sm:$0xff]
      %869 = vst [vmem:[%s41 + $0xce8] sm:$0xff] %v868
      %v870 = vld [vmem:[%s40 + $0xcf0] sm:$0xff]
      %871 = vst [vmem:[%s41 + $0xcf0] sm:$0xff] %v870
      %v872 = vld [vmem:[%s40 + $0xcf8] sm:$0xff]
      %873 = vst [vmem:[%s41 + $0xcf8] sm:$0xff] %v872
      %v874 = vld [vmem:[%s40 + $0xd00] sm:$0xff]
      %875 = vst [vmem:[%s41 + $0xd00] sm:$0xff] %v874
      %v876 = vld [vmem:[%s40 + $0xd08] sm:$0xff]
      %877 = vst [vmem:[%s41 + $0xd08] sm:$0xff] %v876
      %v878 = vld [vmem:[%s40 + $0xd10] sm:$0xff]
      %879 = vst [vmem:[%s41 + $0xd10] sm:$0xff] %v878
      %v880 = vld [vmem:[%s40 + $0xd18] sm:$0xff]
      %881 = vst [vmem:[%s41 + $0xd18] sm:$0xff] %v880
      %v882 = vld [vmem:[%s40 + $0xd20] sm:$0xff]
      %883 = vst [vmem:[%s41 + $0xd20] sm:$0xff] %v882
      %v884 = vld [vmem:[%s40 + $0xd28] sm:$0xff]
      %885 = vst [vmem:[%s41 + $0xd28] sm:$0xff] %v884
      %v886 = vld [vmem:[%s40 + $0xd30] sm:$0xff]
      %887 = vst [vmem:[%s41 + $0xd30] sm:$0xff] %v886
      %v888 = vld [vmem:[%s40 + $0xd38] sm:$0xff]
      %889 = vst [vmem:[%s41 + $0xd38] sm:$0xff] %v888
      %v890 = vld [vmem:[%s40 + $0xd40] sm:$0xff]
      %891 = vst [vmem:[%s41 + $0xd40] sm:$0xff] %v890
      %v892 = vld [vmem:[%s40 + $0xd48] sm:$0xff]
      %893 = vst [vmem:[%s41 + $0xd48] sm:$0xff] %v892
      %v894 = vld [vmem:[%s40 + $0xd50] sm:$0xff]
      %895 = vst [vmem:[%s41 + $0xd50] sm:$0xff] %v894
      %v896 = vld [vmem:[%s40 + $0xd58] sm:$0xff]
      %897 = vst [vmem:[%s41 + $0xd58] sm:$0xff] %v896
      %v898 = vld [vmem:[%s40 + $0xd60] sm:$0xff]
      %899 = vst [vmem:[%s41 + $0xd60] sm:$0xff] %v898
      %v900 = vld [vmem:[%s40 + $0xd68] sm:$0xff]
      %901 = vst [vmem:[%s41 + $0xd68] sm:$0xff] %v900
      %v902 = vld [vmem:[%s40 + $0xd70] sm:$0xff]
      %903 = vst [vmem:[%s41 + $0xd70] sm:$0xff] %v902
      %v904 = vld [vmem:[%s40 + $0xd78] sm:$0xff]
      %905 = vst [vmem:[%s41 + $0xd78] sm:$0xff] %v904
      %v906 = vld [vmem:[%s40 + $0xd80] sm:$0xff]
      %907 = vst [vmem:[%s41 + $0xd80] sm:$0xff] %v906
      %v908 = vld [vmem:[%s40 + $0xd88] sm:$0xff]
      %909 = vst [vmem:[%s41 + $0xd88] sm:$0xff] %v908
      %v910 = vld [vmem:[%s40 + $0xd90] sm:$0xff]
      %911 = vst [vmem:[%s41 + $0xd90] sm:$0xff] %v910
      %v912 = vld [vmem:[%s40 + $0xd98] sm:$0xff]
      %913 = vst [vmem:[%s41 + $0xd98] sm:$0xff] %v912
      %v914 = vld [vmem:[%s40 + $0xda0] sm:$0xff]
      %915 = vst [vmem:[%s41 + $0xda0] sm:$0xff] %v914
      %v916 = vld [vmem:[%s40 + $0xda8] sm:$0xff]
      %917 = vst [vmem:[%s41 + $0xda8] sm:$0xff] %v916
      %v918 = vld [vmem:[%s40 + $0xdb0] sm:$0xff]
      %919 = vst [vmem:[%s41 + $0xdb0] sm:$0xff] %v918
      %v920 = vld [vmem:[%s40 + $0xdb8] sm:$0xff]
      %921 = vst [vmem:[%s41 + $0xdb8] sm:$0xff] %v920
      %v922 = vld [vmem:[%s40 + $0xdc0] sm:$0xff]
      %923 = vst [vmem:[%s41 + $0xdc0] sm:$0xff] %v922
      %v924 = vld [vmem:[%s40 + $0xdc8] sm:$0xff]
      %925 = vst [vmem:[%s41 + $0xdc8] sm:$0xff] %v924
      %v926 = vld [vmem:[%s40 + $0xdd0] sm:$0xff]
      %927 = vst [vmem:[%s41 + $0xdd0] sm:$0xff] %v926
      %v928 = vld [vmem:[%s40 + $0xdd8] sm:$0xff]
      %929 = vst [vmem:[%s41 + $0xdd8] sm:$0xff] %v928
      %v930 = vld [vmem:[%s40 + $0xde0] sm:$0xff]
      %931 = vst [vmem:[%s41 + $0xde0] sm:$0xff] %v930
      %v932 = vld [vmem:[%s40 + $0xde8] sm:$0xff]
      %933 = vst [vmem:[%s41 + $0xde8] sm:$0xff] %v932
      %v934 = vld [vmem:[%s40 + $0xdf0] sm:$0xff]
      %935 = vst [vmem:[%s41 + $0xdf0] sm:$0xff] %v934
      %v936 = vld [vmem:[%s40 + $0xdf8] sm:$0xff]
      %937 = vst [vmem:[%s41 + $0xdf8] sm:$0xff] %v936
      %v938 = vld [vmem:[%s40 + $0xe00] sm:$0xff]
      %939 = vst [vmem:[%s41 + $0xe00] sm:$0xff] %v938
      %v940 = vld [vmem:[%s40 + $0xe08] sm:$0xff]
      %941 = vst [vmem:[%s41 + $0xe08] sm:$0xff] %v940
      %v942 = vld [vmem:[%s40 + $0xe10] sm:$0xff]
      %943 = vst [vmem:[%s41 + $0xe10] sm:$0xff] %v942
      %v944 = vld [vmem:[%s40 + $0xe18] sm:$0xff]
      %945 = vst [vmem:[%s41 + $0xe18] sm:$0xff] %v944
      %v946 = vld [vmem:[%s40 + $0xe20] sm:$0xff]
      %947 = vst [vmem:[%s41 + $0xe20] sm:$0xff] %v946
      %v948 = vld [vmem:[%s40 + $0xe28] sm:$0xff]
      %949 = vst [vmem:[%s41 + $0xe28] sm:$0xff] %v948
      %v950 = vld [vmem:[%s40 + $0xe30] sm:$0xff]
      %951 = vst [vmem:[%s41 + $0xe30] sm:$0xff] %v950
      %v952 = vld [vmem:[%s40 + $0xe38] sm:$0xff]
      %953 = vst [vmem:[%s41 + $0xe38] sm:$0xff] %v952
      %v954 = vld [vmem:[%s40 + $0xe40] sm:$0xff]
      %955 = vst [vmem:[%s41 + $0xe40] sm:$0xff] %v954
      %v956 = vld [vmem:[%s40 + $0xe48] sm:$0xff]
      %957 = vst [vmem:[%s41 + $0xe48] sm:$0xff] %v956
      %v958 = vld [vmem:[%s40 + $0xe50] sm:$0xff]
      %959 = vst [vmem:[%s41 + $0xe50] sm:$0xff] %v958
      %v960 = vld [vmem:[%s40 + $0xe58] sm:$0xff]
      %961 = vst [vmem:[%s41 + $0xe58] sm:$0xff] %v960
      %v962 = vld [vmem:[%s40 + $0xe60] sm:$0xff]
      %963 = vst [vmem:[%s41 + $0xe60] sm:$0xff] %v962
      %v964 = vld [vmem:[%s40 + $0xe68] sm:$0xff]
      %965 = vst [vmem:[%s41 + $0xe68] sm:$0xff] %v964
      %v966 = vld [vmem:[%s40 + $0xe70] sm:$0xff]
      %967 = vst [vmem:[%s41 + $0xe70] sm:$0xff] %v966
      %v968 = vld [vmem:[%s40 + $0xe78] sm:$0xff]
      %969 = vst [vmem:[%s41 + $0xe78] sm:$0xff] %v968
      %v970 = vld [vmem:[%s40 + $0xe80] sm:$0xff]
      %971 = vst [vmem:[%s41 + $0xe80] sm:$0xff] %v970
      %v972 = vld [vmem:[%s40 + $0xe88] sm:$0xff]
      %973 = vst [vmem:[%s41 + $0xe88] sm:$0xff] %v972
      %v974 = vld [vmem:[%s40 + $0xe90] sm:$0xff]
      %975 = vst [vmem:[%s41 + $0xe90] sm:$0xff] %v974
      %v976 = vld [vmem:[%s40 + $0xe98] sm:$0xff]
      %977 = vst [vmem:[%s41 + $0xe98] sm:$0xff] %v976
      %v978 = vld [vmem:[%s40 + $0xea0] sm:$0xff]
      %979 = vst [vmem:[%s41 + $0xea0] sm:$0xff] %v978
      %v980 = vld [vmem:[%s40 + $0xea8] sm:$0xff]
      %981 = vst [vmem:[%s41 + $0xea8] sm:$0xff] %v980
      %v982 = vld [vmem:[%s40 + $0xeb0] sm:$0xff]
      %983 = vst [vmem:[%s41 + $0xeb0] sm:$0xff] %v982
      %v984 = vld [vmem:[%s40 + $0xeb8] sm:$0xff]
      %985 = vst [vmem:[%s41 + $0xeb8] sm:$0xff] %v984
      %v986 = vld [vmem:[%s40 + $0xec0] sm:$0xff]
      %987 = vst [vmem:[%s41 + $0xec0] sm:$0xff] %v986
      %v988 = vld [vmem:[%s40 + $0xec8] sm:$0xff]
      %989 = vst [vmem:[%s41 + $0xec8] sm:$0xff] %v988
      %v990 = vld [vmem:[%s40 + $0xed0] sm:$0xff]
      %991 = vst [vmem:[%s41 + $0xed0] sm:$0xff] %v990
      %v992 = vld [vmem:[%s40 + $0xed8] sm:$0xff]
      %993 = vst [vmem:[%s41 + $0xed8] sm:$0xff] %v992
      %v994 = vld [vmem:[%s40 + $0xee0] sm:$0xff]
      %995 = vst [vmem:[%s41 + $0xee0] sm:$0xff] %v994
      %v996 = vld [vmem:[%s40 + $0xee8] sm:$0xff]
      %997 = vst [vmem:[%s41 + $0xee8] sm:$0xff] %v996
      %v998 = vld [vmem:[%s40 + $0xef0] sm:$0xff]
      %999 = vst [vmem:[%s41 + $0xef0] sm:$0xff] %v998
      %v1000 = vld [vmem:[%s40 + $0xef8] sm:$0xff]
      %1001 = vst [vmem:[%s41 + $0xef8] sm:$0xff] %v1000
      %v1002 = vld [vmem:[%s40 + $0xf00] sm:$0xff]
      %1003 = vst [vmem:[%s41 + $0xf00] sm:$0xff] %v1002
      %v1004 = vld [vmem:[%s40 + $0xf08] sm:$0xff]
      %1005 = vst [vmem:[%s41 + $0xf08] sm:$0xff] %v1004
      %v1006 = vld [vmem:[%s40 + $0xf10] sm:$0xff]
      %1007 = vst [vmem:[%s41 + $0xf10] sm:$0xff] %v1006
      %v1008 = vld [vmem:[%s40 + $0xf18] sm:$0xff]
      %1009 = vst [vmem:[%s41 + $0xf18] sm:$0xff] %v1008
      %v1010 = vld [vmem:[%s40 + $0xf20] sm:$0xff]
      %1011 = vst [vmem:[%s41 + $0xf20] sm:$0xff] %v1010
      %v1012 = vld [vmem:[%s40 + $0xf28] sm:$0xff]
      %1013 = vst [vmem:[%s41 + $0xf28] sm:$0xff] %v1012
      %v1014 = vld [vmem:[%s40 + $0xf30] sm:$0xff]
      %1015 = vst [vmem:[%s41 + $0xf30] sm:$0xff] %v1014
      %v1016 = vld [vmem:[%s40 + $0xf38] sm:$0xff]
      %1017 = vst [vmem:[%s41 + $0xf38] sm:$0xff] %v1016
      %v1018 = vld [vmem:[%s40 + $0xf40] sm:$0xff]
      %1019 = vst [vmem:[%s41 + $0xf40] sm:$0xff] %v1018
      %v1020 = vld [vmem:[%s40 + $0xf48] sm:$0xff]
      %1021 = vst [vmem:[%s41 + $0xf48] sm:$0xff] %v1020
      %v1022 = vld [vmem:[%s40 + $0xf50] sm:$0xff]
      %1023 = vst [vmem:[%s41 + $0xf50] sm:$0xff] %v1022
      %v1024 = vld [vmem:[%s40 + $0xf58] sm:$0xff]
      %1025 = vst [vmem:[%s41 + $0xf58] sm:$0xff] %v1024
      %v1026 = vld [vmem:[%s40 + $0xf60] sm:$0xff]
      %1027 = vst [vmem:[%s41 + $0xf60] sm:$0xff] %v1026
      %v1028 = vld [vmem:[%s40 + $0xf68] sm:$0xff]
      %1029 = vst [vmem:[%s41 + $0xf68] sm:$0xff] %v1028
      %v1030 = vld [vmem:[%s40 + $0xf70] sm:$0xff]
      %1031 = vst [vmem:[%s41 + $0xf70] sm:$0xff] %v1030
      %v1032 = vld [vmem:[%s40 + $0xf78] sm:$0xff]
      %1033 = vst [vmem:[%s41 + $0xf78] sm:$0xff] %v1032
      %v1034 = vld [vmem:[%s40 + $0xf80] sm:$0xff]
      %1035 = vst [vmem:[%s41 + $0xf80] sm:$0xff] %v1034
      %v1036 = vld [vmem:[%s40 + $0xf88] sm:$0xff]
      %1037 = vst [vmem:[%s41 + $0xf88] sm:$0xff] %v1036
      %v1038 = vld [vmem:[%s40 + $0xf90] sm:$0xff]
      %1039 = vst [vmem:[%s41 + $0xf90] sm:$0xff] %v1038
      %v1040 = vld [vmem:[%s40 + $0xf98] sm:$0xff]
      %1041 = vst [vmem:[%s41 + $0xf98] sm:$0xff] %v1040
      %v1042 = vld [vmem:[%s40 + $0xfa0] sm:$0xff]
      %1043 = vst [vmem:[%s41 + $0xfa0] sm:$0xff] %v1042
      %v1044 = vld [vmem:[%s40 + $0xfa8] sm:$0xff]
      %1045 = vst [vmem:[%s41 + $0xfa8] sm:$0xff] %v1044
      %v1046 = vld [vmem:[%s40 + $0xfb0] sm:$0xff]
      %1047 = vst [vmem:[%s41 + $0xfb0] sm:$0xff] %v1046
      %v1048 = vld [vmem:[%s40 + $0xfb8] sm:$0xff]
      %1049 = vst [vmem:[%s41 + $0xfb8] sm:$0xff] %v1048
      %v1050 = vld [vmem:[%s40 + $0xfc0] sm:$0xff]
      %1051 = vst [vmem:[%s41 + $0xfc0] sm:$0xff] %v1050
      %v1052 = vld [vmem:[%s40 + $0xfc8] sm:$0xff]
      %1053 = vst [vmem:[%s41 + $0xfc8] sm:$0xff] %v1052
      %v1054 = vld [vmem:[%s40 + $0xfd0] sm:$0xff]
      %1055 = vst [vmem:[%s41 + $0xfd0] sm:$0xff] %v1054
      %v1056 = vld [vmem:[%s40 + $0xfd8] sm:$0xff]
      %1057 = vst [vmem:[%s41 + $0xfd8] sm:$0xff] %v1056
      %v1058 = vld [vmem:[%s40 + $0xfe0] sm:$0xff]
      %1059 = vst [vmem:[%s41 + $0xfe0] sm:$0xff] %v1058
      %v1060 = vld [vmem:[%s40 + $0xfe8] sm:$0xff]
      %1061 = vst [vmem:[%s41 + $0xfe8] sm:$0xff] %v1060
      %v1062 = vld [vmem:[%s40 + $0xff0] sm:$0xff]
      %1063 = vst [vmem:[%s41 + $0xff0] sm:$0xff] %v1062
      %v1064 = vld [vmem:[%s40 + $0xff8] sm:$0xff]
      %1065 = vst [vmem:[%s41 + $0xff8] sm:$0xff] %v1064
      %v1066 = vld [vmem:[%s40 + $0x1000] sm:$0xff]
      %1067 = vst [vmem:[%s41 + $0x1000] sm:$0xff] %v1066
      %v1068 = vld [vmem:[%s40 + $0x1008] sm:$0xff]
      %1069 = vst [vmem:[%s41 + $0x1008] sm:$0xff] %v1068
      %v1070 = vld [vmem:[%s40 + $0x1010] sm:$0xff]
      %1071 = vst [vmem:[%s41 + $0x1010] sm:$0xff] %v1070
      %v1072 = vld [vmem:[%s40 + $0x1018] sm:$0xff]
      %1073 = vst [vmem:[%s41 + $0x1018] sm:$0xff] %v1072
      %v1074 = vld [vmem:[%s40 + $0x1020] sm:$0xff]
      %1075 = vst [vmem:[%s41 + $0x1020] sm:$0xff] %v1074
      %v1076 = vld [vmem:[%s40 + $0x1028] sm:$0xff]
      %1077 = vst [vmem:[%s41 + $0x1028] sm:$0xff] %v1076
      %v1078 = vld [vmem:[%s40 + $0x1030] sm:$0xff]
      %1079 = vst [vmem:[%s41 + $0x1030] sm:$0xff] %v1078
      %v1080 = vld [vmem:[%s40 + $0x1038] sm:$0xff]
      %1081 = vst [vmem:[%s41 + $0x1038] sm:$0xff] %v1080
      %v1082 = vld [vmem:[%s40 + $0x1040] sm:$0xff]
      %1083 = vst [vmem:[%s41 + $0x1040] sm:$0xff] %v1082
      %v1084 = vld [vmem:[%s40 + $0x1048] sm:$0xff]
      %1085 = vst [vmem:[%s41 + $0x1048] sm:$0xff] %v1084
      %v1086 = vld [vmem:[%s40 + $0x1050] sm:$0xff]
      %1087 = vst [vmem:[%s41 + $0x1050] sm:$0xff] %v1086
      %v1088 = vld [vmem:[%s40 + $0x1058] sm:$0xff]
      %1089 = vst [vmem:[%s41 + $0x1058] sm:$0xff] %v1088
      %v1090 = vld [vmem:[%s40 + $0x1060] sm:$0xff]
      %1091 = vst [vmem:[%s41 + $0x1060] sm:$0xff] %v1090
      %v1092 = vld [vmem:[%s40 + $0x1068] sm:$0xff]
      %1093 = vst [vmem:[%s41 + $0x1068] sm:$0xff] %v1092
      %v1094 = vld [vmem:[%s40 + $0x1070] sm:$0xff]
      %1095 = vst [vmem:[%s41 + $0x1070] sm:$0xff] %v1094
      %v1096 = vld [vmem:[%s40 + $0x1078] sm:$0xff]
      %1097 = vst [vmem:[%s41 + $0x1078] sm:$0xff] %v1096
      %v1098 = vld [vmem:[%s40 + $0x1080] sm:$0xff]
      %1099 = vst [vmem:[%s41 + $0x1080] sm:$0xff] %v1098
      %v1100 = vld [vmem:[%s40 + $0x1088] sm:$0xff]
      %1101 = vst [vmem:[%s41 + $0x1088] sm:$0xff] %v1100
      %v1102 = vld [vmem:[%s40 + $0x1090] sm:$0xff]
      %1103 = vst [vmem:[%s41 + $0x1090] sm:$0xff] %v1102
      %v1104 = vld [vmem:[%s40 + $0x1098] sm:$0xff]
      %1105 = vst [vmem:[%s41 + $0x1098] sm:$0xff] %v1104
      %v1106 = vld [vmem:[%s40 + $0x10a0] sm:$0xff]
      %1107 = vst [vmem:[%s41 + $0x10a0] sm:$0xff] %v1106
      %v1108 = vld [vmem:[%s40 + $0x10a8] sm:$0xff]
      %1109 = vst [vmem:[%s41 + $0x10a8] sm:$0xff] %v1108
      %v1110 = vld [vmem:[%s40 + $0x10b0] sm:$0xff]
      %1111 = vst [vmem:[%s41 + $0x10b0] sm:$0xff] %v1110
      %v1112 = vld [vmem:[%s40 + $0x10b8] sm:$0xff]
      %1113 = vst [vmem:[%s41 + $0x10b8] sm:$0xff] %v1112
      %v1114 = vld [vmem:[%s40 + $0x10c0] sm:$0xff]
      %1115 = vst [vmem:[%s41 + $0x10c0] sm:$0xff] %v1114
      %v1116 = vld [vmem:[%s40 + $0x10c8] sm:$0xff]
      %1117 = vst [vmem:[%s41 + $0x10c8] sm:$0xff] %v1116
      %v1118 = vld [vmem:[%s40 + $0x10d0] sm:$0xff]
      %1119 = vst [vmem:[%s41 + $0x10d0] sm:$0xff] %v1118
      %v1120 = vld [vmem:[%s40 + $0x10d8] sm:$0xff]
      %1121 = vst [vmem:[%s41 + $0x10d8] sm:$0xff] %v1120
      %v1122 = vld [vmem:[%s40 + $0x10e0] sm:$0xff]
      %1123 = vst [vmem:[%s41 + $0x10e0] sm:$0xff] %v1122
      %v1124 = vld [vmem:[%s40 + $0x10e8] sm:$0xff]
      %1125 = vst [vmem:[%s41 + $0x10e8] sm:$0xff] %v1124
      %v1126 = vld [vmem:[%s40 + $0x10f0] sm:$0xff]
      %1127 = vst [vmem:[%s41 + $0x10f0] sm:$0xff] %v1126
      %v1128 = vld [vmem:[%s40 + $0x10f8] sm:$0xff]
      %1129 = vst [vmem:[%s41 + $0x10f8] sm:$0xff] %v1128
      %v1130 = vld [vmem:[%s40 + $0x1100] sm:$0xff]
      %1131 = vst [vmem:[%s41 + $0x1100] sm:$0xff] %v1130
      %v1132 = vld [vmem:[%s40 + $0x1108] sm:$0xff]
      %1133 = vst [vmem:[%s41 + $0x1108] sm:$0xff] %v1132
      %v1134 = vld [vmem:[%s40 + $0x1110] sm:$0xff]
      %1135 = vst [vmem:[%s41 + $0x1110] sm:$0xff] %v1134
      %v1136 = vld [vmem:[%s40 + $0x1118] sm:$0xff]
      %1137 = vst [vmem:[%s41 + $0x1118] sm:$0xff] %v1136
      %v1138 = vld [vmem:[%s40 + $0x1120] sm:$0xff]
      %1139 = vst [vmem:[%s41 + $0x1120] sm:$0xff] %v1138
      %v1140 = vld [vmem:[%s40 + $0x1128] sm:$0xff]
      %1141 = vst [vmem:[%s41 + $0x1128] sm:$0xff] %v1140
      %v1142 = vld [vmem:[%s40 + $0x1130] sm:$0xff]
      %1143 = vst [vmem:[%s41 + $0x1130] sm:$0xff] %v1142
      %v1144 = vld [vmem:[%s40 + $0x1138] sm:$0xff]
      %1145 = vst [vmem:[%s41 + $0x1138] sm:$0xff] %v1144
      %v1146 = vld [vmem:[%s40 + $0x1140] sm:$0xff]
      %1147 = vst [vmem:[%s41 + $0x1140] sm:$0xff] %v1146
      %v1148 = vld [vmem:[%s40 + $0x1148] sm:$0xff]
      %1149 = vst [vmem:[%s41 + $0x1148] sm:$0xff] %v1148
      %v1150 = vld [vmem:[%s40 + $0x1150] sm:$0xff]
      %1151 = vst [vmem:[%s41 + $0x1150] sm:$0xff] %v1150
      %v1152 = vld [vmem:[%s40 + $0x1158] sm:$0xff]
      %1153 = vst [vmem:[%s41 + $0x1158] sm:$0xff] %v1152
      %v1154 = vld [vmem:[%s40 + $0x1160] sm:$0xff]
      %1155 = vst [vmem:[%s41 + $0x1160] sm:$0xff] %v1154
      %v1156 = vld [vmem:[%s40 + $0x1168] sm:$0xff]
      %1157 = vst [vmem:[%s41 + $0x1168] sm:$0xff] %v1156
      %v1158 = vld [vmem:[%s40 + $0x1170] sm:$0xff]
      %1159 = vst [vmem:[%s41 + $0x1170] sm:$0xff] %v1158
      %v1160 = vld [vmem:[%s40 + $0x1178] sm:$0xff]
      %1161 = vst [vmem:[%s41 + $0x1178] sm:$0xff] %v1160
      %v1162 = vld [vmem:[%s40 + $0x1180] sm:$0xff]
      %1163 = vst [vmem:[%s41 + $0x1180] sm:$0xff] %v1162
      %v1164 = vld [vmem:[%s40 + $0x1188] sm:$0xff]
      %1165 = vst [vmem:[%s41 + $0x1188] sm:$0xff] %v1164
      %v1166 = vld [vmem:[%s40 + $0x1190] sm:$0xff]
      %1167 = vst [vmem:[%s41 + $0x1190] sm:$0xff] %v1166
      %v1168 = vld [vmem:[%s40 + $0x1198] sm:$0xff]
      %1169 = vst [vmem:[%s41 + $0x1198] sm:$0xff] %v1168
      %v1170 = vld [vmem:[%s40 + $0x11a0] sm:$0xff]
      %1171 = vst [vmem:[%s41 + $0x11a0] sm:$0xff] %v1170
      %v1172 = vld [vmem:[%s40 + $0x11a8] sm:$0xff]
      %1173 = vst [vmem:[%s41 + $0x11a8] sm:$0xff] %v1172
      %v1174 = vld [vmem:[%s40 + $0x11b0] sm:$0xff]
      %1175 = vst [vmem:[%s41 + $0x11b0] sm:$0xff] %v1174
      %v1176 = vld [vmem:[%s40 + $0x11b8] sm:$0xff]
      %1177 = vst [vmem:[%s41 + $0x11b8] sm:$0xff] %v1176
      %v1178 = vld [vmem:[%s40 + $0x11c0] sm:$0xff]
      %1179 = vst [vmem:[%s41 + $0x11c0] sm:$0xff] %v1178
      %v1180 = vld [vmem:[%s40 + $0x11c8] sm:$0xff]
      %1181 = vst [vmem:[%s41 + $0x11c8] sm:$0xff] %v1180
      %v1182 = vld [vmem:[%s40 + $0x11d0] sm:$0xff]
      %1183 = vst [vmem:[%s41 + $0x11d0] sm:$0xff] %v1182
      %v1184 = vld [vmem:[%s40 + $0x11d8] sm:$0xff]
      %1185 = vst [vmem:[%s41 + $0x11d8] sm:$0xff] %v1184
      %v1186 = vld [vmem:[%s40 + $0x11e0] sm:$0xff]
      %1187 = vst [vmem:[%s41 + $0x11e0] sm:$0xff] %v1186
      %v1188 = vld [vmem:[%s40 + $0x11e8] sm:$0xff]
      %1189 = vst [vmem:[%s41 + $0x11e8] sm:$0xff] %v1188
      %v1190 = vld [vmem:[%s40 + $0x11f0] sm:$0xff]
      %1191 = vst [vmem:[%s41 + $0x11f0] sm:$0xff] %v1190
      %v1192 = vld [vmem:[%s40 + $0x11f8] sm:$0xff]
      %1193 = vst [vmem:[%s41 + $0x11f8] sm:$0xff] %v1192
    $region42: #{mlp_for_forward.1} parent=36 // loop_footer
      %s39 = sadd.s32 1, %s35
    $region43: #{mlp_for_forward.1} parent=36 // loop_footer_branch
      %34 = sbr.rel target = $region39
    $region44: #{mlp_for_forward.1} parent=36 // loop_exit
      _
  $region37: #{mlp_for_forward.1} parent=0 // pred_fallthru
    _
  // Predicated region
  $region45: #{mlp_for_forward.1} parent=0 // pred_check
    _
  $region46: #{mlp_for_forward.1} parent=0 // pred_check_branch
    %1195 = sbr.rel target = $region48
  $region47: #{mlp_for_forward.1} parent=0 // pred_region
    _
  $region48: #{mlp_for_forward.1} parent=0 // pred_fallthru
    _
  // Predicated region
  $region49: #{mlp_for_forward.1} parent=0 // pred_check
    _
  $region50: #{mlp_for_forward.1} parent=0 // pred_check_branch
    %1198 = sbr.rel (0) target = $region52
  $region51: #{mlp_for_forward.1} parent=0 // pred_region
    %1199 = vsyncadd [#allocation4], 73728
  $region52: #{mlp_for_forward.1} parent=0 // pred_fallthru
    _
  %s1200 = scalar_lea.sflag [#allocation4], 1
  // Predicated region
  $region53: #{mlp_for_forward.1} parent=0 // pred_check
    _
  $region54: #{mlp_for_forward.1} parent=0 // pred_check_branch
    %1202 = sbr.rel (0) target = $region56
  $region55: #{mlp_for_forward.1} parent=0 // pred_region
    loop: start=0, step=1, limit=1
    $region57: #{mlp_for_forward.1} parent=55 // loop_pre_header
      _
    $region58: #{mlp_for_forward.1} parent=55 // loop_header
      %s1204 = sphi 0, %s1208
      %p1205 = scmp.ge.s32.totalorder %s1204, 1
      %s1209 = sphi %s6, %s6
      %s1210 = sphi [#allocation3], [#allocation3]
    $region59: #{mlp_for_forward.1} parent=55 // loop_header_branch
      %1207 = sbr.rel (%p1205) target = $region63
    $region60: #{mlp_for_forward.1} parent=55 // loop_body
      %v1211 = vld [vmem:[%s1209] sm:$0xff]
      %1212 = vst [vmem:[%s1210] sm:$0xff] %v1211
      %v1213 = vld [vmem:[%s1209 + $0x8] sm:$0xff]
      %1214 = vst [vmem:[%s1210 + $0x8] sm:$0xff] %v1213
      %v1215 = vld [vmem:[%s1209 + $0x10] sm:$0xff]
      %1216 = vst [vmem:[%s1210 + $0x10] sm:$0xff] %v1215
      %v1217 = vld [vmem:[%s1209 + $0x18] sm:$0xff]
      %1218 = vst [vmem:[%s1210 + $0x18] sm:$0xff] %v1217
      %v1219 = vld [vmem:[%s1209 + $0x20] sm:$0xff]
      %1220 = vst [vmem:[%s1210 + $0x20] sm:$0xff] %v1219
      %v1221 = vld [vmem:[%s1209 + $0x28] sm:$0xff]
      %1222 = vst [vmem:[%s1210 + $0x28] sm:$0xff] %v1221
      %v1223 = vld [vmem:[%s1209 + $0x30] sm:$0xff]
      %1224 = vst [vmem:[%s1210 + $0x30] sm:$0xff] %v1223
      %v1225 = vld [vmem:[%s1209 + $0x38] sm:$0xff]
      %1226 = vst [vmem:[%s1210 + $0x38] sm:$0xff] %v1225
      %v1227 = vld [vmem:[%s1209 + $0x40] sm:$0xff]
      %1228 = vst [vmem:[%s1210 + $0x40] sm:$0xff] %v1227
      %v1229 = vld [vmem:[%s1209 + $0x48] sm:$0xff]
      %1230 = vst [vmem:[%s1210 + $0x48] sm:$0xff] %v1229
      %v1231 = vld [vmem:[%s1209 + $0x50] sm:$0xff]
      %1232 = vst [vmem:[%s1210 + $0x50] sm:$0xff] %v1231
      %v1233 = vld [vmem:[%s1209 + $0x58] sm:$0xff]
      %1234 = vst [vmem:[%s1210 + $0x58] sm:$0xff] %v1233
      %v1235 = vld [vmem:[%s1209 + $0x60] sm:$0xff]
      %1236 = vst [vmem:[%s1210 + $0x60] sm:$0xff] %v1235
      %v1237 = vld [vmem:[%s1209 + $0x68] sm:$0xff]
      %1238 = vst [vmem:[%s1210 + $0x68] sm:$0xff] %v1237
      %v1239 = vld [vmem:[%s1209 + $0x70] sm:$0xff]
      %1240 = vst [vmem:[%s1210 + $0x70] sm:$0xff] %v1239
      %v1241 = vld [vmem:[%s1209 + $0x78] sm:$0xff]
      %1242 = vst [vmem:[%s1210 + $0x78] sm:$0xff] %v1241
      %v1243 = vld [vmem:[%s1209 + $0x80] sm:$0xff]
      %1244 = vst [vmem:[%s1210 + $0x80] sm:$0xff] %v1243
      %v1245 = vld [vmem:[%s1209 + $0x88] sm:$0xff]
      %1246 = vst [vmem:[%s1210 + $0x88] sm:$0xff] %v1245
      %v1247 = vld [vmem:[%s1209 + $0x90] sm:$0xff]
      %1248 = vst [vmem:[%s1210 + $0x90] sm:$0xff] %v1247
      %v1249 = vld [vmem:[%s1209 + $0x98] sm:$0xff]
      %1250 = vst [vmem:[%s1210 + $0x98] sm:$0xff] %v1249
      %v1251 = vld [vmem:[%s1209 + $0xa0] sm:$0xff]
      %1252 = vst [vmem:[%s1210 + $0xa0] sm:$0xff] %v1251
      %v1253 = vld [vmem:[%s1209 + $0xa8] sm:$0xff]
      %1254 = vst [vmem:[%s1210 + $0xa8] sm:$0xff] %v1253
      %v1255 = vld [vmem:[%s1209 + $0xb0] sm:$0xff]
      %1256 = vst [vmem:[%s1210 + $0xb0] sm:$0xff] %v1255
      %v1257 = vld [vmem:[%s1209 + $0xb8] sm:$0xff]
      %1258 = vst [vmem:[%s1210 + $0xb8] sm:$0xff] %v1257
      %v1259 = vld [vmem:[%s1209 + $0xc0] sm:$0xff]
      %1260 = vst [vmem:[%s1210 + $0xc0] sm:$0xff] %v1259
      %v1261 = vld [vmem:[%s1209 + $0xc8] sm:$0xff]
      %1262 = vst [vmem:[%s1210 + $0xc8] sm:$0xff] %v1261
      %v1263 = vld [vmem:[%s1209 + $0xd0] sm:$0xff]
      %1264 = vst [vmem:[%s1210 + $0xd0] sm:$0xff] %v1263
      %v1265 = vld [vmem:[%s1209 + $0xd8] sm:$0xff]
      %1266 = vst [vmem:[%s1210 + $0xd8] sm:$0xff] %v1265
      %v1267 = vld [vmem:[%s1209 + $0xe0] sm:$0xff]
      %1268 = vst [vmem:[%s1210 + $0xe0] sm:$0xff] %v1267
      %v1269 = vld [vmem:[%s1209 + $0xe8] sm:$0xff]
      %1270 = vst [vmem:[%s1210 + $0xe8] sm:$0xff] %v1269
      %v1271 = vld [vmem:[%s1209 + $0xf0] sm:$0xff]
      %1272 = vst [vmem:[%s1210 + $0xf0] sm:$0xff] %v1271
      %v1273 = vld [vmem:[%s1209 + $0xf8] sm:$0xff]
      %1274 = vst [vmem:[%s1210 + $0xf8] sm:$0xff] %v1273
      %v1275 = vld [vmem:[%s1209 + $0x100] sm:$0xff]
      %1276 = vst [vmem:[%s1210 + $0x100] sm:$0xff] %v1275
      %v1277 = vld [vmem:[%s1209 + $0x108] sm:$0xff]
      %1278 = vst [vmem:[%s1210 + $0x108] sm:$0xff] %v1277
      %v1279 = vld [vmem:[%s1209 + $0x110] sm:$0xff]
      %1280 = vst [vmem:[%s1210 + $0x110] sm:$0xff] %v1279
      %v1281 = vld [vmem:[%s1209 + $0x118] sm:$0xff]
      %1282 = vst [vmem:[%s1210 + $0x118] sm:$0xff] %v1281
      %v1283 = vld [vmem:[%s1209 + $0x120] sm:$0xff]
      %1284 = vst [vmem:[%s1210 + $0x120] sm:$0xff] %v1283
      %v1285 = vld [vmem:[%s1209 + $0x128] sm:$0xff]
      %1286 = vst [vmem:[%s1210 + $0x128] sm:$0xff] %v1285
      %v1287 = vld [vmem:[%s1209 + $0x130] sm:$0xff]
      %1288 = vst [vmem:[%s1210 + $0x130] sm:$0xff] %v1287
      %v1289 = vld [vmem:[%s1209 + $0x138] sm:$0xff]
      %1290 = vst [vmem:[%s1210 + $0x138] sm:$0xff] %v1289
      %v1291 = vld [vmem:[%s1209 + $0x140] sm:$0xff]
      %1292 = vst [vmem:[%s1210 + $0x140] sm:$0xff] %v1291
      %v1293 = vld [vmem:[%s1209 + $0x148] sm:$0xff]
      %1294 = vst [vmem:[%s1210 + $0x148] sm:$0xff] %v1293
      %v1295 = vld [vmem:[%s1209 + $0x150] sm:$0xff]
      %1296 = vst [vmem:[%s1210 + $0x150] sm:$0xff] %v1295
      %v1297 = vld [vmem:[%s1209 + $0x158] sm:$0xff]
      %1298 = vst [vmem:[%s1210 + $0x158] sm:$0xff] %v1297
      %v1299 = vld [vmem:[%s1209 + $0x160] sm:$0xff]
      %1300 = vst [vmem:[%s1210 + $0x160] sm:$0xff] %v1299
      %v1301 = vld [vmem:[%s1209 + $0x168] sm:$0xff]
      %1302 = vst [vmem:[%s1210 + $0x168] sm:$0xff] %v1301
      %v1303 = vld [vmem:[%s1209 + $0x170] sm:$0xff]
      %1304 = vst [vmem:[%s1210 + $0x170] sm:$0xff] %v1303
      %v1305 = vld [vmem:[%s1209 + $0x178] sm:$0xff]
      %1306 = vst [vmem:[%s1210 + $0x178] sm:$0xff] %v1305
      %v1307 = vld [vmem:[%s1209 + $0x180] sm:$0xff]
      %1308 = vst [vmem:[%s1210 + $0x180] sm:$0xff] %v1307
      %v1309 = vld [vmem:[%s1209 + $0x188] sm:$0xff]
      %1310 = vst [vmem:[%s1210 + $0x188] sm:$0xff] %v1309
      %v1311 = vld [vmem:[%s1209 + $0x190] sm:$0xff]
      %1312 = vst [vmem:[%s1210 + $0x190] sm:$0xff] %v1311
      %v1313 = vld [vmem:[%s1209 + $0x198] sm:$0xff]
      %1314 = vst [vmem:[%s1210 + $0x198] sm:$0xff] %v1313
      %v1315 = vld [vmem:[%s1209 + $0x1a0] sm:$0xff]
      %1316 = vst [vmem:[%s1210 + $0x1a0] sm:$0xff] %v1315
      %v1317 = vld [vmem:[%s1209 + $0x1a8] sm:$0xff]
      %1318 = vst [vmem:[%s1210 + $0x1a8] sm:$0xff] %v1317
      %v1319 = vld [vmem:[%s1209 + $0x1b0] sm:$0xff]
      %1320 = vst [vmem:[%s1210 + $0x1b0] sm:$0xff] %v1319
      %v1321 = vld [vmem:[%s1209 + $0x1b8] sm:$0xff]
      %1322 = vst [vmem:[%s1210 + $0x1b8] sm:$0xff] %v1321
      %v1323 = vld [vmem:[%s1209 + $0x1c0] sm:$0xff]
      %1324 = vst [vmem:[%s1210 + $0x1c0] sm:$0xff] %v1323
      %v1325 = vld [vmem:[%s1209 + $0x1c8] sm:$0xff]
      %1326 = vst [vmem:[%s1210 + $0x1c8] sm:$0xff] %v1325
      %v1327 = vld [vmem:[%s1209 + $0x1d0] sm:$0xff]
      %1328 = vst [vmem:[%s1210 + $0x1d0] sm:$0xff] %v1327
      %v1329 = vld [vmem:[%s1209 + $0x1d8] sm:$0xff]
      %1330 = vst [vmem:[%s1210 + $0x1d8] sm:$0xff] %v1329
      %v1331 = vld [vmem:[%s1209 + $0x1e0] sm:$0xff]
      %1332 = vst [vmem:[%s1210 + $0x1e0] sm:$0xff] %v1331
      %v1333 = vld [vmem:[%s1209 + $0x1e8] sm:$0xff]
      %1334 = vst [vmem:[%s1210 + $0x1e8] sm:$0xff] %v1333
      %v1335 = vld [vmem:[%s1209 + $0x1f0] sm:$0xff]
      %1336 = vst [vmem:[%s1210 + $0x1f0] sm:$0xff] %v1335
      %v1337 = vld [vmem:[%s1209 + $0x1f8] sm:$0xff]
      %1338 = vst [vmem:[%s1210 + $0x1f8] sm:$0xff] %v1337
    $region61: #{mlp_for_forward.1} parent=55 // loop_footer
      %s1208 = sadd.s32 1, %s1204
    $region62: #{mlp_for_forward.1} parent=55 // loop_footer_branch
      %1203 = sbr.rel target = $region58
    $region63: #{mlp_for_forward.1} parent=55 // loop_exit
      _
  $region56: #{mlp_for_forward.1} parent=0 // pred_fallthru
    _
  // Predicated region
  $region64: #{mlp_for_forward.1} parent=0 // pred_check
    _
  $region65: #{mlp_for_forward.1} parent=0 // pred_check_branch
    %1340 = sbr.rel target = $region67
  $region66: #{mlp_for_forward.1} parent=0 // pred_region
    _
  $region67: #{mlp_for_forward.1} parent=0 // pred_fallthru
    _
  // Predicated region
  $region68: #{mlp_for_forward.1} parent=0 // pred_check
    _
  $region69: #{mlp_for_forward.1} parent=0 // pred_check_branch
    %1343 = sbr.rel (0) target = $region71
  $region70: #{mlp_for_forward.1} parent=0 // pred_region
    %1344 = vsyncadd %s1200, 8192
  $region71: #{mlp_for_forward.1} parent=0 // pred_fallthru
    _
  %v1345 = vld [vmem:[%s2] sm:$0x3]
  %v1346 = vld [vmem:[%s2 + $0x8] sm:$0xf]
  %v1347 = vld [vmem:[%s2 + $0xc] sm:$0xf]
  %v1348 = vld [vmem:[%s2 + $0x10] sm:$0xf]
  %v1349 = vld [vmem:[%s2 + $0x14] sm:$0xf]
  %v1350 = vld [vmem:[%s2 + $0x18] sm:$0xf]
  %v1351 = vld [vmem:[%s2 + $0x1c] sm:$0xf]
  %v1352 = vld [vmem:[%s2 + $0x20] sm:$0xf]
  %v1353 = vld [vmem:[%s2 + $0x24] sm:$0xf]
  %v1354 = vld [vmem:[%s2 + $0x28] sm:$0xf]
  %v1355 = vld [vmem:[%s2 + $0x2c] sm:$0xf]
  %v1356 = vld [vmem:[%s2 + $0x30] sm:$0xf]
  %v1357 = vld [vmem:[%s2 + $0x34] sm:$0xf]
  %v1358 = vld [vmem:[%s2 + $0x38] sm:$0xf]
  %v1359 = vld [vmem:[%s2 + $0x3c] sm:$0xf]
  %v1360 = vld [vmem:[%s2 + $0x40] sm:$0xf]
  %v1361 = vld [vmem:[%s2 + $0x44] sm:$0xf]
  %v1362 = vld [vmem:[%s2 + $0x48] sm:$0xf]
  %v1363 = vld [vmem:[%s2 + $0x4c] sm:$0xf]
  %v1364 = vld [vmem:[%s2 + $0x50] sm:$0xf]
  %v1365 = vld [vmem:[%s2 + $0x54] sm:$0xf]
  %v1366 = vld [vmem:[%s2 + $0x58] sm:$0xf]
  %v1367 = vld [vmem:[%s2 + $0x5c] sm:$0xf]
  %v1368 = vld [vmem:[%s2 + $0x60] sm:$0xf]
  %v1369 = vld [vmem:[%s2 + $0x64] sm:$0xf]
  %v1370 = vld [vmem:[%s2 + $0x68] sm:$0x3]
  %v1371 = vld [vmem:[%s0] sm:$0x77]
  %1373 = vst [vmem:[#allocation1] ss:$2 sm:$0xff] %v1371
  %v1374 = vld.sshfl [vmem:[#allocation1] sm:$0xff pattern:$0x75316420]
  %v1375 = vld.sshfl [vmem:[#allocation1 + $0x8] sm:$0xff pattern:$0x75316420]
  %v1378 = vpack.c.bf16 %v1374, %v1374
  %v1379 = vpack.c.bf16 %v1375, %v1375
  %v1380 = vld [vmem:[%s9] ss:$0 sm:$0xff]
  %1381 = vxpose.binary.xlu0.c.b16.start [1/16] %v1379, %v1378, 128
  %1382 = vxpose.binary.xlu0.c.b16.cont [2/16] 0, 0, 128
  %1383 = vxpose.binary.xlu0.c.b16.cont [3/16] 0, 0, 128
  %1384 = vxpose.binary.xlu0.c.b16.cont [4/16] 0, 0, 128
  %1385 = vxpose.binary.xlu0.c.b16.cont [5/16] 0, 0, 128
  %1386 = vxpose.binary.xlu0.c.b16.cont [6/16] 0, 0, 128
  %1387 = vxpose.binary.xlu0.c.b16.cont [7/16] 0, 0, 128
  %1388 = vxpose.binary.xlu0.c.b16.end [8/16] 0, 0, 128
  %v1389 = vpop.trf.xlu0
  %v1390 = vpop.trf.xlu0
  %v1391 = vpop.trf.xlu0
  %v1392 = vpop.trf.xlu0
  %v1393 = vpop.trf.xlu0
  %v1394 = vpop.trf.xlu0
  %v1395 = vpop.trf.xlu0
  %v1396 = vpop.trf.xlu0
  %v1397 = vpop.trf.xlu0
  %v1398 = vpop.trf.xlu0
  %v1399 = vpop.trf.xlu0
  %v1400 = vpop.trf.xlu0
  %v1401 = vpop.trf.xlu0
  %v1402 = vpop.trf.xlu0
  %v1403 = vpop.trf.xlu0
  %v1404 = vpop.trf.xlu0
  %vm1405 = vcmask 23552
  %v1407 = vsel %vm1405, %v1389, 0
  %v1410 = vsel %vm1405, %v1391, 0
  %v1413 = vsel %vm1405, %v1393, 0
  %v1416 = vsel %vm1405, %v1395, 0
  %v1419 = vsel %vm1405, %v1397, 0
  %v1422 = vsel %vm1405, %v1399, 0
  %v1425 = vsel %vm1405, %v1401, 0
  %v1428 = vsel %vm1405, %v1403, 0
  %v1431 = vsel %vm1405, %v1390, 0
  %v1434 = vsel %vm1405, %v1392, 0
  %v1437 = vsel %vm1405, %v1394, 0
  %v1440 = vsel %vm1405, %v1396, 0
  %v1443 = vsel %vm1405, %v1398, 0
  %v1446 = vsel %vm1405, %v1400, 0
  %v1449 = vsel %vm1405, %v1402, 0
  %v1452 = vsel %vm1405, %v1404, 0
  %vm1454 = vcmask 1040384
  %vm1455 = vcmask 1041408
  %v1456 = vsel %vm1454, 4294967295, 65535
  %v1457 = vsel %vm1455, %v1456, 0
  %v1459 = vand.u32 %v1345, %v1457
  %1461 = vmatpush.bf16.msra.mxu0 0
  %1462 = vmatpush.bf16.msra.mxu0 0
  %1463 = vmatpush.bf16.msra.mxu0 0
  %1464 = vmatpush.bf16.msra.mxu0 0
  %1465 = vmatpush.bf16.msra.mxu0 0
  %1466 = vmatpush.bf16.msra.mxu0 0
  %1467 = vmatpush.bf16.msra.mxu0 0
  %1468 = vmatpush.bf16.msra.mxu0 %v1459
  %1469 = vmatmul.bf16.gmra.mxu0 %v1407
  %v1470 = vpop.f32.mrf.mxu0
  %v1471 = vadd.f32 %v1380, %v1470
  %v1472 = vpop.f32.mrf.mxu0
  %v1473 = vadd.f32 %v1380, %v1472
  %1474 = vmatmul.bf16.gmra.mxu0 %v1410
  %v1475 = vpop.f32.mrf.mxu0
  %v1476 = vadd.f32 %v1380, %v1475
  %v1477 = vpop.f32.mrf.mxu0
  %v1478 = vadd.f32 %v1380, %v1477
  %1479 = vmatmul.bf16.gmra.mxu0 %v1413
  %v1480 = vpop.f32.mrf.mxu0
  %v1481 = vadd.f32 %v1380, %v1480
  %v1482 = vpop.f32.mrf.mxu0
  %v1483 = vadd.f32 %v1380, %v1482
  %1484 = vmatmul.bf16.gmra.mxu0 %v1416
  %v1485 = vpop.f32.mrf.mxu0
  %v1486 = vadd.f32 %v1380, %v1485
  %v1487 = vpop.f32.mrf.mxu0
  %v1488 = vadd.f32 %v1380, %v1487
  %1489 = vmatmul.bf16.gmra.mxu0 %v1419
  %v1490 = vpop.f32.mrf.mxu0
  %v1491 = vadd.f32 %v1380, %v1490
  %v1492 = vpop.f32.mrf.mxu0
  %v1493 = vadd.f32 %v1380, %v1492
  %1494 = vmatmul.bf16.gmra.mxu0 %v1422
  %v1495 = vpop.f32.mrf.mxu0
  %v1496 = vadd.f32 %v1380, %v1495
  %v1497 = vpop.f32.mrf.mxu0
  %v1498 = vadd.f32 %v1380, %v1497
  %1499 = vmatmul.bf16.gmra.mxu0 %v1425
  %v1500 = vpop.f32.mrf.mxu0
  %v1501 = vadd.f32 %v1380, %v1500
  %v1502 = vpop.f32.mrf.mxu0
  %v1503 = vadd.f32 %v1380, %v1502
  %1504 = vmatmul.bf16.gmra.mxu0 %v1428
  %v1505 = vpop.f32.mrf.mxu0
  %v1506 = vadd.f32 %v1380, %v1505
  %v1507 = vpop.f32.mrf.mxu0
  %v1508 = vadd.f32 %v1380, %v1507
  %1509 = vmatmul.bf16.gmra.mxu0 %v1431
  %v1510 = vpop.f32.mrf.mxu0
  %v1511 = vadd.f32 %v1380, %v1510
  %v1512 = vpop.f32.mrf.mxu0
  %v1513 = vadd.f32 %v1380, %v1512
  %1514 = vmatmul.bf16.gmra.mxu0 %v1434
  %v1515 = vpop.f32.mrf.mxu0
  %v1516 = vadd.f32 %v1380, %v1515
  %v1517 = vpop.f32.mrf.mxu0
  %v1518 = vadd.f32 %v1380, %v1517
  %1519 = vmatmul.bf16.gmra.mxu0 %v1437
  %v1520 = vpop.f32.mrf.mxu0
  %v1521 = vadd.f32 %v1380, %v1520
  %v1522 = vpop.f32.mrf.mxu0
  %v1523 = vadd.f32 %v1380, %v1522
  %1524 = vmatmul.bf16.gmra.mxu0 %v1440
  %v1525 = vpop.f32.mrf.mxu0
  %v1526 = vadd.f32 %v1380, %v1525
  %v1527 = vpop.f32.mrf.mxu0
  %v1528 = vadd.f32 %v1380, %v1527
  %1529 = vmatmul.bf16.gmra.mxu0 %v1443
  %v1530 = vpop.f32.mrf.mxu0
  %v1531 = vadd.f32 %v1380, %v1530
  %v1532 = vpop.f32.mrf.mxu0
  %v1533 = vadd.f32 %v1380, %v1532
  %1534 = vmatmul.bf16.gmra.mxu0 %v1446
  %v1535 = vpop.f32.mrf.mxu0
  %v1536 = vadd.f32 %v1380, %v1535
  %v1537 = vpop.f32.mrf.mxu0
  %v1538 = vadd.f32 %v1380, %v1537
  %1539 = vmatmul.bf16.gmra.mxu0 %v1449
  %v1540 = vpop.f32.mrf.mxu0
  %v1541 = vadd.f32 %v1380, %v1540
  %v1542 = vpop.f32.mrf.mxu0
  %v1543 = vadd.f32 %v1380, %v1542
  %1544 = vmatmul.bf16.gmra.mxu0 %v1452
  %v1545 = vpop.f32.mrf.mxu0
  %v1546 = vadd.f32 %v1380, %v1545
  %v1547 = vpop.f32.mrf.mxu0
  %v1548 = vadd.f32 %v1380, %v1547
  %1549 = vdwg.mxu0
  %v1550 = vmax.f32 %v1471, 0.0
  %v1551 = vmax.f32 %v1473, 0.0
  %v1552 = vmax.f32 %v1476, 0.0
  %v1553 = vmax.f32 %v1478, 0.0
  %v1554 = vmax.f32 %v1481, 0.0
  %v1555 = vmax.f32 %v1483, 0.0
  %v1556 = vmax.f32 %v1486, 0.0
  %v1557 = vmax.f32 %v1488, 0.0
  %v1558 = vmax.f32 %v1491, 0.0
  %v1559 = vmax.f32 %v1493, 0.0
  %v1560 = vmax.f32 %v1496, 0.0
  %v1561 = vmax.f32 %v1498, 0.0
  %v1562 = vmax.f32 %v1501, 0.0
  %v1563 = vmax.f32 %v1503, 0.0
  %v1564 = vmax.f32 %v1506, 0.0
  %v1565 = vmax.f32 %v1508, 0.0
  %v1566 = vmax.f32 %v1511, 0.0
  %v1567 = vmax.f32 %v1513, 0.0
  %v1568 = vmax.f32 %v1516, 0.0
  %v1569 = vmax.f32 %v1518, 0.0
  %v1570 = vmax.f32 %v1521, 0.0
  %v1571 = vmax.f32 %v1523, 0.0
  %v1572 = vmax.f32 %v1526, 0.0
  %v1573 = vmax.f32 %v1528, 0.0
  %v1574 = vmax.f32 %v1531, 0.0
  %v1575 = vmax.f32 %v1533, 0.0
  %v1576 = vmax.f32 %v1536, 0.0
  %v1577 = vmax.f32 %v1538, 0.0
  %v1578 = vmax.f32 %v1541, 0.0
  %v1579 = vmax.f32 %v1543, 0.0
  %v1580 = vmax.f32 %v1546, 0.0
  %v1581 = vmax.f32 %v1548, 0.0
  %v1582 = vpack.c.bf16 %v1551, %v1550
  %v1583 = vpack.c.bf16 %v1553, %v1552
  %v1584 = vpack.c.bf16 %v1555, %v1554
  %v1585 = vpack.c.bf16 %v1557, %v1556
  %v1586 = vpack.c.bf16 %v1559, %v1558
  %v1587 = vpack.c.bf16 %v1561, %v1560
  %v1588 = vpack.c.bf16 %v1563, %v1562
  %v1589 = vpack.c.bf16 %v1565, %v1564
  %v1590 = vpack.c.bf16 %v1567, %v1566
  %v1591 = vpack.c.bf16 %v1569, %v1568
  %v1592 = vpack.c.bf16 %v1571, %v1570
  %v1593 = vpack.c.bf16 %v1573, %v1572
  %v1594 = vpack.c.bf16 %v1575, %v1574
  %v1595 = vpack.c.bf16 %v1577, %v1576
  %v1596 = vpack.c.bf16 %v1579, %v1578
  %v1597 = vpack.c.bf16 %v1581, %v1580
  %v1598 = vld [vmem:[%s9 + $0x1] ss:$0 sm:$0xff]
  %v1607 = vunpack.c.l.b16 %v1346
  %v1608 = vunpack.c.l.b16 %v1347
  %v1609 = vunpack.c.l.b16 %v1348
  %v1610 = vunpack.c.l.b16 %v1349
  %v1611 = vunpack.c.l.b16 %v1350
  %v1612 = vunpack.c.l.b16 %v1351
  %v1613 = vunpack.c.l.b16 %v1352
  %v1614 = vunpack.c.l.b16 %v1353
  %v1615 = vpack.c.b16 %v1608, %v1607
  %v1616 = vpack.c.b16 %v1610, %v1609
  %v1617 = vpack.c.b16 %v1612, %v1611
  %v1618 = vpack.c.b16 %v1614, %v1613
  %vm1623 = vcmask 523264
  %v1625 = vsel %vm1623, %v1582, 0
  %v1628 = vsel %vm1623, %v1583, 0
  %v1631 = vsel %vm1623, %v1584, 0
  %v1634 = vsel %vm1623, %v1585, 0
  %v1637 = vsel %vm1623, %v1586, 0
  %v1640 = vsel %vm1623, %v1587, 0
  %v1643 = vsel %vm1623, %v1588, 0
  %v1646 = vsel %vm1623, %v1589, 0
  %v1649 = vsel %vm1623, %v1590, 0
  %v1652 = vsel %vm1623, %v1591, 0
  %v1655 = vsel %vm1623, %v1592, 0
  %v1658 = vsel %vm1623, %v1593, 0
  %v1661 = vsel %vm1623, %v1594, 0
  %v1664 = vsel %vm1623, %v1595, 0
  %v1667 = vsel %vm1623, %v1596, 0
  %v1670 = vsel %vm1623, %v1597, 0
  %1672 = vmatpush.bf16.msra.mxu0 0
  %1673 = vmatpush.bf16.msra.mxu0 0
  %1674 = vmatpush.bf16.msra.mxu0 0
  %1675 = vmatpush.bf16.msra.mxu0 0
  %1676 = vmatpush.bf16.msra.mxu0 %v1618
  %1677 = vmatpush.bf16.msra.mxu0 %v1617
  %1678 = vmatpush.bf16.msra.mxu0 %v1616
  %1679 = vmatpush.bf16.msra.mxu0 %v1615
  %1680 = vmatmul.bf16.gmra.mxu0 %v1625
  %v1681 = vpop.f32.mrf.mxu0
  %v1682 = vadd.f32 %v1598, %v1681
  %v1683 = vpop.f32.mrf.mxu0
  %v1684 = vadd.f32 %v1598, %v1683
  %1685 = vmatmul.bf16.gmra.mxu0 %v1628
  %v1686 = vpop.f32.mrf.mxu0
  %v1687 = vadd.f32 %v1598, %v1686
  %v1688 = vpop.f32.mrf.mxu0
  %v1689 = vadd.f32 %v1598, %v1688
  %1690 = vmatmul.bf16.gmra.mxu0 %v1631
  %v1691 = vpop.f32.mrf.mxu0
  %v1692 = vadd.f32 %v1598, %v1691
  %v1693 = vpop.f32.mrf.mxu0
  %v1694 = vadd.f32 %v1598, %v1693
  %1695 = vmatmul.bf16.gmra.mxu0 %v1634
  %v1696 = vpop.f32.mrf.mxu0
  %v1697 = vadd.f32 %v1598, %v1696
  %v1698 = vpop.f32.mrf.mxu0
  %v1699 = vadd.f32 %v1598, %v1698
  %1700 = vmatmul.bf16.gmra.mxu0 %v1637
  %v1701 = vpop.f32.mrf.mxu0
  %v1702 = vadd.f32 %v1598, %v1701
  %v1703 = vpop.f32.mrf.mxu0
  %v1704 = vadd.f32 %v1598, %v1703
  %1705 = vmatmul.bf16.gmra.mxu0 %v1640
  %v1706 = vpop.f32.mrf.mxu0
  %v1707 = vadd.f32 %v1598, %v1706
  %v1708 = vpop.f32.mrf.mxu0
  %v1709 = vadd.f32 %v1598, %v1708
  %1710 = vmatmul.bf16.gmra.mxu0 %v1643
  %v1711 = vpop.f32.mrf.mxu0
  %v1712 = vadd.f32 %v1598, %v1711
  %v1713 = vpop.f32.mrf.mxu0
  %v1714 = vadd.f32 %v1598, %v1713
  %1715 = vmatmul.bf16.gmra.mxu0 %v1646
  %v1716 = vpop.f32.mrf.mxu0
  %v1717 = vadd.f32 %v1598, %v1716
  %v1718 = vpop.f32.mrf.mxu0
  %v1719 = vadd.f32 %v1598, %v1718
  %1720 = vmatmul.bf16.gmra.mxu0 %v1649
  %v1721 = vpop.f32.mrf.mxu0
  %v1722 = vadd.f32 %v1598, %v1721
  %v1723 = vpop.f32.mrf.mxu0
  %v1724 = vadd.f32 %v1598, %v1723
  %1725 = vmatmul.bf16.gmra.mxu0 %v1652
  %v1726 = vpop.f32.mrf.mxu0
  %v1727 = vadd.f32 %v1598, %v1726
  %v1728 = vpop.f32.mrf.mxu0
  %v1729 = vadd.f32 %v1598, %v1728
  %1730 = vmatmul.bf16.gmra.mxu0 %v1655
  %v1731 = vpop.f32.mrf.mxu0
  %v1732 = vadd.f32 %v1598, %v1731
  %v1733 = vpop.f32.mrf.mxu0
  %v1734 = vadd.f32 %v1598, %v1733
  %1735 = vmatmul.bf16.gmra.mxu0 %v1658
  %v1736 = vpop.f32.mrf.mxu0
  %v1737 = vadd.f32 %v1598, %v1736
  %v1738 = vpop.f32.mrf.mxu0
  %v1739 = vadd.f32 %v1598, %v1738
  %1740 = vmatmul.bf16.gmra.mxu0 %v1661
  %v1741 = vpop.f32.mrf.mxu0
  %v1742 = vadd.f32 %v1598, %v1741
  %v1743 = vpop.f32.mrf.mxu0
  %v1744 = vadd.f32 %v1598, %v1743
  %1745 = vmatmul.bf16.gmra.mxu0 %v1664
  %v1746 = vpop.f32.mrf.mxu0
  %v1747 = vadd.f32 %v1598, %v1746
  %v1748 = vpop.f32.mrf.mxu0
  %v1749 = vadd.f32 %v1598, %v1748
  %1750 = vmatmul.bf16.gmra.mxu0 %v1667
  %v1751 = vpop.f32.mrf.mxu0
  %v1752 = vadd.f32 %v1598, %v1751
  %v1753 = vpop.f32.mrf.mxu0
  %v1754 = vadd.f32 %v1598, %v1753
  %1755 = vmatmul.bf16.gmra.mxu0 %v1670
  %v1756 = vpop.f32.mrf.mxu0
  %v1757 = vadd.f32 %v1598, %v1756
  %v1758 = vpop.f32.mrf.mxu0
  %v1759 = vadd.f32 %v1598, %v1758
  %1760 = vdwg.mxu0
  %v1761 = vmax.f32 %v1682, 0.0
  %v1762 = vmax.f32 %v1684, 0.0
  %v1763 = vmax.f32 %v1687, 0.0
  %v1764 = vmax.f32 %v1689, 0.0
  %v1765 = vmax.f32 %v1692, 0.0
  %v1766 = vmax.f32 %v1694, 0.0
  %v1767 = vmax.f32 %v1697, 0.0
  %v1768 = vmax.f32 %v1699, 0.0
  %v1769 = vmax.f32 %v1702, 0.0
  %v1770 = vmax.f32 %v1704, 0.0
  %v1771 = vmax.f32 %v1707, 0.0
  %v1772 = vmax.f32 %v1709, 0.0
  %v1773 = vmax.f32 %v1712, 0.0
  %v1774 = vmax.f32 %v1714, 0.0
  %v1775 = vmax.f32 %v1717, 0.0
  %v1776 = vmax.f32 %v1719, 0.0
  %v1777 = vmax.f32 %v1722, 0.0
  %v1778 = vmax.f32 %v1724, 0.0
  %v1779 = vmax.f32 %v1727, 0.0
  %v1780 = vmax.f32 %v1729, 0.0
  %v1781 = vmax.f32 %v1732, 0.0
  %v1782 = vmax.f32 %v1734, 0.0
  %v1783 = vmax.f32 %v1737, 0.0
  %v1784 = vmax.f32 %v1739, 0.0
  %v1785 = vmax.f32 %v1742, 0.0
  %v1786 = vmax.f32 %v1744, 0.0
  %v1787 = vmax.f32 %v1747, 0.0
  %v1788 = vmax.f32 %v1749, 0.0
  %v1789 = vmax.f32 %v1752, 0.0
  %v1790 = vmax.f32 %v1754, 0.0
  %v1791 = vmax.f32 %v1757, 0.0
  %v1792 = vmax.f32 %v1759, 0.0
  %v1793 = vpack.c.bf16 %v1762, %v1761
  %v1794 = vpack.c.bf16 %v1764, %v1763
  %v1795 = vpack.c.bf16 %v1766, %v1765
  %v1796 = vpack.c.bf16 %v1768, %v1767
  %v1797 = vpack.c.bf16 %v1770, %v1769
  %v1798 = vpack.c.bf16 %v1772, %v1771
  %v1799 = vpack.c.bf16 %v1774, %v1773
  %v1800 = vpack.c.bf16 %v1776, %v1775
  %v1801 = vpack.c.bf16 %v1778, %v1777
  %v1802 = vpack.c.bf16 %v1780, %v1779
  %v1803 = vpack.c.bf16 %v1782, %v1781
  %v1804 = vpack.c.bf16 %v1784, %v1783
  %v1805 = vpack.c.bf16 %v1786, %v1785
  %v1806 = vpack.c.bf16 %v1788, %v1787
  %v1807 = vpack.c.bf16 %v1790, %v1789
  %v1808 = vpack.c.bf16 %v1792, %v1791
  %v1809 = vld [vmem:[%s9 + $0x2] ss:$0 sm:$0xff]
  %v1818 = vunpack.c.l.b16 %v1354
  %v1819 = vunpack.c.l.b16 %v1355
  %v1820 = vunpack.c.l.b16 %v1356
  %v1821 = vunpack.c.l.b16 %v1357
  %v1822 = vunpack.c.l.b16 %v1358
  %v1823 = vunpack.c.l.b16 %v1359
  %v1824 = vunpack.c.l.b16 %v1360
  %v1825 = vunpack.c.l.b16 %v1361
  %v1826 = vpack.c.b16 %v1819, %v1818
  %v1827 = vpack.c.b16 %v1821, %v1820
  %v1828 = vpack.c.b16 %v1823, %v1822
  %v1829 = vpack.c.b16 %v1825, %v1824
  %v1835 = vsel %vm1623, %v1793, 0
  %v1838 = vsel %vm1623, %v1794, 0
  %v1841 = vsel %vm1623, %v1795, 0
  %v1844 = vsel %vm1623, %v1796, 0
  %v1847 = vsel %vm1623, %v1797, 0
  %v1850 = vsel %vm1623, %v1798, 0
  %v1853 = vsel %vm1623, %v1799, 0
  %v1856 = vsel %vm1623, %v1800, 0
  %v1859 = vsel %vm1623, %v1801, 0
  %v1862 = vsel %vm1623, %v1802, 0
  %v1865 = vsel %vm1623, %v1803, 0
  %v1868 = vsel %vm1623, %v1804, 0
  %v1871 = vsel %vm1623, %v1805, 0
  %v1874 = vsel %vm1623, %v1806, 0
  %v1877 = vsel %vm1623, %v1807, 0
  %v1880 = vsel %vm1623, %v1808, 0
  %1882 = vmatpush.bf16.msra.mxu0 0
  %1883 = vmatpush.bf16.msra.mxu0 0
  %1884 = vmatpush.bf16.msra.mxu0 0
  %1885 = vmatpush.bf16.msra.mxu0 0
  %1886 = vmatpush.bf16.msra.mxu0 %v1829
  %1887 = vmatpush.bf16.msra.mxu0 %v1828
  %1888 = vmatpush.bf16.msra.mxu0 %v1827
  %1889 = vmatpush.bf16.msra.mxu0 %v1826
  %1890 = vmatmul.bf16.gmra.mxu0 %v1835
  %v1891 = vpop.f32.mrf.mxu0
  %v1892 = vadd.f32 %v1809, %v1891
  %v1893 = vpop.f32.mrf.mxu0
  %v1894 = vadd.f32 %v1809, %v1893
  %1895 = vmatmul.bf16.gmra.mxu0 %v1838
  %v1896 = vpop.f32.mrf.mxu0
  %v1897 = vadd.f32 %v1809, %v1896
  %v1898 = vpop.f32.mrf.mxu0
  %v1899 = vadd.f32 %v1809, %v1898
  %1900 = vmatmul.bf16.gmra.mxu0 %v1841
  %v1901 = vpop.f32.mrf.mxu0
  %v1902 = vadd.f32 %v1809, %v1901
  %v1903 = vpop.f32.mrf.mxu0
  %v1904 = vadd.f32 %v1809, %v1903
  %1905 = vmatmul.bf16.gmra.mxu0 %v1844
  %v1906 = vpop.f32.mrf.mxu0
  %v1907 = vadd.f32 %v1809, %v1906
  %v1908 = vpop.f32.mrf.mxu0
  %v1909 = vadd.f32 %v1809, %v1908
  %1910 = vmatmul.bf16.gmra.mxu0 %v1847
  %v1911 = vpop.f32.mrf.mxu0
  %v1912 = vadd.f32 %v1809, %v1911
  %v1913 = vpop.f32.mrf.mxu0
  %v1914 = vadd.f32 %v1809, %v1913
  %1915 = vmatmul.bf16.gmra.mxu0 %v1850
  %v1916 = vpop.f32.mrf.mxu0
  %v1917 = vadd.f32 %v1809, %v1916
  %v1918 = vpop.f32.mrf.mxu0
  %v1919 = vadd.f32 %v1809, %v1918
  %1920 = vmatmul.bf16.gmra.mxu0 %v1853
  %v1921 = vpop.f32.mrf.mxu0
  %v1922 = vadd.f32 %v1809, %v1921
  %v1923 = vpop.f32.mrf.mxu0
  %v1924 = vadd.f32 %v1809, %v1923
  %1925 = vmatmul.bf16.gmra.mxu0 %v1856
  %v1926 = vpop.f32.mrf.mxu0
  %v1927 = vadd.f32 %v1809, %v1926
  %v1928 = vpop.f32.mrf.mxu0
  %v1929 = vadd.f32 %v1809, %v1928
  %1930 = vmatmul.bf16.gmra.mxu0 %v1859
  %v1931 = vpop.f32.mrf.mxu0
  %v1932 = vadd.f32 %v1809, %v1931
  %v1933 = vpop.f32.mrf.mxu0
  %v1934 = vadd.f32 %v1809, %v1933
  %1935 = vmatmul.bf16.gmra.mxu0 %v1862
  %v1936 = vpop.f32.mrf.mxu0
  %v1937 = vadd.f32 %v1809, %v1936
  %v1938 = vpop.f32.mrf.mxu0
  %v1939 = vadd.f32 %v1809, %v1938
  %1940 = vmatmul.bf16.gmra.mxu0 %v1865
  %v1941 = vpop.f32.mrf.mxu0
  %v1942 = vadd.f32 %v1809, %v1941
  %v1943 = vpop.f32.mrf.mxu0
  %v1944 = vadd.f32 %v1809, %v1943
  %1945 = vmatmul.bf16.gmra.mxu0 %v1868
  %v1946 = vpop.f32.mrf.mxu0
  %v1947 = vadd.f32 %v1809, %v1946
  %v1948 = vpop.f32.mrf.mxu0
  %v1949 = vadd.f32 %v1809, %v1948
  %1950 = vmatmul.bf16.gmra.mxu0 %v1871
  %v1951 = vpop.f32.mrf.mxu0
  %v1952 = vadd.f32 %v1809, %v1951
  %v1953 = vpop.f32.mrf.mxu0
  %v1954 = vadd.f32 %v1809, %v1953
  %1955 = vmatmul.bf16.gmra.mxu0 %v1874
  %v1956 = vpop.f32.mrf.mxu0
  %v1957 = vadd.f32 %v1809, %v1956
  %v1958 = vpop.f32.mrf.mxu0
  %v1959 = vadd.f32 %v1809, %v1958
  %1960 = vmatmul.bf16.gmra.mxu0 %v1877
  %v1961 = vpop.f32.mrf.mxu0
  %v1962 = vadd.f32 %v1809, %v1961
  %v1963 = vpop.f32.mrf.mxu0
  %v1964 = vadd.f32 %v1809, %v1963
  %1965 = vmatmul.bf16.gmra.mxu0 %v1880
  %v1966 = vpop.f32.mrf.mxu0
  %v1967 = vadd.f32 %v1809, %v1966
  %v1968 = vpop.f32.mrf.mxu0
  %v1969 = vadd.f32 %v1809, %v1968
  %1970 = vdwg.mxu0
  %v1971 = vmax.f32 %v1892, 0.0
  %v1972 = vmax.f32 %v1894, 0.0
  %v1973 = vmax.f32 %v1897, 0.0
  %v1974 = vmax.f32 %v1899, 0.0
  %v1975 = vmax.f32 %v1902, 0.0
  %v1976 = vmax.f32 %v1904, 0.0
  %v1977 = vmax.f32 %v1907, 0.0
  %v1978 = vmax.f32 %v1909, 0.0
  %v1979 = vmax.f32 %v1912, 0.0
  %v1980 = vmax.f32 %v1914, 0.0
  %v1981 = vmax.f32 %v1917, 0.0
  %v1982 = vmax.f32 %v1919, 0.0
  %v1983 = vmax.f32 %v1922, 0.0
  %v1984 = vmax.f32 %v1924, 0.0
  %v1985 = vmax.f32 %v1927, 0.0
  %v1986 = vmax.f32 %v1929, 0.0
  %v1987 = vmax.f32 %v1932, 0.0
  %v1988 = vmax.f32 %v1934, 0.0
  %v1989 = vmax.f32 %v1937, 0.0
  %v1990 = vmax.f32 %v1939, 0.0
  %v1991 = vmax.f32 %v1942, 0.0
  %v1992 = vmax.f32 %v1944, 0.0
  %v1993 = vmax.f32 %v1947, 0.0
  %v1994 = vmax.f32 %v1949, 0.0
  %v1995 = vmax.f32 %v1952, 0.0
  %v1996 = vmax.f32 %v1954, 0.0
  %v1997 = vmax.f32 %v1957, 0.0
  %v1998 = vmax.f32 %v1959, 0.0
  %v1999 = vmax.f32 %v1962, 0.0
  %v2000 = vmax.f32 %v1964, 0.0
  %v2001 = vmax.f32 %v1967, 0.0
  %v2002 = vmax.f32 %v1969, 0.0
  %v2003 = vpack.c.bf16 %v1972, %v1971
  %v2004 = vpack.c.bf16 %v1974, %v1973
  %v2005 = vpack.c.bf16 %v1976, %v1975
  %v2006 = vpack.c.bf16 %v1978, %v1977
  %v2007 = vpack.c.bf16 %v1980, %v1979
  %v2008 = vpack.c.bf16 %v1982, %v1981
  %v2009 = vpack.c.bf16 %v1984, %v1983
  %v2010 = vpack.c.bf16 %v1986, %v1985
  %v2011 = vpack.c.bf16 %v1988, %v1987
  %v2012 = vpack.c.bf16 %v1990, %v1989
  %v2013 = vpack.c.bf16 %v1992, %v1991
  %v2014 = vpack.c.bf16 %v1994, %v1993
  %v2015 = vpack.c.bf16 %v1996, %v1995
  %v2016 = vpack.c.bf16 %v1998, %v1997
  %v2017 = vpack.c.bf16 %v2000, %v1999
  %v2018 = vpack.c.bf16 %v2002, %v2001
  %v2019 = vld [vmem:[%s9 + $0x3] ss:$0 sm:$0xff]
  %v2028 = vunpack.c.l.b16 %v1362
  %v2029 = vunpack.c.l.b16 %v1363
  %v2030 = vunpack.c.l.b16 %v1364
  %v2031 = vunpack.c.l.b16 %v1365
  %v2032 = vunpack.c.l.b16 %v1366
  %v2033 = vunpack.c.l.b16 %v1367
  %v2034 = vunpack.c.l.b16 %v1368
  %v2035 = vunpack.c.l.b16 %v1369
  %v2036 = vpack.c.b16 %v2029, %v2028
  %v2037 = vpack.c.b16 %v2031, %v2030
  %v2038 = vpack.c.b16 %v2033, %v2032
  %v2039 = vpack.c.b16 %v2035, %v2034
  %v2045 = vsel %vm1623, %v2003, 0
  %v2048 = vsel %vm1623, %v2004, 0
  %v2051 = vsel %vm1623, %v2005, 0
  %v2054 = vsel %vm1623, %v2006, 0
  %v2057 = vsel %vm1623, %v2007, 0
  %v2060 = vsel %vm1623, %v2008, 0
  %v2063 = vsel %vm1623, %v2009, 0
  %v2066 = vsel %vm1623, %v2010, 0
  %v2069 = vsel %vm1623, %v2011, 0
  %v2072 = vsel %vm1623, %v2012, 0
  %v2075 = vsel %vm1623, %v2013, 0
  %v2078 = vsel %vm1623, %v2014, 0
  %v2081 = vsel %vm1623, %v2015, 0
  %v2084 = vsel %vm1623, %v2016, 0
  %v2087 = vsel %vm1623, %v2017, 0
  %v2090 = vsel %vm1623, %v2018, 0
  %2092 = vmatpush.bf16.msra.mxu0 0
  %2093 = vmatpush.bf16.msra.mxu0 0
  %2094 = vmatpush.bf16.msra.mxu0 0
  %2095 = vmatpush.bf16.msra.mxu0 0
  %2096 = vmatpush.bf16.msra.mxu0 %v2039
  %2097 = vmatpush.bf16.msra.mxu0 %v2038
  %2098 = vmatpush.bf16.msra.mxu0 %v2037
  %2099 = vmatpush.bf16.msra.mxu0 %v2036
  %2100 = vmatmul.bf16.gmra.mxu0 %v2045
  %v2101 = vpop.f32.mrf.mxu0
  %v2102 = vadd.f32 %v2019, %v2101
  %v2103 = vpop.f32.mrf.mxu0
  %v2104 = vadd.f32 %v2019, %v2103
  %2105 = vmatmul.bf16.gmra.mxu0 %v2048
  %v2106 = vpop.f32.mrf.mxu0
  %v2107 = vadd.f32 %v2019, %v2106
  %v2108 = vpop.f32.mrf.mxu0
  %v2109 = vadd.f32 %v2019, %v2108
  %2110 = vmatmul.bf16.gmra.mxu0 %v2051
  %v2111 = vpop.f32.mrf.mxu0
  %v2112 = vadd.f32 %v2019, %v2111
  %v2113 = vpop.f32.mrf.mxu0
  %v2114 = vadd.f32 %v2019, %v2113
  %2115 = vmatmul.bf16.gmra.mxu0 %v2054
  %v2116 = vpop.f32.mrf.mxu0
  %v2117 = vadd.f32 %v2019, %v2116
  %v2118 = vpop.f32.mrf.mxu0
  %v2119 = vadd.f32 %v2019, %v2118
  %2120 = vmatmul.bf16.gmra.mxu0 %v2057
  %v2121 = vpop.f32.mrf.mxu0
  %v2122 = vadd.f32 %v2019, %v2121
  %v2123 = vpop.f32.mrf.mxu0
  %v2124 = vadd.f32 %v2019, %v2123
  %2125 = vmatmul.bf16.gmra.mxu0 %v2060
  %v2126 = vpop.f32.mrf.mxu0
  %v2127 = vadd.f32 %v2019, %v2126
  %v2128 = vpop.f32.mrf.mxu0
  %v2129 = vadd.f32 %v2019, %v2128
  %2130 = vmatmul.bf16.gmra.mxu0 %v2063
  %v2131 = vpop.f32.mrf.mxu0
  %v2132 = vadd.f32 %v2019, %v2131
  %v2133 = vpop.f32.mrf.mxu0
  %v2134 = vadd.f32 %v2019, %v2133
  %2135 = vmatmul.bf16.gmra.mxu0 %v2066
  %v2136 = vpop.f32.mrf.mxu0
  %v2137 = vadd.f32 %v2019, %v2136
  %v2138 = vpop.f32.mrf.mxu0
  %v2139 = vadd.f32 %v2019, %v2138
  %2140 = vmatmul.bf16.gmra.mxu0 %v2069
  %v2141 = vpop.f32.mrf.mxu0
  %v2142 = vadd.f32 %v2019, %v2141
  %v2143 = vpop.f32.mrf.mxu0
  %v2144 = vadd.f32 %v2019, %v2143
  %2145 = vmatmul.bf16.gmra.mxu0 %v2072
  %v2146 = vpop.f32.mrf.mxu0
  %v2147 = vadd.f32 %v2019, %v2146
  %v2148 = vpop.f32.mrf.mxu0
  %v2149 = vadd.f32 %v2019, %v2148
  %2150 = vmatmul.bf16.gmra.mxu0 %v2075
  %v2151 = vpop.f32.mrf.mxu0
  %v2152 = vadd.f32 %v2019, %v2151
  %v2153 = vpop.f32.mrf.mxu0
  %v2154 = vadd.f32 %v2019, %v2153
  %2155 = vmatmul.bf16.gmra.mxu0 %v2078
  %v2156 = vpop.f32.mrf.mxu0
  %v2157 = vadd.f32 %v2019, %v2156
  %v2158 = vpop.f32.mrf.mxu0
  %v2159 = vadd.f32 %v2019, %v2158
  %2160 = vmatmul.bf16.gmra.mxu0 %v2081
  %v2161 = vpop.f32.mrf.mxu0
  %v2162 = vadd.f32 %v2019, %v2161
  %v2163 = vpop.f32.mrf.mxu0
  %v2164 = vadd.f32 %v2019, %v2163
  %2165 = vmatmul.bf16.gmra.mxu0 %v2084
  %v2166 = vpop.f32.mrf.mxu0
  %v2167 = vadd.f32 %v2019, %v2166
  %v2168 = vpop.f32.mrf.mxu0
  %v2169 = vadd.f32 %v2019, %v2168
  %2170 = vmatmul.bf16.gmra.mxu0 %v2087
  %v2171 = vpop.f32.mrf.mxu0
  %v2172 = vadd.f32 %v2019, %v2171
  %v2173 = vpop.f32.mrf.mxu0
  %v2174 = vadd.f32 %v2019, %v2173
  %2175 = vmatmul.bf16.gmra.mxu0 %v2090
  %v2176 = vpop.f32.mrf.mxu0
  %v2177 = vadd.f32 %v2019, %v2176
  %v2178 = vpop.f32.mrf.mxu0
  %v2179 = vadd.f32 %v2019, %v2178
  %2180 = vdwg.mxu0
  %v2181 = vmax.f32 %v2102, 0.0
  %v2182 = vmax.f32 %v2104, 0.0
  %v2183 = vmax.f32 %v2107, 0.0
  %v2184 = vmax.f32 %v2109, 0.0
  %v2185 = vmax.f32 %v2112, 0.0
  %v2186 = vmax.f32 %v2114, 0.0
  %v2187 = vmax.f32 %v2117, 0.0
  %v2188 = vmax.f32 %v2119, 0.0
  %v2189 = vmax.f32 %v2122, 0.0
  %v2190 = vmax.f32 %v2124, 0.0
  %v2191 = vmax.f32 %v2127, 0.0
  %v2192 = vmax.f32 %v2129, 0.0
  %v2193 = vmax.f32 %v2132, 0.0
  %v2194 = vmax.f32 %v2134, 0.0
  %v2195 = vmax.f32 %v2137, 0.0
  %v2196 = vmax.f32 %v2139, 0.0
  %v2197 = vmax.f32 %v2142, 0.0
  %v2198 = vmax.f32 %v2144, 0.0
  %v2199 = vmax.f32 %v2147, 0.0
  %v2200 = vmax.f32 %v2149, 0.0
  %v2201 = vmax.f32 %v2152, 0.0
  %v2202 = vmax.f32 %v2154, 0.0
  %v2203 = vmax.f32 %v2157, 0.0
  %v2204 = vmax.f32 %v2159, 0.0
  %v2205 = vmax.f32 %v2162, 0.0
  %v2206 = vmax.f32 %v2164, 0.0
  %v2207 = vmax.f32 %v2167, 0.0
  %v2208 = vmax.f32 %v2169, 0.0
  %v2209 = vmax.f32 %v2172, 0.0
  %v2210 = vmax.f32 %v2174, 0.0
  %v2211 = vmax.f32 %v2177, 0.0
  %v2212 = vmax.f32 %v2179, 0.0
  %v2213 = vld [vmem:[%s3] sm:$0xff]
  %v2214 = vld [vmem:[%s3 + $0x8] sm:$0xff]
  %v2215 = vld [vmem:[%s3 + $0x10] sm:$0xff]
  %v2216 = vld [vmem:[%s3 + $0x18] sm:$0xff]
  %v2217 = vld [vmem:[%s3 + $0x20] sm:$0xff]
  %v2218 = vld [vmem:[%s3 + $0x28] sm:$0xff]
  %v2219 = vld [vmem:[%s3 + $0x30] sm:$0xff]
  %v2220 = vld [vmem:[%s3 + $0x38] sm:$0xff]
  %v2221 = vld [vmem:[%s3 + $0x40] sm:$0xff]
  %v2222 = vld [vmem:[%s3 + $0x48] sm:$0xff]
  %v2223 = vld [vmem:[%s3 + $0x50] sm:$0xff]
  %v2224 = vld [vmem:[%s3 + $0x58] sm:$0xff]
  %v2225 = vld [vmem:[%s3 + $0x60] sm:$0xff]
  %v2226 = vld [vmem:[%s3 + $0x68] sm:$0xff]
  %v2227 = vld [vmem:[%s3 + $0x70] sm:$0xff]
  %v2228 = vld [vmem:[%s3 + $0x78] sm:$0xff]
  %v2229 = vld [vmem:[%s3 + $0x80] sm:$0xff]
  %v2230 = vld [vmem:[%s3 + $0x88] sm:$0xff]
  %v2231 = vld [vmem:[%s3 + $0x90] sm:$0xff]
  %v2232 = vld [vmem:[%s3 + $0x98] sm:$0xff]
  %v2233 = vld [vmem:[%s3 + $0xa0] sm:$0xff]
  %v2234 = vld [vmem:[%s3 + $0xa8] sm:$0xff]
  %v2235 = vld [vmem:[%s3 + $0xb0] sm:$0xff]
  %v2236 = vld [vmem:[%s3 + $0xb8] sm:$0xff]
  %v2237 = vld [vmem:[%s3 + $0xc0] sm:$0xff]
  %v2238 = vld [vmem:[%s3 + $0xc8] sm:$0xff]
  %v2239 = vld [vmem:[%s3 + $0xd0] sm:$0xff]
  %v2240 = vld [vmem:[%s3 + $0xd8] sm:$0xff]
  %v2241 = vld [vmem:[%s3 + $0xe0] sm:$0xff]
  %v2242 = vld [vmem:[%s3 + $0xe8] sm:$0xff]
  %v2243 = vld [vmem:[%s3 + $0xf0] sm:$0xff]
  %v2244 = vld [vmem:[%s3 + $0xf8] sm:$0xff]
  %v2245 = vld [vmem:[%s3 + $0x100] sm:$0xff]
  %v2246 = vld [vmem:[%s3 + $0x108] sm:$0xff]
  %v2247 = vld [vmem:[%s3 + $0x110] sm:$0xff]
  %v2248 = vld [vmem:[%s3 + $0x118] sm:$0xff]
  %v2249 = vld [vmem:[%s3 + $0x120] sm:$0xff]
  %v2250 = vld [vmem:[%s3 + $0x128] sm:$0xff]
  %v2251 = vld [vmem:[%s3 + $0x130] sm:$0xff]
  %v2252 = vld [vmem:[%s3 + $0x138] sm:$0xff]
  %v2253 = vld [vmem:[%s3 + $0x140] sm:$0xff]
  %v2254 = vld [vmem:[%s3 + $0x148] sm:$0xff]
  %v2255 = vld [vmem:[%s3 + $0x150] sm:$0xff]
  %v2256 = vld [vmem:[%s3 + $0x158] sm:$0xff]
  %v2257 = vld [vmem:[%s3 + $0x160] sm:$0xff]
  %v2258 = vld [vmem:[%s3 + $0x168] sm:$0xff]
  %v2259 = vld [vmem:[%s3 + $0x170] sm:$0xff]
  %v2260 = vld [vmem:[%s3 + $0x178] sm:$0xff]
  %v2261 = vld [vmem:[%s3 + $0x180] sm:$0xff]
  %v2262 = vld [vmem:[%s3 + $0x188] sm:$0xff]
  %v2263 = vld [vmem:[%s3 + $0x190] sm:$0xff]
  %v2264 = vld [vmem:[%s3 + $0x198] sm:$0xff]
  %v2265 = vld [vmem:[%s3 + $0x1a0] sm:$0xff]
  %v2266 = vld [vmem:[%s3 + $0x1a8] sm:$0xff]
  %v2267 = vld [vmem:[%s3 + $0x1b0] sm:$0xff]
  %v2268 = vld [vmem:[%s3 + $0x1b8] sm:$0xff]
  %v2269 = vld [vmem:[%s3 + $0x1c0] sm:$0xff]
  %v2270 = vld [vmem:[%s3 + $0x1c8] sm:$0xff]
  %v2271 = vld [vmem:[%s3 + $0x1d0] sm:$0xff]
  %v2272 = vld [vmem:[%s3 + $0x1d8] sm:$0xff]
  %v2273 = vld [vmem:[%s3 + $0x1e0] sm:$0xff]
  %v2274 = vld [vmem:[%s3 + $0x1e8] sm:$0xff]
  %v2275 = vld [vmem:[%s3 + $0x1f0] sm:$0xff]
  %v2276 = vld [vmem:[%s3 + $0x1f8] sm:$0xff]
  %v2277 = vpack.c.bf16 %v2182, %v2181
  %v2278 = vpack.c.bf16 %v2184, %v2183
  %v2279 = vpack.c.bf16 %v2186, %v2185
  %v2280 = vpack.c.bf16 %v2188, %v2187
  %v2281 = vpack.c.bf16 %v2190, %v2189
  %v2282 = vpack.c.bf16 %v2192, %v2191
  %v2283 = vpack.c.bf16 %v2194, %v2193
  %v2284 = vpack.c.bf16 %v2196, %v2195
  %v2285 = vpack.c.bf16 %v2198, %v2197
  %v2286 = vpack.c.bf16 %v2200, %v2199
  %v2287 = vpack.c.bf16 %v2202, %v2201
  %v2288 = vpack.c.bf16 %v2204, %v2203
  %v2289 = vpack.c.bf16 %v2206, %v2205
  %v2290 = vpack.c.bf16 %v2208, %v2207
  %v2291 = vpack.c.bf16 %v2210, %v2209
  %v2292 = vpack.c.bf16 %v2212, %v2211
  %s2293 = scalar_lea.vmem %s9, 4
  %v2294 = vld [vmem:[%s2293] ss:$8 sm:$0xf]
  %v2295 = vld [vmem:[%s2293] ss:$8 sm:$0xf0]
  %v2296 = vor.u32 %v2294, %v2295
  %v2298 = vperm.slane %v2296, 0
  %v2299 = vperm.slane %v2296, 1
  %v2300 = vperm.slane %v2296, 2
  %v2301 = vperm.slane %v2296, 3
  %v2302 = vperm.slane %v2296, 4
  %v2303 = vperm.slane %v2296, 5
  %v2304 = vperm.slane %v2296, 6
  %v2305 = vperm.slane %v2296, 7
  %v2378 = vunpack.c.l.b16 %v2213
  %v2379 = vunpack.c.h.b16 %v2213
  %v2380 = vunpack.c.l.b16 %v2214
  %v2381 = vunpack.c.h.b16 %v2214
  %v2382 = vunpack.c.l.b16 %v2215
  %v2383 = vunpack.c.h.b16 %v2215
  %v2384 = vunpack.c.l.b16 %v2216
  %v2385 = vunpack.c.h.b16 %v2216
  %v2386 = vunpack.c.l.b16 %v2217
  %v2387 = vunpack.c.h.b16 %v2217
  %v2388 = vunpack.c.l.b16 %v2218
  %v2389 = vunpack.c.h.b16 %v2218
  %v2390 = vunpack.c.l.b16 %v2219
  %v2391 = vunpack.c.h.b16 %v2219
  %v2392 = vunpack.c.l.b16 %v2220
  %v2393 = vunpack.c.h.b16 %v2220
  %v2394 = vunpack.c.l.b16 %v2221
  %v2395 = vunpack.c.h.b16 %v2221
  %v2396 = vunpack.c.l.b16 %v2222
  %v2397 = vunpack.c.h.b16 %v2222
  %v2398 = vunpack.c.l.b16 %v2223
  %v2399 = vunpack.c.h.b16 %v2223
  %v2400 = vunpack.c.l.b16 %v2224
  %v2401 = vunpack.c.h.b16 %v2224
  %v2402 = vunpack.c.l.b16 %v2225
  %v2403 = vunpack.c.h.b16 %v2225
  %v2404 = vunpack.c.l.b16 %v2226
  %v2405 = vunpack.c.h.b16 %v2226
  %v2406 = vunpack.c.l.b16 %v2227
  %v2407 = vunpack.c.h.b16 %v2227
  %v2408 = vunpack.c.l.b16 %v2228
  %v2409 = vunpack.c.h.b16 %v2228
  %v2410 = vunpack.c.l.b16 %v2229
  %v2411 = vunpack.c.h.b16 %v2229
  %v2412 = vunpack.c.l.b16 %v2230
  %v2413 = vunpack.c.h.b16 %v2230
  %v2414 = vunpack.c.l.b16 %v2231
  %v2415 = vunpack.c.h.b16 %v2231
  %v2416 = vunpack.c.l.b16 %v2232
  %v2417 = vunpack.c.h.b16 %v2232
  %v2418 = vunpack.c.l.b16 %v2233
  %v2419 = vunpack.c.h.b16 %v2233
  %v2420 = vunpack.c.l.b16 %v2234
  %v2421 = vunpack.c.h.b16 %v2234
  %v2422 = vunpack.c.l.b16 %v2235
  %v2423 = vunpack.c.h.b16 %v2235
  %v2424 = vunpack.c.l.b16 %v2236
  %v2425 = vunpack.c.h.b16 %v2236
  %v2426 = vunpack.c.l.b16 %v2237
  %v2427 = vunpack.c.h.b16 %v2237
  %v2428 = vunpack.c.l.b16 %v2238
  %v2429 = vunpack.c.h.b16 %v2238
  %v2430 = vunpack.c.l.b16 %v2239
  %v2431 = vunpack.c.h.b16 %v2239
  %v2432 = vunpack.c.l.b16 %v2240
  %v2433 = vunpack.c.h.b16 %v2240
  %v2434 = vunpack.c.l.b16 %v2241
  %v2435 = vunpack.c.h.b16 %v2241
  %v2436 = vunpack.c.l.b16 %v2242
  %v2437 = vunpack.c.h.b16 %v2242
  %v2438 = vunpack.c.l.b16 %v2243
  %v2439 = vunpack.c.h.b16 %v2243
  %v2440 = vunpack.c.l.b16 %v2244
  %v2441 = vunpack.c.h.b16 %v2244
  %v2442 = vunpack.c.l.b16 %v2245
  %v2443 = vunpack.c.h.b16 %v2245
  %v2444 = vunpack.c.l.b16 %v2246
  %v2445 = vunpack.c.h.b16 %v2246
  %v2446 = vunpack.c.l.b16 %v2247
  %v2447 = vunpack.c.h.b16 %v2247
  %v2448 = vunpack.c.l.b16 %v2248
  %v2449 = vunpack.c.h.b16 %v2248
  %v2450 = vunpack.c.l.b16 %v2249
  %v2451 = vunpack.c.h.b16 %v2249
  %v2452 = vunpack.c.l.b16 %v2250
  %v2453 = vunpack.c.h.b16 %v2250
  %v2454 = vunpack.c.l.b16 %v2251
  %v2455 = vunpack.c.h.b16 %v2251
  %v2456 = vunpack.c.l.b16 %v2252
  %v2457 = vunpack.c.h.b16 %v2252
  %v2458 = vunpack.c.l.b16 %v2253
  %v2459 = vunpack.c.h.b16 %v2253
  %v2460 = vunpack.c.l.b16 %v2254
  %v2461 = vunpack.c.h.b16 %v2254
  %v2462 = vunpack.c.l.b16 %v2255
  %v2463 = vunpack.c.h.b16 %v2255
  %v2464 = vunpack.c.l.b16 %v2256
  %v2465 = vunpack.c.h.b16 %v2256
  %v2466 = vunpack.c.l.b16 %v2257
  %v2467 = vunpack.c.h.b16 %v2257
  %v2468 = vunpack.c.l.b16 %v2258
  %v2469 = vunpack.c.h.b16 %v2258
  %v2470 = vunpack.c.l.b16 %v2259
  %v2471 = vunpack.c.h.b16 %v2259
  %v2472 = vunpack.c.l.b16 %v2260
  %v2473 = vunpack.c.h.b16 %v2260
  %v2474 = vunpack.c.l.b16 %v2261
  %v2475 = vunpack.c.h.b16 %v2261
  %v2476 = vunpack.c.l.b16 %v2262
  %v2477 = vunpack.c.h.b16 %v2262
  %v2478 = vunpack.c.l.b16 %v2263
  %v2479 = vunpack.c.h.b16 %v2263
  %v2480 = vunpack.c.l.b16 %v2264
  %v2481 = vunpack.c.h.b16 %v2264
  %v2482 = vunpack.c.l.b16 %v2265
  %v2483 = vunpack.c.h.b16 %v2265
  %v2484 = vunpack.c.l.b16 %v2266
  %v2485 = vunpack.c.h.b16 %v2266
  %v2486 = vunpack.c.l.b16 %v2267
  %v2487 = vunpack.c.h.b16 %v2267
  %v2488 = vunpack.c.l.b16 %v2268
  %v2489 = vunpack.c.h.b16 %v2268
  %v2490 = vunpack.c.l.b16 %v2269
  %v2491 = vunpack.c.h.b16 %v2269
  %v2492 = vunpack.c.l.b16 %v2270
  %v2493 = vunpack.c.h.b16 %v2270
  %v2494 = vunpack.c.l.b16 %v2271
  %v2495 = vunpack.c.h.b16 %v2271
  %v2496 = vunpack.c.l.b16 %v2272
  %v2497 = vunpack.c.h.b16 %v2272
  %v2498 = vunpack.c.l.b16 %v2273
  %v2499 = vunpack.c.h.b16 %v2273
  %v2500 = vunpack.c.l.b16 %v2274
  %v2501 = vunpack.c.h.b16 %v2274
  %v2502 = vunpack.c.l.b16 %v2275
  %v2503 = vunpack.c.h.b16 %v2275
  %v2504 = vunpack.c.l.b16 %v2276
  %v2505 = vunpack.c.h.b16 %v2276
  %v2506 = vpack.c.b16 %v2386, %v2378
  %v2507 = vpack.c.b16 %v2387, %v2379
  %v2508 = vpack.c.b16 %v2388, %v2380
  %v2509 = vpack.c.b16 %v2389, %v2381
  %v2510 = vpack.c.b16 %v2390, %v2382
  %v2511 = vpack.c.b16 %v2391, %v2383
  %v2512 = vpack.c.b16 %v2392, %v2384
  %v2513 = vpack.c.b16 %v2393, %v2385
  %v2514 = vpack.c.b16 %v2402, %v2394
  %v2515 = vpack.c.b16 %v2403, %v2395
  %v2516 = vpack.c.b16 %v2404, %v2396
  %v2517 = vpack.c.b16 %v2405, %v2397
  %v2518 = vpack.c.b16 %v2406, %v2398
  %v2519 = vpack.c.b16 %v2407, %v2399
  %v2520 = vpack.c.b16 %v2408, %v2400
  %v2521 = vpack.c.b16 %v2409, %v2401
  %v2522 = vpack.c.b16 %v2418, %v2410
  %v2523 = vpack.c.b16 %v2419, %v2411
  %v2524 = vpack.c.b16 %v2420, %v2412
  %v2525 = vpack.c.b16 %v2421, %v2413
  %v2526 = vpack.c.b16 %v2422, %v2414
  %v2527 = vpack.c.b16 %v2423, %v2415
  %v2528 = vpack.c.b16 %v2424, %v2416
  %v2529 = vpack.c.b16 %v2425, %v2417
  %v2530 = vpack.c.b16 %v2434, %v2426
  %v2531 = vpack.c.b16 %v2435, %v2427
  %v2532 = vpack.c.b16 %v2436, %v2428
  %v2533 = vpack.c.b16 %v2437, %v2429
  %v2534 = vpack.c.b16 %v2438, %v2430
  %v2535 = vpack.c.b16 %v2439, %v2431
  %v2536 = vpack.c.b16 %v2440, %v2432
  %v2537 = vpack.c.b16 %v2441, %v2433
  %v2538 = vpack.c.b16 %v2450, %v2442
  %v2539 = vpack.c.b16 %v2451, %v2443
  %v2540 = vpack.c.b16 %v2452, %v2444
  %v2541 = vpack.c.b16 %v2453, %v2445
  %v2542 = vpack.c.b16 %v2454, %v2446
  %v2543 = vpack.c.b16 %v2455, %v2447
  %v2544 = vpack.c.b16 %v2456, %v2448
  %v2545 = vpack.c.b16 %v2457, %v2449
  %v2546 = vpack.c.b16 %v2466, %v2458
  %v2547 = vpack.c.b16 %v2467, %v2459
  %v2548 = vpack.c.b16 %v2468, %v2460
  %v2549 = vpack.c.b16 %v2469, %v2461
  %v2550 = vpack.c.b16 %v2470, %v2462
  %v2551 = vpack.c.b16 %v2471, %v2463
  %v2552 = vpack.c.b16 %v2472, %v2464
  %v2553 = vpack.c.b16 %v2473, %v2465
  %v2554 = vpack.c.b16 %v2482, %v2474
  %v2555 = vpack.c.b16 %v2483, %v2475
  %v2556 = vpack.c.b16 %v2484, %v2476
  %v2557 = vpack.c.b16 %v2485, %v2477
  %v2558 = vpack.c.b16 %v2486, %v2478
  %v2559 = vpack.c.b16 %v2487, %v2479
  %v2560 = vpack.c.b16 %v2488, %v2480
  %v2561 = vpack.c.b16 %v2489, %v2481
  %v2562 = vpack.c.b16 %v2498, %v2490
  %v2563 = vpack.c.b16 %v2499, %v2491
  %v2564 = vpack.c.b16 %v2500, %v2492
  %v2565 = vpack.c.b16 %v2501, %v2493
  %v2566 = vpack.c.b16 %v2502, %v2494
  %v2567 = vpack.c.b16 %v2503, %v2495
  %v2568 = vpack.c.b16 %v2504, %v2496
  %v2569 = vpack.c.b16 %v2505, %v2497
  %2634 = vmatpush.bf16.msra.mxu0 %v2562
  %2635 = vmatpush.bf16.msra.mxu0 %v2554
  %2636 = vmatpush.bf16.msra.mxu0 %v2546
  %2637 = vmatpush.bf16.msra.mxu0 %v2538
  %2638 = vmatpush.bf16.msra.mxu0 %v2530
  %2639 = vmatpush.bf16.msra.mxu0 %v2522
  %2640 = vmatpush.bf16.msra.mxu0 %v2514
  %2641 = vmatpush.bf16.msra.mxu0 %v2506
  %2642 = vmatmul.bf16.gmra.mxu0 %v2277
  %v2643 = vpop.f32.mrf.mxu0
  %v2644 = vadd.f32 %v2298, %v2643
  %v2645 = vpop.f32.mrf.mxu0
  %v2646 = vadd.f32 %v2298, %v2645
  %2647 = vmatmul.bf16.gmra.mxu0 %v2278
  %v2648 = vpop.f32.mrf.mxu0
  %v2649 = vadd.f32 %v2298, %v2648
  %v2650 = vpop.f32.mrf.mxu0
  %v2651 = vadd.f32 %v2298, %v2650
  %2652 = vmatmul.bf16.gmra.mxu0 %v2279
  %v2653 = vpop.f32.mrf.mxu0
  %v2654 = vadd.f32 %v2298, %v2653
  %v2655 = vpop.f32.mrf.mxu0
  %v2656 = vadd.f32 %v2298, %v2655
  %2657 = vmatmul.bf16.gmra.mxu0 %v2280
  %v2658 = vpop.f32.mrf.mxu0
  %v2659 = vadd.f32 %v2298, %v2658
  %v2660 = vpop.f32.mrf.mxu0
  %v2661 = vadd.f32 %v2298, %v2660
  %2662 = vmatmul.bf16.gmra.mxu0 %v2281
  %v2663 = vpop.f32.mrf.mxu0
  %v2664 = vadd.f32 %v2298, %v2663
  %v2665 = vpop.f32.mrf.mxu0
  %v2666 = vadd.f32 %v2298, %v2665
  %2667 = vmatmul.bf16.gmra.mxu0 %v2282
  %v2668 = vpop.f32.mrf.mxu0
  %v2669 = vadd.f32 %v2298, %v2668
  %v2670 = vpop.f32.mrf.mxu0
  %v2671 = vadd.f32 %v2298, %v2670
  %2672 = vmatmul.bf16.gmra.mxu0 %v2283
  %v2673 = vpop.f32.mrf.mxu0
  %v2674 = vadd.f32 %v2298, %v2673
  %v2675 = vpop.f32.mrf.mxu0
  %v2676 = vadd.f32 %v2298, %v2675
  %2677 = vmatmul.bf16.gmra.mxu0 %v2284
  %v2678 = vpop.f32.mrf.mxu0
  %v2679 = vadd.f32 %v2298, %v2678
  %v2680 = vpop.f32.mrf.mxu0
  %v2681 = vadd.f32 %v2298, %v2680
  %2682 = vmatmul.bf16.gmra.mxu0 %v2285
  %v2683 = vpop.f32.mrf.mxu0
  %v2684 = vadd.f32 %v2298, %v2683
  %v2685 = vpop.f32.mrf.mxu0
  %v2686 = vadd.f32 %v2298, %v2685
  %2687 = vmatmul.bf16.gmra.mxu0 %v2286
  %v2688 = vpop.f32.mrf.mxu0
  %v2689 = vadd.f32 %v2298, %v2688
  %v2690 = vpop.f32.mrf.mxu0
  %v2691 = vadd.f32 %v2298, %v2690
  %2692 = vmatmul.bf16.gmra.mxu0 %v2287
  %v2693 = vpop.f32.mrf.mxu0
  %v2694 = vadd.f32 %v2298, %v2693
  %v2695 = vpop.f32.mrf.mxu0
  %v2696 = vadd.f32 %v2298, %v2695
  %2697 = vmatmul.bf16.gmra.mxu0 %v2288
  %v2698 = vpop.f32.mrf.mxu0
  %v2699 = vadd.f32 %v2298, %v2698
  %v2700 = vpop.f32.mrf.mxu0
  %v2701 = vadd.f32 %v2298, %v2700
  %2702 = vmatmul.bf16.gmra.mxu0 %v2289
  %v2703 = vpop.f32.mrf.mxu0
  %v2704 = vadd.f32 %v2298, %v2703
  %v2705 = vpop.f32.mrf.mxu0
  %v2706 = vadd.f32 %v2298, %v2705
  %2707 = vmatmul.bf16.gmra.mxu0 %v2290
  %v2708 = vpop.f32.mrf.mxu0
  %v2709 = vadd.f32 %v2298, %v2708
  %v2710 = vpop.f32.mrf.mxu0
  %v2711 = vadd.f32 %v2298, %v2710
  %2712 = vmatmul.bf16.gmra.mxu0 %v2291
  %v2713 = vpop.f32.mrf.mxu0
  %v2714 = vadd.f32 %v2298, %v2713
  %v2715 = vpop.f32.mrf.mxu0
  %v2716 = vadd.f32 %v2298, %v2715
  %2717 = vmatmul.bf16.gmra.mxu0 %v2292
  %v2718 = vpop.f32.mrf.mxu0
  %v2719 = vadd.f32 %v2298, %v2718
  %v2720 = vpop.f32.mrf.mxu0
  %v2721 = vadd.f32 %v2298, %v2720
  %2722 = vdwg.mxu0
  %2723 = vmatpush.bf16.msra.mxu0 %v2563
  %2724 = vmatpush.bf16.msra.mxu0 %v2555
  %2725 = vmatpush.bf16.msra.mxu0 %v2547
  %2726 = vmatpush.bf16.msra.mxu0 %v2539
  %2727 = vmatpush.bf16.msra.mxu0 %v2531
  %2728 = vmatpush.bf16.msra.mxu0 %v2523
  %2729 = vmatpush.bf16.msra.mxu0 %v2515
  %2730 = vmatpush.bf16.msra.mxu0 %v2507
  %2731 = vmatmul.bf16.gmra.mxu0 %v2277
  %v2732 = vpop.f32.mrf.mxu0
  %v2733 = vadd.f32 %v2299, %v2732
  %v2734 = vpop.f32.mrf.mxu0
  %v2735 = vadd.f32 %v2299, %v2734
  %2736 = vmatmul.bf16.gmra.mxu0 %v2278
  %v2737 = vpop.f32.mrf.mxu0
  %v2738 = vadd.f32 %v2299, %v2737
  %v2739 = vpop.f32.mrf.mxu0
  %v2740 = vadd.f32 %v2299, %v2739
  %2741 = vmatmul.bf16.gmra.mxu0 %v2279
  %v2742 = vpop.f32.mrf.mxu0
  %v2743 = vadd.f32 %v2299, %v2742
  %v2744 = vpop.f32.mrf.mxu0
  %v2745 = vadd.f32 %v2299, %v2744
  %2746 = vmatmul.bf16.gmra.mxu0 %v2280
  %v2747 = vpop.f32.mrf.mxu0
  %v2748 = vadd.f32 %v2299, %v2747
  %v2749 = vpop.f32.mrf.mxu0
  %v2750 = vadd.f32 %v2299, %v2749
  %2751 = vmatmul.bf16.gmra.mxu0 %v2281
  %v2752 = vpop.f32.mrf.mxu0
  %v2753 = vadd.f32 %v2299, %v2752
  %v2754 = vpop.f32.mrf.mxu0
  %v2755 = vadd.f32 %v2299, %v2754
  %2756 = vmatmul.bf16.gmra.mxu0 %v2282
  %v2757 = vpop.f32.mrf.mxu0
  %v2758 = vadd.f32 %v2299, %v2757
  %v2759 = vpop.f32.mrf.mxu0
  %v2760 = vadd.f32 %v2299, %v2759
  %2761 = vmatmul.bf16.gmra.mxu0 %v2283
  %v2762 = vpop.f32.mrf.mxu0
  %v2763 = vadd.f32 %v2299, %v2762
  %v2764 = vpop.f32.mrf.mxu0
  %v2765 = vadd.f32 %v2299, %v2764
  %2766 = vmatmul.bf16.gmra.mxu0 %v2284
  %v2767 = vpop.f32.mrf.mxu0
  %v2768 = vadd.f32 %v2299, %v2767
  %v2769 = vpop.f32.mrf.mxu0
  %v2770 = vadd.f32 %v2299, %v2769
  %2771 = vmatmul.bf16.gmra.mxu0 %v2285
  %v2772 = vpop.f32.mrf.mxu0
  %v2773 = vadd.f32 %v2299, %v2772
  %v2774 = vpop.f32.mrf.mxu0
  %v2775 = vadd.f32 %v2299, %v2774
  %2776 = vmatmul.bf16.gmra.mxu0 %v2286
  %v2777 = vpop.f32.mrf.mxu0
  %v2778 = vadd.f32 %v2299, %v2777
  %v2779 = vpop.f32.mrf.mxu0
  %v2780 = vadd.f32 %v2299, %v2779
  %2781 = vmatmul.bf16.gmra.mxu0 %v2287
  %v2782 = vpop.f32.mrf.mxu0
  %v2783 = vadd.f32 %v2299, %v2782
  %v2784 = vpop.f32.mrf.mxu0
  %v2785 = vadd.f32 %v2299, %v2784
  %2786 = vmatmul.bf16.gmra.mxu0 %v2288
  %v2787 = vpop.f32.mrf.mxu0
  %v2788 = vadd.f32 %v2299, %v2787
  %v2789 = vpop.f32.mrf.mxu0
  %v2790 = vadd.f32 %v2299, %v2789
  %2791 = vmatmul.bf16.gmra.mxu0 %v2289
  %v2792 = vpop.f32.mrf.mxu0
  %v2793 = vadd.f32 %v2299, %v2792
  %v2794 = vpop.f32.mrf.mxu0
  %v2795 = vadd.f32 %v2299, %v2794
  %2796 = vmatmul.bf16.gmra.mxu0 %v2290
  %v2797 = vpop.f32.mrf.mxu0
  %v2798 = vadd.f32 %v2299, %v2797
  %v2799 = vpop.f32.mrf.mxu0
  %v2800 = vadd.f32 %v2299, %v2799
  %2801 = vmatmul.bf16.gmra.mxu0 %v2291
  %v2802 = vpop.f32.mrf.mxu0
  %v2803 = vadd.f32 %v2299, %v2802
  %v2804 = vpop.f32.mrf.mxu0
  %v2805 = vadd.f32 %v2299, %v2804
  %2806 = vmatmul.bf16.gmra.mxu0 %v2292
  %v2807 = vpop.f32.mrf.mxu0
  %v2808 = vadd.f32 %v2299, %v2807
  %v2809 = vpop.f32.mrf.mxu0
  %v2810 = vadd.f32 %v2299, %v2809
  %2811 = vdwg.mxu0
  %2812 = vmatpush.bf16.msra.mxu0 %v2564
  %2813 = vmatpush.bf16.msra.mxu0 %v2556
  %2814 = vmatpush.bf16.msra.mxu0 %v2548
  %2815 = vmatpush.bf16.msra.mxu0 %v2540
  %2816 = vmatpush.bf16.msra.mxu0 %v2532
  %2817 = vmatpush.bf16.msra.mxu0 %v2524
  %2818 = vmatpush.bf16.msra.mxu0 %v2516
  %2819 = vmatpush.bf16.msra.mxu0 %v2508
  %2820 = vmatmul.bf16.gmra.mxu0 %v2277
  %v2821 = vpop.f32.mrf.mxu0
  %v2822 = vadd.f32 %v2300, %v2821
  %v2823 = vpop.f32.mrf.mxu0
  %v2824 = vadd.f32 %v2300, %v2823
  %2825 = vmatmul.bf16.gmra.mxu0 %v2278
  %v2826 = vpop.f32.mrf.mxu0
  %v2827 = vadd.f32 %v2300, %v2826
  %v2828 = vpop.f32.mrf.mxu0
  %v2829 = vadd.f32 %v2300, %v2828
  %2830 = vmatmul.bf16.gmra.mxu0 %v2279
  %v2831 = vpop.f32.mrf.mxu0
  %v2832 = vadd.f32 %v2300, %v2831
  %v2833 = vpop.f32.mrf.mxu0
  %v2834 = vadd.f32 %v2300, %v2833
  %2835 = vmatmul.bf16.gmra.mxu0 %v2280
  %v2836 = vpop.f32.mrf.mxu0
  %v2837 = vadd.f32 %v2300, %v2836
  %v2838 = vpop.f32.mrf.mxu0
  %v2839 = vadd.f32 %v2300, %v2838
  %2840 = vmatmul.bf16.gmra.mxu0 %v2281
  %v2841 = vpop.f32.mrf.mxu0
  %v2842 = vadd.f32 %v2300, %v2841
  %v2843 = vpop.f32.mrf.mxu0
  %v2844 = vadd.f32 %v2300, %v2843
  %2845 = vmatmul.bf16.gmra.mxu0 %v2282
  %v2846 = vpop.f32.mrf.mxu0
  %v2847 = vadd.f32 %v2300, %v2846
  %v2848 = vpop.f32.mrf.mxu0
  %v2849 = vadd.f32 %v2300, %v2848
  %2850 = vmatmul.bf16.gmra.mxu0 %v2283
  %v2851 = vpop.f32.mrf.mxu0
  %v2852 = vadd.f32 %v2300, %v2851
  %v2853 = vpop.f32.mrf.mxu0
  %v2854 = vadd.f32 %v2300, %v2853
  %2855 = vmatmul.bf16.gmra.mxu0 %v2284
  %v2856 = vpop.f32.mrf.mxu0
  %v2857 = vadd.f32 %v2300, %v2856
  %v2858 = vpop.f32.mrf.mxu0
  %v2859 = vadd.f32 %v2300, %v2858
  %2860 = vmatmul.bf16.gmra.mxu0 %v2285
  %v2861 = vpop.f32.mrf.mxu0
  %v2862 = vadd.f32 %v2300, %v2861
  %v2863 = vpop.f32.mrf.mxu0
  %v2864 = vadd.f32 %v2300, %v2863
  %2865 = vmatmul.bf16.gmra.mxu0 %v2286
  %v2866 = vpop.f32.mrf.mxu0
  %v2867 = vadd.f32 %v2300, %v2866
  %v2868 = vpop.f32.mrf.mxu0
  %v2869 = vadd.f32 %v2300, %v2868
  %2870 = vmatmul.bf16.gmra.mxu0 %v2287
  %v2871 = vpop.f32.mrf.mxu0
  %v2872 = vadd.f32 %v2300, %v2871
  %v2873 = vpop.f32.mrf.mxu0
  %v2874 = vadd.f32 %v2300, %v2873
  %2875 = vmatmul.bf16.gmra.mxu0 %v2288
  %v2876 = vpop.f32.mrf.mxu0
  %v2877 = vadd.f32 %v2300, %v2876
  %v2878 = vpop.f32.mrf.mxu0
  %v2879 = vadd.f32 %v2300, %v2878
  %2880 = vmatmul.bf16.gmra.mxu0 %v2289
  %v2881 = vpop.f32.mrf.mxu0
  %v2882 = vadd.f32 %v2300, %v2881
  %v2883 = vpop.f32.mrf.mxu0
  %v2884 = vadd.f32 %v2300, %v2883
  %2885 = vmatmul.bf16.gmra.mxu0 %v2290
  %v2886 = vpop.f32.mrf.mxu0
  %v2887 = vadd.f32 %v2300, %v2886
  %v2888 = vpop.f32.mrf.mxu0
  %v2889 = vadd.f32 %v2300, %v2888
  %2890 = vmatmul.bf16.gmra.mxu0 %v2291
  %v2891 = vpop.f32.mrf.mxu0
  %v2892 = vadd.f32 %v2300, %v2891
  %v2893 = vpop.f32.mrf.mxu0
  %v2894 = vadd.f32 %v2300, %v2893
  %2895 = vmatmul.bf16.gmra.mxu0 %v2292
  %v2896 = vpop.f32.mrf.mxu0
  %v2897 = vadd.f32 %v2300, %v2896
  %v2898 = vpop.f32.mrf.mxu0
  %v2899 = vadd.f32 %v2300, %v2898
  %2900 = vdwg.mxu0
  %2901 = vmatpush.bf16.msra.mxu0 %v2565
  %2902 = vmatpush.bf16.msra.mxu0 %v2557
  %2903 = vmatpush.bf16.msra.mxu0 %v2549
  %2904 = vmatpush.bf16.msra.mxu0 %v2541
  %2905 = vmatpush.bf16.msra.mxu0 %v2533
  %2906 = vmatpush.bf16.msra.mxu0 %v2525
  %2907 = vmatpush.bf16.msra.mxu0 %v2517
  %2908 = vmatpush.bf16.msra.mxu0 %v2509
  %2909 = vmatmul.bf16.gmra.mxu0 %v2277
  %v2910 = vpop.f32.mrf.mxu0
  %v2911 = vadd.f32 %v2301, %v2910
  %v2912 = vpop.f32.mrf.mxu0
  %v2913 = vadd.f32 %v2301, %v2912
  %2914 = vmatmul.bf16.gmra.mxu0 %v2278
  %v2915 = vpop.f32.mrf.mxu0
  %v2916 = vadd.f32 %v2301, %v2915
  %v2917 = vpop.f32.mrf.mxu0
  %v2918 = vadd.f32 %v2301, %v2917
  %2919 = vmatmul.bf16.gmra.mxu0 %v2279
  %v2920 = vpop.f32.mrf.mxu0
  %v2921 = vadd.f32 %v2301, %v2920
  %v2922 = vpop.f32.mrf.mxu0
  %v2923 = vadd.f32 %v2301, %v2922
  %2924 = vmatmul.bf16.gmra.mxu0 %v2280
  %v2925 = vpop.f32.mrf.mxu0
  %v2926 = vadd.f32 %v2301, %v2925
  %v2927 = vpop.f32.mrf.mxu0
  %v2928 = vadd.f32 %v2301, %v2927
  %2929 = vmatmul.bf16.gmra.mxu0 %v2281
  %v2930 = vpop.f32.mrf.mxu0
  %v2931 = vadd.f32 %v2301, %v2930
  %v2932 = vpop.f32.mrf.mxu0
  %v2933 = vadd.f32 %v2301, %v2932
  %2934 = vmatmul.bf16.gmra.mxu0 %v2282
  %v2935 = vpop.f32.mrf.mxu0
  %v2936 = vadd.f32 %v2301, %v2935
  %v2937 = vpop.f32.mrf.mxu0
  %v2938 = vadd.f32 %v2301, %v2937
  %2939 = vmatmul.bf16.gmra.mxu0 %v2283
  %v2940 = vpop.f32.mrf.mxu0
  %v2941 = vadd.f32 %v2301, %v2940
  %v2942 = vpop.f32.mrf.mxu0
  %v2943 = vadd.f32 %v2301, %v2942
  %2944 = vmatmul.bf16.gmra.mxu0 %v2284
  %v2945 = vpop.f32.mrf.mxu0
  %v2946 = vadd.f32 %v2301, %v2945
  %v2947 = vpop.f32.mrf.mxu0
  %v2948 = vadd.f32 %v2301, %v2947
  %2949 = vmatmul.bf16.gmra.mxu0 %v2285
  %v2950 = vpop.f32.mrf.mxu0
  %v2951 = vadd.f32 %v2301, %v2950
  %v2952 = vpop.f32.mrf.mxu0
  %v2953 = vadd.f32 %v2301, %v2952
  %2954 = vmatmul.bf16.gmra.mxu0 %v2286
  %v2955 = vpop.f32.mrf.mxu0
  %v2956 = vadd.f32 %v2301, %v2955
  %v2957 = vpop.f32.mrf.mxu0
  %v2958 = vadd.f32 %v2301, %v2957
  %2959 = vmatmul.bf16.gmra.mxu0 %v2287
  %v2960 = vpop.f32.mrf.mxu0
  %v2961 = vadd.f32 %v2301, %v2960
  %v2962 = vpop.f32.mrf.mxu0
  %v2963 = vadd.f32 %v2301, %v2962
  %2964 = vmatmul.bf16.gmra.mxu0 %v2288
  %v2965 = vpop.f32.mrf.mxu0
  %v2966 = vadd.f32 %v2301, %v2965
  %v2967 = vpop.f32.mrf.mxu0
  %v2968 = vadd.f32 %v2301, %v2967
  %2969 = vmatmul.bf16.gmra.mxu0 %v2289
  %v2970 = vpop.f32.mrf.mxu0
  %v2971 = vadd.f32 %v2301, %v2970
  %v2972 = vpop.f32.mrf.mxu0
  %v2973 = vadd.f32 %v2301, %v2972
  %2974 = vmatmul.bf16.gmra.mxu0 %v2290
  %v2975 = vpop.f32.mrf.mxu0
  %v2976 = vadd.f32 %v2301, %v2975
  %v2977 = vpop.f32.mrf.mxu0
  %v2978 = vadd.f32 %v2301, %v2977
  %2979 = vmatmul.bf16.gmra.mxu0 %v2291
  %v2980 = vpop.f32.mrf.mxu0
  %v2981 = vadd.f32 %v2301, %v2980
  %v2982 = vpop.f32.mrf.mxu0
  %v2983 = vadd.f32 %v2301, %v2982
  %2984 = vmatmul.bf16.gmra.mxu0 %v2292
  %v2985 = vpop.f32.mrf.mxu0
  %v2986 = vadd.f32 %v2301, %v2985
  %v2987 = vpop.f32.mrf.mxu0
  %v2988 = vadd.f32 %v2301, %v2987
  %2989 = vdwg.mxu0
  %2990 = vmatpush.bf16.msra.mxu0 %v2566
  %2991 = vmatpush.bf16.msra.mxu0 %v2558
  %2992 = vmatpush.bf16.msra.mxu0 %v2550
  %2993 = vmatpush.bf16.msra.mxu0 %v2542
  %2994 = vmatpush.bf16.msra.mxu0 %v2534
  %2995 = vmatpush.bf16.msra.mxu0 %v2526
  %2996 = vmatpush.bf16.msra.mxu0 %v2518
  %2997 = vmatpush.bf16.msra.mxu0 %v2510
  %2998 = vmatmul.bf16.gmra.mxu0 %v2277
  %v2999 = vpop.f32.mrf.mxu0
  %v3000 = vadd.f32 %v2302, %v2999
  %v3001 = vpop.f32.mrf.mxu0
  %v3002 = vadd.f32 %v2302, %v3001
  %3003 = vmatmul.bf16.gmra.mxu0 %v2278
  %v3004 = vpop.f32.mrf.mxu0
  %v3005 = vadd.f32 %v2302, %v3004
  %v3006 = vpop.f32.mrf.mxu0
  %v3007 = vadd.f32 %v2302, %v3006
  %3008 = vmatmul.bf16.gmra.mxu0 %v2279
  %v3009 = vpop.f32.mrf.mxu0
  %v3010 = vadd.f32 %v2302, %v3009
  %v3011 = vpop.f32.mrf.mxu0
  %v3012 = vadd.f32 %v2302, %v3011
  %3013 = vmatmul.bf16.gmra.mxu0 %v2280
  %v3014 = vpop.f32.mrf.mxu0
  %v3015 = vadd.f32 %v2302, %v3014
  %v3016 = vpop.f32.mrf.mxu0
  %v3017 = vadd.f32 %v2302, %v3016
  %3018 = vmatmul.bf16.gmra.mxu0 %v2281
  %v3019 = vpop.f32.mrf.mxu0
  %v3020 = vadd.f32 %v2302, %v3019
  %v3021 = vpop.f32.mrf.mxu0
  %v3022 = vadd.f32 %v2302, %v3021
  %3023 = vmatmul.bf16.gmra.mxu0 %v2282
  %v3024 = vpop.f32.mrf.mxu0
  %v3025 = vadd.f32 %v2302, %v3024
  %v3026 = vpop.f32.mrf.mxu0
  %v3027 = vadd.f32 %v2302, %v3026
  %3028 = vmatmul.bf16.gmra.mxu0 %v2283
  %v3029 = vpop.f32.mrf.mxu0
  %v3030 = vadd.f32 %v2302, %v3029
  %v3031 = vpop.f32.mrf.mxu0
  %v3032 = vadd.f32 %v2302, %v3031
  %3033 = vmatmul.bf16.gmra.mxu0 %v2284
  %v3034 = vpop.f32.mrf.mxu0
  %v3035 = vadd.f32 %v2302, %v3034
  %v3036 = vpop.f32.mrf.mxu0
  %v3037 = vadd.f32 %v2302, %v3036
  %3038 = vmatmul.bf16.gmra.mxu0 %v2285
  %v3039 = vpop.f32.mrf.mxu0
  %v3040 = vadd.f32 %v2302, %v3039
  %v3041 = vpop.f32.mrf.mxu0
  %v3042 = vadd.f32 %v2302, %v3041
  %3043 = vmatmul.bf16.gmra.mxu0 %v2286
  %v3044 = vpop.f32.mrf.mxu0
  %v3045 = vadd.f32 %v2302, %v3044
  %v3046 = vpop.f32.mrf.mxu0
  %v3047 = vadd.f32 %v2302, %v3046
  %3048 = vmatmul.bf16.gmra.mxu0 %v2287
  %v3049 = vpop.f32.mrf.mxu0
  %v3050 = vadd.f32 %v2302, %v3049
  %v3051 = vpop.f32.mrf.mxu0
  %v3052 = vadd.f32 %v2302, %v3051
  %3053 = vmatmul.bf16.gmra.mxu0 %v2288
  %v3054 = vpop.f32.mrf.mxu0
  %v3055 = vadd.f32 %v2302, %v3054
  %v3056 = vpop.f32.mrf.mxu0
  %v3057 = vadd.f32 %v2302, %v3056
  %3058 = vmatmul.bf16.gmra.mxu0 %v2289
  %v3059 = vpop.f32.mrf.mxu0
  %v3060 = vadd.f32 %v2302, %v3059
  %v3061 = vpop.f32.mrf.mxu0
  %v3062 = vadd.f32 %v2302, %v3061
  %3063 = vmatmul.bf16.gmra.mxu0 %v2290
  %v3064 = vpop.f32.mrf.mxu0
  %v3065 = vadd.f32 %v2302, %v3064
  %v3066 = vpop.f32.mrf.mxu0
  %v3067 = vadd.f32 %v2302, %v3066
  %3068 = vmatmul.bf16.gmra.mxu0 %v2291
  %v3069 = vpop.f32.mrf.mxu0
  %v3070 = vadd.f32 %v2302, %v3069
  %v3071 = vpop.f32.mrf.mxu0
  %v3072 = vadd.f32 %v2302, %v3071
  %3073 = vmatmul.bf16.gmra.mxu0 %v2292
  %v3074 = vpop.f32.mrf.mxu0
  %v3075 = vadd.f32 %v2302, %v3074
  %v3076 = vpop.f32.mrf.mxu0
  %v3077 = vadd.f32 %v2302, %v3076
  %3078 = vdwg.mxu0
  %3079 = vmatpush.bf16.msra.mxu0 %v2567
  %3080 = vmatpush.bf16.msra.mxu0 %v2559
  %3081 = vmatpush.bf16.msra.mxu0 %v2551
  %3082 = vmatpush.bf16.msra.mxu0 %v2543
  %3083 = vmatpush.bf16.msra.mxu0 %v2535
  %3084 = vmatpush.bf16.msra.mxu0 %v2527
  %3085 = vmatpush.bf16.msra.mxu0 %v2519
  %3086 = vmatpush.bf16.msra.mxu0 %v2511
  %3087 = vmatmul.bf16.gmra.mxu0 %v2277
  %v3088 = vpop.f32.mrf.mxu0
  %v3089 = vadd.f32 %v2303, %v3088
  %v3090 = vpop.f32.mrf.mxu0
  %v3091 = vadd.f32 %v2303, %v3090
  %3092 = vmatmul.bf16.gmra.mxu0 %v2278
  %v3093 = vpop.f32.mrf.mxu0
  %v3094 = vadd.f32 %v2303, %v3093
  %v3095 = vpop.f32.mrf.mxu0
  %v3096 = vadd.f32 %v2303, %v3095
  %3097 = vmatmul.bf16.gmra.mxu0 %v2279
  %v3098 = vpop.f32.mrf.mxu0
  %v3099 = vadd.f32 %v2303, %v3098
  %v3100 = vpop.f32.mrf.mxu0
  %v3101 = vadd.f32 %v2303, %v3100
  %3102 = vmatmul.bf16.gmra.mxu0 %v2280
  %v3103 = vpop.f32.mrf.mxu0
  %v3104 = vadd.f32 %v2303, %v3103
  %v3105 = vpop.f32.mrf.mxu0
  %v3106 = vadd.f32 %v2303, %v3105
  %3107 = vmatmul.bf16.gmra.mxu0 %v2281
  %v3108 = vpop.f32.mrf.mxu0
  %v3109 = vadd.f32 %v2303, %v3108
  %v3110 = vpop.f32.mrf.mxu0
  %v3111 = vadd.f32 %v2303, %v3110
  %3112 = vmatmul.bf16.gmra.mxu0 %v2282
  %v3113 = vpop.f32.mrf.mxu0
  %v3114 = vadd.f32 %v2303, %v3113
  %v3115 = vpop.f32.mrf.mxu0
  %v3116 = vadd.f32 %v2303, %v3115
  %3117 = vmatmul.bf16.gmra.mxu0 %v2283
  %v3118 = vpop.f32.mrf.mxu0
  %v3119 = vadd.f32 %v2303, %v3118
  %v3120 = vpop.f32.mrf.mxu0
  %v3121 = vadd.f32 %v2303, %v3120
  %3122 = vmatmul.bf16.gmra.mxu0 %v2284
  %v3123 = vpop.f32.mrf.mxu0
  %v3124 = vadd.f32 %v2303, %v3123
  %v3125 = vpop.f32.mrf.mxu0
  %v3126 = vadd.f32 %v2303, %v3125
  %3127 = vmatmul.bf16.gmra.mxu0 %v2285
  %v3128 = vpop.f32.mrf.mxu0
  %v3129 = vadd.f32 %v2303, %v3128
  %v3130 = vpop.f32.mrf.mxu0
  %v3131 = vadd.f32 %v2303, %v3130
  %3132 = vmatmul.bf16.gmra.mxu0 %v2286
  %v3133 = vpop.f32.mrf.mxu0
  %v3134 = vadd.f32 %v2303, %v3133
  %v3135 = vpop.f32.mrf.mxu0
  %v3136 = vadd.f32 %v2303, %v3135
  %3137 = vmatmul.bf16.gmra.mxu0 %v2287
  %v3138 = vpop.f32.mrf.mxu0
  %v3139 = vadd.f32 %v2303, %v3138
  %v3140 = vpop.f32.mrf.mxu0
  %v3141 = vadd.f32 %v2303, %v3140
  %3142 = vmatmul.bf16.gmra.mxu0 %v2288
  %v3143 = vpop.f32.mrf.mxu0
  %v3144 = vadd.f32 %v2303, %v3143
  %v3145 = vpop.f32.mrf.mxu0
  %v3146 = vadd.f32 %v2303, %v3145
  %3147 = vmatmul.bf16.gmra.mxu0 %v2289
  %v3148 = vpop.f32.mrf.mxu0
  %v3149 = vadd.f32 %v2303, %v3148
  %v3150 = vpop.f32.mrf.mxu0
  %v3151 = vadd.f32 %v2303, %v3150
  %3152 = vmatmul.bf16.gmra.mxu0 %v2290
  %v3153 = vpop.f32.mrf.mxu0
  %v3154 = vadd.f32 %v2303, %v3153
  %v3155 = vpop.f32.mrf.mxu0
  %v3156 = vadd.f32 %v2303, %v3155
  %3157 = vmatmul.bf16.gmra.mxu0 %v2291
  %v3158 = vpop.f32.mrf.mxu0
  %v3159 = vadd.f32 %v2303, %v3158
  %v3160 = vpop.f32.mrf.mxu0
  %v3161 = vadd.f32 %v2303, %v3160
  %3162 = vmatmul.bf16.gmra.mxu0 %v2292
  %v3163 = vpop.f32.mrf.mxu0
  %v3164 = vadd.f32 %v2303, %v3163
  %v3165 = vpop.f32.mrf.mxu0
  %v3166 = vadd.f32 %v2303, %v3165
  %3167 = vdwg.mxu0
  %3168 = vmatpush.bf16.msra.mxu0 %v2568
  %3169 = vmatpush.bf16.msra.mxu0 %v2560
  %3170 = vmatpush.bf16.msra.mxu0 %v2552
  %3171 = vmatpush.bf16.msra.mxu0 %v2544
  %3172 = vmatpush.bf16.msra.mxu0 %v2536
  %3173 = vmatpush.bf16.msra.mxu0 %v2528
  %3174 = vmatpush.bf16.msra.mxu0 %v2520
  %3175 = vmatpush.bf16.msra.mxu0 %v2512
  %3176 = vmatmul.bf16.gmra.mxu0 %v2277
  %v3177 = vpop.f32.mrf.mxu0
  %v3178 = vadd.f32 %v2304, %v3177
  %v3179 = vpop.f32.mrf.mxu0
  %v3180 = vadd.f32 %v2304, %v3179
  %3181 = vmatmul.bf16.gmra.mxu0 %v2278
  %v3182 = vpop.f32.mrf.mxu0
  %v3183 = vadd.f32 %v2304, %v3182
  %v3184 = vpop.f32.mrf.mxu0
  %v3185 = vadd.f32 %v2304, %v3184
  %3186 = vmatmul.bf16.gmra.mxu0 %v2279
  %v3187 = vpop.f32.mrf.mxu0
  %v3188 = vadd.f32 %v2304, %v3187
  %v3189 = vpop.f32.mrf.mxu0
  %v3190 = vadd.f32 %v2304, %v3189
  %3191 = vmatmul.bf16.gmra.mxu0 %v2280
  %v3192 = vpop.f32.mrf.mxu0
  %v3193 = vadd.f32 %v2304, %v3192
  %v3194 = vpop.f32.mrf.mxu0
  %v3195 = vadd.f32 %v2304, %v3194
  %3196 = vmatmul.bf16.gmra.mxu0 %v2281
  %v3197 = vpop.f32.mrf.mxu0
  %v3198 = vadd.f32 %v2304, %v3197
  %v3199 = vpop.f32.mrf.mxu0
  %v3200 = vadd.f32 %v2304, %v3199
  %3201 = vmatmul.bf16.gmra.mxu0 %v2282
  %v3202 = vpop.f32.mrf.mxu0
  %v3203 = vadd.f32 %v2304, %v3202
  %v3204 = vpop.f32.mrf.mxu0
  %v3205 = vadd.f32 %v2304, %v3204
  %3206 = vmatmul.bf16.gmra.mxu0 %v2283
  %v3207 = vpop.f32.mrf.mxu0
  %v3208 = vadd.f32 %v2304, %v3207
  %v3209 = vpop.f32.mrf.mxu0
  %v3210 = vadd.f32 %v2304, %v3209
  %3211 = vmatmul.bf16.gmra.mxu0 %v2284
  %v3212 = vpop.f32.mrf.mxu0
  %v3213 = vadd.f32 %v2304, %v3212
  %v3214 = vpop.f32.mrf.mxu0
  %v3215 = vadd.f32 %v2304, %v3214
  %3216 = vmatmul.bf16.gmra.mxu0 %v2285
  %v3217 = vpop.f32.mrf.mxu0
  %v3218 = vadd.f32 %v2304, %v3217
  %v3219 = vpop.f32.mrf.mxu0
  %v3220 = vadd.f32 %v2304, %v3219
  %3221 = vmatmul.bf16.gmra.mxu0 %v2286
  %v3222 = vpop.f32.mrf.mxu0
  %v3223 = vadd.f32 %v2304, %v3222
  %v3224 = vpop.f32.mrf.mxu0
  %v3225 = vadd.f32 %v2304, %v3224
  %3226 = vmatmul.bf16.gmra.mxu0 %v2287
  %v3227 = vpop.f32.mrf.mxu0
  %v3228 = vadd.f32 %v2304, %v3227
  %v3229 = vpop.f32.mrf.mxu0
  %v3230 = vadd.f32 %v2304, %v3229
  %3231 = vmatmul.bf16.gmra.mxu0 %v2288
  %v3232 = vpop.f32.mrf.mxu0
  %v3233 = vadd.f32 %v2304, %v3232
  %v3234 = vpop.f32.mrf.mxu0
  %v3235 = vadd.f32 %v2304, %v3234
  %3236 = vmatmul.bf16.gmra.mxu0 %v2289
  %v3237 = vpop.f32.mrf.mxu0
  %v3238 = vadd.f32 %v2304, %v3237
  %v3239 = vpop.f32.mrf.mxu0
  %v3240 = vadd.f32 %v2304, %v3239
  %3241 = vmatmul.bf16.gmra.mxu0 %v2290
  %v3242 = vpop.f32.mrf.mxu0
  %v3243 = vadd.f32 %v2304, %v3242
  %v3244 = vpop.f32.mrf.mxu0
  %v3245 = vadd.f32 %v2304, %v3244
  %3246 = vmatmul.bf16.gmra.mxu0 %v2291
  %v3247 = vpop.f32.mrf.mxu0
  %v3248 = vadd.f32 %v2304, %v3247
  %v3249 = vpop.f32.mrf.mxu0
  %v3250 = vadd.f32 %v2304, %v3249
  %3251 = vmatmul.bf16.gmra.mxu0 %v2292
  %v3252 = vpop.f32.mrf.mxu0
  %v3253 = vadd.f32 %v2304, %v3252
  %v3254 = vpop.f32.mrf.mxu0
  %v3255 = vadd.f32 %v2304, %v3254
  %3256 = vdwg.mxu0
  %3257 = vmatpush.bf16.msra.mxu0 %v2569
  %3258 = vmatpush.bf16.msra.mxu0 %v2561
  %3259 = vmatpush.bf16.msra.mxu0 %v2553
  %3260 = vmatpush.bf16.msra.mxu0 %v2545
  %3261 = vmatpush.bf16.msra.mxu0 %v2537
  %3262 = vmatpush.bf16.msra.mxu0 %v2529
  %3263 = vmatpush.bf16.msra.mxu0 %v2521
  %3264 = vmatpush.bf16.msra.mxu0 %v2513
  %3265 = vmatmul.bf16.gmra.mxu0 %v2277
  %v3266 = vpop.f32.mrf.mxu0
  %v3267 = vadd.f32 %v2305, %v3266
  %v3268 = vpop.f32.mrf.mxu0
  %v3269 = vadd.f32 %v2305, %v3268
  %3270 = vmatmul.bf16.gmra.mxu0 %v2278
  %v3271 = vpop.f32.mrf.mxu0
  %v3272 = vadd.f32 %v2305, %v3271
  %v3273 = vpop.f32.mrf.mxu0
  %v3274 = vadd.f32 %v2305, %v3273
  %3275 = vmatmul.bf16.gmra.mxu0 %v2279
  %v3276 = vpop.f32.mrf.mxu0
  %v3277 = vadd.f32 %v2305, %v3276
  %v3278 = vpop.f32.mrf.mxu0
  %v3279 = vadd.f32 %v2305, %v3278
  %3280 = vmatmul.bf16.gmra.mxu0 %v2280
  %v3281 = vpop.f32.mrf.mxu0
  %v3282 = vadd.f32 %v2305, %v3281
  %v3283 = vpop.f32.mrf.mxu0
  %v3284 = vadd.f32 %v2305, %v3283
  %3285 = vmatmul.bf16.gmra.mxu0 %v2281
  %v3286 = vpop.f32.mrf.mxu0
  %v3287 = vadd.f32 %v2305, %v3286
  %v3288 = vpop.f32.mrf.mxu0
  %v3289 = vadd.f32 %v2305, %v3288
  %3290 = vmatmul.bf16.gmra.mxu0 %v2282
  %v3291 = vpop.f32.mrf.mxu0
  %v3292 = vadd.f32 %v2305, %v3291
  %v3293 = vpop.f32.mrf.mxu0
  %v3294 = vadd.f32 %v2305, %v3293
  %3295 = vmatmul.bf16.gmra.mxu0 %v2283
  %v3296 = vpop.f32.mrf.mxu0
  %v3297 = vadd.f32 %v2305, %v3296
  %v3298 = vpop.f32.mrf.mxu0
  %v3299 = vadd.f32 %v2305, %v3298
  %3300 = vmatmul.bf16.gmra.mxu0 %v2284
  %v3301 = vpop.f32.mrf.mxu0
  %v3302 = vadd.f32 %v2305, %v3301
  %v3303 = vpop.f32.mrf.mxu0
  %v3304 = vadd.f32 %v2305, %v3303
  %3305 = vmatmul.bf16.gmra.mxu0 %v2285
  %v3306 = vpop.f32.mrf.mxu0
  %v3307 = vadd.f32 %v2305, %v3306
  %v3308 = vpop.f32.mrf.mxu0
  %v3309 = vadd.f32 %v2305, %v3308
  %3310 = vmatmul.bf16.gmra.mxu0 %v2286
  %v3311 = vpop.f32.mrf.mxu0
  %v3312 = vadd.f32 %v2305, %v3311
  %v3313 = vpop.f32.mrf.mxu0
  %v3314 = vadd.f32 %v2305, %v3313
  %3315 = vmatmul.bf16.gmra.mxu0 %v2287
  %v3316 = vpop.f32.mrf.mxu0
  %v3317 = vadd.f32 %v2305, %v3316
  %v3318 = vpop.f32.mrf.mxu0
  %v3319 = vadd.f32 %v2305, %v3318
  %3320 = vmatmul.bf16.gmra.mxu0 %v2288
  %v3321 = vpop.f32.mrf.mxu0
  %v3322 = vadd.f32 %v2305, %v3321
  %v3323 = vpop.f32.mrf.mxu0
  %v3324 = vadd.f32 %v2305, %v3323
  %3325 = vmatmul.bf16.gmra.mxu0 %v2289
  %v3326 = vpop.f32.mrf.mxu0
  %v3327 = vadd.f32 %v2305, %v3326
  %v3328 = vpop.f32.mrf.mxu0
  %v3329 = vadd.f32 %v2305, %v3328
  %3330 = vmatmul.bf16.gmra.mxu0 %v2290
  %v3331 = vpop.f32.mrf.mxu0
  %v3332 = vadd.f32 %v2305, %v3331
  %v3333 = vpop.f32.mrf.mxu0
  %v3334 = vadd.f32 %v2305, %v3333
  %3335 = vmatmul.bf16.gmra.mxu0 %v2291
  %v3336 = vpop.f32.mrf.mxu0
  %v3337 = vadd.f32 %v2305, %v3336
  %v3338 = vpop.f32.mrf.mxu0
  %v3339 = vadd.f32 %v2305, %v3338
  %3340 = vmatmul.bf16.gmra.mxu0 %v2292
  %v3341 = vpop.f32.mrf.mxu0
  %v3342 = vadd.f32 %v2305, %v3341
  %v3343 = vpop.f32.mrf.mxu0
  %v3344 = vadd.f32 %v2305, %v3343
  %3345 = vdwg.mxu0
  %v3346 = vmax.f32 %v2644, 0.0
  %v3347 = vmax.f32 %v2733, 0.0
  %v3348 = vmax.f32 %v2822, 0.0
  %v3349 = vmax.f32 %v2911, 0.0
  %v3350 = vmax.f32 %v3000, 0.0
  %v3351 = vmax.f32 %v3089, 0.0
  %v3352 = vmax.f32 %v3178, 0.0
  %v3353 = vmax.f32 %v3267, 0.0
  %v3354 = vmax.f32 %v2646, 0.0
  %v3355 = vmax.f32 %v2735, 0.0
  %v3356 = vmax.f32 %v2824, 0.0
  %v3357 = vmax.f32 %v2913, 0.0
  %v3358 = vmax.f32 %v3002, 0.0
  %v3359 = vmax.f32 %v3091, 0.0
  %v3360 = vmax.f32 %v3180, 0.0
  %v3361 = vmax.f32 %v3269, 0.0
  %v3362 = vmax.f32 %v2649, 0.0
  %v3363 = vmax.f32 %v2738, 0.0
  %v3364 = vmax.f32 %v2827, 0.0
  %v3365 = vmax.f32 %v2916, 0.0
  %v3366 = vmax.f32 %v3005, 0.0
  %v3367 = vmax.f32 %v3094, 0.0
  %v3368 = vmax.f32 %v3183, 0.0
  %v3369 = vmax.f32 %v3272, 0.0
  %v3370 = vmax.f32 %v2651, 0.0
  %v3371 = vmax.f32 %v2740, 0.0
  %v3372 = vmax.f32 %v2829, 0.0
  %v3373 = vmax.f32 %v2918, 0.0
  %v3374 = vmax.f32 %v3007, 0.0
  %v3375 = vmax.f32 %v3096, 0.0
  %v3376 = vmax.f32 %v3185, 0.0
  %v3377 = vmax.f32 %v3274, 0.0
  %v3378 = vmax.f32 %v2654, 0.0
  %v3379 = vmax.f32 %v2743, 0.0
  %v3380 = vmax.f32 %v2832, 0.0
  %v3381 = vmax.f32 %v2921, 0.0
  %v3382 = vmax.f32 %v3010, 0.0
  %v3383 = vmax.f32 %v3099, 0.0
  %v3384 = vmax.f32 %v3188, 0.0
  %v3385 = vmax.f32 %v3277, 0.0
  %v3386 = vmax.f32 %v2656, 0.0
  %v3387 = vmax.f32 %v2745, 0.0
  %v3388 = vmax.f32 %v2834, 0.0
  %v3389 = vmax.f32 %v2923, 0.0
  %v3390 = vmax.f32 %v3012, 0.0
  %v3391 = vmax.f32 %v3101, 0.0
  %v3392 = vmax.f32 %v3190, 0.0
  %v3393 = vmax.f32 %v3279, 0.0
  %v3394 = vmax.f32 %v2659, 0.0
  %v3395 = vmax.f32 %v2748, 0.0
  %v3396 = vmax.f32 %v2837, 0.0
  %v3397 = vmax.f32 %v2926, 0.0
  %v3398 = vmax.f32 %v3015, 0.0
  %v3399 = vmax.f32 %v3104, 0.0
  %v3400 = vmax.f32 %v3193, 0.0
  %v3401 = vmax.f32 %v3282, 0.0
  %v3402 = vmax.f32 %v2661, 0.0
  %v3403 = vmax.f32 %v2750, 0.0
  %v3404 = vmax.f32 %v2839, 0.0
  %v3405 = vmax.f32 %v2928, 0.0
  %v3406 = vmax.f32 %v3017, 0.0
  %v3407 = vmax.f32 %v3106, 0.0
  %v3408 = vmax.f32 %v3195, 0.0
  %v3409 = vmax.f32 %v3284, 0.0
  %v3410 = vmax.f32 %v2664, 0.0
  %v3411 = vmax.f32 %v2753, 0.0
  %v3412 = vmax.f32 %v2842, 0.0
  %v3413 = vmax.f32 %v2931, 0.0
  %v3414 = vmax.f32 %v3020, 0.0
  %v3415 = vmax.f32 %v3109, 0.0
  %v3416 = vmax.f32 %v3198, 0.0
  %v3417 = vmax.f32 %v3287, 0.0
  %v3418 = vmax.f32 %v2666, 0.0
  %v3419 = vmax.f32 %v2755, 0.0
  %v3420 = vmax.f32 %v2844, 0.0
  %v3421 = vmax.f32 %v2933, 0.0
  %v3422 = vmax.f32 %v3022, 0.0
  %v3423 = vmax.f32 %v3111, 0.0
  %v3424 = vmax.f32 %v3200, 0.0
  %v3425 = vmax.f32 %v3289, 0.0
  %v3426 = vmax.f32 %v2669, 0.0
  %v3427 = vmax.f32 %v2758, 0.0
  %v3428 = vmax.f32 %v2847, 0.0
  %v3429 = vmax.f32 %v2936, 0.0
  %v3430 = vmax.f32 %v3025, 0.0
  %v3431 = vmax.f32 %v3114, 0.0
  %v3432 = vmax.f32 %v3203, 0.0
  %v3433 = vmax.f32 %v3292, 0.0
  %v3434 = vmax.f32 %v2671, 0.0
  %v3435 = vmax.f32 %v2760, 0.0
  %v3436 = vmax.f32 %v2849, 0.0
  %v3437 = vmax.f32 %v2938, 0.0
  %v3438 = vmax.f32 %v3027, 0.0
  %v3439 = vmax.f32 %v3116, 0.0
  %v3440 = vmax.f32 %v3205, 0.0
  %v3441 = vmax.f32 %v3294, 0.0
  %v3442 = vmax.f32 %v2674, 0.0
  %v3443 = vmax.f32 %v2763, 0.0
  %v3444 = vmax.f32 %v2852, 0.0
  %v3445 = vmax.f32 %v2941, 0.0
  %v3446 = vmax.f32 %v3030, 0.0
  %v3447 = vmax.f32 %v3119, 0.0
  %v3448 = vmax.f32 %v3208, 0.0
  %v3449 = vmax.f32 %v3297, 0.0
  %v3450 = vmax.f32 %v2676, 0.0
  %v3451 = vmax.f32 %v2765, 0.0
  %v3452 = vmax.f32 %v2854, 0.0
  %v3453 = vmax.f32 %v2943, 0.0
  %v3454 = vmax.f32 %v3032, 0.0
  %v3455 = vmax.f32 %v3121, 0.0
  %v3456 = vmax.f32 %v3210, 0.0
  %v3457 = vmax.f32 %v3299, 0.0
  %v3458 = vmax.f32 %v2679, 0.0
  %v3459 = vmax.f32 %v2768, 0.0
  %v3460 = vmax.f32 %v2857, 0.0
  %v3461 = vmax.f32 %v2946, 0.0
  %v3462 = vmax.f32 %v3035, 0.0
  %v3463 = vmax.f32 %v3124, 0.0
  %v3464 = vmax.f32 %v3213, 0.0
  %v3465 = vmax.f32 %v3302, 0.0
  %v3466 = vmax.f32 %v2681, 0.0
  %v3467 = vmax.f32 %v2770, 0.0
  %v3468 = vmax.f32 %v2859, 0.0
  %v3469 = vmax.f32 %v2948, 0.0
  %v3470 = vmax.f32 %v3037, 0.0
  %v3471 = vmax.f32 %v3126, 0.0
  %v3472 = vmax.f32 %v3215, 0.0
  %v3473 = vmax.f32 %v3304, 0.0
  %v3474 = vmax.f32 %v2684, 0.0
  %v3475 = vmax.f32 %v2773, 0.0
  %v3476 = vmax.f32 %v2862, 0.0
  %v3477 = vmax.f32 %v2951, 0.0
  %v3478 = vmax.f32 %v3040, 0.0
  %v3479 = vmax.f32 %v3129, 0.0
  %v3480 = vmax.f32 %v3218, 0.0
  %v3481 = vmax.f32 %v3307, 0.0
  %v3482 = vmax.f32 %v2686, 0.0
  %v3483 = vmax.f32 %v2775, 0.0
  %v3484 = vmax.f32 %v2864, 0.0
  %v3485 = vmax.f32 %v2953, 0.0
  %v3486 = vmax.f32 %v3042, 0.0
  %v3487 = vmax.f32 %v3131, 0.0
  %v3488 = vmax.f32 %v3220, 0.0
  %v3489 = vmax.f32 %v3309, 0.0
  %v3490 = vmax.f32 %v2689, 0.0
  %v3491 = vmax.f32 %v2778, 0.0
  %v3492 = vmax.f32 %v2867, 0.0
  %v3493 = vmax.f32 %v2956, 0.0
  %v3494 = vmax.f32 %v3045, 0.0
  %v3495 = vmax.f32 %v3134, 0.0
  %v3496 = vmax.f32 %v3223, 0.0
  %v3497 = vmax.f32 %v3312, 0.0
  %v3498 = vmax.f32 %v2691, 0.0
  %v3499 = vmax.f32 %v2780, 0.0
  %v3500 = vmax.f32 %v2869, 0.0
  %v3501 = vmax.f32 %v2958, 0.0
  %v3502 = vmax.f32 %v3047, 0.0
  %v3503 = vmax.f32 %v3136, 0.0
  %v3504 = vmax.f32 %v3225, 0.0
  %v3505 = vmax.f32 %v3314, 0.0
  %v3506 = vmax.f32 %v2694, 0.0
  %v3507 = vmax.f32 %v2783, 0.0
  %v3508 = vmax.f32 %v2872, 0.0
  %v3509 = vmax.f32 %v2961, 0.0
  %v3510 = vmax.f32 %v3050, 0.0
  %v3511 = vmax.f32 %v3139, 0.0
  %v3512 = vmax.f32 %v3228, 0.0
  %v3513 = vmax.f32 %v3317, 0.0
  %v3514 = vmax.f32 %v2696, 0.0
  %v3515 = vmax.f32 %v2785, 0.0
  %v3516 = vmax.f32 %v2874, 0.0
  %v3517 = vmax.f32 %v2963, 0.0
  %v3518 = vmax.f32 %v3052, 0.0
  %v3519 = vmax.f32 %v3141, 0.0
  %v3520 = vmax.f32 %v3230, 0.0
  %v3521 = vmax.f32 %v3319, 0.0
  %v3522 = vmax.f32 %v2699, 0.0
  %v3523 = vmax.f32 %v2788, 0.0
  %v3524 = vmax.f32 %v2877, 0.0
  %v3525 = vmax.f32 %v2966, 0.0
  %v3526 = vmax.f32 %v3055, 0.0
  %v3527 = vmax.f32 %v3144, 0.0
  %v3528 = vmax.f32 %v3233, 0.0
  %v3529 = vmax.f32 %v3322, 0.0
  %v3530 = vmax.f32 %v2701, 0.0
  %v3531 = vmax.f32 %v2790, 0.0
  %v3532 = vmax.f32 %v2879, 0.0
  %v3533 = vmax.f32 %v2968, 0.0
  %v3534 = vmax.f32 %v3057, 0.0
  %v3535 = vmax.f32 %v3146, 0.0
  %v3536 = vmax.f32 %v3235, 0.0
  %v3537 = vmax.f32 %v3324, 0.0
  %v3538 = vmax.f32 %v2704, 0.0
  %v3539 = vmax.f32 %v2793, 0.0
  %v3540 = vmax.f32 %v2882, 0.0
  %v3541 = vmax.f32 %v2971, 0.0
  %v3542 = vmax.f32 %v3060, 0.0
  %v3543 = vmax.f32 %v3149, 0.0
  %v3544 = vmax.f32 %v3238, 0.0
  %v3545 = vmax.f32 %v3327, 0.0
  %v3546 = vmax.f32 %v2706, 0.0
  %v3547 = vmax.f32 %v2795, 0.0
  %v3548 = vmax.f32 %v2884, 0.0
  %v3549 = vmax.f32 %v2973, 0.0
  %v3550 = vmax.f32 %v3062, 0.0
  %v3551 = vmax.f32 %v3151, 0.0
  %v3552 = vmax.f32 %v3240, 0.0
  %v3553 = vmax.f32 %v3329, 0.0
  %v3554 = vmax.f32 %v2709, 0.0
  %v3555 = vmax.f32 %v2798, 0.0
  %v3556 = vmax.f32 %v2887, 0.0
  %v3557 = vmax.f32 %v2976, 0.0
  %v3558 = vmax.f32 %v3065, 0.0
  %v3559 = vmax.f32 %v3154, 0.0
  %v3560 = vmax.f32 %v3243, 0.0
  %v3561 = vmax.f32 %v3332, 0.0
  %v3562 = vmax.f32 %v2711, 0.0
  %v3563 = vmax.f32 %v2800, 0.0
  %v3564 = vmax.f32 %v2889, 0.0
  %v3565 = vmax.f32 %v2978, 0.0
  %v3566 = vmax.f32 %v3067, 0.0
  %v3567 = vmax.f32 %v3156, 0.0
  %v3568 = vmax.f32 %v3245, 0.0
  %v3569 = vmax.f32 %v3334, 0.0
  %v3570 = vmax.f32 %v2714, 0.0
  %v3571 = vmax.f32 %v2803, 0.0
  %v3572 = vmax.f32 %v2892, 0.0
  %v3573 = vmax.f32 %v2981, 0.0
  %v3574 = vmax.f32 %v3070, 0.0
  %v3575 = vmax.f32 %v3159, 0.0
  %v3576 = vmax.f32 %v3248, 0.0
  %v3577 = vmax.f32 %v3337, 0.0
  %v3578 = vmax.f32 %v2716, 0.0
  %v3579 = vmax.f32 %v2805, 0.0
  %v3580 = vmax.f32 %v2894, 0.0
  %v3581 = vmax.f32 %v2983, 0.0
  %v3582 = vmax.f32 %v3072, 0.0
  %v3583 = vmax.f32 %v3161, 0.0
  %v3584 = vmax.f32 %v3250, 0.0
  %v3585 = vmax.f32 %v3339, 0.0
  %v3586 = vmax.f32 %v2719, 0.0
  %v3587 = vmax.f32 %v2808, 0.0
  %v3588 = vmax.f32 %v2897, 0.0
  %v3589 = vmax.f32 %v2986, 0.0
  %v3590 = vmax.f32 %v3075, 0.0
  %v3591 = vmax.f32 %v3164, 0.0
  %v3592 = vmax.f32 %v3253, 0.0
  %v3593 = vmax.f32 %v3342, 0.0
  %v3594 = vmax.f32 %v2721, 0.0
  %v3595 = vmax.f32 %v2810, 0.0
  %v3596 = vmax.f32 %v2899, 0.0
  %v3597 = vmax.f32 %v2988, 0.0
  %v3598 = vmax.f32 %v3077, 0.0
  %v3599 = vmax.f32 %v3166, 0.0
  %v3600 = vmax.f32 %v3255, 0.0
  %v3601 = vmax.f32 %v3344, 0.0
  %v3602 = vmax.f32 %v3346, %v3354
  %v3603 = vmax.f32 %v3602, %v3362
  %v3604 = vmax.f32 %v3603, %v3370
  %v3605 = vmax.f32 %v3604, %v3378
  %v3606 = vmax.f32 %v3605, %v3386
  %v3607 = vmax.f32 %v3606, %v3394
  %v3608 = vmax.f32 %v3607, %v3402
  %v3609 = vmax.f32 %v3608, %v3410
  %v3610 = vmax.f32 %v3609, %v3418
  %v3611 = vmax.f32 %v3610, %v3426
  %v3612 = vmax.f32 %v3611, %v3434
  %v3613 = vmax.f32 %v3612, %v3442
  %v3614 = vmax.f32 %v3613, %v3450
  %v3615 = vmax.f32 %v3614, %v3458
  %v3616 = vmax.f32 %v3615, %v3466
  %v3617 = vrot.slane %v3616, 4
  %v3618 = vmax.f32 %v3616, %v3617
  %v3619 = vrot.slane %v3618, 2
  %v3620 = vmax.f32 %v3618, %v3619
  %v3621 = vrot.slane %v3620, 1
  %v3622 = vmax.f32 %v3620, %v3621
  %v3623 = vmax.f32 %v3347, %v3355
  %v3624 = vmax.f32 %v3623, %v3363
  %v3625 = vmax.f32 %v3624, %v3371
  %v3626 = vmax.f32 %v3625, %v3379
  %v3627 = vmax.f32 %v3626, %v3387
  %v3628 = vmax.f32 %v3627, %v3395
  %v3629 = vmax.f32 %v3628, %v3403
  %v3630 = vmax.f32 %v3629, %v3411
  %v3631 = vmax.f32 %v3630, %v3419
  %v3632 = vmax.f32 %v3631, %v3427
  %v3633 = vmax.f32 %v3632, %v3435
  %v3634 = vmax.f32 %v3633, %v3443
  %v3635 = vmax.f32 %v3634, %v3451
  %v3636 = vmax.f32 %v3635, %v3459
  %v3637 = vmax.f32 %v3636, %v3467
  %v3638 = vrot.slane %v3637, 4
  %v3639 = vmax.f32 %v3637, %v3638
  %v3640 = vrot.slane %v3639, 2
  %v3641 = vmax.f32 %v3639, %v3640
  %v3642 = vrot.slane %v3641, 1
  %v3643 = vmax.f32 %v3641, %v3642
  %v3644 = vmax.f32 %v3348, %v3356
  %v3645 = vmax.f32 %v3644, %v3364
  %v3646 = vmax.f32 %v3645, %v3372
  %v3647 = vmax.f32 %v3646, %v3380
  %v3648 = vmax.f32 %v3647, %v3388
  %v3649 = vmax.f32 %v3648, %v3396
  %v3650 = vmax.f32 %v3649, %v3404
  %v3651 = vmax.f32 %v3650, %v3412
  %v3652 = vmax.f32 %v3651, %v3420
  %v3653 = vmax.f32 %v3652, %v3428
  %v3654 = vmax.f32 %v3653, %v3436
  %v3655 = vmax.f32 %v3654, %v3444
  %v3656 = vmax.f32 %v3655, %v3452
  %v3657 = vmax.f32 %v3656, %v3460
  %v3658 = vmax.f32 %v3657, %v3468
  %v3659 = vrot.slane %v3658, 4
  %v3660 = vmax.f32 %v3658, %v3659
  %v3661 = vrot.slane %v3660, 2
  %v3662 = vmax.f32 %v3660, %v3661
  %v3663 = vrot.slane %v3662, 1
  %v3664 = vmax.f32 %v3662, %v3663
  %v3665 = vmax.f32 %v3349, %v3357
  %v3666 = vmax.f32 %v3665, %v3365
  %v3667 = vmax.f32 %v3666, %v3373
  %v3668 = vmax.f32 %v3667, %v3381
  %v3669 = vmax.f32 %v3668, %v3389
  %v3670 = vmax.f32 %v3669, %v3397
  %v3671 = vmax.f32 %v3670, %v3405
  %v3672 = vmax.f32 %v3671, %v3413
  %v3673 = vmax.f32 %v3672, %v3421
  %v3674 = vmax.f32 %v3673, %v3429
  %v3675 = vmax.f32 %v3674, %v3437
  %v3676 = vmax.f32 %v3675, %v3445
  %v3677 = vmax.f32 %v3676, %v3453
  %v3678 = vmax.f32 %v3677, %v3461
  %v3679 = vmax.f32 %v3678, %v3469
  %v3680 = vrot.slane %v3679, 4
  %v3681 = vmax.f32 %v3679, %v3680
  %v3682 = vrot.slane %v3681, 2
  %v3683 = vmax.f32 %v3681, %v3682
  %v3684 = vrot.slane %v3683, 1
  %v3685 = vmax.f32 %v3683, %v3684
  %v3686 = vmax.f32 %v3350, %v3358
  %v3687 = vmax.f32 %v3686, %v3366
  %v3688 = vmax.f32 %v3687, %v3374
  %v3689 = vmax.f32 %v3688, %v3382
  %v3690 = vmax.f32 %v3689, %v3390
  %v3691 = vmax.f32 %v3690, %v3398
  %v3692 = vmax.f32 %v3691, %v3406
  %v3693 = vmax.f32 %v3692, %v3414
  %v3694 = vmax.f32 %v3693, %v3422
  %v3695 = vmax.f32 %v3694, %v3430
  %v3696 = vmax.f32 %v3695, %v3438
  %v3697 = vmax.f32 %v3696, %v3446
  %v3698 = vmax.f32 %v3697, %v3454
  %v3699 = vmax.f32 %v3698, %v3462
  %v3700 = vmax.f32 %v3699, %v3470
  %v3701 = vrot.slane %v3700, 4
  %v3702 = vmax.f32 %v3700, %v3701
  %v3703 = vrot.slane %v3702, 2
  %v3704 = vmax.f32 %v3702, %v3703
  %v3705 = vrot.slane %v3704, 1
  %v3706 = vmax.f32 %v3704, %v3705
  %v3707 = vmax.f32 %v3351, %v3359
  %v3708 = vmax.f32 %v3707, %v3367
  %v3709 = vmax.f32 %v3708, %v3375
  %v3710 = vmax.f32 %v3709, %v3383
  %v3711 = vmax.f32 %v3710, %v3391
  %v3712 = vmax.f32 %v3711, %v3399
  %v3713 = vmax.f32 %v3712, %v3407
  %v3714 = vmax.f32 %v3713, %v3415
  %v3715 = vmax.f32 %v3714, %v3423
  %v3716 = vmax.f32 %v3715, %v3431
  %v3717 = vmax.f32 %v3716, %v3439
  %v3718 = vmax.f32 %v3717, %v3447
  %v3719 = vmax.f32 %v3718, %v3455
  %v3720 = vmax.f32 %v3719, %v3463
  %v3721 = vmax.f32 %v3720, %v3471
  %v3722 = vrot.slane %v3721, 4
  %v3723 = vmax.f32 %v3721, %v3722
  %v3724 = vrot.slane %v3723, 2
  %v3725 = vmax.f32 %v3723, %v3724
  %v3726 = vrot.slane %v3725, 1
  %v3727 = vmax.f32 %v3725, %v3726
  %v3728 = vmax.f32 %v3352, %v3360
  %v3729 = vmax.f32 %v3728, %v3368
  %v3730 = vmax.f32 %v3729, %v3376
  %v3731 = vmax.f32 %v3730, %v3384
  %v3732 = vmax.f32 %v3731, %v3392
  %v3733 = vmax.f32 %v3732, %v3400
  %v3734 = vmax.f32 %v3733, %v3408
  %v3735 = vmax.f32 %v3734, %v3416
  %v3736 = vmax.f32 %v3735, %v3424
  %v3737 = vmax.f32 %v3736, %v3432
  %v3738 = vmax.f32 %v3737, %v3440
  %v3739 = vmax.f32 %v3738, %v3448
  %v3740 = vmax.f32 %v3739, %v3456
  %v3741 = vmax.f32 %v3740, %v3464
  %v3742 = vmax.f32 %v3741, %v3472
  %v3743 = vrot.slane %v3742, 4
  %v3744 = vmax.f32 %v3742, %v3743
  %v3745 = vrot.slane %v3744, 2
  %v3746 = vmax.f32 %v3744, %v3745
  %v3747 = vrot.slane %v3746, 1
  %v3748 = vmax.f32 %v3746, %v3747
  %v3749 = vmax.f32 %v3353, %v3361
  %v3750 = vmax.f32 %v3749, %v3369
  %v3751 = vmax.f32 %v3750, %v3377
  %v3752 = vmax.f32 %v3751, %v3385
  %v3753 = vmax.f32 %v3752, %v3393
  %v3754 = vmax.f32 %v3753, %v3401
  %v3755 = vmax.f32 %v3754, %v3409
  %v3756 = vmax.f32 %v3755, %v3417
  %v3757 = vmax.f32 %v3756, %v3425
  %v3758 = vmax.f32 %v3757, %v3433
  %v3759 = vmax.f32 %v3758, %v3441
  %v3760 = vmax.f32 %v3759, %v3449
  %v3761 = vmax.f32 %v3760, %v3457
  %v3762 = vmax.f32 %v3761, %v3465
  %v3763 = vmax.f32 %v3762, %v3473
  %v3764 = vrot.slane %v3763, 4
  %v3765 = vmax.f32 %v3763, %v3764
  %v3766 = vrot.slane %v3765, 2
  %v3767 = vmax.f32 %v3765, %v3766
  %v3768 = vrot.slane %v3767, 1
  %v3769 = vmax.f32 %v3767, %v3768
  %v3770 = vmax.f32 %v3474, %v3482
  %v3771 = vmax.f32 %v3770, %v3490
  %v3772 = vmax.f32 %v3771, %v3498
  %v3773 = vmax.f32 %v3772, %v3506
  %v3774 = vmax.f32 %v3773, %v3514
  %v3775 = vmax.f32 %v3774, %v3522
  %v3776 = vmax.f32 %v3775, %v3530
  %v3777 = vmax.f32 %v3776, %v3538
  %v3778 = vmax.f32 %v3777, %v3546
  %v3779 = vmax.f32 %v3778, %v3554
  %v3780 = vmax.f32 %v3779, %v3562
  %v3781 = vmax.f32 %v3780, %v3570
  %v3782 = vmax.f32 %v3781, %v3578
  %v3783 = vmax.f32 %v3782, %v3586
  %v3784 = vmax.f32 %v3783, %v3594
  %v3785 = vrot.slane %v3784, 4
  %v3786 = vmax.f32 %v3784, %v3785
  %v3787 = vrot.slane %v3786, 2
  %v3788 = vmax.f32 %v3786, %v3787
  %v3789 = vrot.slane %v3788, 1
  %v3790 = vmax.f32 %v3788, %v3789
  %v3791 = vmax.f32 %v3475, %v3483
  %v3792 = vmax.f32 %v3791, %v3491
  %v3793 = vmax.f32 %v3792, %v3499
  %v3794 = vmax.f32 %v3793, %v3507
  %v3795 = vmax.f32 %v3794, %v3515
  %v3796 = vmax.f32 %v3795, %v3523
  %v3797 = vmax.f32 %v3796, %v3531
  %v3798 = vmax.f32 %v3797, %v3539
  %v3799 = vmax.f32 %v3798, %v3547
  %v3800 = vmax.f32 %v3799, %v3555
  %v3801 = vmax.f32 %v3800, %v3563
  %v3802 = vmax.f32 %v3801, %v3571
  %v3803 = vmax.f32 %v3802, %v3579
  %v3804 = vmax.f32 %v3803, %v3587
  %v3805 = vmax.f32 %v3804, %v3595
  %v3806 = vrot.slane %v3805, 4
  %v3807 = vmax.f32 %v3805, %v3806
  %v3808 = vrot.slane %v3807, 2
  %v3809 = vmax.f32 %v3807, %v3808
  %v3810 = vrot.slane %v3809, 1
  %v3811 = vmax.f32 %v3809, %v3810
  %v3812 = vmax.f32 %v3476, %v3484
  %v3813 = vmax.f32 %v3812, %v3492
  %v3814 = vmax.f32 %v3813, %v3500
  %v3815 = vmax.f32 %v3814, %v3508
  %v3816 = vmax.f32 %v3815, %v3516
  %v3817 = vmax.f32 %v3816, %v3524
  %v3818 = vmax.f32 %v3817, %v3532
  %v3819 = vmax.f32 %v3818, %v3540
  %v3820 = vmax.f32 %v3819, %v3548
  %v3821 = vmax.f32 %v3820, %v3556
  %v3822 = vmax.f32 %v3821, %v3564
  %v3823 = vmax.f32 %v3822, %v3572
  %v3824 = vmax.f32 %v3823, %v3580
  %v3825 = vmax.f32 %v3824, %v3588
  %v3826 = vmax.f32 %v3825, %v3596
  %v3827 = vrot.slane %v3826, 4
  %v3828 = vmax.f32 %v3826, %v3827
  %v3829 = vrot.slane %v3828, 2
  %v3830 = vmax.f32 %v3828, %v3829
  %v3831 = vrot.slane %v3830, 1
  %v3832 = vmax.f32 %v3830, %v3831
  %v3833 = vmax.f32 %v3477, %v3485
  %v3834 = vmax.f32 %v3833, %v3493
  %v3835 = vmax.f32 %v3834, %v3501
  %v3836 = vmax.f32 %v3835, %v3509
  %v3837 = vmax.f32 %v3836, %v3517
  %v3838 = vmax.f32 %v3837, %v3525
  %v3839 = vmax.f32 %v3838, %v3533
  %v3840 = vmax.f32 %v3839, %v3541
  %v3841 = vmax.f32 %v3840, %v3549
  %v3842 = vmax.f32 %v3841, %v3557
  %v3843 = vmax.f32 %v3842, %v3565
  %v3844 = vmax.f32 %v3843, %v3573
  %v3845 = vmax.f32 %v3844, %v3581
  %v3846 = vmax.f32 %v3845, %v3589
  %v3847 = vmax.f32 %v3846, %v3597
  %v3848 = vrot.slane %v3847, 4
  %v3849 = vmax.f32 %v3847, %v3848
  %v3850 = vrot.slane %v3849, 2
  %v3851 = vmax.f32 %v3849, %v3850
  %v3852 = vrot.slane %v3851, 1
  %v3853 = vmax.f32 %v3851, %v3852
  %v3854 = vmax.f32 %v3478, %v3486
  %v3855 = vmax.f32 %v3854, %v3494
  %v3856 = vmax.f32 %v3855, %v3502
  %v3857 = vmax.f32 %v3856, %v3510
  %v3858 = vmax.f32 %v3857, %v3518
  %v3859 = vmax.f32 %v3858, %v3526
  %v3860 = vmax.f32 %v3859, %v3534
  %v3861 = vmax.f32 %v3860, %v3542
  %v3862 = vmax.f32 %v3861, %v3550
  %v3863 = vmax.f32 %v3862, %v3558
  %v3864 = vmax.f32 %v3863, %v3566
  %v3865 = vmax.f32 %v3864, %v3574
  %v3866 = vmax.f32 %v3865, %v3582
  %v3867 = vmax.f32 %v3866, %v3590
  %v3868 = vmax.f32 %v3867, %v3598
  %v3869 = vrot.slane %v3868, 4
  %v3870 = vmax.f32 %v3868, %v3869
  %v3871 = vrot.slane %v3870, 2
  %v3872 = vmax.f32 %v3870, %v3871
  %v3873 = vrot.slane %v3872, 1
  %v3874 = vmax.f32 %v3872, %v3873
  %v3875 = vmax.f32 %v3479, %v3487
  %v3876 = vmax.f32 %v3875, %v3495
  %v3877 = vmax.f32 %v3876, %v3503
  %v3878 = vmax.f32 %v3877, %v3511
  %v3879 = vmax.f32 %v3878, %v3519
  %v3880 = vmax.f32 %v3879, %v3527
  %v3881 = vmax.f32 %v3880, %v3535
  %v3882 = vmax.f32 %v3881, %v3543
  %v3883 = vmax.f32 %v3882, %v3551
  %v3884 = vmax.f32 %v3883, %v3559
  %v3885 = vmax.f32 %v3884, %v3567
  %v3886 = vmax.f32 %v3885, %v3575
  %v3887 = vmax.f32 %v3886, %v3583
  %v3888 = vmax.f32 %v3887, %v3591
  %v3889 = vmax.f32 %v3888, %v3599
  %v3890 = vrot.slane %v3889, 4
  %v3891 = vmax.f32 %v3889, %v3890
  %v3892 = vrot.slane %v3891, 2
  %v3893 = vmax.f32 %v3891, %v3892
  %v3894 = vrot.slane %v3893, 1
  %v3895 = vmax.f32 %v3893, %v3894
  %v3896 = vmax.f32 %v3480, %v3488
  %v3897 = vmax.f32 %v3896, %v3496
  %v3898 = vmax.f32 %v3897, %v3504
  %v3899 = vmax.f32 %v3898, %v3512
  %v3900 = vmax.f32 %v3899, %v3520
  %v3901 = vmax.f32 %v3900, %v3528
  %v3902 = vmax.f32 %v3901, %v3536
  %v3903 = vmax.f32 %v3902, %v3544
  %v3904 = vmax.f32 %v3903, %v3552
  %v3905 = vmax.f32 %v3904, %v3560
  %v3906 = vmax.f32 %v3905, %v3568
  %v3907 = vmax.f32 %v3906, %v3576
  %v3908 = vmax.f32 %v3907, %v3584
  %v3909 = vmax.f32 %v3908, %v3592
  %v3910 = vmax.f32 %v3909, %v3600
  %v3911 = vrot.slane %v3910, 4
  %v3912 = vmax.f32 %v3910, %v3911
  %v3913 = vrot.slane %v3912, 2
  %v3914 = vmax.f32 %v3912, %v3913
  %v3915 = vrot.slane %v3914, 1
  %v3916 = vmax.f32 %v3914, %v3915
  %v3917 = vmax.f32 %v3481, %v3489
  %v3918 = vmax.f32 %v3917, %v3497
  %v3919 = vmax.f32 %v3918, %v3505
  %v3920 = vmax.f32 %v3919, %v3513
  %v3921 = vmax.f32 %v3920, %v3521
  %v3922 = vmax.f32 %v3921, %v3529
  %v3923 = vmax.f32 %v3922, %v3537
  %v3924 = vmax.f32 %v3923, %v3545
  %v3925 = vmax.f32 %v3924, %v3553
  %v3926 = vmax.f32 %v3925, %v3561
  %v3927 = vmax.f32 %v3926, %v3569
  %v3928 = vmax.f32 %v3927, %v3577
  %v3929 = vmax.f32 %v3928, %v3585
  %v3930 = vmax.f32 %v3929, %v3593
  %v3931 = vmax.f32 %v3930, %v3601
  %v3932 = vrot.slane %v3931, 4
  %v3933 = vmax.f32 %v3931, %v3932
  %v3934 = vrot.slane %v3933, 2
  %v3935 = vmax.f32 %v3933, %v3934
  %v3936 = vrot.slane %v3935, 1
  %v3937 = vmax.f32 %v3935, %v3936
  %v3938 = vld [vmem:[%s1] sm:$0xff]
  %v3939 = vld [vmem:[%s1 + $0x8] sm:$0xff]
  %v3940 = vld [vmem:[%s1 + $0x10] sm:$0xf]
  %vm3957 = vcmask 1041409
  %v3958 = vsel %vm3957, %v3790, %v3622
  %v3959 = vsel %vm3957, %v3811, %v3643
  %v3960 = vsel %vm3957, %v3832, %v3664
  %v3961 = vsel %vm3957, %v3853, %v3685
  %v3962 = vsel %vm3957, %v3874, %v3706
  %v3963 = vsel %vm3957, %v3895, %v3727
  %v3964 = vsel %vm3957, %v3916, %v3748
  %v3965 = vsel %vm3957, %v3937, %v3769
  %3977 = vst [vmem:[#allocation1] ss:$4 sm:$0xff] %v3938
  %s3978 = scalar_lea.vmem [#allocation1], 32
  %3979 = vst [vmem:[%s3978] ss:$4 sm:$0xff] %v3939
  %v3980 = vld.sshfl [vmem:[#allocation1] sm:$0xff pattern:$0x73625140]
  %v3981 = vld.sshfl [vmem:[#allocation1 + $0x8] sm:$0xff pattern:$0x73625140]
  %v3982 = vld.sshfl [vmem:[#allocation1 + $0x10] sm:$0xff pattern:$0x73625140]
  %v3983 = vld.sshfl [vmem:[#allocation1 + $0x18] sm:$0xff pattern:$0x73625140]
  %v3984 = vld.sshfl [vmem:[#allocation1 + $0x20] sm:$0xff pattern:$0x73625140]
  %v3985 = vld.sshfl [vmem:[#allocation1 + $0x28] sm:$0xff pattern:$0x73625140]
  %v3986 = vld.sshfl [vmem:[#allocation1 + $0x30] sm:$0xff pattern:$0x73625140]
  %v3987 = vld.sshfl [vmem:[#allocation1 + $0x38] sm:$0xff pattern:$0x73625140]
  %3988 = vst [vmem:[#allocation1] ss:$4 sm:$0xff] %v3940
  %v3989 = vld.sshfl [vmem:[#allocation1] sm:$0xff pattern:$0x73625140]
  %v3990 = vld.sshfl [vmem:[#allocation1 + $0x8] sm:$0xff pattern:$0x73625140]
  %s4001 = smul.u32 4, 288
  %s4002 = smul.u32 %s4001, 4
  %s4003 = sshll.u32 %s4002, 4
  %4004 = dma.done [#allocation4], %s4003
  %v4005 = vpack.c.bf16 %v3958, %v3958
  %v4006 = vpack.c.bf16 %v3959, %v3959
  %v4007 = vpack.c.bf16 %v3960, %v3960
  %v4008 = vpack.c.bf16 %v3961, %v3961
  %v4009 = vpack.c.bf16 %v3962, %v3962
  %v4010 = vpack.c.bf16 %v3963, %v3963
  %v4011 = vpack.c.bf16 %v3964, %v3964
  %v4012 = vpack.c.bf16 %v3965, %v3965
  %v4013 = vpack.c.bf16 %v3980, %v3980
  %v4014 = vpack.c.bf16 %v3981, %v3981
  %v4015 = vpack.c.bf16 %v3982, %v3982
  %v4016 = vpack.c.bf16 %v3983, %v3983
  %v4017 = vpack.c.bf16 %v3984, %v3984
  %v4018 = vpack.c.bf16 %v3985, %v3985
  %v4019 = vpack.c.bf16 %v3986, %v3986
  %v4020 = vpack.c.bf16 %v3987, %v3987
  %v4021 = vpack.c.bf16 %v3989, %v3989
  %v4022 = vpack.c.bf16 %v3990, %v3990
  %v4023 = vld [vmem:[#allocation2] sm:$0xff]
  %v4024 = vld [vmem:[#allocation2 + $0x8] sm:$0xff]
  %v4025 = vld [vmem:[#allocation2 + $0x10] sm:$0xff]
  %v4026 = vld [vmem:[#allocation2 + $0x18] sm:$0xff]
  %v4027 = vld [vmem:[#allocation2 + $0x20] sm:$0xff]
  %v4028 = vld [vmem:[#allocation2 + $0x28] sm:$0xff]
  %v4029 = vld [vmem:[#allocation2 + $0x30] sm:$0xff]
  %v4030 = vld [vmem:[#allocation2 + $0x38] sm:$0xff]
  %v4031 = vld [vmem:[#allocation2 + $0x40] sm:$0xff]
  %v4032 = vld [vmem:[#allocation2 + $0x48] sm:$0xff]
  %v4033 = vld [vmem:[#allocation2 + $0x50] sm:$0xff]
  %v4034 = vld [vmem:[#allocation2 + $0x58] sm:$0xff]
  %v4035 = vld [vmem:[#allocation2 + $0x60] sm:$0xff]
  %v4036 = vld [vmem:[#allocation2 + $0x68] sm:$0xff]
  %v4037 = vld [vmem:[#allocation2 + $0x70] sm:$0xff]
  %v4038 = vld [vmem:[#allocation2 + $0x78] sm:$0xff]
  %v4039 = vld [vmem:[#allocation2 + $0x80] sm:$0xff]
  %v4040 = vld [vmem:[#allocation2 + $0x88] sm:$0xff]
  %v4041 = vld [vmem:[#allocation2 + $0x90] sm:$0xff]
  %v4042 = vld [vmem:[#allocation2 + $0x98] sm:$0xff]
  %v4043 = vld [vmem:[#allocation2 + $0xa0] sm:$0xff]
  %v4044 = vld [vmem:[#allocation2 + $0xa8] sm:$0xff]
  %v4045 = vld [vmem:[#allocation2 + $0xb0] sm:$0xff]
  %v4046 = vld [vmem:[#allocation2 + $0xb8] sm:$0xff]
  %v4047 = vld [vmem:[#allocation2 + $0xc0] sm:$0xff]
  %v4048 = vld [vmem:[#allocation2 + $0xc8] sm:$0xff]
  %v4049 = vld [vmem:[#allocation2 + $0xd0] sm:$0xff]
  %v4050 = vld [vmem:[#allocation2 + $0xd8] sm:$0xff]
  %v4051 = vld [vmem:[#allocation2 + $0xe0] sm:$0xff]
  %v4052 = vld [vmem:[#allocation2 + $0xe8] sm:$0xff]
  %v4053 = vld [vmem:[#allocation2 + $0xf0] sm:$0xff]
  %v4054 = vld [vmem:[#allocation2 + $0xf8] sm:$0xff]
  %v4055 = vld [vmem:[#allocation2 + $0x100] sm:$0xff]
  %v4056 = vld [vmem:[#allocation2 + $0x108] sm:$0xff]
  %v4057 = vld [vmem:[#allocation2 + $0x110] sm:$0xff]
  %v4058 = vld [vmem:[#allocation2 + $0x118] sm:$0xff]
  %v4059 = vld [vmem:[#allocation2 + $0x120] sm:$0xff]
  %v4060 = vld [vmem:[#allocation2 + $0x128] sm:$0xff]
  %v4061 = vld [vmem:[#allocation2 + $0x130] sm:$0xff]
  %v4062 = vld [vmem:[#allocation2 + $0x138] sm:$0xff]
  %v4063 = vld [vmem:[#allocation2 + $0x140] sm:$0xff]
  %v4064 = vld [vmem:[#allocation2 + $0x148] sm:$0xff]
  %v4065 = vld [vmem:[#allocation2 + $0x150] sm:$0xff]
  %v4066 = vld [vmem:[#allocation2 + $0x158] sm:$0xff]
  %v4067 = vld [vmem:[#allocation2 + $0x160] sm:$0xff]
  %v4068 = vld [vmem:[#allocation2 + $0x168] sm:$0xff]
  %v4069 = vld [vmem:[#allocation2 + $0x170] sm:$0xff]
  %v4070 = vld [vmem:[#allocation2 + $0x178] sm:$0xff]
  %v4071 = vld [vmem:[#allocation2 + $0x180] sm:$0xff]
  %v4072 = vld [vmem:[#allocation2 + $0x188] sm:$0xff]
  %v4073 = vld [vmem:[#allocation2 + $0x190] sm:$0xff]
  %v4074 = vld [vmem:[#allocation2 + $0x198] sm:$0xff]
  %v4075 = vld [vmem:[#allocation2 + $0x1a0] sm:$0xff]
  %v4076 = vld [vmem:[#allocation2 + $0x1a8] sm:$0xff]
  %v4077 = vld [vmem:[#allocation2 + $0x1b0] sm:$0xff]
  %v4078 = vld [vmem:[#allocation2 + $0x1b8] sm:$0xff]
  %v4079 = vld [vmem:[#allocation2 + $0x1c0] sm:$0xff]
  %v4080 = vld [vmem:[#allocation2 + $0x1c8] sm:$0xff]
  %v4081 = vld [vmem:[#allocation2 + $0x1d0] sm:$0xff]
  %v4082 = vld [vmem:[#allocation2 + $0x1d8] sm:$0xff]
  %v4083 = vld [vmem:[#allocation2 + $0x1e0] sm:$0xff]
  %v4084 = vld [vmem:[#allocation2 + $0x1e8] sm:$0xff]
  %v4085 = vld [vmem:[#allocation2 + $0x1f0] sm:$0xff]
  %v4086 = vld [vmem:[#allocation2 + $0x1f8] sm:$0xff]
  %v4087 = vld [vmem:[#allocation2 + $0x200] sm:$0xff]
  %v4088 = vld [vmem:[#allocation2 + $0x208] sm:$0xff]
  %v4089 = vld [vmem:[#allocation2 + $0x210] sm:$0xff]
  %v4090 = vld [vmem:[#allocation2 + $0x218] sm:$0xff]
  %v4091 = vld [vmem:[#allocation2 + $0x220] sm:$0xff]
  %v4092 = vld [vmem:[#allocation2 + $0x228] sm:$0xff]
  %v4093 = vld [vmem:[#allocation2 + $0x230] sm:$0xff]
  %v4094 = vld [vmem:[#allocation2 + $0x238] sm:$0xff]
  %v4095 = vld [vmem:[#allocation2 + $0x240] sm:$0xff]
  %v4096 = vld [vmem:[#allocation2 + $0x248] sm:$0xff]
  %v4097 = vld [vmem:[#allocation2 + $0x250] sm:$0xff]
  %v4098 = vld [vmem:[#allocation2 + $0x258] sm:$0xff]
  %v4099 = vld [vmem:[#allocation2 + $0x260] sm:$0xff]
  %v4100 = vld [vmem:[#allocation2 + $0x268] sm:$0xff]
  %v4101 = vld [vmem:[#allocation2 + $0x270] sm:$0xff]
  %v4102 = vld [vmem:[#allocation2 + $0x278] sm:$0xff]
  %v4103 = vld [vmem:[#allocation2 + $0x280] sm:$0xff]
  %v4104 = vld [vmem:[#allocation2 + $0x288] sm:$0xff]
  %v4105 = vld [vmem:[#allocation2 + $0x290] sm:$0xff]
  %v4106 = vld [vmem:[#allocation2 + $0x298] sm:$0xff]
  %v4107 = vld [vmem:[#allocation2 + $0x2a0] sm:$0xff]
  %v4108 = vld [vmem:[#allocation2 + $0x2a8] sm:$0xff]
  %v4109 = vld [vmem:[#allocation2 + $0x2b0] sm:$0xff]
  %v4110 = vld [vmem:[#allocation2 + $0x2b8] sm:$0xff]
  %v4111 = vld [vmem:[#allocation2 + $0x2c0] sm:$0xff]
  %v4112 = vld [vmem:[#allocation2 + $0x2c8] sm:$0xff]
  %v4113 = vld [vmem:[#allocation2 + $0x2d0] sm:$0xff]
  %v4114 = vld [vmem:[#allocation2 + $0x2d8] sm:$0xff]
  %v4115 = vld [vmem:[#allocation2 + $0x2e0] sm:$0xff]
  %v4116 = vld [vmem:[#allocation2 + $0x2e8] sm:$0xff]
  %v4117 = vld [vmem:[#allocation2 + $0x2f0] sm:$0xff]
  %v4118 = vld [vmem:[#allocation2 + $0x2f8] sm:$0xff]
  %v4119 = vld [vmem:[#allocation2 + $0x300] sm:$0xff]
  %v4120 = vld [vmem:[#allocation2 + $0x308] sm:$0xff]
  %v4121 = vld [vmem:[#allocation2 + $0x310] sm:$0xff]
  %v4122 = vld [vmem:[#allocation2 + $0x318] sm:$0xff]
  %v4123 = vld [vmem:[#allocation2 + $0x320] sm:$0xff]
  %v4124 = vld [vmem:[#allocation2 + $0x328] sm:$0xff]
  %v4125 = vld [vmem:[#allocation2 + $0x330] sm:$0xff]
  %v4126 = vld [vmem:[#allocation2 + $0x338] sm:$0xff]
  %v4127 = vld [vmem:[#allocation2 + $0x340] sm:$0xff]
  %v4128 = vld [vmem:[#allocation2 + $0x348] sm:$0xff]
  %v4129 = vld [vmem:[#allocation2 + $0x350] sm:$0xff]
  %v4130 = vld [vmem:[#allocation2 + $0x358] sm:$0xff]
  %v4131 = vld [vmem:[#allocation2 + $0x360] sm:$0xff]
  %v4132 = vld [vmem:[#allocation2 + $0x368] sm:$0xff]
  %v4133 = vld [vmem:[#allocation2 + $0x370] sm:$0xff]
  %v4134 = vld [vmem:[#allocation2 + $0x378] sm:$0xff]
  %v4135 = vld [vmem:[#allocation2 + $0x380] sm:$0xff]
  %v4136 = vld [vmem:[#allocation2 + $0x388] sm:$0xff]
  %v4137 = vld [vmem:[#allocation2 + $0x390] sm:$0xff]
  %v4138 = vld [vmem:[#allocation2 + $0x398] sm:$0xff]
  %v4139 = vld [vmem:[#allocation2 + $0x3a0] sm:$0xff]
  %v4140 = vld [vmem:[#allocation2 + $0x3a8] sm:$0xff]
  %v4141 = vld [vmem:[#allocation2 + $0x3b0] sm:$0xff]
  %v4142 = vld [vmem:[#allocation2 + $0x3b8] sm:$0xff]
  %v4143 = vld [vmem:[#allocation2 + $0x3c0] sm:$0xff]
  %v4144 = vld [vmem:[#allocation2 + $0x3c8] sm:$0xff]
  %v4145 = vld [vmem:[#allocation2 + $0x3d0] sm:$0xff]
  %v4146 = vld [vmem:[#allocation2 + $0x3d8] sm:$0xff]
  %v4147 = vld [vmem:[#allocation2 + $0x3e0] sm:$0xff]
  %v4148 = vld [vmem:[#allocation2 + $0x3e8] sm:$0xff]
  %v4149 = vld [vmem:[#allocation2 + $0x3f0] sm:$0xff]
  %v4150 = vld [vmem:[#allocation2 + $0x3f8] sm:$0xff]
  %v4151 = vld [vmem:[#allocation2 + $0x400] sm:$0xff]
  %v4152 = vld [vmem:[#allocation2 + $0x408] sm:$0xff]
  %v4153 = vld [vmem:[#allocation2 + $0x410] sm:$0xff]
  %v4154 = vld [vmem:[#allocation2 + $0x418] sm:$0xff]
  %v4155 = vld [vmem:[#allocation2 + $0x420] sm:$0xff]
  %v4156 = vld [vmem:[#allocation2 + $0x428] sm:$0xff]
  %v4157 = vld [vmem:[#allocation2 + $0x430] sm:$0xff]
  %v4158 = vld [vmem:[#allocation2 + $0x438] sm:$0xff]
  %v4159 = vld [vmem:[#allocation2 + $0x440] sm:$0xff]
  %v4160 = vld [vmem:[#allocation2 + $0x448] sm:$0xff]
  %v4161 = vld [vmem:[#allocation2 + $0x450] sm:$0xff]
  %v4162 = vld [vmem:[#allocation2 + $0x458] sm:$0xff]
  %v4163 = vld [vmem:[#allocation2 + $0x460] sm:$0xff]
  %v4164 = vld [vmem:[#allocation2 + $0x468] sm:$0xff]
  %v4165 = vld [vmem:[#allocation2 + $0x470] sm:$0xff]
  %v4166 = vld [vmem:[#allocation2 + $0x478] sm:$0xff]
  %v4167 = vld [vmem:[#allocation2 + $0x480] sm:$0xff]
  %v4168 = vld [vmem:[#allocation2 + $0x488] sm:$0xff]
  %v4169 = vld [vmem:[#allocation2 + $0x490] sm:$0xff]
  %v4170 = vld [vmem:[#allocation2 + $0x498] sm:$0xff]
  %v4171 = vld [vmem:[#allocation2 + $0x4a0] sm:$0xff]
  %v4172 = vld [vmem:[#allocation2 + $0x4a8] sm:$0xff]
  %v4173 = vld [vmem:[#allocation2 + $0x4b0] sm:$0xff]
  %v4174 = vld [vmem:[#allocation2 + $0x4b8] sm:$0xff]
  %v4175 = vld [vmem:[#allocation2 + $0x4c0] sm:$0xff]
  %v4176 = vld [vmem:[#allocation2 + $0x4c8] sm:$0xff]
  %v4177 = vld [vmem:[#allocation2 + $0x4d0] sm:$0xff]
  %v4178 = vld [vmem:[#allocation2 + $0x4d8] sm:$0xff]
  %v4179 = vld [vmem:[#allocation2 + $0x4e0] sm:$0xff]
  %v4180 = vld [vmem:[#allocation2 + $0x4e8] sm:$0xff]
  %v4181 = vld [vmem:[#allocation2 + $0x4f0] sm:$0xff]
  %v4182 = vld [vmem:[#allocation2 + $0x4f8] sm:$0xff]
  %v4183 = vld [vmem:[#allocation2 + $0x500] sm:$0xff]
  %v4184 = vld [vmem:[#allocation2 + $0x508] sm:$0xff]
  %v4185 = vld [vmem:[#allocation2 + $0x510] sm:$0xff]
  %v4186 = vld [vmem:[#allocation2 + $0x518] sm:$0xff]
  %v4187 = vld [vmem:[#allocation2 + $0x520] sm:$0xff]
  %v4188 = vld [vmem:[#allocation2 + $0x528] sm:$0xff]
  %v4189 = vld [vmem:[#allocation2 + $0x530] sm:$0xff]
  %v4190 = vld [vmem:[#allocation2 + $0x538] sm:$0xff]
  %v4191 = vld [vmem:[#allocation2 + $0x540] sm:$0xff]
  %v4192 = vld [vmem:[#allocation2 + $0x548] sm:$0xff]
  %v4193 = vld [vmem:[#allocation2 + $0x550] sm:$0xff]
  %v4194 = vld [vmem:[#allocation2 + $0x558] sm:$0xff]
  %v4195 = vld [vmem:[#allocation2 + $0x560] sm:$0xff]
  %v4196 = vld [vmem:[#allocation2 + $0x568] sm:$0xff]
  %v4197 = vld [vmem:[#allocation2 + $0x570] sm:$0xff]
  %v4198 = vld [vmem:[#allocation2 + $0x578] sm:$0xff]
  %v4199 = vld [vmem:[#allocation2 + $0x580] sm:$0xff]
  %v4200 = vld [vmem:[#allocation2 + $0x588] sm:$0xff]
  %v4201 = vld [vmem:[#allocation2 + $0x590] sm:$0xff]
  %v4202 = vld [vmem:[#allocation2 + $0x598] sm:$0xff]
  %v4203 = vld [vmem:[#allocation2 + $0x5a0] sm:$0xff]
  %v4204 = vld [vmem:[#allocation2 + $0x5a8] sm:$0xff]
  %v4205 = vld [vmem:[#allocation2 + $0x5b0] sm:$0xff]
  %v4206 = vld [vmem:[#allocation2 + $0x5b8] sm:$0xff]
  %v4207 = vld [vmem:[#allocation2 + $0x5c0] sm:$0xff]
  %v4208 = vld [vmem:[#allocation2 + $0x5c8] sm:$0xff]
  %v4209 = vld [vmem:[#allocation2 + $0x5d0] sm:$0xff]
  %v4210 = vld [vmem:[#allocation2 + $0x5d8] sm:$0xff]
  %v4211 = vld [vmem:[#allocation2 + $0x5e0] sm:$0xff]
  %v4212 = vld [vmem:[#allocation2 + $0x5e8] sm:$0xff]
  %v4213 = vld [vmem:[#allocation2 + $0x5f0] sm:$0xff]
  %v4214 = vld [vmem:[#allocation2 + $0x5f8] sm:$0xff]
  %v4215 = vld [vmem:[#allocation2 + $0x600] sm:$0xff]
  %v4216 = vld [vmem:[#allocation2 + $0x608] sm:$0xff]
  %v4217 = vld [vmem:[#allocation2 + $0x610] sm:$0xff]
  %v4218 = vld [vmem:[#allocation2 + $0x618] sm:$0xff]
  %v4219 = vld [vmem:[#allocation2 + $0x620] sm:$0xff]
  %v4220 = vld [vmem:[#allocation2 + $0x628] sm:$0xff]
  %v4221 = vld [vmem:[#allocation2 + $0x630] sm:$0xff]
  %v4222 = vld [vmem:[#allocation2 + $0x638] sm:$0xff]
  %v4223 = vld [vmem:[#allocation2 + $0x640] sm:$0xff]
  %v4224 = vld [vmem:[#allocation2 + $0x648] sm:$0xff]
  %v4225 = vld [vmem:[#allocation2 + $0x650] sm:$0xff]
  %v4226 = vld [vmem:[#allocation2 + $0x658] sm:$0xff]
  %v4227 = vld [vmem:[#allocation2 + $0x660] sm:$0xff]
  %v4228 = vld [vmem:[#allocation2 + $0x668] sm:$0xff]
  %v4229 = vld [vmem:[#allocation2 + $0x670] sm:$0xff]
  %v4230 = vld [vmem:[#allocation2 + $0x678] sm:$0xff]
  %v4231 = vld [vmem:[#allocation2 + $0x680] sm:$0xff]
  %v4232 = vld [vmem:[#allocation2 + $0x688] sm:$0xff]
  %v4233 = vld [vmem:[#allocation2 + $0x690] sm:$0xff]
  %v4234 = vld [vmem:[#allocation2 + $0x698] sm:$0xff]
  %v4235 = vld [vmem:[#allocation2 + $0x6a0] sm:$0xff]
  %v4236 = vld [vmem:[#allocation2 + $0x6a8] sm:$0xff]
  %v4237 = vld [vmem:[#allocation2 + $0x6b0] sm:$0xff]
  %v4238 = vld [vmem:[#allocation2 + $0x6b8] sm:$0xff]
  %v4239 = vld [vmem:[#allocation2 + $0x6c0] sm:$0xff]
  %v4240 = vld [vmem:[#allocation2 + $0x6c8] sm:$0xff]
  %v4241 = vld [vmem:[#allocation2 + $0x6d0] sm:$0xff]
  %v4242 = vld [vmem:[#allocation2 + $0x6d8] sm:$0xff]
  %v4243 = vld [vmem:[#allocation2 + $0x6e0] sm:$0xff]
  %v4244 = vld [vmem:[#allocation2 + $0x6e8] sm:$0xff]
  %v4245 = vld [vmem:[#allocation2 + $0x6f0] sm:$0xff]
  %v4246 = vld [vmem:[#allocation2 + $0x6f8] sm:$0xff]
  %v4247 = vld [vmem:[#allocation2 + $0x700] sm:$0xff]
  %v4248 = vld [vmem:[#allocation2 + $0x708] sm:$0xff]
  %v4249 = vld [vmem:[#allocation2 + $0x710] sm:$0xff]
  %v4250 = vld [vmem:[#allocation2 + $0x718] sm:$0xff]
  %v4251 = vld [vmem:[#allocation2 + $0x720] sm:$0xff]
  %v4252 = vld [vmem:[#allocation2 + $0x728] sm:$0xff]
  %v4253 = vld [vmem:[#allocation2 + $0x730] sm:$0xff]
  %v4254 = vld [vmem:[#allocation2 + $0x738] sm:$0xff]
  %v4255 = vld [vmem:[#allocation2 + $0x740] sm:$0xff]
  %v4256 = vld [vmem:[#allocation2 + $0x748] sm:$0xff]
  %v4257 = vld [vmem:[#allocation2 + $0x750] sm:$0xff]
  %v4258 = vld [vmem:[#allocation2 + $0x758] sm:$0xff]
  %v4259 = vld [vmem:[#allocation2 + $0x760] sm:$0xff]
  %v4260 = vld [vmem:[#allocation2 + $0x768] sm:$0xff]
  %v4261 = vld [vmem:[#allocation2 + $0x770] sm:$0xff]
  %v4262 = vld [vmem:[#allocation2 + $0x778] sm:$0xff]
  %v4263 = vld [vmem:[#allocation2 + $0x780] sm:$0xff]
  %v4264 = vld [vmem:[#allocation2 + $0x788] sm:$0xff]
  %v4265 = vld [vmem:[#allocation2 + $0x790] sm:$0xff]
  %v4266 = vld [vmem:[#allocation2 + $0x798] sm:$0xff]
  %v4267 = vld [vmem:[#allocation2 + $0x7a0] sm:$0xff]
  %v4268 = vld [vmem:[#allocation2 + $0x7a8] sm:$0xff]
  %v4269 = vld [vmem:[#allocation2 + $0x7b0] sm:$0xff]
  %v4270 = vld [vmem:[#allocation2 + $0x7b8] sm:$0xff]
  %v4271 = vld [vmem:[#allocation2 + $0x7c0] sm:$0xff]
  %v4272 = vld [vmem:[#allocation2 + $0x7c8] sm:$0xff]
  %v4273 = vld [vmem:[#allocation2 + $0x7d0] sm:$0xff]
  %v4274 = vld [vmem:[#allocation2 + $0x7d8] sm:$0xff]
  %v4275 = vld [vmem:[#allocation2 + $0x7e0] sm:$0xff]
  %v4276 = vld [vmem:[#allocation2 + $0x7e8] sm:$0xff]
  %v4277 = vld [vmem:[#allocation2 + $0x7f0] sm:$0xff]
  %v4278 = vld [vmem:[#allocation2 + $0x7f8] sm:$0xff]
  %v4279 = vld [vmem:[#allocation2 + $0x800] sm:$0xff]
  %v4280 = vld [vmem:[#allocation2 + $0x808] sm:$0xff]
  %v4281 = vld [vmem:[#allocation2 + $0x810] sm:$0xff]
  %v4282 = vld [vmem:[#allocation2 + $0x818] sm:$0xff]
  %v4283 = vld [vmem:[#allocation2 + $0x820] sm:$0xff]
  %v4284 = vld [vmem:[#allocation2 + $0x828] sm:$0xff]
  %v4285 = vld [vmem:[#allocation2 + $0x830] sm:$0xff]
  %v4286 = vld [vmem:[#allocation2 + $0x838] sm:$0xff]
  %v4287 = vld [vmem:[#allocation2 + $0x840] sm:$0xff]
  %v4288 = vld [vmem:[#allocation2 + $0x848] sm:$0xff]
  %v4289 = vld [vmem:[#allocation2 + $0x850] sm:$0xff]
  %v4290 = vld [vmem:[#allocation2 + $0x858] sm:$0xff]
  %v4291 = vld [vmem:[#allocation2 + $0x860] sm:$0xff]
  %v4292 = vld [vmem:[#allocation2 + $0x868] sm:$0xff]
  %v4293 = vld [vmem:[#allocation2 + $0x870] sm:$0xff]
  %v4294 = vld [vmem:[#allocation2 + $0x878] sm:$0xff]
  %v4295 = vld [vmem:[#allocation2 + $0x880] sm:$0xff]
  %v4296 = vld [vmem:[#allocation2 + $0x888] sm:$0xff]
  %v4297 = vld [vmem:[#allocation2 + $0x890] sm:$0xff]
  %v4298 = vld [vmem:[#allocation2 + $0x898] sm:$0xff]
  %v4299 = vld [vmem:[#allocation2 + $0x8a0] sm:$0xff]
  %v4300 = vld [vmem:[#allocation2 + $0x8a8] sm:$0xff]
  %v4301 = vld [vmem:[#allocation2 + $0x8b0] sm:$0xff]
  %v4302 = vld [vmem:[#allocation2 + $0x8b8] sm:$0xff]
  %v4303 = vld [vmem:[#allocation2 + $0x8c0] sm:$0xff]
  %v4304 = vld [vmem:[#allocation2 + $0x8c8] sm:$0xff]
  %v4305 = vld [vmem:[#allocation2 + $0x8d0] sm:$0xff]
  %v4306 = vld [vmem:[#allocation2 + $0x8d8] sm:$0xff]
  %v4307 = vld [vmem:[#allocation2 + $0x8e0] sm:$0xff]
  %v4308 = vld [vmem:[#allocation2 + $0x8e8] sm:$0xff]
  %v4309 = vld [vmem:[#allocation2 + $0x8f0] sm:$0xff]
  %v4310 = vld [vmem:[#allocation2 + $0x8f8] sm:$0xff]
  %v4311 = vld [vmem:[#allocation2 + $0x900] sm:$0xff]
  %v4312 = vld [vmem:[#allocation2 + $0x908] sm:$0xff]
  %v4313 = vld [vmem:[#allocation2 + $0x910] sm:$0xff]
  %v4314 = vld [vmem:[#allocation2 + $0x918] sm:$0xff]
  %v4315 = vld [vmem:[#allocation2 + $0x920] sm:$0xff]
  %v4316 = vld [vmem:[#allocation2 + $0x928] sm:$0xff]
  %v4317 = vld [vmem:[#allocation2 + $0x930] sm:$0xff]
  %v4318 = vld [vmem:[#allocation2 + $0x938] sm:$0xff]
  %v4319 = vld [vmem:[#allocation2 + $0x940] sm:$0xff]
  %v4320 = vld [vmem:[#allocation2 + $0x948] sm:$0xff]
  %v4321 = vld [vmem:[#allocation2 + $0x950] sm:$0xff]
  %v4322 = vld [vmem:[#allocation2 + $0x958] sm:$0xff]
  %v4323 = vld [vmem:[#allocation2 + $0x960] sm:$0xff]
  %v4324 = vld [vmem:[#allocation2 + $0x968] sm:$0xff]
  %v4325 = vld [vmem:[#allocation2 + $0x970] sm:$0xff]
  %v4326 = vld [vmem:[#allocation2 + $0x978] sm:$0xff]
  %v4327 = vld [vmem:[#allocation2 + $0x980] sm:$0xff]
  %v4328 = vld [vmem:[#allocation2 + $0x988] sm:$0xff]
  %v4329 = vld [vmem:[#allocation2 + $0x990] sm:$0xff]
  %v4330 = vld [vmem:[#allocation2 + $0x998] sm:$0xff]
  %v4331 = vld [vmem:[#allocation2 + $0x9a0] sm:$0xff]
  %v4332 = vld [vmem:[#allocation2 + $0x9a8] sm:$0xff]
  %v4333 = vld [vmem:[#allocation2 + $0x9b0] sm:$0xff]
  %v4334 = vld [vmem:[#allocation2 + $0x9b8] sm:$0xff]
  %v4335 = vld [vmem:[#allocation2 + $0x9c0] sm:$0xff]
  %v4336 = vld [vmem:[#allocation2 + $0x9c8] sm:$0xff]
  %v4337 = vld [vmem:[#allocation2 + $0x9d0] sm:$0xff]
  %v4338 = vld [vmem:[#allocation2 + $0x9d8] sm:$0xff]
  %v4339 = vld [vmem:[#allocation2 + $0x9e0] sm:$0xff]
  %v4340 = vld [vmem:[#allocation2 + $0x9e8] sm:$0xff]
  %v4341 = vld [vmem:[#allocation2 + $0x9f0] sm:$0xff]
  %v4342 = vld [vmem:[#allocation2 + $0x9f8] sm:$0xff]
  %v4343 = vld [vmem:[#allocation2 + $0xa00] sm:$0xff]
  %v4344 = vld [vmem:[#allocation2 + $0xa08] sm:$0xff]
  %v4345 = vld [vmem:[#allocation2 + $0xa10] sm:$0xff]
  %v4346 = vld [vmem:[#allocation2 + $0xa18] sm:$0xff]
  %v4347 = vld [vmem:[#allocation2 + $0xa20] sm:$0xff]
  %v4348 = vld [vmem:[#allocation2 + $0xa28] sm:$0xff]
  %v4349 = vld [vmem:[#allocation2 + $0xa30] sm:$0xff]
  %v4350 = vld [vmem:[#allocation2 + $0xa38] sm:$0xff]
  %v4351 = vld [vmem:[#allocation2 + $0xa40] sm:$0xff]
  %v4352 = vld [vmem:[#allocation2 + $0xa48] sm:$0xff]
  %v4353 = vld [vmem:[#allocation2 + $0xa50] sm:$0xff]
  %v4354 = vld [vmem:[#allocation2 + $0xa58] sm:$0xff]
  %v4355 = vld [vmem:[#allocation2 + $0xa60] sm:$0xff]
  %v4356 = vld [vmem:[#allocation2 + $0xa68] sm:$0xff]
  %v4357 = vld [vmem:[#allocation2 + $0xa70] sm:$0xff]
  %v4358 = vld [vmem:[#allocation2 + $0xa78] sm:$0xff]
  %v4359 = vld [vmem:[#allocation2 + $0xa80] sm:$0xff]
  %v4360 = vld [vmem:[#allocation2 + $0xa88] sm:$0xff]
  %v4361 = vld [vmem:[#allocation2 + $0xa90] sm:$0xff]
  %v4362 = vld [vmem:[#allocation2 + $0xa98] sm:$0xff]
  %v4363 = vld [vmem:[#allocation2 + $0xaa0] sm:$0xff]
  %v4364 = vld [vmem:[#allocation2 + $0xaa8] sm:$0xff]
  %v4365 = vld [vmem:[#allocation2 + $0xab0] sm:$0xff]
  %v4366 = vld [vmem:[#allocation2 + $0xab8] sm:$0xff]
  %v4367 = vld [vmem:[#allocation2 + $0xac0] sm:$0xff]
  %v4368 = vld [vmem:[#allocation2 + $0xac8] sm:$0xff]
  %v4369 = vld [vmem:[#allocation2 + $0xad0] sm:$0xff]
  %v4370 = vld [vmem:[#allocation2 + $0xad8] sm:$0xff]
  %v4371 = vld [vmem:[#allocation2 + $0xae0] sm:$0xff]
  %v4372 = vld [vmem:[#allocation2 + $0xae8] sm:$0xff]
  %v4373 = vld [vmem:[#allocation2 + $0xaf0] sm:$0xff]
  %v4374 = vld [vmem:[#allocation2 + $0xaf8] sm:$0xff]
  %v4375 = vld [vmem:[#allocation2 + $0xb00] sm:$0xff]
  %v4376 = vld [vmem:[#allocation2 + $0xb08] sm:$0xff]
  %v4377 = vld [vmem:[#allocation2 + $0xb10] sm:$0xff]
  %v4378 = vld [vmem:[#allocation2 + $0xb18] sm:$0xff]
  %v4379 = vld [vmem:[#allocation2 + $0xb20] sm:$0xff]
  %v4380 = vld [vmem:[#allocation2 + $0xb28] sm:$0xff]
  %v4381 = vld [vmem:[#allocation2 + $0xb30] sm:$0xff]
  %v4382 = vld [vmem:[#allocation2 + $0xb38] sm:$0xff]
  %v4383 = vld [vmem:[#allocation2 + $0xb40] sm:$0xff]
  %v4384 = vld [vmem:[#allocation2 + $0xb48] sm:$0xff]
  %v4385 = vld [vmem:[#allocation2 + $0xb50] sm:$0xff]
  %v4386 = vld [vmem:[#allocation2 + $0xb58] sm:$0xff]
  %v4387 = vld [vmem:[#allocation2 + $0xb60] sm:$0xff]
  %v4388 = vld [vmem:[#allocation2 + $0xb68] sm:$0xff]
  %v4389 = vld [vmem:[#allocation2 + $0xb70] sm:$0xff]
  %v4390 = vld [vmem:[#allocation2 + $0xb78] sm:$0xff]
  %v4391 = vld [vmem:[#allocation2 + $0xb80] sm:$0xff]
  %v4392 = vld [vmem:[#allocation2 + $0xb88] sm:$0xff]
  %v4393 = vld [vmem:[#allocation2 + $0xb90] sm:$0xff]
  %v4394 = vld [vmem:[#allocation2 + $0xb98] sm:$0xff]
  %v4395 = vld [vmem:[#allocation2 + $0xba0] sm:$0xff]
  %v4396 = vld [vmem:[#allocation2 + $0xba8] sm:$0xff]
  %v4397 = vld [vmem:[#allocation2 + $0xbb0] sm:$0xff]
  %v4398 = vld [vmem:[#allocation2 + $0xbb8] sm:$0xff]
  %v4399 = vld [vmem:[#allocation2 + $0xbc0] sm:$0xff]
  %v4400 = vld [vmem:[#allocation2 + $0xbc8] sm:$0xff]
  %v4401 = vld [vmem:[#allocation2 + $0xbd0] sm:$0xff]
  %v4402 = vld [vmem:[#allocation2 + $0xbd8] sm:$0xff]
  %v4403 = vld [vmem:[#allocation2 + $0xbe0] sm:$0xff]
  %v4404 = vld [vmem:[#allocation2 + $0xbe8] sm:$0xff]
  %v4405 = vld [vmem:[#allocation2 + $0xbf0] sm:$0xff]
  %v4406 = vld [vmem:[#allocation2 + $0xbf8] sm:$0xff]
  %v4407 = vld [vmem:[#allocation2 + $0xc00] sm:$0xff]
  %v4408 = vld [vmem:[#allocation2 + $0xc08] sm:$0xff]
  %v4409 = vld [vmem:[#allocation2 + $0xc10] sm:$0xff]
  %v4410 = vld [vmem:[#allocation2 + $0xc18] sm:$0xff]
  %v4411 = vld [vmem:[#allocation2 + $0xc20] sm:$0xff]
  %v4412 = vld [vmem:[#allocation2 + $0xc28] sm:$0xff]
  %v4413 = vld [vmem:[#allocation2 + $0xc30] sm:$0xff]
  %v4414 = vld [vmem:[#allocation2 + $0xc38] sm:$0xff]
  %v4415 = vld [vmem:[#allocation2 + $0xc40] sm:$0xff]
  %v4416 = vld [vmem:[#allocation2 + $0xc48] sm:$0xff]
  %v4417 = vld [vmem:[#allocation2 + $0xc50] sm:$0xff]
  %v4418 = vld [vmem:[#allocation2 + $0xc58] sm:$0xff]
  %v4419 = vld [vmem:[#allocation2 + $0xc60] sm:$0xff]
  %v4420 = vld [vmem:[#allocation2 + $0xc68] sm:$0xff]
  %v4421 = vld [vmem:[#allocation2 + $0xc70] sm:$0xff]
  %v4422 = vld [vmem:[#allocation2 + $0xc78] sm:$0xff]
  %v4423 = vld [vmem:[#allocation2 + $0xc80] sm:$0xff]
  %v4424 = vld [vmem:[#allocation2 + $0xc88] sm:$0xff]
  %v4425 = vld [vmem:[#allocation2 + $0xc90] sm:$0xff]
  %v4426 = vld [vmem:[#allocation2 + $0xc98] sm:$0xff]
  %v4427 = vld [vmem:[#allocation2 + $0xca0] sm:$0xff]
  %v4428 = vld [vmem:[#allocation2 + $0xca8] sm:$0xff]
  %v4429 = vld [vmem:[#allocation2 + $0xcb0] sm:$0xff]
  %v4430 = vld [vmem:[#allocation2 + $0xcb8] sm:$0xff]
  %v4431 = vld [vmem:[#allocation2 + $0xcc0] sm:$0xff]
  %v4432 = vld [vmem:[#allocation2 + $0xcc8] sm:$0xff]
  %v4433 = vld [vmem:[#allocation2 + $0xcd0] sm:$0xff]
  %v4434 = vld [vmem:[#allocation2 + $0xcd8] sm:$0xff]
  %v4435 = vld [vmem:[#allocation2 + $0xce0] sm:$0xff]
  %v4436 = vld [vmem:[#allocation2 + $0xce8] sm:$0xff]
  %v4437 = vld [vmem:[#allocation2 + $0xcf0] sm:$0xff]
  %v4438 = vld [vmem:[#allocation2 + $0xcf8] sm:$0xff]
  %v4439 = vld [vmem:[#allocation2 + $0xd00] sm:$0xff]
  %v4440 = vld [vmem:[#allocation2 + $0xd08] sm:$0xff]
  %v4441 = vld [vmem:[#allocation2 + $0xd10] sm:$0xff]
  %v4442 = vld [vmem:[#allocation2 + $0xd18] sm:$0xff]
  %v4443 = vld [vmem:[#allocation2 + $0xd20] sm:$0xff]
  %v4444 = vld [vmem:[#allocation2 + $0xd28] sm:$0xff]
  %v4445 = vld [vmem:[#allocation2 + $0xd30] sm:$0xff]
  %v4446 = vld [vmem:[#allocation2 + $0xd38] sm:$0xff]
  %v4447 = vld [vmem:[#allocation2 + $0xd40] sm:$0xff]
  %v4448 = vld [vmem:[#allocation2 + $0xd48] sm:$0xff]
  %v4449 = vld [vmem:[#allocation2 + $0xd50] sm:$0xff]
  %v4450 = vld [vmem:[#allocation2 + $0xd58] sm:$0xff]
  %v4451 = vld [vmem:[#allocation2 + $0xd60] sm:$0xff]
  %v4452 = vld [vmem:[#allocation2 + $0xd68] sm:$0xff]
  %v4453 = vld [vmem:[#allocation2 + $0xd70] sm:$0xff]
  %v4454 = vld [vmem:[#allocation2 + $0xd78] sm:$0xff]
  %v4455 = vld [vmem:[#allocation2 + $0xd80] sm:$0xff]
  %v4456 = vld [vmem:[#allocation2 + $0xd88] sm:$0xff]
  %v4457 = vld [vmem:[#allocation2 + $0xd90] sm:$0xff]
  %v4458 = vld [vmem:[#allocation2 + $0xd98] sm:$0xff]
  %v4459 = vld [vmem:[#allocation2 + $0xda0] sm:$0xff]
  %v4460 = vld [vmem:[#allocation2 + $0xda8] sm:$0xff]
  %v4461 = vld [vmem:[#allocation2 + $0xdb0] sm:$0xff]
  %v4462 = vld [vmem:[#allocation2 + $0xdb8] sm:$0xff]
  %v4463 = vld [vmem:[#allocation2 + $0xdc0] sm:$0xff]
  %v4464 = vld [vmem:[#allocation2 + $0xdc8] sm:$0xff]
  %v4465 = vld [vmem:[#allocation2 + $0xdd0] sm:$0xff]
  %v4466 = vld [vmem:[#allocation2 + $0xdd8] sm:$0xff]
  %v4467 = vld [vmem:[#allocation2 + $0xde0] sm:$0xff]
  %v4468 = vld [vmem:[#allocation2 + $0xde8] sm:$0xff]
  %v4469 = vld [vmem:[#allocation2 + $0xdf0] sm:$0xff]
  %v4470 = vld [vmem:[#allocation2 + $0xdf8] sm:$0xff]
  %v4471 = vld [vmem:[#allocation2 + $0xe00] sm:$0xff]
  %v4472 = vld [vmem:[#allocation2 + $0xe08] sm:$0xff]
  %v4473 = vld [vmem:[#allocation2 + $0xe10] sm:$0xff]
  %v4474 = vld [vmem:[#allocation2 + $0xe18] sm:$0xff]
  %v4475 = vld [vmem:[#allocation2 + $0xe20] sm:$0xff]
  %v4476 = vld [vmem:[#allocation2 + $0xe28] sm:$0xff]
  %v4477 = vld [vmem:[#allocation2 + $0xe30] sm:$0xff]
  %v4478 = vld [vmem:[#allocation2 + $0xe38] sm:$0xff]
  %v4479 = vld [vmem:[#allocation2 + $0xe40] sm:$0xff]
  %v4480 = vld [vmem:[#allocation2 + $0xe48] sm:$0xff]
  %v4481 = vld [vmem:[#allocation2 + $0xe50] sm:$0xff]
  %v4482 = vld [vmem:[#allocation2 + $0xe58] sm:$0xff]
  %v4483 = vld [vmem:[#allocation2 + $0xe60] sm:$0xff]
  %v4484 = vld [vmem:[#allocation2 + $0xe68] sm:$0xff]
  %v4485 = vld [vmem:[#allocation2 + $0xe70] sm:$0xff]
  %v4486 = vld [vmem:[#allocation2 + $0xe78] sm:$0xff]
  %v4487 = vld [vmem:[#allocation2 + $0xe80] sm:$0xff]
  %v4488 = vld [vmem:[#allocation2 + $0xe88] sm:$0xff]
  %v4489 = vld [vmem:[#allocation2 + $0xe90] sm:$0xff]
  %v4490 = vld [vmem:[#allocation2 + $0xe98] sm:$0xff]
  %v4491 = vld [vmem:[#allocation2 + $0xea0] sm:$0xff]
  %v4492 = vld [vmem:[#allocation2 + $0xea8] sm:$0xff]
  %v4493 = vld [vmem:[#allocation2 + $0xeb0] sm:$0xff]
  %v4494 = vld [vmem:[#allocation2 + $0xeb8] sm:$0xff]
  %v4495 = vld [vmem:[#allocation2 + $0xec0] sm:$0xff]
  %v4496 = vld [vmem:[#allocation2 + $0xec8] sm:$0xff]
  %v4497 = vld [vmem:[#allocation2 + $0xed0] sm:$0xff]
  %v4498 = vld [vmem:[#allocation2 + $0xed8] sm:$0xff]
  %v4499 = vld [vmem:[#allocation2 + $0xee0] sm:$0xff]
  %v4500 = vld [vmem:[#allocation2 + $0xee8] sm:$0xff]
  %v4501 = vld [vmem:[#allocation2 + $0xef0] sm:$0xff]
  %v4502 = vld [vmem:[#allocation2 + $0xef8] sm:$0xff]
  %v4503 = vld [vmem:[#allocation2 + $0xf00] sm:$0xff]
  %v4504 = vld [vmem:[#allocation2 + $0xf08] sm:$0xff]
  %v4505 = vld [vmem:[#allocation2 + $0xf10] sm:$0xff]
  %v4506 = vld [vmem:[#allocation2 + $0xf18] sm:$0xff]
  %v4507 = vld [vmem:[#allocation2 + $0xf20] sm:$0xff]
  %v4508 = vld [vmem:[#allocation2 + $0xf28] sm:$0xff]
  %v4509 = vld [vmem:[#allocation2 + $0xf30] sm:$0xff]
  %v4510 = vld [vmem:[#allocation2 + $0xf38] sm:$0xff]
  %v4511 = vld [vmem:[#allocation2 + $0xf40] sm:$0xff]
  %v4512 = vld [vmem:[#allocation2 + $0xf48] sm:$0xff]
  %v4513 = vld [vmem:[#allocation2 + $0xf50] sm:$0xff]
  %v4514 = vld [vmem:[#allocation2 + $0xf58] sm:$0xff]
  %v4515 = vld [vmem:[#allocation2 + $0xf60] sm:$0xff]
  %v4516 = vld [vmem:[#allocation2 + $0xf68] sm:$0xff]
  %v4517 = vld [vmem:[#allocation2 + $0xf70] sm:$0xff]
  %v4518 = vld [vmem:[#allocation2 + $0xf78] sm:$0xff]
  %v4519 = vld [vmem:[#allocation2 + $0xf80] sm:$0xff]
  %v4520 = vld [vmem:[#allocation2 + $0xf88] sm:$0xff]
  %v4521 = vld [vmem:[#allocation2 + $0xf90] sm:$0xff]
  %v4522 = vld [vmem:[#allocation2 + $0xf98] sm:$0xff]
  %v4523 = vld [vmem:[#allocation2 + $0xfa0] sm:$0xff]
  %v4524 = vld [vmem:[#allocation2 + $0xfa8] sm:$0xff]
  %v4525 = vld [vmem:[#allocation2 + $0xfb0] sm:$0xff]
  %v4526 = vld [vmem:[#allocation2 + $0xfb8] sm:$0xff]
  %v4527 = vld [vmem:[#allocation2 + $0xfc0] sm:$0xff]
  %v4528 = vld [vmem:[#allocation2 + $0xfc8] sm:$0xff]
  %v4529 = vld [vmem:[#allocation2 + $0xfd0] sm:$0xff]
  %v4530 = vld [vmem:[#allocation2 + $0xfd8] sm:$0xff]
  %v4531 = vld [vmem:[#allocation2 + $0xfe0] sm:$0xff]
  %v4532 = vld [vmem:[#allocation2 + $0xfe8] sm:$0xff]
  %v4533 = vld [vmem:[#allocation2 + $0xff0] sm:$0xff]
  %v4534 = vld [vmem:[#allocation2 + $0xff8] sm:$0xff]
  %v4535 = vld [vmem:[#allocation2 + $0x1000] sm:$0xff]
  %v4536 = vld [vmem:[#allocation2 + $0x1008] sm:$0xff]
  %v4537 = vld [vmem:[#allocation2 + $0x1010] sm:$0xff]
  %v4538 = vld [vmem:[#allocation2 + $0x1018] sm:$0xff]
  %v4539 = vld [vmem:[#allocation2 + $0x1020] sm:$0xff]
  %v4540 = vld [vmem:[#allocation2 + $0x1028] sm:$0xff]
  %v4541 = vld [vmem:[#allocation2 + $0x1030] sm:$0xff]
  %v4542 = vld [vmem:[#allocation2 + $0x1038] sm:$0xff]
  %v4543 = vld [vmem:[#allocation2 + $0x1040] sm:$0xff]
  %v4544 = vld [vmem:[#allocation2 + $0x1048] sm:$0xff]
  %v4545 = vld [vmem:[#allocation2 + $0x1050] sm:$0xff]
  %v4546 = vld [vmem:[#allocation2 + $0x1058] sm:$0xff]
  %v4547 = vld [vmem:[#allocation2 + $0x1060] sm:$0xff]
  %v4548 = vld [vmem:[#allocation2 + $0x1068] sm:$0xff]
  %v4549 = vld [vmem:[#allocation2 + $0x1070] sm:$0xff]
  %v4550 = vld [vmem:[#allocation2 + $0x1078] sm:$0xff]
  %v4551 = vld [vmem:[#allocation2 + $0x1080] sm:$0xff]
  %v4552 = vld [vmem:[#allocation2 + $0x1088] sm:$0xff]
  %v4553 = vld [vmem:[#allocation2 + $0x1090] sm:$0xff]
  %v4554 = vld [vmem:[#allocation2 + $0x1098] sm:$0xff]
  %v4555 = vld [vmem:[#allocation2 + $0x10a0] sm:$0xff]
  %v4556 = vld [vmem:[#allocation2 + $0x10a8] sm:$0xff]
  %v4557 = vld [vmem:[#allocation2 + $0x10b0] sm:$0xff]
  %v4558 = vld [vmem:[#allocation2 + $0x10b8] sm:$0xff]
  %v4559 = vld [vmem:[#allocation2 + $0x10c0] sm:$0xff]
  %v4560 = vld [vmem:[#allocation2 + $0x10c8] sm:$0xff]
  %v4561 = vld [vmem:[#allocation2 + $0x10d0] sm:$0xff]
  %v4562 = vld [vmem:[#allocation2 + $0x10d8] sm:$0xff]
  %v4563 = vld [vmem:[#allocation2 + $0x10e0] sm:$0xff]
  %v4564 = vld [vmem:[#allocation2 + $0x10e8] sm:$0xff]
  %v4565 = vld [vmem:[#allocation2 + $0x10f0] sm:$0xff]
  %v4566 = vld [vmem:[#allocation2 + $0x10f8] sm:$0xff]
  %v4567 = vld [vmem:[#allocation2 + $0x1100] sm:$0xff]
  %v4568 = vld [vmem:[#allocation2 + $0x1108] sm:$0xff]
  %v4569 = vld [vmem:[#allocation2 + $0x1110] sm:$0xff]
  %v4570 = vld [vmem:[#allocation2 + $0x1118] sm:$0xff]
  %v4571 = vld [vmem:[#allocation2 + $0x1120] sm:$0xff]
  %v4572 = vld [vmem:[#allocation2 + $0x1128] sm:$0xff]
  %v4573 = vld [vmem:[#allocation2 + $0x1130] sm:$0xff]
  %v4574 = vld [vmem:[#allocation2 + $0x1138] sm:$0xff]
  %v4575 = vld [vmem:[#allocation2 + $0x1140] sm:$0xff]
  %v4576 = vld [vmem:[#allocation2 + $0x1148] sm:$0xff]
  %v4577 = vld [vmem:[#allocation2 + $0x1150] sm:$0xff]
  %v4578 = vld [vmem:[#allocation2 + $0x1158] sm:$0xff]
  %v4579 = vld [vmem:[#allocation2 + $0x1160] sm:$0xff]
  %v4580 = vld [vmem:[#allocation2 + $0x1168] sm:$0xff]
  %v4581 = vld [vmem:[#allocation2 + $0x1170] sm:$0xff]
  %v4582 = vld [vmem:[#allocation2 + $0x1178] sm:$0xff]
  %v4583 = vld [vmem:[#allocation2 + $0x1180] sm:$0xff]
  %v4584 = vld [vmem:[#allocation2 + $0x1188] sm:$0xff]
  %v4585 = vld [vmem:[#allocation2 + $0x1190] sm:$0xff]
  %v4586 = vld [vmem:[#allocation2 + $0x1198] sm:$0xff]
  %v4587 = vld [vmem:[#allocation2 + $0x11a0] sm:$0xff]
  %v4588 = vld [vmem:[#allocation2 + $0x11a8] sm:$0xff]
  %v4589 = vld [vmem:[#allocation2 + $0x11b0] sm:$0xff]
  %v4590 = vld [vmem:[#allocation2 + $0x11b8] sm:$0xff]
  %v4591 = vld [vmem:[#allocation2 + $0x11c0] sm:$0xff]
  %v4592 = vld [vmem:[#allocation2 + $0x11c8] sm:$0xff]
  %v4593 = vld [vmem:[#allocation2 + $0x11d0] sm:$0xff]
  %v4594 = vld [vmem:[#allocation2 + $0x11d8] sm:$0xff]
  %v4595 = vld [vmem:[#allocation2 + $0x11e0] sm:$0xff]
  %v4596 = vld [vmem:[#allocation2 + $0x11e8] sm:$0xff]
  %v4597 = vld [vmem:[#allocation2 + $0x11f0] sm:$0xff]
  %v4598 = vld [vmem:[#allocation2 + $0x11f8] sm:$0xff]
  %s4599 = scalar_lea.vmem %s9, 5
  %v4600 = vld [vmem:[%s4599] ss:$8 sm:$0xf]
  %v4602 = vperm.slane %v4600, 0
  %v4603 = vperm.slane %v4600, 1
  %v4604 = vperm.slane %v4600, 2
  %v4605 = vperm.slane %v4600, 3
  %v5186 = vunpack.c.l.b16 %v4023
  %v5187 = vunpack.c.h.b16 %v4023
  %v5188 = vunpack.c.l.b16 %v4024
  %v5189 = vunpack.c.h.b16 %v4024
  %v5190 = vunpack.c.l.b16 %v4025
  %v5191 = vunpack.c.h.b16 %v4025
  %v5192 = vunpack.c.l.b16 %v4026
  %v5193 = vunpack.c.h.b16 %v4026
  %v5194 = vunpack.c.l.b16 %v4027
  %v5195 = vunpack.c.h.b16 %v4027
  %v5196 = vunpack.c.l.b16 %v4028
  %v5197 = vunpack.c.h.b16 %v4028
  %v5198 = vunpack.c.l.b16 %v4029
  %v5199 = vunpack.c.h.b16 %v4029
  %v5200 = vunpack.c.l.b16 %v4030
  %v5201 = vunpack.c.h.b16 %v4030
  %v5202 = vunpack.c.l.b16 %v4031
  %v5203 = vunpack.c.h.b16 %v4031
  %v5204 = vunpack.c.l.b16 %v4032
  %v5205 = vunpack.c.h.b16 %v4032
  %v5206 = vunpack.c.l.b16 %v4033
  %v5207 = vunpack.c.h.b16 %v4033
  %v5208 = vunpack.c.l.b16 %v4034
  %v5209 = vunpack.c.h.b16 %v4034
  %v5210 = vunpack.c.l.b16 %v4035
  %v5211 = vunpack.c.h.b16 %v4035
  %v5212 = vunpack.c.l.b16 %v4036
  %v5213 = vunpack.c.h.b16 %v4036
  %v5214 = vunpack.c.l.b16 %v4037
  %v5215 = vunpack.c.h.b16 %v4037
  %v5216 = vunpack.c.l.b16 %v4038
  %v5217 = vunpack.c.h.b16 %v4038
  %v5218 = vunpack.c.l.b16 %v4039
  %v5219 = vunpack.c.h.b16 %v4039
  %v5220 = vunpack.c.l.b16 %v4040
  %v5221 = vunpack.c.h.b16 %v4040
  %v5222 = vunpack.c.l.b16 %v4041
  %v5223 = vunpack.c.h.b16 %v4041
  %v5224 = vunpack.c.l.b16 %v4042
  %v5225 = vunpack.c.h.b16 %v4042
  %v5226 = vunpack.c.l.b16 %v4043
  %v5227 = vunpack.c.h.b16 %v4043
  %v5228 = vunpack.c.l.b16 %v4044
  %v5229 = vunpack.c.h.b16 %v4044
  %v5230 = vunpack.c.l.b16 %v4045
  %v5231 = vunpack.c.h.b16 %v4045
  %v5232 = vunpack.c.l.b16 %v4046
  %v5233 = vunpack.c.h.b16 %v4046
  %v5234 = vunpack.c.l.b16 %v4047
  %v5235 = vunpack.c.h.b16 %v4047
  %v5236 = vunpack.c.l.b16 %v4048
  %v5237 = vunpack.c.h.b16 %v4048
  %v5238 = vunpack.c.l.b16 %v4049
  %v5239 = vunpack.c.h.b16 %v4049
  %v5240 = vunpack.c.l.b16 %v4050
  %v5241 = vunpack.c.h.b16 %v4050
  %v5242 = vunpack.c.l.b16 %v4051
  %v5243 = vunpack.c.h.b16 %v4051
  %v5244 = vunpack.c.l.b16 %v4052
  %v5245 = vunpack.c.h.b16 %v4052
  %v5246 = vunpack.c.l.b16 %v4053
  %v5247 = vunpack.c.h.b16 %v4053
  %v5248 = vunpack.c.l.b16 %v4054
  %v5249 = vunpack.c.h.b16 %v4054
  %v5250 = vunpack.c.l.b16 %v4055
  %v5251 = vunpack.c.h.b16 %v4055
  %v5252 = vunpack.c.l.b16 %v4056
  %v5253 = vunpack.c.h.b16 %v4056
  %v5254 = vunpack.c.l.b16 %v4057
  %v5255 = vunpack.c.h.b16 %v4057
  %v5256 = vunpack.c.l.b16 %v4058
  %v5257 = vunpack.c.h.b16 %v4058
  %v5258 = vunpack.c.l.b16 %v4059
  %v5259 = vunpack.c.h.b16 %v4059
  %v5260 = vunpack.c.l.b16 %v4060
  %v5261 = vunpack.c.h.b16 %v4060
  %v5262 = vunpack.c.l.b16 %v4061
  %v5263 = vunpack.c.h.b16 %v4061
  %v5264 = vunpack.c.l.b16 %v4062
  %v5265 = vunpack.c.h.b16 %v4062
  %v5266 = vunpack.c.l.b16 %v4063
  %v5267 = vunpack.c.h.b16 %v4063
  %v5268 = vunpack.c.l.b16 %v4064
  %v5269 = vunpack.c.h.b16 %v4064
  %v5270 = vunpack.c.l.b16 %v4065
  %v5271 = vunpack.c.h.b16 %v4065
  %v5272 = vunpack.c.l.b16 %v4066
  %v5273 = vunpack.c.h.b16 %v4066
  %v5274 = vunpack.c.l.b16 %v4067
  %v5275 = vunpack.c.h.b16 %v4067
  %v5276 = vunpack.c.l.b16 %v4068
  %v5277 = vunpack.c.h.b16 %v4068
  %v5278 = vunpack.c.l.b16 %v4069
  %v5279 = vunpack.c.h.b16 %v4069
  %v5280 = vunpack.c.l.b16 %v4070
  %v5281 = vunpack.c.h.b16 %v4070
  %v5282 = vunpack.c.l.b16 %v4071
  %v5283 = vunpack.c.h.b16 %v4071
  %v5284 = vunpack.c.l.b16 %v4072
  %v5285 = vunpack.c.h.b16 %v4072
  %v5286 = vunpack.c.l.b16 %v4073
  %v5287 = vunpack.c.h.b16 %v4073
  %v5288 = vunpack.c.l.b16 %v4074
  %v5289 = vunpack.c.h.b16 %v4074
  %v5290 = vunpack.c.l.b16 %v4075
  %v5291 = vunpack.c.h.b16 %v4075
  %v5292 = vunpack.c.l.b16 %v4076
  %v5293 = vunpack.c.h.b16 %v4076
  %v5294 = vunpack.c.l.b16 %v4077
  %v5295 = vunpack.c.h.b16 %v4077
  %v5296 = vunpack.c.l.b16 %v4078
  %v5297 = vunpack.c.h.b16 %v4078
  %v5298 = vunpack.c.l.b16 %v4079
  %v5299 = vunpack.c.h.b16 %v4079
  %v5300 = vunpack.c.l.b16 %v4080
  %v5301 = vunpack.c.h.b16 %v4080
  %v5302 = vunpack.c.l.b16 %v4081
  %v5303 = vunpack.c.h.b16 %v4081
  %v5304 = vunpack.c.l.b16 %v4082
  %v5305 = vunpack.c.h.b16 %v4082
  %v5306 = vunpack.c.l.b16 %v4083
  %v5307 = vunpack.c.h.b16 %v4083
  %v5308 = vunpack.c.l.b16 %v4084
  %v5309 = vunpack.c.h.b16 %v4084
  %v5310 = vunpack.c.l.b16 %v4085
  %v5311 = vunpack.c.h.b16 %v4085
  %v5312 = vunpack.c.l.b16 %v4086
  %v5313 = vunpack.c.h.b16 %v4086
  %v5314 = vunpack.c.l.b16 %v4087
  %v5315 = vunpack.c.h.b16 %v4087
  %v5316 = vunpack.c.l.b16 %v4088
  %v5317 = vunpack.c.h.b16 %v4088
  %v5318 = vunpack.c.l.b16 %v4089
  %v5319 = vunpack.c.h.b16 %v4089
  %v5320 = vunpack.c.l.b16 %v4090
  %v5321 = vunpack.c.h.b16 %v4090
  %v5322 = vunpack.c.l.b16 %v4091
  %v5323 = vunpack.c.h.b16 %v4091
  %v5324 = vunpack.c.l.b16 %v4092
  %v5325 = vunpack.c.h.b16 %v4092
  %v5326 = vunpack.c.l.b16 %v4093
  %v5327 = vunpack.c.h.b16 %v4093
  %v5328 = vunpack.c.l.b16 %v4094
  %v5329 = vunpack.c.h.b16 %v4094
  %v5330 = vunpack.c.l.b16 %v4095
  %v5331 = vunpack.c.h.b16 %v4095
  %v5332 = vunpack.c.l.b16 %v4096
  %v5333 = vunpack.c.h.b16 %v4096
  %v5334 = vunpack.c.l.b16 %v4097
  %v5335 = vunpack.c.h.b16 %v4097
  %v5336 = vunpack.c.l.b16 %v4098
  %v5337 = vunpack.c.h.b16 %v4098
  %v5338 = vunpack.c.l.b16 %v4099
  %v5339 = vunpack.c.h.b16 %v4099
  %v5340 = vunpack.c.l.b16 %v4100
  %v5341 = vunpack.c.h.b16 %v4100
  %v5342 = vunpack.c.l.b16 %v4101
  %v5343 = vunpack.c.h.b16 %v4101
  %v5344 = vunpack.c.l.b16 %v4102
  %v5345 = vunpack.c.h.b16 %v4102
  %v5346 = vunpack.c.l.b16 %v4103
  %v5347 = vunpack.c.h.b16 %v4103
  %v5348 = vunpack.c.l.b16 %v4104
  %v5349 = vunpack.c.h.b16 %v4104
  %v5350 = vunpack.c.l.b16 %v4105
  %v5351 = vunpack.c.h.b16 %v4105
  %v5352 = vunpack.c.l.b16 %v4106
  %v5353 = vunpack.c.h.b16 %v4106
  %v5354 = vunpack.c.l.b16 %v4107
  %v5355 = vunpack.c.h.b16 %v4107
  %v5356 = vunpack.c.l.b16 %v4108
  %v5357 = vunpack.c.h.b16 %v4108
  %v5358 = vunpack.c.l.b16 %v4109
  %v5359 = vunpack.c.h.b16 %v4109
  %v5360 = vunpack.c.l.b16 %v4110
  %v5361 = vunpack.c.h.b16 %v4110
  %v5362 = vunpack.c.l.b16 %v4111
  %v5363 = vunpack.c.h.b16 %v4111
  %v5364 = vunpack.c.l.b16 %v4112
  %v5365 = vunpack.c.h.b16 %v4112
  %v5366 = vunpack.c.l.b16 %v4113
  %v5367 = vunpack.c.h.b16 %v4113
  %v5368 = vunpack.c.l.b16 %v4114
  %v5369 = vunpack.c.h.b16 %v4114
  %v5370 = vunpack.c.l.b16 %v4115
  %v5371 = vunpack.c.h.b16 %v4115
  %v5372 = vunpack.c.l.b16 %v4116
  %v5373 = vunpack.c.h.b16 %v4116
  %v5374 = vunpack.c.l.b16 %v4117
  %v5375 = vunpack.c.h.b16 %v4117
  %v5376 = vunpack.c.l.b16 %v4118
  %v5377 = vunpack.c.h.b16 %v4118
  %v5378 = vunpack.c.l.b16 %v4119
  %v5379 = vunpack.c.h.b16 %v4119
  %v5380 = vunpack.c.l.b16 %v4120
  %v5381 = vunpack.c.h.b16 %v4120
  %v5382 = vunpack.c.l.b16 %v4121
  %v5383 = vunpack.c.h.b16 %v4121
  %v5384 = vunpack.c.l.b16 %v4122
  %v5385 = vunpack.c.h.b16 %v4122
  %v5386 = vunpack.c.l.b16 %v4123
  %v5387 = vunpack.c.h.b16 %v4123
  %v5388 = vunpack.c.l.b16 %v4124
  %v5389 = vunpack.c.h.b16 %v4124
  %v5390 = vunpack.c.l.b16 %v4125
  %v5391 = vunpack.c.h.b16 %v4125
  %v5392 = vunpack.c.l.b16 %v4126
  %v5393 = vunpack.c.h.b16 %v4126
  %v5394 = vunpack.c.l.b16 %v4127
  %v5395 = vunpack.c.h.b16 %v4127
  %v5396 = vunpack.c.l.b16 %v4128
  %v5397 = vunpack.c.h.b16 %v4128
  %v5398 = vunpack.c.l.b16 %v4129
  %v5399 = vunpack.c.h.b16 %v4129
  %v5400 = vunpack.c.l.b16 %v4130
  %v5401 = vunpack.c.h.b16 %v4130
  %v5402 = vunpack.c.l.b16 %v4131
  %v5403 = vunpack.c.h.b16 %v4131
  %v5404 = vunpack.c.l.b16 %v4132
  %v5405 = vunpack.c.h.b16 %v4132
  %v5406 = vunpack.c.l.b16 %v4133
  %v5407 = vunpack.c.h.b16 %v4133
  %v5408 = vunpack.c.l.b16 %v4134
  %v5409 = vunpack.c.h.b16 %v4134
  %v5410 = vunpack.c.l.b16 %v4135
  %v5411 = vunpack.c.h.b16 %v4135
  %v5412 = vunpack.c.l.b16 %v4136
  %v5413 = vunpack.c.h.b16 %v4136
  %v5414 = vunpack.c.l.b16 %v4137
  %v5415 = vunpack.c.h.b16 %v4137
  %v5416 = vunpack.c.l.b16 %v4138
  %v5417 = vunpack.c.h.b16 %v4138
  %v5418 = vunpack.c.l.b16 %v4139
  %v5419 = vunpack.c.h.b16 %v4139
  %v5420 = vunpack.c.l.b16 %v4140
  %v5421 = vunpack.c.h.b16 %v4140
  %v5422 = vunpack.c.l.b16 %v4141
  %v5423 = vunpack.c.h.b16 %v4141
  %v5424 = vunpack.c.l.b16 %v4142
  %v5425 = vunpack.c.h.b16 %v4142
  %v5426 = vunpack.c.l.b16 %v4143
  %v5427 = vunpack.c.h.b16 %v4143
  %v5428 = vunpack.c.l.b16 %v4144
  %v5429 = vunpack.c.h.b16 %v4144
  %v5430 = vunpack.c.l.b16 %v4145
  %v5431 = vunpack.c.h.b16 %v4145
  %v5432 = vunpack.c.l.b16 %v4146
  %v5433 = vunpack.c.h.b16 %v4146
  %v5434 = vunpack.c.l.b16 %v4147
  %v5435 = vunpack.c.h.b16 %v4147
  %v5436 = vunpack.c.l.b16 %v4148
  %v5437 = vunpack.c.h.b16 %v4148
  %v5438 = vunpack.c.l.b16 %v4149
  %v5439 = vunpack.c.h.b16 %v4149
  %v5440 = vunpack.c.l.b16 %v4150
  %v5441 = vunpack.c.h.b16 %v4150
  %v5442 = vunpack.c.l.b16 %v4151
  %v5443 = vunpack.c.h.b16 %v4151
  %v5444 = vunpack.c.l.b16 %v4152
  %v5445 = vunpack.c.h.b16 %v4152
  %v5446 = vunpack.c.l.b16 %v4153
  %v5447 = vunpack.c.h.b16 %v4153
  %v5448 = vunpack.c.l.b16 %v4154
  %v5449 = vunpack.c.h.b16 %v4154
  %v5450 = vunpack.c.l.b16 %v4155
  %v5451 = vunpack.c.h.b16 %v4155
  %v5452 = vunpack.c.l.b16 %v4156
  %v5453 = vunpack.c.h.b16 %v4156
  %v5454 = vunpack.c.l.b16 %v4157
  %v5455 = vunpack.c.h.b16 %v4157
  %v5456 = vunpack.c.l.b16 %v4158
  %v5457 = vunpack.c.h.b16 %v4158
  %v5458 = vunpack.c.l.b16 %v4159
  %v5459 = vunpack.c.h.b16 %v4159
  %v5460 = vunpack.c.l.b16 %v4160
  %v5461 = vunpack.c.h.b16 %v4160
  %v5462 = vunpack.c.l.b16 %v4161
  %v5463 = vunpack.c.h.b16 %v4161
  %v5464 = vunpack.c.l.b16 %v4162
  %v5465 = vunpack.c.h.b16 %v4162
  %v5466 = vunpack.c.l.b16 %v4163
  %v5467 = vunpack.c.h.b16 %v4163
  %v5468 = vunpack.c.l.b16 %v4164
  %v5469 = vunpack.c.h.b16 %v4164
  %v5470 = vunpack.c.l.b16 %v4165
  %v5471 = vunpack.c.h.b16 %v4165
  %v5472 = vunpack.c.l.b16 %v4166
  %v5473 = vunpack.c.h.b16 %v4166
  %v5474 = vunpack.c.l.b16 %v4167
  %v5475 = vunpack.c.h.b16 %v4167
  %v5476 = vunpack.c.l.b16 %v4168
  %v5477 = vunpack.c.h.b16 %v4168
  %v5478 = vunpack.c.l.b16 %v4169
  %v5479 = vunpack.c.h.b16 %v4169
  %v5480 = vunpack.c.l.b16 %v4170
  %v5481 = vunpack.c.h.b16 %v4170
  %v5482 = vunpack.c.l.b16 %v4171
  %v5483 = vunpack.c.h.b16 %v4171
  %v5484 = vunpack.c.l.b16 %v4172
  %v5485 = vunpack.c.h.b16 %v4172
  %v5486 = vunpack.c.l.b16 %v4173
  %v5487 = vunpack.c.h.b16 %v4173
  %v5488 = vunpack.c.l.b16 %v4174
  %v5489 = vunpack.c.h.b16 %v4174
  %v5490 = vunpack.c.l.b16 %v4175
  %v5491 = vunpack.c.h.b16 %v4175
  %v5492 = vunpack.c.l.b16 %v4176
  %v5493 = vunpack.c.h.b16 %v4176
  %v5494 = vunpack.c.l.b16 %v4177
  %v5495 = vunpack.c.h.b16 %v4177
  %v5496 = vunpack.c.l.b16 %v4178
  %v5497 = vunpack.c.h.b16 %v4178
  %v5498 = vunpack.c.l.b16 %v4179
  %v5499 = vunpack.c.h.b16 %v4179
  %v5500 = vunpack.c.l.b16 %v4180
  %v5501 = vunpack.c.h.b16 %v4180
  %v5502 = vunpack.c.l.b16 %v4181
  %v5503 = vunpack.c.h.b16 %v4181
  %v5504 = vunpack.c.l.b16 %v4182
  %v5505 = vunpack.c.h.b16 %v4182
  %v5506 = vunpack.c.l.b16 %v4183
  %v5507 = vunpack.c.h.b16 %v4183
  %v5508 = vunpack.c.l.b16 %v4184
  %v5509 = vunpack.c.h.b16 %v4184
  %v5510 = vunpack.c.l.b16 %v4185
  %v5511 = vunpack.c.h.b16 %v4185
  %v5512 = vunpack.c.l.b16 %v4186
  %v5513 = vunpack.c.h.b16 %v4186
  %v5514 = vunpack.c.l.b16 %v4187
  %v5515 = vunpack.c.h.b16 %v4187
  %v5516 = vunpack.c.l.b16 %v4188
  %v5517 = vunpack.c.h.b16 %v4188
  %v5518 = vunpack.c.l.b16 %v4189
  %v5519 = vunpack.c.h.b16 %v4189
  %v5520 = vunpack.c.l.b16 %v4190
  %v5521 = vunpack.c.h.b16 %v4190
  %v5522 = vunpack.c.l.b16 %v4191
  %v5523 = vunpack.c.h.b16 %v4191
  %v5524 = vunpack.c.l.b16 %v4192
  %v5525 = vunpack.c.h.b16 %v4192
  %v5526 = vunpack.c.l.b16 %v4193
  %v5527 = vunpack.c.h.b16 %v4193
  %v5528 = vunpack.c.l.b16 %v4194
  %v5529 = vunpack.c.h.b16 %v4194
  %v5530 = vunpack.c.l.b16 %v4195
  %v5531 = vunpack.c.h.b16 %v4195
  %v5532 = vunpack.c.l.b16 %v4196
  %v5533 = vunpack.c.h.b16 %v4196
  %v5534 = vunpack.c.l.b16 %v4197
  %v5535 = vunpack.c.h.b16 %v4197
  %v5536 = vunpack.c.l.b16 %v4198
  %v5537 = vunpack.c.h.b16 %v4198
  %v5538 = vunpack.c.l.b16 %v4199
  %v5539 = vunpack.c.h.b16 %v4199
  %v5540 = vunpack.c.l.b16 %v4200
  %v5541 = vunpack.c.h.b16 %v4200
  %v5542 = vunpack.c.l.b16 %v4201
  %v5543 = vunpack.c.h.b16 %v4201
  %v5544 = vunpack.c.l.b16 %v4202
  %v5545 = vunpack.c.h.b16 %v4202
  %v5546 = vunpack.c.l.b16 %v4203
  %v5547 = vunpack.c.h.b16 %v4203
  %v5548 = vunpack.c.l.b16 %v4204
  %v5549 = vunpack.c.h.b16 %v4204
  %v5550 = vunpack.c.l.b16 %v4205
  %v5551 = vunpack.c.h.b16 %v4205
  %v5552 = vunpack.c.l.b16 %v4206
  %v5553 = vunpack.c.h.b16 %v4206
  %v5554 = vunpack.c.l.b16 %v4207
  %v5555 = vunpack.c.h.b16 %v4207
  %v5556 = vunpack.c.l.b16 %v4208
  %v5557 = vunpack.c.h.b16 %v4208
  %v5558 = vunpack.c.l.b16 %v4209
  %v5559 = vunpack.c.h.b16 %v4209
  %v5560 = vunpack.c.l.b16 %v4210
  %v5561 = vunpack.c.h.b16 %v4210
  %v5562 = vunpack.c.l.b16 %v4211
  %v5563 = vunpack.c.h.b16 %v4211
  %v5564 = vunpack.c.l.b16 %v4212
  %v5565 = vunpack.c.h.b16 %v4212
  %v5566 = vunpack.c.l.b16 %v4213
  %v5567 = vunpack.c.h.b16 %v4213
  %v5568 = vunpack.c.l.b16 %v4214
  %v5569 = vunpack.c.h.b16 %v4214
  %v5570 = vunpack.c.l.b16 %v4215
  %v5571 = vunpack.c.h.b16 %v4215
  %v5572 = vunpack.c.l.b16 %v4216
  %v5573 = vunpack.c.h.b16 %v4216
  %v5574 = vunpack.c.l.b16 %v4217
  %v5575 = vunpack.c.h.b16 %v4217
  %v5576 = vunpack.c.l.b16 %v4218
  %v5577 = vunpack.c.h.b16 %v4218
  %v5578 = vunpack.c.l.b16 %v4219
  %v5579 = vunpack.c.h.b16 %v4219
  %v5580 = vunpack.c.l.b16 %v4220
  %v5581 = vunpack.c.h.b16 %v4220
  %v5582 = vunpack.c.l.b16 %v4221
  %v5583 = vunpack.c.h.b16 %v4221
  %v5584 = vunpack.c.l.b16 %v4222
  %v5585 = vunpack.c.h.b16 %v4222
  %v5586 = vunpack.c.l.b16 %v4223
  %v5587 = vunpack.c.h.b16 %v4223
  %v5588 = vunpack.c.l.b16 %v4224
  %v5589 = vunpack.c.h.b16 %v4224
  %v5590 = vunpack.c.l.b16 %v4225
  %v5591 = vunpack.c.h.b16 %v4225
  %v5592 = vunpack.c.l.b16 %v4226
  %v5593 = vunpack.c.h.b16 %v4226
  %v5594 = vunpack.c.l.b16 %v4227
  %v5595 = vunpack.c.h.b16 %v4227
  %v5596 = vunpack.c.l.b16 %v4228
  %v5597 = vunpack.c.h.b16 %v4228
  %v5598 = vunpack.c.l.b16 %v4229
  %v5599 = vunpack.c.h.b16 %v4229
  %v5600 = vunpack.c.l.b16 %v4230
  %v5601 = vunpack.c.h.b16 %v4230
  %v5602 = vunpack.c.l.b16 %v4231
  %v5603 = vunpack.c.h.b16 %v4231
  %v5604 = vunpack.c.l.b16 %v4232
  %v5605 = vunpack.c.h.b16 %v4232
  %v5606 = vunpack.c.l.b16 %v4233
  %v5607 = vunpack.c.h.b16 %v4233
  %v5608 = vunpack.c.l.b16 %v4234
  %v5609 = vunpack.c.h.b16 %v4234
  %v5610 = vunpack.c.l.b16 %v4235
  %v5611 = vunpack.c.h.b16 %v4235
  %v5612 = vunpack.c.l.b16 %v4236
  %v5613 = vunpack.c.h.b16 %v4236
  %v5614 = vunpack.c.l.b16 %v4237
  %v5615 = vunpack.c.h.b16 %v4237
  %v5616 = vunpack.c.l.b16 %v4238
  %v5617 = vunpack.c.h.b16 %v4238
  %v5618 = vunpack.c.l.b16 %v4239
  %v5619 = vunpack.c.h.b16 %v4239
  %v5620 = vunpack.c.l.b16 %v4240
  %v5621 = vunpack.c.h.b16 %v4240
  %v5622 = vunpack.c.l.b16 %v4241
  %v5623 = vunpack.c.h.b16 %v4241
  %v5624 = vunpack.c.l.b16 %v4242
  %v5625 = vunpack.c.h.b16 %v4242
  %v5626 = vunpack.c.l.b16 %v4243
  %v5627 = vunpack.c.h.b16 %v4243
  %v5628 = vunpack.c.l.b16 %v4244
  %v5629 = vunpack.c.h.b16 %v4244
  %v5630 = vunpack.c.l.b16 %v4245
  %v5631 = vunpack.c.h.b16 %v4245
  %v5632 = vunpack.c.l.b16 %v4246
  %v5633 = vunpack.c.h.b16 %v4246
  %v5634 = vunpack.c.l.b16 %v4247
  %v5635 = vunpack.c.h.b16 %v4247
  %v5636 = vunpack.c.l.b16 %v4248
  %v5637 = vunpack.c.h.b16 %v4248
  %v5638 = vunpack.c.l.b16 %v4249
  %v5639 = vunpack.c.h.b16 %v4249
  %v5640 = vunpack.c.l.b16 %v4250
  %v5641 = vunpack.c.h.b16 %v4250
  %v5642 = vunpack.c.l.b16 %v4251
  %v5643 = vunpack.c.h.b16 %v4251
  %v5644 = vunpack.c.l.b16 %v4252
  %v5645 = vunpack.c.h.b16 %v4252
  %v5646 = vunpack.c.l.b16 %v4253
  %v5647 = vunpack.c.h.b16 %v4253
  %v5648 = vunpack.c.l.b16 %v4254
  %v5649 = vunpack.c.h.b16 %v4254
  %v5650 = vunpack.c.l.b16 %v4255
  %v5651 = vunpack.c.h.b16 %v4255
  %v5652 = vunpack.c.l.b16 %v4256
  %v5653 = vunpack.c.h.b16 %v4256
  %v5654 = vunpack.c.l.b16 %v4257
  %v5655 = vunpack.c.h.b16 %v4257
  %v5656 = vunpack.c.l.b16 %v4258
  %v5657 = vunpack.c.h.b16 %v4258
  %v5658 = vunpack.c.l.b16 %v4259
  %v5659 = vunpack.c.h.b16 %v4259
  %v5660 = vunpack.c.l.b16 %v4260
  %v5661 = vunpack.c.h.b16 %v4260
  %v5662 = vunpack.c.l.b16 %v4261
  %v5663 = vunpack.c.h.b16 %v4261
  %v5664 = vunpack.c.l.b16 %v4262
  %v5665 = vunpack.c.h.b16 %v4262
  %v5666 = vunpack.c.l.b16 %v4263
  %v5667 = vunpack.c.h.b16 %v4263
  %v5668 = vunpack.c.l.b16 %v4264
  %v5669 = vunpack.c.h.b16 %v4264
  %v5670 = vunpack.c.l.b16 %v4265
  %v5671 = vunpack.c.h.b16 %v4265
  %v5672 = vunpack.c.l.b16 %v4266
  %v5673 = vunpack.c.h.b16 %v4266
  %v5674 = vunpack.c.l.b16 %v4267
  %v5675 = vunpack.c.h.b16 %v4267
  %v5676 = vunpack.c.l.b16 %v4268
  %v5677 = vunpack.c.h.b16 %v4268
  %v5678 = vunpack.c.l.b16 %v4269
  %v5679 = vunpack.c.h.b16 %v4269
  %v5680 = vunpack.c.l.b16 %v4270
  %v5681 = vunpack.c.h.b16 %v4270
  %v5682 = vunpack.c.l.b16 %v4271
  %v5683 = vunpack.c.h.b16 %v4271
  %v5684 = vunpack.c.l.b16 %v4272
  %v5685 = vunpack.c.h.b16 %v4272
  %v5686 = vunpack.c.l.b16 %v4273
  %v5687 = vunpack.c.h.b16 %v4273
  %v5688 = vunpack.c.l.b16 %v4274
  %v5689 = vunpack.c.h.b16 %v4274
  %v5690 = vunpack.c.l.b16 %v4275
  %v5691 = vunpack.c.h.b16 %v4275
  %v5692 = vunpack.c.l.b16 %v4276
  %v5693 = vunpack.c.h.b16 %v4276
  %v5694 = vunpack.c.l.b16 %v4277
  %v5695 = vunpack.c.h.b16 %v4277
  %v5696 = vunpack.c.l.b16 %v4278
  %v5697 = vunpack.c.h.b16 %v4278
  %v5698 = vunpack.c.l.b16 %v4279
  %v5699 = vunpack.c.h.b16 %v4279
  %v5700 = vunpack.c.l.b16 %v4280
  %v5701 = vunpack.c.h.b16 %v4280
  %v5702 = vunpack.c.l.b16 %v4281
  %v5703 = vunpack.c.h.b16 %v4281
  %v5704 = vunpack.c.l.b16 %v4282
  %v5705 = vunpack.c.h.b16 %v4282
  %v5706 = vunpack.c.l.b16 %v4283
  %v5707 = vunpack.c.h.b16 %v4283
  %v5708 = vunpack.c.l.b16 %v4284
  %v5709 = vunpack.c.h.b16 %v4284
  %v5710 = vunpack.c.l.b16 %v4285
  %v5711 = vunpack.c.h.b16 %v4285
  %v5712 = vunpack.c.l.b16 %v4286
  %v5713 = vunpack.c.h.b16 %v4286
  %v5714 = vunpack.c.l.b16 %v4287
  %v5715 = vunpack.c.h.b16 %v4287
  %v5716 = vunpack.c.l.b16 %v4288
  %v5717 = vunpack.c.h.b16 %v4288
  %v5718 = vunpack.c.l.b16 %v4289
  %v5719 = vunpack.c.h.b16 %v4289
  %v5720 = vunpack.c.l.b16 %v4290
  %v5721 = vunpack.c.h.b16 %v4290
  %v5722 = vunpack.c.l.b16 %v4291
  %v5723 = vunpack.c.h.b16 %v4291
  %v5724 = vunpack.c.l.b16 %v4292
  %v5725 = vunpack.c.h.b16 %v4292
  %v5726 = vunpack.c.l.b16 %v4293
  %v5727 = vunpack.c.h.b16 %v4293
  %v5728 = vunpack.c.l.b16 %v4294
  %v5729 = vunpack.c.h.b16 %v4294
  %v5730 = vunpack.c.l.b16 %v4295
  %v5731 = vunpack.c.h.b16 %v4295
  %v5732 = vunpack.c.l.b16 %v4296
  %v5733 = vunpack.c.h.b16 %v4296
  %v5734 = vunpack.c.l.b16 %v4297
  %v5735 = vunpack.c.h.b16 %v4297
  %v5736 = vunpack.c.l.b16 %v4298
  %v5737 = vunpack.c.h.b16 %v4298
  %v5738 = vunpack.c.l.b16 %v4299
  %v5739 = vunpack.c.h.b16 %v4299
  %v5740 = vunpack.c.l.b16 %v4300
  %v5741 = vunpack.c.h.b16 %v4300
  %v5742 = vunpack.c.l.b16 %v4301
  %v5743 = vunpack.c.h.b16 %v4301
  %v5744 = vunpack.c.l.b16 %v4302
  %v5745 = vunpack.c.h.b16 %v4302
  %v5746 = vunpack.c.l.b16 %v4303
  %v5747 = vunpack.c.h.b16 %v4303
  %v5748 = vunpack.c.l.b16 %v4304
  %v5749 = vunpack.c.h.b16 %v4304
  %v5750 = vunpack.c.l.b16 %v4305
  %v5751 = vunpack.c.h.b16 %v4305
  %v5752 = vunpack.c.l.b16 %v4306
  %v5753 = vunpack.c.h.b16 %v4306
  %v5754 = vunpack.c.l.b16 %v4307
  %v5755 = vunpack.c.h.b16 %v4307
  %v5756 = vunpack.c.l.b16 %v4308
  %v5757 = vunpack.c.h.b16 %v4308
  %v5758 = vunpack.c.l.b16 %v4309
  %v5759 = vunpack.c.h.b16 %v4309
  %v5760 = vunpack.c.l.b16 %v4310
  %v5761 = vunpack.c.h.b16 %v4310
  %v5762 = vunpack.c.l.b16 %v4311
  %v5763 = vunpack.c.h.b16 %v4311
  %v5764 = vunpack.c.l.b16 %v4312
  %v5765 = vunpack.c.h.b16 %v4312
  %v5766 = vunpack.c.l.b16 %v4313
  %v5767 = vunpack.c.h.b16 %v4313
  %v5768 = vunpack.c.l.b16 %v4314
  %v5769 = vunpack.c.h.b16 %v4314
  %v5770 = vunpack.c.l.b16 %v4315
  %v5771 = vunpack.c.h.b16 %v4315
  %v5772 = vunpack.c.l.b16 %v4316
  %v5773 = vunpack.c.h.b16 %v4316
  %v5774 = vunpack.c.l.b16 %v4317
  %v5775 = vunpack.c.h.b16 %v4317
  %v5776 = vunpack.c.l.b16 %v4318
  %v5777 = vunpack.c.h.b16 %v4318
  %v5778 = vunpack.c.l.b16 %v4319
  %v5779 = vunpack.c.h.b16 %v4319
  %v5780 = vunpack.c.l.b16 %v4320
  %v5781 = vunpack.c.h.b16 %v4320
  %v5782 = vunpack.c.l.b16 %v4321
  %v5783 = vunpack.c.h.b16 %v4321
  %v5784 = vunpack.c.l.b16 %v4322
  %v5785 = vunpack.c.h.b16 %v4322
  %v5786 = vunpack.c.l.b16 %v4323
  %v5787 = vunpack.c.h.b16 %v4323
  %v5788 = vunpack.c.l.b16 %v4324
  %v5789 = vunpack.c.h.b16 %v4324
  %v5790 = vunpack.c.l.b16 %v4325
  %v5791 = vunpack.c.h.b16 %v4325
  %v5792 = vunpack.c.l.b16 %v4326
  %v5793 = vunpack.c.h.b16 %v4326
  %v5794 = vunpack.c.l.b16 %v4327
  %v5795 = vunpack.c.h.b16 %v4327
  %v5796 = vunpack.c.l.b16 %v4328
  %v5797 = vunpack.c.h.b16 %v4328
  %v5798 = vunpack.c.l.b16 %v4329
  %v5799 = vunpack.c.h.b16 %v4329
  %v5800 = vunpack.c.l.b16 %v4330
  %v5801 = vunpack.c.h.b16 %v4330
  %v5802 = vunpack.c.l.b16 %v4331
  %v5803 = vunpack.c.h.b16 %v4331
  %v5804 = vunpack.c.l.b16 %v4332
  %v5805 = vunpack.c.h.b16 %v4332
  %v5806 = vunpack.c.l.b16 %v4333
  %v5807 = vunpack.c.h.b16 %v4333
  %v5808 = vunpack.c.l.b16 %v4334
  %v5809 = vunpack.c.h.b16 %v4334
  %v5810 = vunpack.c.l.b16 %v4335
  %v5811 = vunpack.c.h.b16 %v4335
  %v5812 = vunpack.c.l.b16 %v4336
  %v5813 = vunpack.c.h.b16 %v4336
  %v5814 = vunpack.c.l.b16 %v4337
  %v5815 = vunpack.c.h.b16 %v4337
  %v5816 = vunpack.c.l.b16 %v4338
  %v5817 = vunpack.c.h.b16 %v4338
  %v5818 = vunpack.c.l.b16 %v4339
  %v5819 = vunpack.c.h.b16 %v4339
  %v5820 = vunpack.c.l.b16 %v4340
  %v5821 = vunpack.c.h.b16 %v4340
  %v5822 = vunpack.c.l.b16 %v4341
  %v5823 = vunpack.c.h.b16 %v4341
  %v5824 = vunpack.c.l.b16 %v4342
  %v5825 = vunpack.c.h.b16 %v4342
  %v5826 = vunpack.c.l.b16 %v4343
  %v5827 = vunpack.c.h.b16 %v4343
  %v5828 = vunpack.c.l.b16 %v4344
  %v5829 = vunpack.c.h.b16 %v4344
  %v5830 = vunpack.c.l.b16 %v4345
  %v5831 = vunpack.c.h.b16 %v4345
  %v5832 = vunpack.c.l.b16 %v4346
  %v5833 = vunpack.c.h.b16 %v4346
  %v5834 = vunpack.c.l.b16 %v4347
  %v5835 = vunpack.c.h.b16 %v4347
  %v5836 = vunpack.c.l.b16 %v4348
  %v5837 = vunpack.c.h.b16 %v4348
  %v5838 = vunpack.c.l.b16 %v4349
  %v5839 = vunpack.c.h.b16 %v4349
  %v5840 = vunpack.c.l.b16 %v4350
  %v5841 = vunpack.c.h.b16 %v4350
  %v5842 = vunpack.c.l.b16 %v4351
  %v5843 = vunpack.c.h.b16 %v4351
  %v5844 = vunpack.c.l.b16 %v4352
  %v5845 = vunpack.c.h.b16 %v4352
  %v5846 = vunpack.c.l.b16 %v4353
  %v5847 = vunpack.c.h.b16 %v4353
  %v5848 = vunpack.c.l.b16 %v4354
  %v5849 = vunpack.c.h.b16 %v4354
  %v5850 = vunpack.c.l.b16 %v4355
  %v5851 = vunpack.c.h.b16 %v4355
  %v5852 = vunpack.c.l.b16 %v4356
  %v5853 = vunpack.c.h.b16 %v4356
  %v5854 = vunpack.c.l.b16 %v4357
  %v5855 = vunpack.c.h.b16 %v4357
  %v5856 = vunpack.c.l.b16 %v4358
  %v5857 = vunpack.c.h.b16 %v4358
  %v5858 = vunpack.c.l.b16 %v4359
  %v5859 = vunpack.c.h.b16 %v4359
  %v5860 = vunpack.c.l.b16 %v4360
  %v5861 = vunpack.c.h.b16 %v4360
  %v5862 = vunpack.c.l.b16 %v4361
  %v5863 = vunpack.c.h.b16 %v4361
  %v5864 = vunpack.c.l.b16 %v4362
  %v5865 = vunpack.c.h.b16 %v4362
  %v5866 = vunpack.c.l.b16 %v4363
  %v5867 = vunpack.c.h.b16 %v4363
  %v5868 = vunpack.c.l.b16 %v4364
  %v5869 = vunpack.c.h.b16 %v4364
  %v5870 = vunpack.c.l.b16 %v4365
  %v5871 = vunpack.c.h.b16 %v4365
  %v5872 = vunpack.c.l.b16 %v4366
  %v5873 = vunpack.c.h.b16 %v4366
  %v5874 = vunpack.c.l.b16 %v4367
  %v5875 = vunpack.c.h.b16 %v4367
  %v5876 = vunpack.c.l.b16 %v4368
  %v5877 = vunpack.c.h.b16 %v4368
  %v5878 = vunpack.c.l.b16 %v4369
  %v5879 = vunpack.c.h.b16 %v4369
  %v5880 = vunpack.c.l.b16 %v4370
  %v5881 = vunpack.c.h.b16 %v4370
  %v5882 = vunpack.c.l.b16 %v4371
  %v5883 = vunpack.c.h.b16 %v4371
  %v5884 = vunpack.c.l.b16 %v4372
  %v5885 = vunpack.c.h.b16 %v4372
  %v5886 = vunpack.c.l.b16 %v4373
  %v5887 = vunpack.c.h.b16 %v4373
  %v5888 = vunpack.c.l.b16 %v4374
  %v5889 = vunpack.c.h.b16 %v4374
  %v5890 = vunpack.c.l.b16 %v4375
  %v5891 = vunpack.c.h.b16 %v4375
  %v5892 = vunpack.c.l.b16 %v4376
  %v5893 = vunpack.c.h.b16 %v4376
  %v5894 = vunpack.c.l.b16 %v4377
  %v5895 = vunpack.c.h.b16 %v4377
  %v5896 = vunpack.c.l.b16 %v4378
  %v5897 = vunpack.c.h.b16 %v4378
  %v5898 = vunpack.c.l.b16 %v4379
  %v5899 = vunpack.c.h.b16 %v4379
  %v5900 = vunpack.c.l.b16 %v4380
  %v5901 = vunpack.c.h.b16 %v4380
  %v5902 = vunpack.c.l.b16 %v4381
  %v5903 = vunpack.c.h.b16 %v4381
  %v5904 = vunpack.c.l.b16 %v4382
  %v5905 = vunpack.c.h.b16 %v4382
  %v5906 = vunpack.c.l.b16 %v4383
  %v5907 = vunpack.c.h.b16 %v4383
  %v5908 = vunpack.c.l.b16 %v4384
  %v5909 = vunpack.c.h.b16 %v4384
  %v5910 = vunpack.c.l.b16 %v4385
  %v5911 = vunpack.c.h.b16 %v4385
  %v5912 = vunpack.c.l.b16 %v4386
  %v5913 = vunpack.c.h.b16 %v4386
  %v5914 = vunpack.c.l.b16 %v4387
  %v5915 = vunpack.c.h.b16 %v4387
  %v5916 = vunpack.c.l.b16 %v4388
  %v5917 = vunpack.c.h.b16 %v4388
  %v5918 = vunpack.c.l.b16 %v4389
  %v5919 = vunpack.c.h.b16 %v4389
  %v5920 = vunpack.c.l.b16 %v4390
  %v5921 = vunpack.c.h.b16 %v4390
  %v5922 = vunpack.c.l.b16 %v4391
  %v5923 = vunpack.c.h.b16 %v4391
  %v5924 = vunpack.c.l.b16 %v4392
  %v5925 = vunpack.c.h.b16 %v4392
  %v5926 = vunpack.c.l.b16 %v4393
  %v5927 = vunpack.c.h.b16 %v4393
  %v5928 = vunpack.c.l.b16 %v4394
  %v5929 = vunpack.c.h.b16 %v4394
  %v5930 = vunpack.c.l.b16 %v4395
  %v5931 = vunpack.c.h.b16 %v4395
  %v5932 = vunpack.c.l.b16 %v4396
  %v5933 = vunpack.c.h.b16 %v4396
  %v5934 = vunpack.c.l.b16 %v4397
  %v5935 = vunpack.c.h.b16 %v4397
  %v5936 = vunpack.c.l.b16 %v4398
  %v5937 = vunpack.c.h.b16 %v4398
  %v5938 = vunpack.c.l.b16 %v4399
  %v5939 = vunpack.c.h.b16 %v4399
  %v5940 = vunpack.c.l.b16 %v4400
  %v5941 = vunpack.c.h.b16 %v4400
  %v5942 = vunpack.c.l.b16 %v4401
  %v5943 = vunpack.c.h.b16 %v4401
  %v5944 = vunpack.c.l.b16 %v4402
  %v5945 = vunpack.c.h.b16 %v4402
  %v5946 = vunpack.c.l.b16 %v4403
  %v5947 = vunpack.c.h.b16 %v4403
  %v5948 = vunpack.c.l.b16 %v4404
  %v5949 = vunpack.c.h.b16 %v4404
  %v5950 = vunpack.c.l.b16 %v4405
  %v5951 = vunpack.c.h.b16 %v4405
  %v5952 = vunpack.c.l.b16 %v4406
  %v5953 = vunpack.c.h.b16 %v4406
  %v5954 = vunpack.c.l.b16 %v4407
  %v5955 = vunpack.c.h.b16 %v4407
  %v5956 = vunpack.c.l.b16 %v4408
  %v5957 = vunpack.c.h.b16 %v4408
  %v5958 = vunpack.c.l.b16 %v4409
  %v5959 = vunpack.c.h.b16 %v4409
  %v5960 = vunpack.c.l.b16 %v4410
  %v5961 = vunpack.c.h.b16 %v4410
  %v5962 = vunpack.c.l.b16 %v4411
  %v5963 = vunpack.c.h.b16 %v4411
  %v5964 = vunpack.c.l.b16 %v4412
  %v5965 = vunpack.c.h.b16 %v4412
  %v5966 = vunpack.c.l.b16 %v4413
  %v5967 = vunpack.c.h.b16 %v4413
  %v5968 = vunpack.c.l.b16 %v4414
  %v5969 = vunpack.c.h.b16 %v4414
  %v5970 = vunpack.c.l.b16 %v4415
  %v5971 = vunpack.c.h.b16 %v4415
  %v5972 = vunpack.c.l.b16 %v4416
  %v5973 = vunpack.c.h.b16 %v4416
  %v5974 = vunpack.c.l.b16 %v4417
  %v5975 = vunpack.c.h.b16 %v4417
  %v5976 = vunpack.c.l.b16 %v4418
  %v5977 = vunpack.c.h.b16 %v4418
  %v5978 = vunpack.c.l.b16 %v4419
  %v5979 = vunpack.c.h.b16 %v4419
  %v5980 = vunpack.c.l.b16 %v4420
  %v5981 = vunpack.c.h.b16 %v4420
  %v5982 = vunpack.c.l.b16 %v4421
  %v5983 = vunpack.c.h.b16 %v4421
  %v5984 = vunpack.c.l.b16 %v4422
  %v5985 = vunpack.c.h.b16 %v4422
  %v5986 = vunpack.c.l.b16 %v4423
  %v5987 = vunpack.c.h.b16 %v4423
  %v5988 = vunpack.c.l.b16 %v4424
  %v5989 = vunpack.c.h.b16 %v4424
  %v5990 = vunpack.c.l.b16 %v4425
  %v5991 = vunpack.c.h.b16 %v4425
  %v5992 = vunpack.c.l.b16 %v4426
  %v5993 = vunpack.c.h.b16 %v4426
  %v5994 = vunpack.c.l.b16 %v4427
  %v5995 = vunpack.c.h.b16 %v4427
  %v5996 = vunpack.c.l.b16 %v4428
  %v5997 = vunpack.c.h.b16 %v4428
  %v5998 = vunpack.c.l.b16 %v4429
  %v5999 = vunpack.c.h.b16 %v4429
  %v6000 = vunpack.c.l.b16 %v4430
  %v6001 = vunpack.c.h.b16 %v4430
  %v6002 = vunpack.c.l.b16 %v4431
  %v6003 = vunpack.c.h.b16 %v4431
  %v6004 = vunpack.c.l.b16 %v4432
  %v6005 = vunpack.c.h.b16 %v4432
  %v6006 = vunpack.c.l.b16 %v4433
  %v6007 = vunpack.c.h.b16 %v4433
  %v6008 = vunpack.c.l.b16 %v4434
  %v6009 = vunpack.c.h.b16 %v4434
  %v6010 = vunpack.c.l.b16 %v4435
  %v6011 = vunpack.c.h.b16 %v4435
  %v6012 = vunpack.c.l.b16 %v4436
  %v6013 = vunpack.c.h.b16 %v4436
  %v6014 = vunpack.c.l.b16 %v4437
  %v6015 = vunpack.c.h.b16 %v4437
  %v6016 = vunpack.c.l.b16 %v4438
  %v6017 = vunpack.c.h.b16 %v4438
  %v6018 = vunpack.c.l.b16 %v4439
  %v6019 = vunpack.c.h.b16 %v4439
  %v6020 = vunpack.c.l.b16 %v4440
  %v6021 = vunpack.c.h.b16 %v4440
  %v6022 = vunpack.c.l.b16 %v4441
  %v6023 = vunpack.c.h.b16 %v4441
  %v6024 = vunpack.c.l.b16 %v4442
  %v6025 = vunpack.c.h.b16 %v4442
  %v6026 = vunpack.c.l.b16 %v4443
  %v6027 = vunpack.c.h.b16 %v4443
  %v6028 = vunpack.c.l.b16 %v4444
  %v6029 = vunpack.c.h.b16 %v4444
  %v6030 = vunpack.c.l.b16 %v4445
  %v6031 = vunpack.c.h.b16 %v4445
  %v6032 = vunpack.c.l.b16 %v4446
  %v6033 = vunpack.c.h.b16 %v4446
  %v6034 = vunpack.c.l.b16 %v4447
  %v6035 = vunpack.c.h.b16 %v4447
  %v6036 = vunpack.c.l.b16 %v4448
  %v6037 = vunpack.c.h.b16 %v4448
  %v6038 = vunpack.c.l.b16 %v4449
  %v6039 = vunpack.c.h.b16 %v4449
  %v6040 = vunpack.c.l.b16 %v4450
  %v6041 = vunpack.c.h.b16 %v4450
  %v6042 = vunpack.c.l.b16 %v4451
  %v6043 = vunpack.c.h.b16 %v4451
  %v6044 = vunpack.c.l.b16 %v4452
  %v6045 = vunpack.c.h.b16 %v4452
  %v6046 = vunpack.c.l.b16 %v4453
  %v6047 = vunpack.c.h.b16 %v4453
  %v6048 = vunpack.c.l.b16 %v4454
  %v6049 = vunpack.c.h.b16 %v4454
  %v6050 = vunpack.c.l.b16 %v4455
  %v6051 = vunpack.c.h.b16 %v4455
  %v6052 = vunpack.c.l.b16 %v4456
  %v6053 = vunpack.c.h.b16 %v4456
  %v6054 = vunpack.c.l.b16 %v4457
  %v6055 = vunpack.c.h.b16 %v4457
  %v6056 = vunpack.c.l.b16 %v4458
  %v6057 = vunpack.c.h.b16 %v4458
  %v6058 = vunpack.c.l.b16 %v4459
  %v6059 = vunpack.c.h.b16 %v4459
  %v6060 = vunpack.c.l.b16 %v4460
  %v6061 = vunpack.c.h.b16 %v4460
  %v6062 = vunpack.c.l.b16 %v4461
  %v6063 = vunpack.c.h.b16 %v4461
  %v6064 = vunpack.c.l.b16 %v4462
  %v6065 = vunpack.c.h.b16 %v4462
  %v6066 = vunpack.c.l.b16 %v4463
  %v6067 = vunpack.c.h.b16 %v4463
  %v6068 = vunpack.c.l.b16 %v4464
  %v6069 = vunpack.c.h.b16 %v4464
  %v6070 = vunpack.c.l.b16 %v4465
  %v6071 = vunpack.c.h.b16 %v4465
  %v6072 = vunpack.c.l.b16 %v4466
  %v6073 = vunpack.c.h.b16 %v4466
  %v6074 = vunpack.c.l.b16 %v4467
  %v6075 = vunpack.c.h.b16 %v4467
  %v6076 = vunpack.c.l.b16 %v4468
  %v6077 = vunpack.c.h.b16 %v4468
  %v6078 = vunpack.c.l.b16 %v4469
  %v6079 = vunpack.c.h.b16 %v4469
  %v6080 = vunpack.c.l.b16 %v4470
  %v6081 = vunpack.c.h.b16 %v4470
  %v6082 = vunpack.c.l.b16 %v4471
  %v6083 = vunpack.c.h.b16 %v4471
  %v6084 = vunpack.c.l.b16 %v4472
  %v6085 = vunpack.c.h.b16 %v4472
  %v6086 = vunpack.c.l.b16 %v4473
  %v6087 = vunpack.c.h.b16 %v4473
  %v6088 = vunpack.c.l.b16 %v4474
  %v6089 = vunpack.c.h.b16 %v4474
  %v6090 = vunpack.c.l.b16 %v4475
  %v6091 = vunpack.c.h.b16 %v4475
  %v6092 = vunpack.c.l.b16 %v4476
  %v6093 = vunpack.c.h.b16 %v4476
  %v6094 = vunpack.c.l.b16 %v4477
  %v6095 = vunpack.c.h.b16 %v4477
  %v6096 = vunpack.c.l.b16 %v4478
  %v6097 = vunpack.c.h.b16 %v4478
  %v6098 = vunpack.c.l.b16 %v4479
  %v6099 = vunpack.c.h.b16 %v4479
  %v6100 = vunpack.c.l.b16 %v4480
  %v6101 = vunpack.c.h.b16 %v4480
  %v6102 = vunpack.c.l.b16 %v4481
  %v6103 = vunpack.c.h.b16 %v4481
  %v6104 = vunpack.c.l.b16 %v4482
  %v6105 = vunpack.c.h.b16 %v4482
  %v6106 = vunpack.c.l.b16 %v4483
  %v6107 = vunpack.c.h.b16 %v4483
  %v6108 = vunpack.c.l.b16 %v4484
  %v6109 = vunpack.c.h.b16 %v4484
  %v6110 = vunpack.c.l.b16 %v4485
  %v6111 = vunpack.c.h.b16 %v4485
  %v6112 = vunpack.c.l.b16 %v4486
  %v6113 = vunpack.c.h.b16 %v4486
  %v6114 = vunpack.c.l.b16 %v4487
  %v6115 = vunpack.c.h.b16 %v4487
  %v6116 = vunpack.c.l.b16 %v4488
  %v6117 = vunpack.c.h.b16 %v4488
  %v6118 = vunpack.c.l.b16 %v4489
  %v6119 = vunpack.c.h.b16 %v4489
  %v6120 = vunpack.c.l.b16 %v4490
  %v6121 = vunpack.c.h.b16 %v4490
  %v6122 = vunpack.c.l.b16 %v4491
  %v6123 = vunpack.c.h.b16 %v4491
  %v6124 = vunpack.c.l.b16 %v4492
  %v6125 = vunpack.c.h.b16 %v4492
  %v6126 = vunpack.c.l.b16 %v4493
  %v6127 = vunpack.c.h.b16 %v4493
  %v6128 = vunpack.c.l.b16 %v4494
  %v6129 = vunpack.c.h.b16 %v4494
  %v6130 = vunpack.c.l.b16 %v4495
  %v6131 = vunpack.c.h.b16 %v4495
  %v6132 = vunpack.c.l.b16 %v4496
  %v6133 = vunpack.c.h.b16 %v4496
  %v6134 = vunpack.c.l.b16 %v4497
  %v6135 = vunpack.c.h.b16 %v4497
  %v6136 = vunpack.c.l.b16 %v4498
  %v6137 = vunpack.c.h.b16 %v4498
  %v6138 = vunpack.c.l.b16 %v4499
  %v6139 = vunpack.c.h.b16 %v4499
  %v6140 = vunpack.c.l.b16 %v4500
  %v6141 = vunpack.c.h.b16 %v4500
  %v6142 = vunpack.c.l.b16 %v4501
  %v6143 = vunpack.c.h.b16 %v4501
  %v6144 = vunpack.c.l.b16 %v4502
  %v6145 = vunpack.c.h.b16 %v4502
  %v6146 = vunpack.c.l.b16 %v4503
  %v6147 = vunpack.c.h.b16 %v4503
  %v6148 = vunpack.c.l.b16 %v4504
  %v6149 = vunpack.c.h.b16 %v4504
  %v6150 = vunpack.c.l.b16 %v4505
  %v6151 = vunpack.c.h.b16 %v4505
  %v6152 = vunpack.c.l.b16 %v4506
  %v6153 = vunpack.c.h.b16 %v4506
  %v6154 = vunpack.c.l.b16 %v4507
  %v6155 = vunpack.c.h.b16 %v4507
  %v6156 = vunpack.c.l.b16 %v4508
  %v6157 = vunpack.c.h.b16 %v4508
  %v6158 = vunpack.c.l.b16 %v4509
  %v6159 = vunpack.c.h.b16 %v4509
  %v6160 = vunpack.c.l.b16 %v4510
  %v6161 = vunpack.c.h.b16 %v4510
  %v6162 = vunpack.c.l.b16 %v4511
  %v6163 = vunpack.c.h.b16 %v4511
  %v6164 = vunpack.c.l.b16 %v4512
  %v6165 = vunpack.c.h.b16 %v4512
  %v6166 = vunpack.c.l.b16 %v4513
  %v6167 = vunpack.c.h.b16 %v4513
  %v6168 = vunpack.c.l.b16 %v4514
  %v6169 = vunpack.c.h.b16 %v4514
  %v6170 = vunpack.c.l.b16 %v4515
  %v6171 = vunpack.c.h.b16 %v4515
  %v6172 = vunpack.c.l.b16 %v4516
  %v6173 = vunpack.c.h.b16 %v4516
  %v6174 = vunpack.c.l.b16 %v4517
  %v6175 = vunpack.c.h.b16 %v4517
  %v6176 = vunpack.c.l.b16 %v4518
  %v6177 = vunpack.c.h.b16 %v4518
  %v6178 = vunpack.c.l.b16 %v4519
  %v6179 = vunpack.c.h.b16 %v4519
  %v6180 = vunpack.c.l.b16 %v4520
  %v6181 = vunpack.c.h.b16 %v4520
  %v6182 = vunpack.c.l.b16 %v4521
  %v6183 = vunpack.c.h.b16 %v4521
  %v6184 = vunpack.c.l.b16 %v4522
  %v6185 = vunpack.c.h.b16 %v4522
  %v6186 = vunpack.c.l.b16 %v4523
  %v6187 = vunpack.c.h.b16 %v4523
  %v6188 = vunpack.c.l.b16 %v4524
  %v6189 = vunpack.c.h.b16 %v4524
  %v6190 = vunpack.c.l.b16 %v4525
  %v6191 = vunpack.c.h.b16 %v4525
  %v6192 = vunpack.c.l.b16 %v4526
  %v6193 = vunpack.c.h.b16 %v4526
  %v6194 = vunpack.c.l.b16 %v4527
  %v6195 = vunpack.c.h.b16 %v4527
  %v6196 = vunpack.c.l.b16 %v4528
  %v6197 = vunpack.c.h.b16 %v4528
  %v6198 = vunpack.c.l.b16 %v4529
  %v6199 = vunpack.c.h.b16 %v4529
  %v6200 = vunpack.c.l.b16 %v4530
  %v6201 = vunpack.c.h.b16 %v4530
  %v6202 = vunpack.c.l.b16 %v4531
  %v6203 = vunpack.c.h.b16 %v4531
  %v6204 = vunpack.c.l.b16 %v4532
  %v6205 = vunpack.c.h.b16 %v4532
  %v6206 = vunpack.c.l.b16 %v4533
  %v6207 = vunpack.c.h.b16 %v4533
  %v6208 = vunpack.c.l.b16 %v4534
  %v6209 = vunpack.c.h.b16 %v4534
  %v6210 = vunpack.c.l.b16 %v4535
  %v6211 = vunpack.c.h.b16 %v4535
  %v6212 = vunpack.c.l.b16 %v4536
  %v6213 = vunpack.c.h.b16 %v4536
  %v6214 = vunpack.c.l.b16 %v4537
  %v6215 = vunpack.c.h.b16 %v4537
  %v6216 = vunpack.c.l.b16 %v4538
  %v6217 = vunpack.c.h.b16 %v4538
  %v6218 = vunpack.c.l.b16 %v4539
  %v6219 = vunpack.c.h.b16 %v4539
  %v6220 = vunpack.c.l.b16 %v4540
  %v6221 = vunpack.c.h.b16 %v4540
  %v6222 = vunpack.c.l.b16 %v4541
  %v6223 = vunpack.c.h.b16 %v4541
  %v6224 = vunpack.c.l.b16 %v4542
  %v6225 = vunpack.c.h.b16 %v4542
  %v6226 = vunpack.c.l.b16 %v4543
  %v6227 = vunpack.c.h.b16 %v4543
  %v6228 = vunpack.c.l.b16 %v4544
  %v6229 = vunpack.c.h.b16 %v4544
  %v6230 = vunpack.c.l.b16 %v4545
  %v6231 = vunpack.c.h.b16 %v4545
  %v6232 = vunpack.c.l.b16 %v4546
  %v6233 = vunpack.c.h.b16 %v4546
  %v6234 = vunpack.c.l.b16 %v4547
  %v6235 = vunpack.c.h.b16 %v4547
  %v6236 = vunpack.c.l.b16 %v4548
  %v6237 = vunpack.c.h.b16 %v4548
  %v6238 = vunpack.c.l.b16 %v4549
  %v6239 = vunpack.c.h.b16 %v4549
  %v6240 = vunpack.c.l.b16 %v4550
  %v6241 = vunpack.c.h.b16 %v4550
  %v6242 = vunpack.c.l.b16 %v4551
  %v6243 = vunpack.c.h.b16 %v4551
  %v6244 = vunpack.c.l.b16 %v4552
  %v6245 = vunpack.c.h.b16 %v4552
  %v6246 = vunpack.c.l.b16 %v4553
  %v6247 = vunpack.c.h.b16 %v4553
  %v6248 = vunpack.c.l.b16 %v4554
  %v6249 = vunpack.c.h.b16 %v4554
  %v6250 = vunpack.c.l.b16 %v4555
  %v6251 = vunpack.c.h.b16 %v4555
  %v6252 = vunpack.c.l.b16 %v4556
  %v6253 = vunpack.c.h.b16 %v4556
  %v6254 = vunpack.c.l.b16 %v4557
  %v6255 = vunpack.c.h.b16 %v4557
  %v6256 = vunpack.c.l.b16 %v4558
  %v6257 = vunpack.c.h.b16 %v4558
  %v6258 = vunpack.c.l.b16 %v4559
  %v6259 = vunpack.c.h.b16 %v4559
  %v6260 = vunpack.c.l.b16 %v4560
  %v6261 = vunpack.c.h.b16 %v4560
  %v6262 = vunpack.c.l.b16 %v4561
  %v6263 = vunpack.c.h.b16 %v4561
  %v6264 = vunpack.c.l.b16 %v4562
  %v6265 = vunpack.c.h.b16 %v4562
  %v6266 = vunpack.c.l.b16 %v4563
  %v6267 = vunpack.c.h.b16 %v4563
  %v6268 = vunpack.c.l.b16 %v4564
  %v6269 = vunpack.c.h.b16 %v4564
  %v6270 = vunpack.c.l.b16 %v4565
  %v6271 = vunpack.c.h.b16 %v4565
  %v6272 = vunpack.c.l.b16 %v4566
  %v6273 = vunpack.c.h.b16 %v4566
  %v6274 = vunpack.c.l.b16 %v4567
  %v6275 = vunpack.c.h.b16 %v4567
  %v6276 = vunpack.c.l.b16 %v4568
  %v6277 = vunpack.c.h.b16 %v4568
  %v6278 = vunpack.c.l.b16 %v4569
  %v6279 = vunpack.c.h.b16 %v4569
  %v6280 = vunpack.c.l.b16 %v4570
  %v6281 = vunpack.c.h.b16 %v4570
  %v6282 = vunpack.c.l.b16 %v4571
  %v6283 = vunpack.c.h.b16 %v4571
  %v6284 = vunpack.c.l.b16 %v4572
  %v6285 = vunpack.c.h.b16 %v4572
  %v6286 = vunpack.c.l.b16 %v4573
  %v6287 = vunpack.c.h.b16 %v4573
  %v6288 = vunpack.c.l.b16 %v4574
  %v6289 = vunpack.c.h.b16 %v4574
  %v6290 = vunpack.c.l.b16 %v4575
  %v6291 = vunpack.c.h.b16 %v4575
  %v6292 = vunpack.c.l.b16 %v4576
  %v6293 = vunpack.c.h.b16 %v4576
  %v6294 = vunpack.c.l.b16 %v4577
  %v6295 = vunpack.c.h.b16 %v4577
  %v6296 = vunpack.c.l.b16 %v4578
  %v6297 = vunpack.c.h.b16 %v4578
  %v6298 = vunpack.c.l.b16 %v4579
  %v6299 = vunpack.c.h.b16 %v4579
  %v6300 = vunpack.c.l.b16 %v4580
  %v6301 = vunpack.c.h.b16 %v4580
  %v6302 = vunpack.c.l.b16 %v4581
  %v6303 = vunpack.c.h.b16 %v4581
  %v6304 = vunpack.c.l.b16 %v4582
  %v6305 = vunpack.c.h.b16 %v4582
  %v6306 = vunpack.c.l.b16 %v4583
  %v6307 = vunpack.c.h.b16 %v4583
  %v6308 = vunpack.c.l.b16 %v4584
  %v6309 = vunpack.c.h.b16 %v4584
  %v6310 = vunpack.c.l.b16 %v4585
  %v6311 = vunpack.c.h.b16 %v4585
  %v6312 = vunpack.c.l.b16 %v4586
  %v6313 = vunpack.c.h.b16 %v4586
  %v6314 = vunpack.c.l.b16 %v4587
  %v6315 = vunpack.c.h.b16 %v4587
  %v6316 = vunpack.c.l.b16 %v4588
  %v6317 = vunpack.c.h.b16 %v4588
  %v6318 = vunpack.c.l.b16 %v4589
  %v6319 = vunpack.c.h.b16 %v4589
  %v6320 = vunpack.c.l.b16 %v4590
  %v6321 = vunpack.c.h.b16 %v4590
  %v6322 = vunpack.c.l.b16 %v4591
  %v6323 = vunpack.c.h.b16 %v4591
  %v6324 = vunpack.c.l.b16 %v4592
  %v6325 = vunpack.c.h.b16 %v4592
  %v6326 = vunpack.c.l.b16 %v4593
  %v6327 = vunpack.c.h.b16 %v4593
  %v6328 = vunpack.c.l.b16 %v4594
  %v6329 = vunpack.c.h.b16 %v4594
  %v6330 = vunpack.c.l.b16 %v4595
  %v6331 = vunpack.c.h.b16 %v4595
  %v6332 = vunpack.c.l.b16 %v4596
  %v6333 = vunpack.c.h.b16 %v4596
  %v6334 = vunpack.c.l.b16 %v4597
  %v6335 = vunpack.c.h.b16 %v4597
  %v6336 = vunpack.c.l.b16 %v4598
  %v6337 = vunpack.c.h.b16 %v4598
  %v6338 = vpack.c.b16 %v5190, %v5186
  %v6339 = vpack.c.b16 %v5191, %v5187
  %v6340 = vpack.c.b16 %v5192, %v5188
  %v6341 = vpack.c.b16 %v5193, %v5189
  %v6342 = vpack.c.b16 %v5198, %v5194
  %v6343 = vpack.c.b16 %v5199, %v5195
  %v6344 = vpack.c.b16 %v5200, %v5196
  %v6345 = vpack.c.b16 %v5201, %v5197
  %v6346 = vpack.c.b16 %v5206, %v5202
  %v6347 = vpack.c.b16 %v5207, %v5203
  %v6348 = vpack.c.b16 %v5208, %v5204
  %v6349 = vpack.c.b16 %v5209, %v5205
  %v6350 = vpack.c.b16 %v5214, %v5210
  %v6351 = vpack.c.b16 %v5215, %v5211
  %v6352 = vpack.c.b16 %v5216, %v5212
  %v6353 = vpack.c.b16 %v5217, %v5213
  %v6354 = vpack.c.b16 %v5222, %v5218
  %v6355 = vpack.c.b16 %v5223, %v5219
  %v6356 = vpack.c.b16 %v5224, %v5220
  %v6357 = vpack.c.b16 %v5225, %v5221
  %v6358 = vpack.c.b16 %v5230, %v5226
  %v6359 = vpack.c.b16 %v5231, %v5227
  %v6360 = vpack.c.b16 %v5232, %v5228
  %v6361 = vpack.c.b16 %v5233, %v5229
  %v6362 = vpack.c.b16 %v5238, %v5234
  %v6363 = vpack.c.b16 %v5239, %v5235
  %v6364 = vpack.c.b16 %v5240, %v5236
  %v6365 = vpack.c.b16 %v5241, %v5237
  %v6366 = vpack.c.b16 %v5246, %v5242
  %v6367 = vpack.c.b16 %v5247, %v5243
  %v6368 = vpack.c.b16 %v5248, %v5244
  %v6369 = vpack.c.b16 %v5249, %v5245
  %v6370 = vpack.c.b16 %v5254, %v5250
  %v6371 = vpack.c.b16 %v5255, %v5251
  %v6372 = vpack.c.b16 %v5256, %v5252
  %v6373 = vpack.c.b16 %v5257, %v5253
  %v6374 = vpack.c.b16 %v5262, %v5258
  %v6375 = vpack.c.b16 %v5263, %v5259
  %v6376 = vpack.c.b16 %v5264, %v5260
  %v6377 = vpack.c.b16 %v5265, %v5261
  %v6378 = vpack.c.b16 %v5270, %v5266
  %v6379 = vpack.c.b16 %v5271, %v5267
  %v6380 = vpack.c.b16 %v5272, %v5268
  %v6381 = vpack.c.b16 %v5273, %v5269
  %v6382 = vpack.c.b16 %v5278, %v5274
  %v6383 = vpack.c.b16 %v5279, %v5275
  %v6384 = vpack.c.b16 %v5280, %v5276
  %v6385 = vpack.c.b16 %v5281, %v5277
  %v6386 = vpack.c.b16 %v5286, %v5282
  %v6387 = vpack.c.b16 %v5287, %v5283
  %v6388 = vpack.c.b16 %v5288, %v5284
  %v6389 = vpack.c.b16 %v5289, %v5285
  %v6390 = vpack.c.b16 %v5294, %v5290
  %v6391 = vpack.c.b16 %v5295, %v5291
  %v6392 = vpack.c.b16 %v5296, %v5292
  %v6393 = vpack.c.b16 %v5297, %v5293
  %v6394 = vpack.c.b16 %v5302, %v5298
  %v6395 = vpack.c.b16 %v5303, %v5299
  %v6396 = vpack.c.b16 %v5304, %v5300
  %v6397 = vpack.c.b16 %v5305, %v5301
  %v6398 = vpack.c.b16 %v5310, %v5306
  %v6399 = vpack.c.b16 %v5311, %v5307
  %v6400 = vpack.c.b16 %v5312, %v5308
  %v6401 = vpack.c.b16 %v5313, %v5309
  %v6402 = vpack.c.b16 %v5318, %v5314
  %v6403 = vpack.c.b16 %v5319, %v5315
  %v6404 = vpack.c.b16 %v5320, %v5316
  %v6405 = vpack.c.b16 %v5321, %v5317
  %v6406 = vpack.c.b16 %v5326, %v5322
  %v6407 = vpack.c.b16 %v5327, %v5323
  %v6408 = vpack.c.b16 %v5328, %v5324
  %v6409 = vpack.c.b16 %v5329, %v5325
  %v6410 = vpack.c.b16 %v5334, %v5330
  %v6411 = vpack.c.b16 %v5335, %v5331
  %v6412 = vpack.c.b16 %v5336, %v5332
  %v6413 = vpack.c.b16 %v5337, %v5333
  %v6414 = vpack.c.b16 %v5342, %v5338
  %v6415 = vpack.c.b16 %v5343, %v5339
  %v6416 = vpack.c.b16 %v5344, %v5340
  %v6417 = vpack.c.b16 %v5345, %v5341
  %v6418 = vpack.c.b16 %v5350, %v5346
  %v6419 = vpack.c.b16 %v5351, %v5347
  %v6420 = vpack.c.b16 %v5352, %v5348
  %v6421 = vpack.c.b16 %v5353, %v5349
  %v6422 = vpack.c.b16 %v5358, %v5354
  %v6423 = vpack.c.b16 %v5359, %v5355
  %v6424 = vpack.c.b16 %v5360, %v5356
  %v6425 = vpack.c.b16 %v5361, %v5357
  %v6426 = vpack.c.b16 %v5366, %v5362
  %v6427 = vpack.c.b16 %v5367, %v5363
  %v6428 = vpack.c.b16 %v5368, %v5364
  %v6429 = vpack.c.b16 %v5369, %v5365
  %v6430 = vpack.c.b16 %v5374, %v5370
  %v6431 = vpack.c.b16 %v5375, %v5371
  %v6432 = vpack.c.b16 %v5376, %v5372
  %v6433 = vpack.c.b16 %v5377, %v5373
  %v6434 = vpack.c.b16 %v5382, %v5378
  %v6435 = vpack.c.b16 %v5383, %v5379
  %v6436 = vpack.c.b16 %v5384, %v5380
  %v6437 = vpack.c.b16 %v5385, %v5381
  %v6438 = vpack.c.b16 %v5390, %v5386
  %v6439 = vpack.c.b16 %v5391, %v5387
  %v6440 = vpack.c.b16 %v5392, %v5388
  %v6441 = vpack.c.b16 %v5393, %v5389
  %v6442 = vpack.c.b16 %v5398, %v5394
  %v6443 = vpack.c.b16 %v5399, %v5395
  %v6444 = vpack.c.b16 %v5400, %v5396
  %v6445 = vpack.c.b16 %v5401, %v5397
  %v6446 = vpack.c.b16 %v5406, %v5402
  %v6447 = vpack.c.b16 %v5407, %v5403
  %v6448 = vpack.c.b16 %v5408, %v5404
  %v6449 = vpack.c.b16 %v5409, %v5405
  %v6450 = vpack.c.b16 %v5414, %v5410
  %v6451 = vpack.c.b16 %v5415, %v5411
  %v6452 = vpack.c.b16 %v5416, %v5412
  %v6453 = vpack.c.b16 %v5417, %v5413
  %v6454 = vpack.c.b16 %v5422, %v5418
  %v6455 = vpack.c.b16 %v5423, %v5419
  %v6456 = vpack.c.b16 %v5424, %v5420
  %v6457 = vpack.c.b16 %v5425, %v5421
  %v6458 = vpack.c.b16 %v5430, %v5426
  %v6459 = vpack.c.b16 %v5431, %v5427
  %v6460 = vpack.c.b16 %v5432, %v5428
  %v6461 = vpack.c.b16 %v5433, %v5429
  %v6462 = vpack.c.b16 %v5438, %v5434
  %v6463 = vpack.c.b16 %v5439, %v5435
  %v6464 = vpack.c.b16 %v5440, %v5436
  %v6465 = vpack.c.b16 %v5441, %v5437
  %v6466 = vpack.c.b16 %v5446, %v5442
  %v6467 = vpack.c.b16 %v5447, %v5443
  %v6468 = vpack.c.b16 %v5448, %v5444
  %v6469 = vpack.c.b16 %v5449, %v5445
  %v6470 = vpack.c.b16 %v5454, %v5450
  %v6471 = vpack.c.b16 %v5455, %v5451
  %v6472 = vpack.c.b16 %v5456, %v5452
  %v6473 = vpack.c.b16 %v5457, %v5453
  %v6474 = vpack.c.b16 %v5462, %v5458
  %v6475 = vpack.c.b16 %v5463, %v5459
  %v6476 = vpack.c.b16 %v5464, %v5460
  %v6477 = vpack.c.b16 %v5465, %v5461
  %v6478 = vpack.c.b16 %v5470, %v5466
  %v6479 = vpack.c.b16 %v5471, %v5467
  %v6480 = vpack.c.b16 %v5472, %v5468
  %v6481 = vpack.c.b16 %v5473, %v5469
  %v6482 = vpack.c.b16 %v5478, %v5474
  %v6483 = vpack.c.b16 %v5479, %v5475
  %v6484 = vpack.c.b16 %v5480, %v5476
  %v6485 = vpack.c.b16 %v5481, %v5477
  %v6486 = vpack.c.b16 %v5486, %v5482
  %v6487 = vpack.c.b16 %v5487, %v5483
  %v6488 = vpack.c.b16 %v5488, %v5484
  %v6489 = vpack.c.b16 %v5489, %v5485
  %v6490 = vpack.c.b16 %v5494, %v5490
  %v6491 = vpack.c.b16 %v5495, %v5491
  %v6492 = vpack.c.b16 %v5496, %v5492
  %v6493 = vpack.c.b16 %v5497, %v5493
  %v6494 = vpack.c.b16 %v5502, %v5498
  %v6495 = vpack.c.b16 %v5503, %v5499
  %v6496 = vpack.c.b16 %v5504, %v5500
  %v6497 = vpack.c.b16 %v5505, %v5501
  %v6498 = vpack.c.b16 %v5510, %v5506
  %v6499 = vpack.c.b16 %v5511, %v5507
  %v6500 = vpack.c.b16 %v5512, %v5508
  %v6501 = vpack.c.b16 %v5513, %v5509
  %v6502 = vpack.c.b16 %v5518, %v5514
  %v6503 = vpack.c.b16 %v5519, %v5515
  %v6504 = vpack.c.b16 %v5520, %v5516
  %v6505 = vpack.c.b16 %v5521, %v5517
  %v6506 = vpack.c.b16 %v5526, %v5522
  %v6507 = vpack.c.b16 %v5527, %v5523
  %v6508 = vpack.c.b16 %v5528, %v5524
  %v6509 = vpack.c.b16 %v5529, %v5525
  %v6510 = vpack.c.b16 %v5534, %v5530
  %v6511 = vpack.c.b16 %v5535, %v5531
  %v6512 = vpack.c.b16 %v5536, %v5532
  %v6513 = vpack.c.b16 %v5537, %v5533
  %v6514 = vpack.c.b16 %v5542, %v5538
  %v6515 = vpack.c.b16 %v5543, %v5539
  %v6516 = vpack.c.b16 %v5544, %v5540
  %v6517 = vpack.c.b16 %v5545, %v5541
  %v6518 = vpack.c.b16 %v5550, %v5546
  %v6519 = vpack.c.b16 %v5551, %v5547
  %v6520 = vpack.c.b16 %v5552, %v5548
  %v6521 = vpack.c.b16 %v5553, %v5549
  %v6522 = vpack.c.b16 %v5558, %v5554
  %v6523 = vpack.c.b16 %v5559, %v5555
  %v6524 = vpack.c.b16 %v5560, %v5556
  %v6525 = vpack.c.b16 %v5561, %v5557
  %v6526 = vpack.c.b16 %v5566, %v5562
  %v6527 = vpack.c.b16 %v5567, %v5563
  %v6528 = vpack.c.b16 %v5568, %v5564
  %v6529 = vpack.c.b16 %v5569, %v5565
  %v6530 = vpack.c.b16 %v5574, %v5570
  %v6531 = vpack.c.b16 %v5575, %v5571
  %v6532 = vpack.c.b16 %v5576, %v5572
  %v6533 = vpack.c.b16 %v5577, %v5573
  %v6534 = vpack.c.b16 %v5582, %v5578
  %v6535 = vpack.c.b16 %v5583, %v5579
  %v6536 = vpack.c.b16 %v5584, %v5580
  %v6537 = vpack.c.b16 %v5585, %v5581
  %v6538 = vpack.c.b16 %v5590, %v5586
  %v6539 = vpack.c.b16 %v5591, %v5587
  %v6540 = vpack.c.b16 %v5592, %v5588
  %v6541 = vpack.c.b16 %v5593, %v5589
  %v6542 = vpack.c.b16 %v5598, %v5594
  %v6543 = vpack.c.b16 %v5599, %v5595
  %v6544 = vpack.c.b16 %v5600, %v5596
  %v6545 = vpack.c.b16 %v5601, %v5597
  %v6546 = vpack.c.b16 %v5606, %v5602
  %v6547 = vpack.c.b16 %v5607, %v5603
  %v6548 = vpack.c.b16 %v5608, %v5604
  %v6549 = vpack.c.b16 %v5609, %v5605
  %v6550 = vpack.c.b16 %v5614, %v5610
  %v6551 = vpack.c.b16 %v5615, %v5611
  %v6552 = vpack.c.b16 %v5616, %v5612
  %v6553 = vpack.c.b16 %v5617, %v5613
  %v6554 = vpack.c.b16 %v5622, %v5618
  %v6555 = vpack.c.b16 %v5623, %v5619
  %v6556 = vpack.c.b16 %v5624, %v5620
  %v6557 = vpack.c.b16 %v5625, %v5621
  %v6558 = vpack.c.b16 %v5630, %v5626
  %v6559 = vpack.c.b16 %v5631, %v5627
  %v6560 = vpack.c.b16 %v5632, %v5628
  %v6561 = vpack.c.b16 %v5633, %v5629
  %v6562 = vpack.c.b16 %v5638, %v5634
  %v6563 = vpack.c.b16 %v5639, %v5635
  %v6564 = vpack.c.b16 %v5640, %v5636
  %v6565 = vpack.c.b16 %v5641, %v5637
  %v6566 = vpack.c.b16 %v5646, %v5642
  %v6567 = vpack.c.b16 %v5647, %v5643
  %v6568 = vpack.c.b16 %v5648, %v5644
  %v6569 = vpack.c.b16 %v5649, %v5645
  %v6570 = vpack.c.b16 %v5654, %v5650
  %v6571 = vpack.c.b16 %v5655, %v5651
  %v6572 = vpack.c.b16 %v5656, %v5652
  %v6573 = vpack.c.b16 %v5657, %v5653
  %v6574 = vpack.c.b16 %v5662, %v5658
  %v6575 = vpack.c.b16 %v5663, %v5659
  %v6576 = vpack.c.b16 %v5664, %v5660
  %v6577 = vpack.c.b16 %v5665, %v5661
  %v6578 = vpack.c.b16 %v5670, %v5666
  %v6579 = vpack.c.b16 %v5671, %v5667
  %v6580 = vpack.c.b16 %v5672, %v5668
  %v6581 = vpack.c.b16 %v5673, %v5669
  %v6582 = vpack.c.b16 %v5678, %v5674
  %v6583 = vpack.c.b16 %v5679, %v5675
  %v6584 = vpack.c.b16 %v5680, %v5676
  %v6585 = vpack.c.b16 %v5681, %v5677
  %v6586 = vpack.c.b16 %v5686, %v5682
  %v6587 = vpack.c.b16 %v5687, %v5683
  %v6588 = vpack.c.b16 %v5688, %v5684
  %v6589 = vpack.c.b16 %v5689, %v5685
  %v6590 = vpack.c.b16 %v5694, %v5690
  %v6591 = vpack.c.b16 %v5695, %v5691
  %v6592 = vpack.c.b16 %v5696, %v5692
  %v6593 = vpack.c.b16 %v5697, %v5693
  %v6594 = vpack.c.b16 %v5702, %v5698
  %v6595 = vpack.c.b16 %v5703, %v5699
  %v6596 = vpack.c.b16 %v5704, %v5700
  %v6597 = vpack.c.b16 %v5705, %v5701
  %v6598 = vpack.c.b16 %v5710, %v5706
  %v6599 = vpack.c.b16 %v5711, %v5707
  %v6600 = vpack.c.b16 %v5712, %v5708
  %v6601 = vpack.c.b16 %v5713, %v5709
  %v6602 = vpack.c.b16 %v5718, %v5714
  %v6603 = vpack.c.b16 %v5719, %v5715
  %v6604 = vpack.c.b16 %v5720, %v5716
  %v6605 = vpack.c.b16 %v5721, %v5717
  %v6606 = vpack.c.b16 %v5726, %v5722
  %v6607 = vpack.c.b16 %v5727, %v5723
  %v6608 = vpack.c.b16 %v5728, %v5724
  %v6609 = vpack.c.b16 %v5729, %v5725
  %v6610 = vpack.c.b16 %v5734, %v5730
  %v6611 = vpack.c.b16 %v5735, %v5731
  %v6612 = vpack.c.b16 %v5736, %v5732
  %v6613 = vpack.c.b16 %v5737, %v5733
  %v6614 = vpack.c.b16 %v5742, %v5738
  %v6615 = vpack.c.b16 %v5743, %v5739
  %v6616 = vpack.c.b16 %v5744, %v5740
  %v6617 = vpack.c.b16 %v5745, %v5741
  %v6618 = vpack.c.b16 %v5750, %v5746
  %v6619 = vpack.c.b16 %v5751, %v5747
  %v6620 = vpack.c.b16 %v5752, %v5748
  %v6621 = vpack.c.b16 %v5753, %v5749
  %v6622 = vpack.c.b16 %v5758, %v5754
  %v6623 = vpack.c.b16 %v5759, %v5755
  %v6624 = vpack.c.b16 %v5760, %v5756
  %v6625 = vpack.c.b16 %v5761, %v5757
  %v6626 = vpack.c.b16 %v5766, %v5762
  %v6627 = vpack.c.b16 %v5767, %v5763
  %v6628 = vpack.c.b16 %v5768, %v5764
  %v6629 = vpack.c.b16 %v5769, %v5765
  %v6630 = vpack.c.b16 %v5774, %v5770
  %v6631 = vpack.c.b16 %v5775, %v5771
  %v6632 = vpack.c.b16 %v5776, %v5772
  %v6633 = vpack.c.b16 %v5777, %v5773
  %v6634 = vpack.c.b16 %v5782, %v5778
  %v6635 = vpack.c.b16 %v5783, %v5779
  %v6636 = vpack.c.b16 %v5784, %v5780
  %v6637 = vpack.c.b16 %v5785, %v5781
  %v6638 = vpack.c.b16 %v5790, %v5786
  %v6639 = vpack.c.b16 %v5791, %v5787
  %v6640 = vpack.c.b16 %v5792, %v5788
  %v6641 = vpack.c.b16 %v5793, %v5789
  %v6642 = vpack.c.b16 %v5798, %v5794
  %v6643 = vpack.c.b16 %v5799, %v5795
  %v6644 = vpack.c.b16 %v5800, %v5796
  %v6645 = vpack.c.b16 %v5801, %v5797
  %v6646 = vpack.c.b16 %v5806, %v5802
  %v6647 = vpack.c.b16 %v5807, %v5803
  %v6648 = vpack.c.b16 %v5808, %v5804
  %v6649 = vpack.c.b16 %v5809, %v5805
  %v6650 = vpack.c.b16 %v5814, %v5810
  %v6651 = vpack.c.b16 %v5815, %v5811
  %v6652 = vpack.c.b16 %v5816, %v5812
  %v6653 = vpack.c.b16 %v5817, %v5813
  %v6654 = vpack.c.b16 %v5822, %v5818
  %v6655 = vpack.c.b16 %v5823, %v5819
  %v6656 = vpack.c.b16 %v5824, %v5820
  %v6657 = vpack.c.b16 %v5825, %v5821
  %v6658 = vpack.c.b16 %v5830, %v5826
  %v6659 = vpack.c.b16 %v5831, %v5827
  %v6660 = vpack.c.b16 %v5832, %v5828
  %v6661 = vpack.c.b16 %v5833, %v5829
  %v6662 = vpack.c.b16 %v5838, %v5834
  %v6663 = vpack.c.b16 %v5839, %v5835
  %v6664 = vpack.c.b16 %v5840, %v5836
  %v6665 = vpack.c.b16 %v5841, %v5837
  %v6666 = vpack.c.b16 %v5846, %v5842
  %v6667 = vpack.c.b16 %v5847, %v5843
  %v6668 = vpack.c.b16 %v5848, %v5844
  %v6669 = vpack.c.b16 %v5849, %v5845
  %v6670 = vpack.c.b16 %v5854, %v5850
  %v6671 = vpack.c.b16 %v5855, %v5851
  %v6672 = vpack.c.b16 %v5856, %v5852
  %v6673 = vpack.c.b16 %v5857, %v5853
  %v6674 = vpack.c.b16 %v5862, %v5858
  %v6675 = vpack.c.b16 %v5863, %v5859
  %v6676 = vpack.c.b16 %v5864, %v5860
  %v6677 = vpack.c.b16 %v5865, %v5861
  %v6678 = vpack.c.b16 %v5870, %v5866
  %v6679 = vpack.c.b16 %v5871, %v5867
  %v6680 = vpack.c.b16 %v5872, %v5868
  %v6681 = vpack.c.b16 %v5873, %v5869
  %v6682 = vpack.c.b16 %v5878, %v5874
  %v6683 = vpack.c.b16 %v5879, %v5875
  %v6684 = vpack.c.b16 %v5880, %v5876
  %v6685 = vpack.c.b16 %v5881, %v5877
  %v6686 = vpack.c.b16 %v5886, %v5882
  %v6687 = vpack.c.b16 %v5887, %v5883
  %v6688 = vpack.c.b16 %v5888, %v5884
  %v6689 = vpack.c.b16 %v5889, %v5885
  %v6690 = vpack.c.b16 %v5894, %v5890
  %v6691 = vpack.c.b16 %v5895, %v5891
  %v6692 = vpack.c.b16 %v5896, %v5892
  %v6693 = vpack.c.b16 %v5897, %v5893
  %v6694 = vpack.c.b16 %v5902, %v5898
  %v6695 = vpack.c.b16 %v5903, %v5899
  %v6696 = vpack.c.b16 %v5904, %v5900
  %v6697 = vpack.c.b16 %v5905, %v5901
  %v6698 = vpack.c.b16 %v5910, %v5906
  %v6699 = vpack.c.b16 %v5911, %v5907
  %v6700 = vpack.c.b16 %v5912, %v5908
  %v6701 = vpack.c.b16 %v5913, %v5909
  %v6702 = vpack.c.b16 %v5918, %v5914
  %v6703 = vpack.c.b16 %v5919, %v5915
  %v6704 = vpack.c.b16 %v5920, %v5916
  %v6705 = vpack.c.b16 %v5921, %v5917
  %v6706 = vpack.c.b16 %v5926, %v5922
  %v6707 = vpack.c.b16 %v5927, %v5923
  %v6708 = vpack.c.b16 %v5928, %v5924
  %v6709 = vpack.c.b16 %v5929, %v5925
  %v6710 = vpack.c.b16 %v5934, %v5930
  %v6711 = vpack.c.b16 %v5935, %v5931
  %v6712 = vpack.c.b16 %v5936, %v5932
  %v6713 = vpack.c.b16 %v5937, %v5933
  %v6714 = vpack.c.b16 %v5942, %v5938
  %v6715 = vpack.c.b16 %v5943, %v5939
  %v6716 = vpack.c.b16 %v5944, %v5940
  %v6717 = vpack.c.b16 %v5945, %v5941
  %v6718 = vpack.c.b16 %v5950, %v5946
  %v6719 = vpack.c.b16 %v5951, %v5947
  %v6720 = vpack.c.b16 %v5952, %v5948
  %v6721 = vpack.c.b16 %v5953, %v5949
  %v6722 = vpack.c.b16 %v5958, %v5954
  %v6723 = vpack.c.b16 %v5959, %v5955
  %v6724 = vpack.c.b16 %v5960, %v5956
  %v6725 = vpack.c.b16 %v5961, %v5957
  %v6726 = vpack.c.b16 %v5966, %v5962
  %v6727 = vpack.c.b16 %v5967, %v5963
  %v6728 = vpack.c.b16 %v5968, %v5964
  %v6729 = vpack.c.b16 %v5969, %v5965
  %v6730 = vpack.c.b16 %v5974, %v5970
  %v6731 = vpack.c.b16 %v5975, %v5971
  %v6732 = vpack.c.b16 %v5976, %v5972
  %v6733 = vpack.c.b16 %v5977, %v5973
  %v6734 = vpack.c.b16 %v5982, %v5978
  %v6735 = vpack.c.b16 %v5983, %v5979
  %v6736 = vpack.c.b16 %v5984, %v5980
  %v6737 = vpack.c.b16 %v5985, %v5981
  %v6738 = vpack.c.b16 %v5990, %v5986
  %v6739 = vpack.c.b16 %v5991, %v5987
  %v6740 = vpack.c.b16 %v5992, %v5988
  %v6741 = vpack.c.b16 %v5993, %v5989
  %v6742 = vpack.c.b16 %v5998, %v5994
  %v6743 = vpack.c.b16 %v5999, %v5995
  %v6744 = vpack.c.b16 %v6000, %v5996
  %v6745 = vpack.c.b16 %v6001, %v5997
  %v6746 = vpack.c.b16 %v6006, %v6002
  %v6747 = vpack.c.b16 %v6007, %v6003
  %v6748 = vpack.c.b16 %v6008, %v6004
  %v6749 = vpack.c.b16 %v6009, %v6005
  %v6750 = vpack.c.b16 %v6014, %v6010
  %v6751 = vpack.c.b16 %v6015, %v6011
  %v6752 = vpack.c.b16 %v6016, %v6012
  %v6753 = vpack.c.b16 %v6017, %v6013
  %v6754 = vpack.c.b16 %v6022, %v6018
  %v6755 = vpack.c.b16 %v6023, %v6019
  %v6756 = vpack.c.b16 %v6024, %v6020
  %v6757 = vpack.c.b16 %v6025, %v6021
  %v6758 = vpack.c.b16 %v6030, %v6026
  %v6759 = vpack.c.b16 %v6031, %v6027
  %v6760 = vpack.c.b16 %v6032, %v6028
  %v6761 = vpack.c.b16 %v6033, %v6029
  %v6762 = vpack.c.b16 %v6038, %v6034
  %v6763 = vpack.c.b16 %v6039, %v6035
  %v6764 = vpack.c.b16 %v6040, %v6036
  %v6765 = vpack.c.b16 %v6041, %v6037
  %v6766 = vpack.c.b16 %v6046, %v6042
  %v6767 = vpack.c.b16 %v6047, %v6043
  %v6768 = vpack.c.b16 %v6048, %v6044
  %v6769 = vpack.c.b16 %v6049, %v6045
  %v6770 = vpack.c.b16 %v6054, %v6050
  %v6771 = vpack.c.b16 %v6055, %v6051
  %v6772 = vpack.c.b16 %v6056, %v6052
  %v6773 = vpack.c.b16 %v6057, %v6053
  %v6774 = vpack.c.b16 %v6062, %v6058
  %v6775 = vpack.c.b16 %v6063, %v6059
  %v6776 = vpack.c.b16 %v6064, %v6060
  %v6777 = vpack.c.b16 %v6065, %v6061
  %v6778 = vpack.c.b16 %v6070, %v6066
  %v6779 = vpack.c.b16 %v6071, %v6067
  %v6780 = vpack.c.b16 %v6072, %v6068
  %v6781 = vpack.c.b16 %v6073, %v6069
  %v6782 = vpack.c.b16 %v6078, %v6074
  %v6783 = vpack.c.b16 %v6079, %v6075
  %v6784 = vpack.c.b16 %v6080, %v6076
  %v6785 = vpack.c.b16 %v6081, %v6077
  %v6786 = vpack.c.b16 %v6086, %v6082
  %v6787 = vpack.c.b16 %v6087, %v6083
  %v6788 = vpack.c.b16 %v6088, %v6084
  %v6789 = vpack.c.b16 %v6089, %v6085
  %v6790 = vpack.c.b16 %v6094, %v6090
  %v6791 = vpack.c.b16 %v6095, %v6091
  %v6792 = vpack.c.b16 %v6096, %v6092
  %v6793 = vpack.c.b16 %v6097, %v6093
  %v6794 = vpack.c.b16 %v6102, %v6098
  %v6795 = vpack.c.b16 %v6103, %v6099
  %v6796 = vpack.c.b16 %v6104, %v6100
  %v6797 = vpack.c.b16 %v6105, %v6101
  %v6798 = vpack.c.b16 %v6110, %v6106
  %v6799 = vpack.c.b16 %v6111, %v6107
  %v6800 = vpack.c.b16 %v6112, %v6108
  %v6801 = vpack.c.b16 %v6113, %v6109
  %v6802 = vpack.c.b16 %v6118, %v6114
  %v6803 = vpack.c.b16 %v6119, %v6115
  %v6804 = vpack.c.b16 %v6120, %v6116
  %v6805 = vpack.c.b16 %v6121, %v6117
  %v6806 = vpack.c.b16 %v6126, %v6122
  %v6807 = vpack.c.b16 %v6127, %v6123
  %v6808 = vpack.c.b16 %v6128, %v6124
  %v6809 = vpack.c.b16 %v6129, %v6125
  %v6810 = vpack.c.b16 %v6134, %v6130
  %v6811 = vpack.c.b16 %v6135, %v6131
  %v6812 = vpack.c.b16 %v6136, %v6132
  %v6813 = vpack.c.b16 %v6137, %v6133
  %v6814 = vpack.c.b16 %v6142, %v6138
  %v6815 = vpack.c.b16 %v6143, %v6139
  %v6816 = vpack.c.b16 %v6144, %v6140
  %v6817 = vpack.c.b16 %v6145, %v6141
  %v6818 = vpack.c.b16 %v6150, %v6146
  %v6819 = vpack.c.b16 %v6151, %v6147
  %v6820 = vpack.c.b16 %v6152, %v6148
  %v6821 = vpack.c.b16 %v6153, %v6149
  %v6822 = vpack.c.b16 %v6158, %v6154
  %v6823 = vpack.c.b16 %v6159, %v6155
  %v6824 = vpack.c.b16 %v6160, %v6156
  %v6825 = vpack.c.b16 %v6161, %v6157
  %v6826 = vpack.c.b16 %v6166, %v6162
  %v6827 = vpack.c.b16 %v6167, %v6163
  %v6828 = vpack.c.b16 %v6168, %v6164
  %v6829 = vpack.c.b16 %v6169, %v6165
  %v6830 = vpack.c.b16 %v6174, %v6170
  %v6831 = vpack.c.b16 %v6175, %v6171
  %v6832 = vpack.c.b16 %v6176, %v6172
  %v6833 = vpack.c.b16 %v6177, %v6173
  %v6834 = vpack.c.b16 %v6182, %v6178
  %v6835 = vpack.c.b16 %v6183, %v6179
  %v6836 = vpack.c.b16 %v6184, %v6180
  %v6837 = vpack.c.b16 %v6185, %v6181
  %v6838 = vpack.c.b16 %v6190, %v6186
  %v6839 = vpack.c.b16 %v6191, %v6187
  %v6840 = vpack.c.b16 %v6192, %v6188
  %v6841 = vpack.c.b16 %v6193, %v6189
  %v6842 = vpack.c.b16 %v6198, %v6194
  %v6843 = vpack.c.b16 %v6199, %v6195
  %v6844 = vpack.c.b16 %v6200, %v6196
  %v6845 = vpack.c.b16 %v6201, %v6197
  %v6846 = vpack.c.b16 %v6206, %v6202
  %v6847 = vpack.c.b16 %v6207, %v6203
  %v6848 = vpack.c.b16 %v6208, %v6204
  %v6849 = vpack.c.b16 %v6209, %v6205
  %v6850 = vpack.c.b16 %v6214, %v6210
  %v6851 = vpack.c.b16 %v6215, %v6211
  %v6852 = vpack.c.b16 %v6216, %v6212
  %v6853 = vpack.c.b16 %v6217, %v6213
  %v6854 = vpack.c.b16 %v6222, %v6218
  %v6855 = vpack.c.b16 %v6223, %v6219
  %v6856 = vpack.c.b16 %v6224, %v6220
  %v6857 = vpack.c.b16 %v6225, %v6221
  %v6858 = vpack.c.b16 %v6230, %v6226
  %v6859 = vpack.c.b16 %v6231, %v6227
  %v6860 = vpack.c.b16 %v6232, %v6228
  %v6861 = vpack.c.b16 %v6233, %v6229
  %v6862 = vpack.c.b16 %v6238, %v6234
  %v6863 = vpack.c.b16 %v6239, %v6235
  %v6864 = vpack.c.b16 %v6240, %v6236
  %v6865 = vpack.c.b16 %v6241, %v6237
  %v6866 = vpack.c.b16 %v6246, %v6242
  %v6867 = vpack.c.b16 %v6247, %v6243
  %v6868 = vpack.c.b16 %v6248, %v6244
  %v6869 = vpack.c.b16 %v6249, %v6245
  %v6870 = vpack.c.b16 %v6254, %v6250
  %v6871 = vpack.c.b16 %v6255, %v6251
  %v6872 = vpack.c.b16 %v6256, %v6252
  %v6873 = vpack.c.b16 %v6257, %v6253
  %v6874 = vpack.c.b16 %v6262, %v6258
  %v6875 = vpack.c.b16 %v6263, %v6259
  %v6876 = vpack.c.b16 %v6264, %v6260
  %v6877 = vpack.c.b16 %v6265, %v6261
  %v6878 = vpack.c.b16 %v6270, %v6266
  %v6879 = vpack.c.b16 %v6271, %v6267
  %v6880 = vpack.c.b16 %v6272, %v6268
  %v6881 = vpack.c.b16 %v6273, %v6269
  %v6882 = vpack.c.b16 %v6278, %v6274
  %v6883 = vpack.c.b16 %v6279, %v6275
  %v6884 = vpack.c.b16 %v6280, %v6276
  %v6885 = vpack.c.b16 %v6281, %v6277
  %v6886 = vpack.c.b16 %v6286, %v6282
  %v6887 = vpack.c.b16 %v6287, %v6283
  %v6888 = vpack.c.b16 %v6288, %v6284
  %v6889 = vpack.c.b16 %v6289, %v6285
  %v6890 = vpack.c.b16 %v6294, %v6290
  %v6891 = vpack.c.b16 %v6295, %v6291
  %v6892 = vpack.c.b16 %v6296, %v6292
  %v6893 = vpack.c.b16 %v6297, %v6293
  %v6894 = vpack.c.b16 %v6302, %v6298
  %v6895 = vpack.c.b16 %v6303, %v6299
  %v6896 = vpack.c.b16 %v6304, %v6300
  %v6897 = vpack.c.b16 %v6305, %v6301
  %v6898 = vpack.c.b16 %v6310, %v6306
  %v6899 = vpack.c.b16 %v6311, %v6307
  %v6900 = vpack.c.b16 %v6312, %v6308
  %v6901 = vpack.c.b16 %v6313, %v6309
  %v6902 = vpack.c.b16 %v6318, %v6314
  %v6903 = vpack.c.b16 %v6319, %v6315
  %v6904 = vpack.c.b16 %v6320, %v6316
  %v6905 = vpack.c.b16 %v6321, %v6317
  %v6906 = vpack.c.b16 %v6326, %v6322
  %v6907 = vpack.c.b16 %v6327, %v6323
  %v6908 = vpack.c.b16 %v6328, %v6324
  %v6909 = vpack.c.b16 %v6329, %v6325
  %v6910 = vpack.c.b16 %v6334, %v6330
  %v6911 = vpack.c.b16 %v6335, %v6331
  %v6912 = vpack.c.b16 %v6336, %v6332
  %v6913 = vpack.c.b16 %v6337, %v6333
  %7490 = vmatpush.bf16.msra.mxu0 %v6366
  %7491 = vmatpush.bf16.msra.mxu0 %v6362
  %7492 = vmatpush.bf16.msra.mxu0 %v6358
  %7493 = vmatpush.bf16.msra.mxu0 %v6354
  %7494 = vmatpush.bf16.msra.mxu0 %v6350
  %7495 = vmatpush.bf16.msra.mxu0 %v6346
  %7496 = vmatpush.bf16.msra.mxu0 %v6342
  %7497 = vmatpush.bf16.msra.mxu0 %v6338
  %7498 = vmatmul.bf16.gmra.mxu0 %v4005
  %v7499 = vpop.f32.mrf.mxu0
  %v7500 = vadd.f32 %v4602, %v7499
  %v7501 = vpop.f32.mrf.mxu0
  %7502 = vdwg.mxu0
  %7503 = vmatpush.bf16.msra.mxu0 %v6398
  %7504 = vmatpush.bf16.msra.mxu0 %v6394
  %7505 = vmatpush.bf16.msra.mxu0 %v6390
  %7506 = vmatpush.bf16.msra.mxu0 %v6386
  %7507 = vmatpush.bf16.msra.mxu0 %v6382
  %7508 = vmatpush.bf16.msra.mxu0 %v6378
  %7509 = vmatpush.bf16.msra.mxu0 %v6374
  %7510 = vmatpush.bf16.msra.mxu0 %v6370
  %7511 = vmatmul.bf16.gmra.mxu0 %v4006
  %v7512 = vpop.f32.mrf.mxu0
  %v7513 = vadd.f32 %v7500, %v7512
  %v7514 = vpop.f32.mrf.mxu0
  %7515 = vdwg.mxu0
  %7516 = vmatpush.bf16.msra.mxu0 %v6430
  %7517 = vmatpush.bf16.msra.mxu0 %v6426
  %7518 = vmatpush.bf16.msra.mxu0 %v6422
  %7519 = vmatpush.bf16.msra.mxu0 %v6418
  %7520 = vmatpush.bf16.msra.mxu0 %v6414
  %7521 = vmatpush.bf16.msra.mxu0 %v6410
  %7522 = vmatpush.bf16.msra.mxu0 %v6406
  %7523 = vmatpush.bf16.msra.mxu0 %v6402
  %7524 = vmatmul.bf16.gmra.mxu0 %v4007
  %v7525 = vpop.f32.mrf.mxu0
  %v7526 = vadd.f32 %v7513, %v7525
  %v7527 = vpop.f32.mrf.mxu0
  %7528 = vdwg.mxu0
  %7529 = vmatpush.bf16.msra.mxu0 %v6462
  %7530 = vmatpush.bf16.msra.mxu0 %v6458
  %7531 = vmatpush.bf16.msra.mxu0 %v6454
  %7532 = vmatpush.bf16.msra.mxu0 %v6450
  %7533 = vmatpush.bf16.msra.mxu0 %v6446
  %7534 = vmatpush.bf16.msra.mxu0 %v6442
  %7535 = vmatpush.bf16.msra.mxu0 %v6438
  %7536 = vmatpush.bf16.msra.mxu0 %v6434
  %7537 = vmatmul.bf16.gmra.mxu0 %v4008
  %v7538 = vpop.f32.mrf.mxu0
  %v7539 = vadd.f32 %v7526, %v7538
  %v7540 = vpop.f32.mrf.mxu0
  %7541 = vdwg.mxu0
  %7542 = vmatpush.bf16.msra.mxu0 %v6494
  %7543 = vmatpush.bf16.msra.mxu0 %v6490
  %7544 = vmatpush.bf16.msra.mxu0 %v6486
  %7545 = vmatpush.bf16.msra.mxu0 %v6482
  %7546 = vmatpush.bf16.msra.mxu0 %v6478
  %7547 = vmatpush.bf16.msra.mxu0 %v6474
  %7548 = vmatpush.bf16.msra.mxu0 %v6470
  %7549 = vmatpush.bf16.msra.mxu0 %v6466
  %7550 = vmatmul.bf16.gmra.mxu0 %v4009
  %v7551 = vpop.f32.mrf.mxu0
  %v7552 = vadd.f32 %v7539, %v7551
  %v7553 = vpop.f32.mrf.mxu0
  %7554 = vdwg.mxu0
  %7555 = vmatpush.bf16.msra.mxu0 %v6526
  %7556 = vmatpush.bf16.msra.mxu0 %v6522
  %7557 = vmatpush.bf16.msra.mxu0 %v6518
  %7558 = vmatpush.bf16.msra.mxu0 %v6514
  %7559 = vmatpush.bf16.msra.mxu0 %v6510
  %7560 = vmatpush.bf16.msra.mxu0 %v6506
  %7561 = vmatpush.bf16.msra.mxu0 %v6502
  %7562 = vmatpush.bf16.msra.mxu0 %v6498
  %7563 = vmatmul.bf16.gmra.mxu0 %v4010
  %v7564 = vpop.f32.mrf.mxu0
  %v7565 = vadd.f32 %v7552, %v7564
  %v7566 = vpop.f32.mrf.mxu0
  %7567 = vdwg.mxu0
  %7568 = vmatpush.bf16.msra.mxu0 %v6558
  %7569 = vmatpush.bf16.msra.mxu0 %v6554
  %7570 = vmatpush.bf16.msra.mxu0 %v6550
  %7571 = vmatpush.bf16.msra.mxu0 %v6546
  %7572 = vmatpush.bf16.msra.mxu0 %v6542
  %7573 = vmatpush.bf16.msra.mxu0 %v6538
  %7574 = vmatpush.bf16.msra.mxu0 %v6534
  %7575 = vmatpush.bf16.msra.mxu0 %v6530
  %7576 = vmatmul.bf16.gmra.mxu0 %v4011
  %v7577 = vpop.f32.mrf.mxu0
  %v7578 = vadd.f32 %v7565, %v7577
  %v7579 = vpop.f32.mrf.mxu0
  %7580 = vdwg.mxu0
  %7581 = vmatpush.bf16.msra.mxu0 %v6590
  %7582 = vmatpush.bf16.msra.mxu0 %v6586
  %7583 = vmatpush.bf16.msra.mxu0 %v6582
  %7584 = vmatpush.bf16.msra.mxu0 %v6578
  %7585 = vmatpush.bf16.msra.mxu0 %v6574
  %7586 = vmatpush.bf16.msra.mxu0 %v6570
  %7587 = vmatpush.bf16.msra.mxu0 %v6566
  %7588 = vmatpush.bf16.msra.mxu0 %v6562
  %7589 = vmatmul.bf16.gmra.mxu0 %v4012
  %v7590 = vpop.f32.mrf.mxu0
  %v7591 = vadd.f32 %v7578, %v7590
  %v7592 = vpop.f32.mrf.mxu0
  %7593 = vdwg.mxu0
  %7594 = vmatpush.bf16.msra.mxu0 %v6622
  %7595 = vmatpush.bf16.msra.mxu0 %v6618
  %7596 = vmatpush.bf16.msra.mxu0 %v6614
  %7597 = vmatpush.bf16.msra.mxu0 %v6610
  %7598 = vmatpush.bf16.msra.mxu0 %v6606
  %7599 = vmatpush.bf16.msra.mxu0 %v6602
  %7600 = vmatpush.bf16.msra.mxu0 %v6598
  %7601 = vmatpush.bf16.msra.mxu0 %v6594
  %7602 = vmatmul.bf16.gmra.mxu0 %v4013
  %v7603 = vpop.f32.mrf.mxu0
  %v7604 = vadd.f32 %v7591, %v7603
  %v7605 = vpop.f32.mrf.mxu0
  %7606 = vdwg.mxu0
  %7607 = vmatpush.bf16.msra.mxu0 %v6654
  %7608 = vmatpush.bf16.msra.mxu0 %v6650
  %7609 = vmatpush.bf16.msra.mxu0 %v6646
  %7610 = vmatpush.bf16.msra.mxu0 %v6642
  %7611 = vmatpush.bf16.msra.mxu0 %v6638
  %7612 = vmatpush.bf16.msra.mxu0 %v6634
  %7613 = vmatpush.bf16.msra.mxu0 %v6630
  %7614 = vmatpush.bf16.msra.mxu0 %v6626
  %7615 = vmatmul.bf16.gmra.mxu0 %v4014
  %v7616 = vpop.f32.mrf.mxu0
  %v7617 = vadd.f32 %v7604, %v7616
  %v7618 = vpop.f32.mrf.mxu0
  %7619 = vdwg.mxu0
  %7620 = vmatpush.bf16.msra.mxu0 %v6686
  %7621 = vmatpush.bf16.msra.mxu0 %v6682
  %7622 = vmatpush.bf16.msra.mxu0 %v6678
  %7623 = vmatpush.bf16.msra.mxu0 %v6674
  %7624 = vmatpush.bf16.msra.mxu0 %v6670
  %7625 = vmatpush.bf16.msra.mxu0 %v6666
  %7626 = vmatpush.bf16.msra.mxu0 %v6662
  %7627 = vmatpush.bf16.msra.mxu0 %v6658
  %7628 = vmatmul.bf16.gmra.mxu0 %v4015
  %v7629 = vpop.f32.mrf.mxu0
  %v7630 = vadd.f32 %v7617, %v7629
  %v7631 = vpop.f32.mrf.mxu0
  %7632 = vdwg.mxu0
  %7633 = vmatpush.bf16.msra.mxu0 %v6718
  %7634 = vmatpush.bf16.msra.mxu0 %v6714
  %7635 = vmatpush.bf16.msra.mxu0 %v6710
  %7636 = vmatpush.bf16.msra.mxu0 %v6706
  %7637 = vmatpush.bf16.msra.mxu0 %v6702
  %7638 = vmatpush.bf16.msra.mxu0 %v6698
  %7639 = vmatpush.bf16.msra.mxu0 %v6694
  %7640 = vmatpush.bf16.msra.mxu0 %v6690
  %7641 = vmatmul.bf16.gmra.mxu0 %v4016
  %v7642 = vpop.f32.mrf.mxu0
  %v7643 = vadd.f32 %v7630, %v7642
  %v7644 = vpop.f32.mrf.mxu0
  %7645 = vdwg.mxu0
  %7646 = vmatpush.bf16.msra.mxu0 %v6750
  %7647 = vmatpush.bf16.msra.mxu0 %v6746
  %7648 = vmatpush.bf16.msra.mxu0 %v6742
  %7649 = vmatpush.bf16.msra.mxu0 %v6738
  %7650 = vmatpush.bf16.msra.mxu0 %v6734
  %7651 = vmatpush.bf16.msra.mxu0 %v6730
  %7652 = vmatpush.bf16.msra.mxu0 %v6726
  %7653 = vmatpush.bf16.msra.mxu0 %v6722
  %7654 = vmatmul.bf16.gmra.mxu0 %v4017
  %v7655 = vpop.f32.mrf.mxu0
  %v7656 = vadd.f32 %v7643, %v7655
  %v7657 = vpop.f32.mrf.mxu0
  %7658 = vdwg.mxu0
  %7659 = vmatpush.bf16.msra.mxu0 %v6782
  %7660 = vmatpush.bf16.msra.mxu0 %v6778
  %7661 = vmatpush.bf16.msra.mxu0 %v6774
  %7662 = vmatpush.bf16.msra.mxu0 %v6770
  %7663 = vmatpush.bf16.msra.mxu0 %v6766
  %7664 = vmatpush.bf16.msra.mxu0 %v6762
  %7665 = vmatpush.bf16.msra.mxu0 %v6758
  %7666 = vmatpush.bf16.msra.mxu0 %v6754
  %7667 = vmatmul.bf16.gmra.mxu0 %v4018
  %v7668 = vpop.f32.mrf.mxu0
  %v7669 = vadd.f32 %v7656, %v7668
  %v7670 = vpop.f32.mrf.mxu0
  %7671 = vdwg.mxu0
  %7672 = vmatpush.bf16.msra.mxu0 %v6814
  %7673 = vmatpush.bf16.msra.mxu0 %v6810
  %7674 = vmatpush.bf16.msra.mxu0 %v6806
  %7675 = vmatpush.bf16.msra.mxu0 %v6802
  %7676 = vmatpush.bf16.msra.mxu0 %v6798
  %7677 = vmatpush.bf16.msra.mxu0 %v6794
  %7678 = vmatpush.bf16.msra.mxu0 %v6790
  %7679 = vmatpush.bf16.msra.mxu0 %v6786
  %7680 = vmatmul.bf16.gmra.mxu0 %v4019
  %v7681 = vpop.f32.mrf.mxu0
  %v7682 = vadd.f32 %v7669, %v7681
  %v7683 = vpop.f32.mrf.mxu0
  %7684 = vdwg.mxu0
  %7685 = vmatpush.bf16.msra.mxu0 %v6846
  %7686 = vmatpush.bf16.msra.mxu0 %v6842
  %7687 = vmatpush.bf16.msra.mxu0 %v6838
  %7688 = vmatpush.bf16.msra.mxu0 %v6834
  %7689 = vmatpush.bf16.msra.mxu0 %v6830
  %7690 = vmatpush.bf16.msra.mxu0 %v6826
  %7691 = vmatpush.bf16.msra.mxu0 %v6822
  %7692 = vmatpush.bf16.msra.mxu0 %v6818
  %7693 = vmatmul.bf16.gmra.mxu0 %v4020
  %v7694 = vpop.f32.mrf.mxu0
  %v7695 = vadd.f32 %v7682, %v7694
  %v7696 = vpop.f32.mrf.mxu0
  %7697 = vdwg.mxu0
  %7698 = vmatpush.bf16.msra.mxu0 %v6878
  %7699 = vmatpush.bf16.msra.mxu0 %v6874
  %7700 = vmatpush.bf16.msra.mxu0 %v6870
  %7701 = vmatpush.bf16.msra.mxu0 %v6866
  %7702 = vmatpush.bf16.msra.mxu0 %v6862
  %7703 = vmatpush.bf16.msra.mxu0 %v6858
  %7704 = vmatpush.bf16.msra.mxu0 %v6854
  %7705 = vmatpush.bf16.msra.mxu0 %v6850
  %7706 = vmatmul.bf16.gmra.mxu0 %v4021
  %v7707 = vpop.f32.mrf.mxu0
  %v7708 = vadd.f32 %v7695, %v7707
  %v7709 = vpop.f32.mrf.mxu0
  %7710 = vdwg.mxu0
  %7711 = vmatpush.bf16.msra.mxu0 %v6910
  %7712 = vmatpush.bf16.msra.mxu0 %v6906
  %7713 = vmatpush.bf16.msra.mxu0 %v6902
  %7714 = vmatpush.bf16.msra.mxu0 %v6898
  %7715 = vmatpush.bf16.msra.mxu0 %v6894
  %7716 = vmatpush.bf16.msra.mxu0 %v6890
  %7717 = vmatpush.bf16.msra.mxu0 %v6886
  %7718 = vmatpush.bf16.msra.mxu0 %v6882
  %7719 = vmatmul.bf16.gmra.mxu0 %v4022
  %v7720 = vpop.f32.mrf.mxu0
  %v7721 = vadd.f32 %v7708, %v7720
  %v7722 = vpop.f32.mrf.mxu0
  %7723 = vdwg.mxu0
  %7724 = vmatpush.bf16.msra.mxu0 %v6367
  %7725 = vmatpush.bf16.msra.mxu0 %v6363
  %7726 = vmatpush.bf16.msra.mxu0 %v6359
  %7727 = vmatpush.bf16.msra.mxu0 %v6355
  %7728 = vmatpush.bf16.msra.mxu0 %v6351
  %7729 = vmatpush.bf16.msra.mxu0 %v6347
  %7730 = vmatpush.bf16.msra.mxu0 %v6343
  %7731 = vmatpush.bf16.msra.mxu0 %v6339
  %7732 = vmatmul.bf16.gmra.mxu0 %v4005
  %v7733 = vpop.f32.mrf.mxu0
  %v7734 = vadd.f32 %v4603, %v7733
  %v7735 = vpop.f32.mrf.mxu0
  %7736 = vdwg.mxu0
  %7737 = vmatpush.bf16.msra.mxu0 %v6399
  %7738 = vmatpush.bf16.msra.mxu0 %v6395
  %7739 = vmatpush.bf16.msra.mxu0 %v6391
  %7740 = vmatpush.bf16.msra.mxu0 %v6387
  %7741 = vmatpush.bf16.msra.mxu0 %v6383
  %7742 = vmatpush.bf16.msra.mxu0 %v6379
  %7743 = vmatpush.bf16.msra.mxu0 %v6375
  %7744 = vmatpush.bf16.msra.mxu0 %v6371
  %7745 = vmatmul.bf16.gmra.mxu0 %v4006
  %v7746 = vpop.f32.mrf.mxu0
  %v7747 = vadd.f32 %v7734, %v7746
  %v7748 = vpop.f32.mrf.mxu0
  %7749 = vdwg.mxu0
  %7750 = vmatpush.bf16.msra.mxu0 %v6431
  %7751 = vmatpush.bf16.msra.mxu0 %v6427
  %7752 = vmatpush.bf16.msra.mxu0 %v6423
  %7753 = vmatpush.bf16.msra.mxu0 %v6419
  %7754 = vmatpush.bf16.msra.mxu0 %v6415
  %7755 = vmatpush.bf16.msra.mxu0 %v6411
  %7756 = vmatpush.bf16.msra.mxu0 %v6407
  %7757 = vmatpush.bf16.msra.mxu0 %v6403
  %7758 = vmatmul.bf16.gmra.mxu0 %v4007
  %v7759 = vpop.f32.mrf.mxu0
  %v7760 = vadd.f32 %v7747, %v7759
  %v7761 = vpop.f32.mrf.mxu0
  %7762 = vdwg.mxu0
  %7763 = vmatpush.bf16.msra.mxu0 %v6463
  %7764 = vmatpush.bf16.msra.mxu0 %v6459
  %7765 = vmatpush.bf16.msra.mxu0 %v6455
  %7766 = vmatpush.bf16.msra.mxu0 %v6451
  %7767 = vmatpush.bf16.msra.mxu0 %v6447
  %7768 = vmatpush.bf16.msra.mxu0 %v6443
  %7769 = vmatpush.bf16.msra.mxu0 %v6439
  %7770 = vmatpush.bf16.msra.mxu0 %v6435
  %7771 = vmatmul.bf16.gmra.mxu0 %v4008
  %v7772 = vpop.f32.mrf.mxu0
  %v7773 = vadd.f32 %v7760, %v7772
  %v7774 = vpop.f32.mrf.mxu0
  %7775 = vdwg.mxu0
  %7776 = vmatpush.bf16.msra.mxu0 %v6495
  %7777 = vmatpush.bf16.msra.mxu0 %v6491
  %7778 = vmatpush.bf16.msra.mxu0 %v6487
  %7779 = vmatpush.bf16.msra.mxu0 %v6483
  %7780 = vmatpush.bf16.msra.mxu0 %v6479
  %7781 = vmatpush.bf16.msra.mxu0 %v6475
  %7782 = vmatpush.bf16.msra.mxu0 %v6471
  %7783 = vmatpush.bf16.msra.mxu0 %v6467
  %7784 = vmatmul.bf16.gmra.mxu0 %v4009
  %v7785 = vpop.f32.mrf.mxu0
  %v7786 = vadd.f32 %v7773, %v7785
  %v7787 = vpop.f32.mrf.mxu0
  %7788 = vdwg.mxu0
  %7789 = vmatpush.bf16.msra.mxu0 %v6527
  %7790 = vmatpush.bf16.msra.mxu0 %v6523
  %7791 = vmatpush.bf16.msra.mxu0 %v6519
  %7792 = vmatpush.bf16.msra.mxu0 %v6515
  %7793 = vmatpush.bf16.msra.mxu0 %v6511
  %7794 = vmatpush.bf16.msra.mxu0 %v6507
  %7795 = vmatpush.bf16.msra.mxu0 %v6503
  %7796 = vmatpush.bf16.msra.mxu0 %v6499
  %7797 = vmatmul.bf16.gmra.mxu0 %v4010
  %v7798 = vpop.f32.mrf.mxu0
  %v7799 = vadd.f32 %v7786, %v7798
  %v7800 = vpop.f32.mrf.mxu0
  %7801 = vdwg.mxu0
  %7802 = vmatpush.bf16.msra.mxu0 %v6559
  %7803 = vmatpush.bf16.msra.mxu0 %v6555
  %7804 = vmatpush.bf16.msra.mxu0 %v6551
  %7805 = vmatpush.bf16.msra.mxu0 %v6547
  %7806 = vmatpush.bf16.msra.mxu0 %v6543
  %7807 = vmatpush.bf16.msra.mxu0 %v6539
  %7808 = vmatpush.bf16.msra.mxu0 %v6535
  %7809 = vmatpush.bf16.msra.mxu0 %v6531
  %7810 = vmatmul.bf16.gmra.mxu0 %v4011
  %v7811 = vpop.f32.mrf.mxu0
  %v7812 = vadd.f32 %v7799, %v7811
  %v7813 = vpop.f32.mrf.mxu0
  %7814 = vdwg.mxu0
  %7815 = vmatpush.bf16.msra.mxu0 %v6591
  %7816 = vmatpush.bf16.msra.mxu0 %v6587
  %7817 = vmatpush.bf16.msra.mxu0 %v6583
  %7818 = vmatpush.bf16.msra.mxu0 %v6579
  %7819 = vmatpush.bf16.msra.mxu0 %v6575
  %7820 = vmatpush.bf16.msra.mxu0 %v6571
  %7821 = vmatpush.bf16.msra.mxu0 %v6567
  %7822 = vmatpush.bf16.msra.mxu0 %v6563
  %7823 = vmatmul.bf16.gmra.mxu0 %v4012
  %v7824 = vpop.f32.mrf.mxu0
  %v7825 = vadd.f32 %v7812, %v7824
  %v7826 = vpop.f32.mrf.mxu0
  %7827 = vdwg.mxu0
  %7828 = vmatpush.bf16.msra.mxu0 %v6623
  %7829 = vmatpush.bf16.msra.mxu0 %v6619
  %7830 = vmatpush.bf16.msra.mxu0 %v6615
  %7831 = vmatpush.bf16.msra.mxu0 %v6611
  %7832 = vmatpush.bf16.msra.mxu0 %v6607
  %7833 = vmatpush.bf16.msra.mxu0 %v6603
  %7834 = vmatpush.bf16.msra.mxu0 %v6599
  %7835 = vmatpush.bf16.msra.mxu0 %v6595
  %7836 = vmatmul.bf16.gmra.mxu0 %v4013
  %v7837 = vpop.f32.mrf.mxu0
  %v7838 = vadd.f32 %v7825, %v7837
  %v7839 = vpop.f32.mrf.mxu0
  %7840 = vdwg.mxu0
  %7841 = vmatpush.bf16.msra.mxu0 %v6655
  %7842 = vmatpush.bf16.msra.mxu0 %v6651
  %7843 = vmatpush.bf16.msra.mxu0 %v6647
  %7844 = vmatpush.bf16.msra.mxu0 %v6643
  %7845 = vmatpush.bf16.msra.mxu0 %v6639
  %7846 = vmatpush.bf16.msra.mxu0 %v6635
  %7847 = vmatpush.bf16.msra.mxu0 %v6631
  %7848 = vmatpush.bf16.msra.mxu0 %v6627
  %7849 = vmatmul.bf16.gmra.mxu0 %v4014
  %v7850 = vpop.f32.mrf.mxu0
  %v7851 = vadd.f32 %v7838, %v7850
  %v7852 = vpop.f32.mrf.mxu0
  %7853 = vdwg.mxu0
  %7854 = vmatpush.bf16.msra.mxu0 %v6687
  %7855 = vmatpush.bf16.msra.mxu0 %v6683
  %7856 = vmatpush.bf16.msra.mxu0 %v6679
  %7857 = vmatpush.bf16.msra.mxu0 %v6675
  %7858 = vmatpush.bf16.msra.mxu0 %v6671
  %7859 = vmatpush.bf16.msra.mxu0 %v6667
  %7860 = vmatpush.bf16.msra.mxu0 %v6663
  %7861 = vmatpush.bf16.msra.mxu0 %v6659
  %7862 = vmatmul.bf16.gmra.mxu0 %v4015
  %v7863 = vpop.f32.mrf.mxu0
  %v7864 = vadd.f32 %v7851, %v7863
  %v7865 = vpop.f32.mrf.mxu0
  %7866 = vdwg.mxu0
  %7867 = vmatpush.bf16.msra.mxu0 %v6719
  %7868 = vmatpush.bf16.msra.mxu0 %v6715
  %7869 = vmatpush.bf16.msra.mxu0 %v6711
  %7870 = vmatpush.bf16.msra.mxu0 %v6707
  %7871 = vmatpush.bf16.msra.mxu0 %v6703
  %7872 = vmatpush.bf16.msra.mxu0 %v6699
  %7873 = vmatpush.bf16.msra.mxu0 %v6695
  %7874 = vmatpush.bf16.msra.mxu0 %v6691
  %7875 = vmatmul.bf16.gmra.mxu0 %v4016
  %v7876 = vpop.f32.mrf.mxu0
  %v7877 = vadd.f32 %v7864, %v7876
  %v7878 = vpop.f32.mrf.mxu0
  %7879 = vdwg.mxu0
  %7880 = vmatpush.bf16.msra.mxu0 %v6751
  %7881 = vmatpush.bf16.msra.mxu0 %v6747
  %7882 = vmatpush.bf16.msra.mxu0 %v6743
  %7883 = vmatpush.bf16.msra.mxu0 %v6739
  %7884 = vmatpush.bf16.msra.mxu0 %v6735
  %7885 = vmatpush.bf16.msra.mxu0 %v6731
  %7886 = vmatpush.bf16.msra.mxu0 %v6727
  %7887 = vmatpush.bf16.msra.mxu0 %v6723
  %7888 = vmatmul.bf16.gmra.mxu0 %v4017
  %v7889 = vpop.f32.mrf.mxu0
  %v7890 = vadd.f32 %v7877, %v7889
  %v7891 = vpop.f32.mrf.mxu0
  %7892 = vdwg.mxu0
  %7893 = vmatpush.bf16.msra.mxu0 %v6783
  %7894 = vmatpush.bf16.msra.mxu0 %v6779
  %7895 = vmatpush.bf16.msra.mxu0 %v6775
  %7896 = vmatpush.bf16.msra.mxu0 %v6771
  %7897 = vmatpush.bf16.msra.mxu0 %v6767
  %7898 = vmatpush.bf16.msra.mxu0 %v6763
  %7899 = vmatpush.bf16.msra.mxu0 %v6759
  %7900 = vmatpush.bf16.msra.mxu0 %v6755
  %7901 = vmatmul.bf16.gmra.mxu0 %v4018
  %v7902 = vpop.f32.mrf.mxu0
  %v7903 = vadd.f32 %v7890, %v7902
  %v7904 = vpop.f32.mrf.mxu0
  %7905 = vdwg.mxu0
  %7906 = vmatpush.bf16.msra.mxu0 %v6815
  %7907 = vmatpush.bf16.msra.mxu0 %v6811
  %7908 = vmatpush.bf16.msra.mxu0 %v6807
  %7909 = vmatpush.bf16.msra.mxu0 %v6803
  %7910 = vmatpush.bf16.msra.mxu0 %v6799
  %7911 = vmatpush.bf16.msra.mxu0 %v6795
  %7912 = vmatpush.bf16.msra.mxu0 %v6791
  %7913 = vmatpush.bf16.msra.mxu0 %v6787
  %7914 = vmatmul.bf16.gmra.mxu0 %v4019
  %v7915 = vpop.f32.mrf.mxu0
  %v7916 = vadd.f32 %v7903, %v7915
  %v7917 = vpop.f32.mrf.mxu0
  %7918 = vdwg.mxu0
  %7919 = vmatpush.bf16.msra.mxu0 %v6847
  %7920 = vmatpush.bf16.msra.mxu0 %v6843
  %7921 = vmatpush.bf16.msra.mxu0 %v6839
  %7922 = vmatpush.bf16.msra.mxu0 %v6835
  %7923 = vmatpush.bf16.msra.mxu0 %v6831
  %7924 = vmatpush.bf16.msra.mxu0 %v6827
  %7925 = vmatpush.bf16.msra.mxu0 %v6823
  %7926 = vmatpush.bf16.msra.mxu0 %v6819
  %7927 = vmatmul.bf16.gmra.mxu0 %v4020
  %v7928 = vpop.f32.mrf.mxu0
  %v7929 = vadd.f32 %v7916, %v7928
  %v7930 = vpop.f32.mrf.mxu0
  %7931 = vdwg.mxu0
  %7932 = vmatpush.bf16.msra.mxu0 %v6879
  %7933 = vmatpush.bf16.msra.mxu0 %v6875
  %7934 = vmatpush.bf16.msra.mxu0 %v6871
  %7935 = vmatpush.bf16.msra.mxu0 %v6867
  %7936 = vmatpush.bf16.msra.mxu0 %v6863
  %7937 = vmatpush.bf16.msra.mxu0 %v6859
  %7938 = vmatpush.bf16.msra.mxu0 %v6855
  %7939 = vmatpush.bf16.msra.mxu0 %v6851
  %7940 = vmatmul.bf16.gmra.mxu0 %v4021
  %v7941 = vpop.f32.mrf.mxu0
  %v7942 = vadd.f32 %v7929, %v7941
  %v7943 = vpop.f32.mrf.mxu0
  %7944 = vdwg.mxu0
  %7945 = vmatpush.bf16.msra.mxu0 %v6911
  %7946 = vmatpush.bf16.msra.mxu0 %v6907
  %7947 = vmatpush.bf16.msra.mxu0 %v6903
  %7948 = vmatpush.bf16.msra.mxu0 %v6899
  %7949 = vmatpush.bf16.msra.mxu0 %v6895
  %7950 = vmatpush.bf16.msra.mxu0 %v6891
  %7951 = vmatpush.bf16.msra.mxu0 %v6887
  %7952 = vmatpush.bf16.msra.mxu0 %v6883
  %7953 = vmatmul.bf16.gmra.mxu0 %v4022
  %v7954 = vpop.f32.mrf.mxu0
  %v7955 = vadd.f32 %v7942, %v7954
  %v7956 = vpop.f32.mrf.mxu0
  %7957 = vdwg.mxu0
  %7958 = vmatpush.bf16.msra.mxu0 %v6368
  %7959 = vmatpush.bf16.msra.mxu0 %v6364
  %7960 = vmatpush.bf16.msra.mxu0 %v6360
  %7961 = vmatpush.bf16.msra.mxu0 %v6356
  %7962 = vmatpush.bf16.msra.mxu0 %v6352
  %7963 = vmatpush.bf16.msra.mxu0 %v6348
  %7964 = vmatpush.bf16.msra.mxu0 %v6344
  %7965 = vmatpush.bf16.msra.mxu0 %v6340
  %7966 = vmatmul.bf16.gmra.mxu0 %v4005
  %v7967 = vpop.f32.mrf.mxu0
  %v7968 = vadd.f32 %v4604, %v7967
  %v7969 = vpop.f32.mrf.mxu0
  %7970 = vdwg.mxu0
  %7971 = vmatpush.bf16.msra.mxu0 %v6400
  %7972 = vmatpush.bf16.msra.mxu0 %v6396
  %7973 = vmatpush.bf16.msra.mxu0 %v6392
  %7974 = vmatpush.bf16.msra.mxu0 %v6388
  %7975 = vmatpush.bf16.msra.mxu0 %v6384
  %7976 = vmatpush.bf16.msra.mxu0 %v6380
  %7977 = vmatpush.bf16.msra.mxu0 %v6376
  %7978 = vmatpush.bf16.msra.mxu0 %v6372
  %7979 = vmatmul.bf16.gmra.mxu0 %v4006
  %v7980 = vpop.f32.mrf.mxu0
  %v7981 = vadd.f32 %v7968, %v7980
  %v7982 = vpop.f32.mrf.mxu0
  %7983 = vdwg.mxu0
  %7984 = vmatpush.bf16.msra.mxu0 %v6432
  %7985 = vmatpush.bf16.msra.mxu0 %v6428
  %7986 = vmatpush.bf16.msra.mxu0 %v6424
  %7987 = vmatpush.bf16.msra.mxu0 %v6420
  %7988 = vmatpush.bf16.msra.mxu0 %v6416
  %7989 = vmatpush.bf16.msra.mxu0 %v6412
  %7990 = vmatpush.bf16.msra.mxu0 %v6408
  %7991 = vmatpush.bf16.msra.mxu0 %v6404
  %7992 = vmatmul.bf16.gmra.mxu0 %v4007
  %v7993 = vpop.f32.mrf.mxu0
  %v7994 = vadd.f32 %v7981, %v7993
  %v7995 = vpop.f32.mrf.mxu0
  %7996 = vdwg.mxu0
  %7997 = vmatpush.bf16.msra.mxu0 %v6464
  %7998 = vmatpush.bf16.msra.mxu0 %v6460
  %7999 = vmatpush.bf16.msra.mxu0 %v6456
  %8000 = vmatpush.bf16.msra.mxu0 %v6452
  %8001 = vmatpush.bf16.msra.mxu0 %v6448
  %8002 = vmatpush.bf16.msra.mxu0 %v6444
  %8003 = vmatpush.bf16.msra.mxu0 %v6440
  %8004 = vmatpush.bf16.msra.mxu0 %v6436
  %8005 = vmatmul.bf16.gmra.mxu0 %v4008
  %v8006 = vpop.f32.mrf.mxu0
  %v8007 = vadd.f32 %v7994, %v8006
  %v8008 = vpop.f32.mrf.mxu0
  %8009 = vdwg.mxu0
  %8010 = vmatpush.bf16.msra.mxu0 %v6496
  %8011 = vmatpush.bf16.msra.mxu0 %v6492
  %8012 = vmatpush.bf16.msra.mxu0 %v6488
  %8013 = vmatpush.bf16.msra.mxu0 %v6484
  %8014 = vmatpush.bf16.msra.mxu0 %v6480
  %8015 = vmatpush.bf16.msra.mxu0 %v6476
  %8016 = vmatpush.bf16.msra.mxu0 %v6472
  %8017 = vmatpush.bf16.msra.mxu0 %v6468
  %8018 = vmatmul.bf16.gmra.mxu0 %v4009
  %v8019 = vpop.f32.mrf.mxu0
  %v8020 = vadd.f32 %v8007, %v8019
  %v8021 = vpop.f32.mrf.mxu0
  %8022 = vdwg.mxu0
  %8023 = vmatpush.bf16.msra.mxu0 %v6528
  %8024 = vmatpush.bf16.msra.mxu0 %v6524
  %8025 = vmatpush.bf16.msra.mxu0 %v6520
  %8026 = vmatpush.bf16.msra.mxu0 %v6516
  %8027 = vmatpush.bf16.msra.mxu0 %v6512
  %8028 = vmatpush.bf16.msra.mxu0 %v6508
  %8029 = vmatpush.bf16.msra.mxu0 %v6504
  %8030 = vmatpush.bf16.msra.mxu0 %v6500
  %8031 = vmatmul.bf16.gmra.mxu0 %v4010
  %v8032 = vpop.f32.mrf.mxu0
  %v8033 = vadd.f32 %v8020, %v8032
  %v8034 = vpop.f32.mrf.mxu0
  %8035 = vdwg.mxu0
  %8036 = vmatpush.bf16.msra.mxu0 %v6560
  %8037 = vmatpush.bf16.msra.mxu0 %v6556
  %8038 = vmatpush.bf16.msra.mxu0 %v6552
  %8039 = vmatpush.bf16.msra.mxu0 %v6548
  %8040 = vmatpush.bf16.msra.mxu0 %v6544
  %8041 = vmatpush.bf16.msra.mxu0 %v6540
  %8042 = vmatpush.bf16.msra.mxu0 %v6536
  %8043 = vmatpush.bf16.msra.mxu0 %v6532
  %8044 = vmatmul.bf16.gmra.mxu0 %v4011
  %v8045 = vpop.f32.mrf.mxu0
  %v8046 = vadd.f32 %v8033, %v8045
  %v8047 = vpop.f32.mrf.mxu0
  %8048 = vdwg.mxu0
  %8049 = vmatpush.bf16.msra.mxu0 %v6592
  %8050 = vmatpush.bf16.msra.mxu0 %v6588
  %8051 = vmatpush.bf16.msra.mxu0 %v6584
  %8052 = vmatpush.bf16.msra.mxu0 %v6580
  %8053 = vmatpush.bf16.msra.mxu0 %v6576
  %8054 = vmatpush.bf16.msra.mxu0 %v6572
  %8055 = vmatpush.bf16.msra.mxu0 %v6568
  %8056 = vmatpush.bf16.msra.mxu0 %v6564
  %8057 = vmatmul.bf16.gmra.mxu0 %v4012
  %v8058 = vpop.f32.mrf.mxu0
  %v8059 = vadd.f32 %v8046, %v8058
  %v8060 = vpop.f32.mrf.mxu0
  %8061 = vdwg.mxu0
  %8062 = vmatpush.bf16.msra.mxu0 %v6624
  %8063 = vmatpush.bf16.msra.mxu0 %v6620
  %8064 = vmatpush.bf16.msra.mxu0 %v6616
  %8065 = vmatpush.bf16.msra.mxu0 %v6612
  %8066 = vmatpush.bf16.msra.mxu0 %v6608
  %8067 = vmatpush.bf16.msra.mxu0 %v6604
  %8068 = vmatpush.bf16.msra.mxu0 %v6600
  %8069 = vmatpush.bf16.msra.mxu0 %v6596
  %8070 = vmatmul.bf16.gmra.mxu0 %v4013
  %v8071 = vpop.f32.mrf.mxu0
  %v8072 = vadd.f32 %v8059, %v8071
  %v8073 = vpop.f32.mrf.mxu0
  %8074 = vdwg.mxu0
  %8075 = vmatpush.bf16.msra.mxu0 %v6656
  %8076 = vmatpush.bf16.msra.mxu0 %v6652
  %8077 = vmatpush.bf16.msra.mxu0 %v6648
  %8078 = vmatpush.bf16.msra.mxu0 %v6644
  %8079 = vmatpush.bf16.msra.mxu0 %v6640
  %8080 = vmatpush.bf16.msra.mxu0 %v6636
  %8081 = vmatpush.bf16.msra.mxu0 %v6632
  %8082 = vmatpush.bf16.msra.mxu0 %v6628
  %8083 = vmatmul.bf16.gmra.mxu0 %v4014
  %v8084 = vpop.f32.mrf.mxu0
  %v8085 = vadd.f32 %v8072, %v8084
  %v8086 = vpop.f32.mrf.mxu0
  %8087 = vdwg.mxu0
  %8088 = vmatpush.bf16.msra.mxu0 %v6688
  %8089 = vmatpush.bf16.msra.mxu0 %v6684
  %8090 = vmatpush.bf16.msra.mxu0 %v6680
  %8091 = vmatpush.bf16.msra.mxu0 %v6676
  %8092 = vmatpush.bf16.msra.mxu0 %v6672
  %8093 = vmatpush.bf16.msra.mxu0 %v6668
  %8094 = vmatpush.bf16.msra.mxu0 %v6664
  %8095 = vmatpush.bf16.msra.mxu0 %v6660
  %8096 = vmatmul.bf16.gmra.mxu0 %v4015
  %v8097 = vpop.f32.mrf.mxu0
  %v8098 = vadd.f32 %v8085, %v8097
  %v8099 = vpop.f32.mrf.mxu0
  %8100 = vdwg.mxu0
  %8101 = vmatpush.bf16.msra.mxu0 %v6720
  %8102 = vmatpush.bf16.msra.mxu0 %v6716
  %8103 = vmatpush.bf16.msra.mxu0 %v6712
  %8104 = vmatpush.bf16.msra.mxu0 %v6708
  %8105 = vmatpush.bf16.msra.mxu0 %v6704
  %8106 = vmatpush.bf16.msra.mxu0 %v6700
  %8107 = vmatpush.bf16.msra.mxu0 %v6696
  %8108 = vmatpush.bf16.msra.mxu0 %v6692
  %8109 = vmatmul.bf16.gmra.mxu0 %v4016
  %v8110 = vpop.f32.mrf.mxu0
  %v8111 = vadd.f32 %v8098, %v8110
  %v8112 = vpop.f32.mrf.mxu0
  %8113 = vdwg.mxu0
  %8114 = vmatpush.bf16.msra.mxu0 %v6752
  %8115 = vmatpush.bf16.msra.mxu0 %v6748
  %8116 = vmatpush.bf16.msra.mxu0 %v6744
  %8117 = vmatpush.bf16.msra.mxu0 %v6740
  %8118 = vmatpush.bf16.msra.mxu0 %v6736
  %8119 = vmatpush.bf16.msra.mxu0 %v6732
  %8120 = vmatpush.bf16.msra.mxu0 %v6728
  %8121 = vmatpush.bf16.msra.mxu0 %v6724
  %8122 = vmatmul.bf16.gmra.mxu0 %v4017
  %v8123 = vpop.f32.mrf.mxu0
  %v8124 = vadd.f32 %v8111, %v8123
  %v8125 = vpop.f32.mrf.mxu0
  %8126 = vdwg.mxu0
  %8127 = vmatpush.bf16.msra.mxu0 %v6784
  %8128 = vmatpush.bf16.msra.mxu0 %v6780
  %8129 = vmatpush.bf16.msra.mxu0 %v6776
  %8130 = vmatpush.bf16.msra.mxu0 %v6772
  %8131 = vmatpush.bf16.msra.mxu0 %v6768
  %8132 = vmatpush.bf16.msra.mxu0 %v6764
  %8133 = vmatpush.bf16.msra.mxu0 %v6760
  %8134 = vmatpush.bf16.msra.mxu0 %v6756
  %8135 = vmatmul.bf16.gmra.mxu0 %v4018
  %v8136 = vpop.f32.mrf.mxu0
  %v8137 = vadd.f32 %v8124, %v8136
  %v8138 = vpop.f32.mrf.mxu0
  %8139 = vdwg.mxu0
  %8140 = vmatpush.bf16.msra.mxu0 %v6816
  %8141 = vmatpush.bf16.msra.mxu0 %v6812
  %8142 = vmatpush.bf16.msra.mxu0 %v6808
  %8143 = vmatpush.bf16.msra.mxu0 %v6804
  %8144 = vmatpush.bf16.msra.mxu0 %v6800
  %8145 = vmatpush.bf16.msra.mxu0 %v6796
  %8146 = vmatpush.bf16.msra.mxu0 %v6792
  %8147 = vmatpush.bf16.msra.mxu0 %v6788
  %8148 = vmatmul.bf16.gmra.mxu0 %v4019
  %v8149 = vpop.f32.mrf.mxu0
  %v8150 = vadd.f32 %v8137, %v8149
  %v8151 = vpop.f32.mrf.mxu0
  %8152 = vdwg.mxu0
  %8153 = vmatpush.bf16.msra.mxu0 %v6848
  %8154 = vmatpush.bf16.msra.mxu0 %v6844
  %8155 = vmatpush.bf16.msra.mxu0 %v6840
  %8156 = vmatpush.bf16.msra.mxu0 %v6836
  %8157 = vmatpush.bf16.msra.mxu0 %v6832
  %8158 = vmatpush.bf16.msra.mxu0 %v6828
  %8159 = vmatpush.bf16.msra.mxu0 %v6824
  %8160 = vmatpush.bf16.msra.mxu0 %v6820
  %8161 = vmatmul.bf16.gmra.mxu0 %v4020
  %v8162 = vpop.f32.mrf.mxu0
  %v8163 = vadd.f32 %v8150, %v8162
  %v8164 = vpop.f32.mrf.mxu0
  %8165 = vdwg.mxu0
  %8166 = vmatpush.bf16.msra.mxu0 %v6880
  %8167 = vmatpush.bf16.msra.mxu0 %v6876
  %8168 = vmatpush.bf16.msra.mxu0 %v6872
  %8169 = vmatpush.bf16.msra.mxu0 %v6868
  %8170 = vmatpush.bf16.msra.mxu0 %v6864
  %8171 = vmatpush.bf16.msra.mxu0 %v6860
  %8172 = vmatpush.bf16.msra.mxu0 %v6856
  %8173 = vmatpush.bf16.msra.mxu0 %v6852
  %8174 = vmatmul.bf16.gmra.mxu0 %v4021
  %v8175 = vpop.f32.mrf.mxu0
  %v8176 = vadd.f32 %v8163, %v8175
  %v8177 = vpop.f32.mrf.mxu0
  %8178 = vdwg.mxu0
  %8179 = vmatpush.bf16.msra.mxu0 %v6912
  %8180 = vmatpush.bf16.msra.mxu0 %v6908
  %8181 = vmatpush.bf16.msra.mxu0 %v6904
  %8182 = vmatpush.bf16.msra.mxu0 %v6900
  %8183 = vmatpush.bf16.msra.mxu0 %v6896
  %8184 = vmatpush.bf16.msra.mxu0 %v6892
  %8185 = vmatpush.bf16.msra.mxu0 %v6888
  %8186 = vmatpush.bf16.msra.mxu0 %v6884
  %8187 = vmatmul.bf16.gmra.mxu0 %v4022
  %v8188 = vpop.f32.mrf.mxu0
  %v8189 = vadd.f32 %v8176, %v8188
  %v8190 = vpop.f32.mrf.mxu0
  %8191 = vdwg.mxu0
  %8192 = vmatpush.bf16.msra.mxu0 %v6369
  %8193 = vmatpush.bf16.msra.mxu0 %v6365
  %8194 = vmatpush.bf16.msra.mxu0 %v6361
  %8195 = vmatpush.bf16.msra.mxu0 %v6357
  %8196 = vmatpush.bf16.msra.mxu0 %v6353
  %8197 = vmatpush.bf16.msra.mxu0 %v6349
  %8198 = vmatpush.bf16.msra.mxu0 %v6345
  %8199 = vmatpush.bf16.msra.mxu0 %v6341
  %8200 = vmatmul.bf16.gmra.mxu0 %v4005
  %v8201 = vpop.f32.mrf.mxu0
  %v8202 = vadd.f32 %v4605, %v8201
  %v8203 = vpop.f32.mrf.mxu0
  %8204 = vdwg.mxu0
  %8205 = vmatpush.bf16.msra.mxu0 %v6401
  %8206 = vmatpush.bf16.msra.mxu0 %v6397
  %8207 = vmatpush.bf16.msra.mxu0 %v6393
  %8208 = vmatpush.bf16.msra.mxu0 %v6389
  %8209 = vmatpush.bf16.msra.mxu0 %v6385
  %8210 = vmatpush.bf16.msra.mxu0 %v6381
  %8211 = vmatpush.bf16.msra.mxu0 %v6377
  %8212 = vmatpush.bf16.msra.mxu0 %v6373
  %8213 = vmatmul.bf16.gmra.mxu0 %v4006
  %v8214 = vpop.f32.mrf.mxu0
  %v8215 = vadd.f32 %v8202, %v8214
  %v8216 = vpop.f32.mrf.mxu0
  %8217 = vdwg.mxu0
  %8218 = vmatpush.bf16.msra.mxu0 %v6433
  %8219 = vmatpush.bf16.msra.mxu0 %v6429
  %8220 = vmatpush.bf16.msra.mxu0 %v6425
  %8221 = vmatpush.bf16.msra.mxu0 %v6421
  %8222 = vmatpush.bf16.msra.mxu0 %v6417
  %8223 = vmatpush.bf16.msra.mxu0 %v6413
  %8224 = vmatpush.bf16.msra.mxu0 %v6409
  %8225 = vmatpush.bf16.msra.mxu0 %v6405
  %8226 = vmatmul.bf16.gmra.mxu0 %v4007
  %v8227 = vpop.f32.mrf.mxu0
  %v8228 = vadd.f32 %v8215, %v8227
  %v8229 = vpop.f32.mrf.mxu0
  %8230 = vdwg.mxu0
  %8231 = vmatpush.bf16.msra.mxu0 %v6465
  %8232 = vmatpush.bf16.msra.mxu0 %v6461
  %8233 = vmatpush.bf16.msra.mxu0 %v6457
  %8234 = vmatpush.bf16.msra.mxu0 %v6453
  %8235 = vmatpush.bf16.msra.mxu0 %v6449
  %8236 = vmatpush.bf16.msra.mxu0 %v6445
  %8237 = vmatpush.bf16.msra.mxu0 %v6441
  %8238 = vmatpush.bf16.msra.mxu0 %v6437
  %8239 = vmatmul.bf16.gmra.mxu0 %v4008
  %v8240 = vpop.f32.mrf.mxu0
  %v8241 = vadd.f32 %v8228, %v8240
  %v8242 = vpop.f32.mrf.mxu0
  %8243 = vdwg.mxu0
  %8244 = vmatpush.bf16.msra.mxu0 %v6497
  %8245 = vmatpush.bf16.msra.mxu0 %v6493
  %8246 = vmatpush.bf16.msra.mxu0 %v6489
  %8247 = vmatpush.bf16.msra.mxu0 %v6485
  %8248 = vmatpush.bf16.msra.mxu0 %v6481
  %8249 = vmatpush.bf16.msra.mxu0 %v6477
  %8250 = vmatpush.bf16.msra.mxu0 %v6473
  %8251 = vmatpush.bf16.msra.mxu0 %v6469
  %8252 = vmatmul.bf16.gmra.mxu0 %v4009
  %v8253 = vpop.f32.mrf.mxu0
  %v8254 = vadd.f32 %v8241, %v8253
  %v8255 = vpop.f32.mrf.mxu0
  %8256 = vdwg.mxu0
  %8257 = vmatpush.bf16.msra.mxu0 %v6529
  %8258 = vmatpush.bf16.msra.mxu0 %v6525
  %8259 = vmatpush.bf16.msra.mxu0 %v6521
  %8260 = vmatpush.bf16.msra.mxu0 %v6517
  %8261 = vmatpush.bf16.msra.mxu0 %v6513
  %8262 = vmatpush.bf16.msra.mxu0 %v6509
  %8263 = vmatpush.bf16.msra.mxu0 %v6505
  %8264 = vmatpush.bf16.msra.mxu0 %v6501
  %8265 = vmatmul.bf16.gmra.mxu0 %v4010
  %v8266 = vpop.f32.mrf.mxu0
  %v8267 = vadd.f32 %v8254, %v8266
  %v8268 = vpop.f32.mrf.mxu0
  %8269 = vdwg.mxu0
  %8270 = vmatpush.bf16.msra.mxu0 %v6561
  %8271 = vmatpush.bf16.msra.mxu0 %v6557
  %8272 = vmatpush.bf16.msra.mxu0 %v6553
  %8273 = vmatpush.bf16.msra.mxu0 %v6549
  %8274 = vmatpush.bf16.msra.mxu0 %v6545
  %8275 = vmatpush.bf16.msra.mxu0 %v6541
  %8276 = vmatpush.bf16.msra.mxu0 %v6537
  %8277 = vmatpush.bf16.msra.mxu0 %v6533
  %8278 = vmatmul.bf16.gmra.mxu0 %v4011
  %v8279 = vpop.f32.mrf.mxu0
  %v8280 = vadd.f32 %v8267, %v8279
  %v8281 = vpop.f32.mrf.mxu0
  %8282 = vdwg.mxu0
  %8283 = vmatpush.bf16.msra.mxu0 %v6593
  %8284 = vmatpush.bf16.msra.mxu0 %v6589
  %8285 = vmatpush.bf16.msra.mxu0 %v6585
  %8286 = vmatpush.bf16.msra.mxu0 %v6581
  %8287 = vmatpush.bf16.msra.mxu0 %v6577
  %8288 = vmatpush.bf16.msra.mxu0 %v6573
  %8289 = vmatpush.bf16.msra.mxu0 %v6569
  %8290 = vmatpush.bf16.msra.mxu0 %v6565
  %8291 = vmatmul.bf16.gmra.mxu0 %v4012
  %v8292 = vpop.f32.mrf.mxu0
  %v8293 = vadd.f32 %v8280, %v8292
  %v8294 = vpop.f32.mrf.mxu0
  %8295 = vdwg.mxu0
  %8296 = vmatpush.bf16.msra.mxu0 %v6625
  %8297 = vmatpush.bf16.msra.mxu0 %v6621
  %8298 = vmatpush.bf16.msra.mxu0 %v6617
  %8299 = vmatpush.bf16.msra.mxu0 %v6613
  %8300 = vmatpush.bf16.msra.mxu0 %v6609
  %8301 = vmatpush.bf16.msra.mxu0 %v6605
  %8302 = vmatpush.bf16.msra.mxu0 %v6601
  %8303 = vmatpush.bf16.msra.mxu0 %v6597
  %8304 = vmatmul.bf16.gmra.mxu0 %v4013
  %v8305 = vpop.f32.mrf.mxu0
  %v8306 = vadd.f32 %v8293, %v8305
  %v8307 = vpop.f32.mrf.mxu0
  %8308 = vdwg.mxu0
  %8309 = vmatpush.bf16.msra.mxu0 %v6657
  %8310 = vmatpush.bf16.msra.mxu0 %v6653
  %8311 = vmatpush.bf16.msra.mxu0 %v6649
  %8312 = vmatpush.bf16.msra.mxu0 %v6645
  %8313 = vmatpush.bf16.msra.mxu0 %v6641
  %8314 = vmatpush.bf16.msra.mxu0 %v6637
  %8315 = vmatpush.bf16.msra.mxu0 %v6633
  %8316 = vmatpush.bf16.msra.mxu0 %v6629
  %8317 = vmatmul.bf16.gmra.mxu0 %v4014
  %v8318 = vpop.f32.mrf.mxu0
  %v8319 = vadd.f32 %v8306, %v8318
  %v8320 = vpop.f32.mrf.mxu0
  %8321 = vdwg.mxu0
  %8322 = vmatpush.bf16.msra.mxu0 %v6689
  %8323 = vmatpush.bf16.msra.mxu0 %v6685
  %8324 = vmatpush.bf16.msra.mxu0 %v6681
  %8325 = vmatpush.bf16.msra.mxu0 %v6677
  %8326 = vmatpush.bf16.msra.mxu0 %v6673
  %8327 = vmatpush.bf16.msra.mxu0 %v6669
  %8328 = vmatpush.bf16.msra.mxu0 %v6665
  %8329 = vmatpush.bf16.msra.mxu0 %v6661
  %8330 = vmatmul.bf16.gmra.mxu0 %v4015
  %v8331 = vpop.f32.mrf.mxu0
  %v8332 = vadd.f32 %v8319, %v8331
  %v8333 = vpop.f32.mrf.mxu0
  %8334 = vdwg.mxu0
  %8335 = vmatpush.bf16.msra.mxu0 %v6721
  %8336 = vmatpush.bf16.msra.mxu0 %v6717
  %8337 = vmatpush.bf16.msra.mxu0 %v6713
  %8338 = vmatpush.bf16.msra.mxu0 %v6709
  %8339 = vmatpush.bf16.msra.mxu0 %v6705
  %8340 = vmatpush.bf16.msra.mxu0 %v6701
  %8341 = vmatpush.bf16.msra.mxu0 %v6697
  %8342 = vmatpush.bf16.msra.mxu0 %v6693
  %8343 = vmatmul.bf16.gmra.mxu0 %v4016
  %v8344 = vpop.f32.mrf.mxu0
  %v8345 = vadd.f32 %v8332, %v8344
  %v8346 = vpop.f32.mrf.mxu0
  %8347 = vdwg.mxu0
  %8348 = vmatpush.bf16.msra.mxu0 %v6753
  %8349 = vmatpush.bf16.msra.mxu0 %v6749
  %8350 = vmatpush.bf16.msra.mxu0 %v6745
  %8351 = vmatpush.bf16.msra.mxu0 %v6741
  %8352 = vmatpush.bf16.msra.mxu0 %v6737
  %8353 = vmatpush.bf16.msra.mxu0 %v6733
  %8354 = vmatpush.bf16.msra.mxu0 %v6729
  %8355 = vmatpush.bf16.msra.mxu0 %v6725
  %8356 = vmatmul.bf16.gmra.mxu0 %v4017
  %v8357 = vpop.f32.mrf.mxu0
  %v8358 = vadd.f32 %v8345, %v8357
  %v8359 = vpop.f32.mrf.mxu0
  %8360 = vdwg.mxu0
  %8361 = vmatpush.bf16.msra.mxu0 %v6785
  %8362 = vmatpush.bf16.msra.mxu0 %v6781
  %8363 = vmatpush.bf16.msra.mxu0 %v6777
  %8364 = vmatpush.bf16.msra.mxu0 %v6773
  %8365 = vmatpush.bf16.msra.mxu0 %v6769
  %8366 = vmatpush.bf16.msra.mxu0 %v6765
  %8367 = vmatpush.bf16.msra.mxu0 %v6761
  %8368 = vmatpush.bf16.msra.mxu0 %v6757
  %8369 = vmatmul.bf16.gmra.mxu0 %v4018
  %v8370 = vpop.f32.mrf.mxu0
  %v8371 = vadd.f32 %v8358, %v8370
  %v8372 = vpop.f32.mrf.mxu0
  %8373 = vdwg.mxu0
  %8374 = vmatpush.bf16.msra.mxu0 %v6817
  %8375 = vmatpush.bf16.msra.mxu0 %v6813
  %8376 = vmatpush.bf16.msra.mxu0 %v6809
  %8377 = vmatpush.bf16.msra.mxu0 %v6805
  %8378 = vmatpush.bf16.msra.mxu0 %v6801
  %8379 = vmatpush.bf16.msra.mxu0 %v6797
  %8380 = vmatpush.bf16.msra.mxu0 %v6793
  %8381 = vmatpush.bf16.msra.mxu0 %v6789
  %8382 = vmatmul.bf16.gmra.mxu0 %v4019
  %v8383 = vpop.f32.mrf.mxu0
  %v8384 = vadd.f32 %v8371, %v8383
  %v8385 = vpop.f32.mrf.mxu0
  %8386 = vdwg.mxu0
  %8387 = vmatpush.bf16.msra.mxu0 %v6849
  %8388 = vmatpush.bf16.msra.mxu0 %v6845
  %8389 = vmatpush.bf16.msra.mxu0 %v6841
  %8390 = vmatpush.bf16.msra.mxu0 %v6837
  %8391 = vmatpush.bf16.msra.mxu0 %v6833
  %8392 = vmatpush.bf16.msra.mxu0 %v6829
  %8393 = vmatpush.bf16.msra.mxu0 %v6825
  %8394 = vmatpush.bf16.msra.mxu0 %v6821
  %8395 = vmatmul.bf16.gmra.mxu0 %v4020
  %v8396 = vpop.f32.mrf.mxu0
  %v8397 = vadd.f32 %v8384, %v8396
  %v8398 = vpop.f32.mrf.mxu0
  %8399 = vdwg.mxu0
  %8400 = vmatpush.bf16.msra.mxu0 %v6881
  %8401 = vmatpush.bf16.msra.mxu0 %v6877
  %8402 = vmatpush.bf16.msra.mxu0 %v6873
  %8403 = vmatpush.bf16.msra.mxu0 %v6869
  %8404 = vmatpush.bf16.msra.mxu0 %v6865
  %8405 = vmatpush.bf16.msra.mxu0 %v6861
  %8406 = vmatpush.bf16.msra.mxu0 %v6857
  %8407 = vmatpush.bf16.msra.mxu0 %v6853
  %8408 = vmatmul.bf16.gmra.mxu0 %v4021
  %v8409 = vpop.f32.mrf.mxu0
  %v8410 = vadd.f32 %v8397, %v8409
  %v8411 = vpop.f32.mrf.mxu0
  %8412 = vdwg.mxu0
  %8413 = vmatpush.bf16.msra.mxu0 %v6913
  %8414 = vmatpush.bf16.msra.mxu0 %v6909
  %8415 = vmatpush.bf16.msra.mxu0 %v6905
  %8416 = vmatpush.bf16.msra.mxu0 %v6901
  %8417 = vmatpush.bf16.msra.mxu0 %v6897
  %8418 = vmatpush.bf16.msra.mxu0 %v6893
  %8419 = vmatpush.bf16.msra.mxu0 %v6889
  %8420 = vmatpush.bf16.msra.mxu0 %v6885
  %8421 = vmatmul.bf16.gmra.mxu0 %v4022
  %v8422 = vpop.f32.mrf.mxu0
  %v8423 = vadd.f32 %v8410, %v8422
  %v8424 = vpop.f32.mrf.mxu0
  %8425 = vdwg.mxu0
  %v8426 = vld [vmem:[%s4] sm:$0xff]
  %v8427 = vld [vmem:[%s4 + $0x8] sm:$0xff]
  %v8428 = vld [vmem:[%s4 + $0x10] sm:$0xff]
  %v8429 = vld [vmem:[%s4 + $0x18] sm:$0xff]
  %v8430 = vld [vmem:[%s4 + $0x20] sm:$0xff]
  %v8431 = vld [vmem:[%s4 + $0x28] sm:$0xff]
  %v8432 = vld [vmem:[%s4 + $0x30] sm:$0xff]
  %v8433 = vld [vmem:[%s4 + $0x38] sm:$0xff]
  %v8434 = vld [vmem:[%s4 + $0x40] sm:$0xff]
  %v8435 = vld [vmem:[%s4 + $0x48] sm:$0xff]
  %v8436 = vld [vmem:[%s4 + $0x50] sm:$0xff]
  %v8437 = vld [vmem:[%s4 + $0x58] sm:$0xff]
  %v8438 = vld [vmem:[%s4 + $0x60] sm:$0xff]
  %v8439 = vld [vmem:[%s4 + $0x68] sm:$0xff]
  %v8440 = vld [vmem:[%s4 + $0x70] sm:$0xff]
  %v8441 = vld [vmem:[%s4 + $0x78] sm:$0xff]
  %v8458 = vunpack.c.l.b16 %v8426
  %v8459 = vunpack.c.h.b16 %v8426
  %v8460 = vunpack.c.l.b16 %v8427
  %v8461 = vunpack.c.h.b16 %v8427
  %v8462 = vunpack.c.l.b16 %v8428
  %v8463 = vunpack.c.h.b16 %v8428
  %v8464 = vunpack.c.l.b16 %v8429
  %v8465 = vunpack.c.h.b16 %v8429
  %v8466 = vunpack.c.l.b16 %v8430
  %v8467 = vunpack.c.h.b16 %v8430
  %v8468 = vunpack.c.l.b16 %v8431
  %v8469 = vunpack.c.h.b16 %v8431
  %v8470 = vunpack.c.l.b16 %v8432
  %v8471 = vunpack.c.h.b16 %v8432
  %v8472 = vunpack.c.l.b16 %v8433
  %v8473 = vunpack.c.h.b16 %v8433
  %v8474 = vunpack.c.l.b16 %v8434
  %v8475 = vunpack.c.h.b16 %v8434
  %v8476 = vunpack.c.l.b16 %v8435
  %v8477 = vunpack.c.h.b16 %v8435
  %v8478 = vunpack.c.l.b16 %v8436
  %v8479 = vunpack.c.h.b16 %v8436
  %v8480 = vunpack.c.l.b16 %v8437
  %v8481 = vunpack.c.h.b16 %v8437
  %v8482 = vunpack.c.l.b16 %v8438
  %v8483 = vunpack.c.h.b16 %v8438
  %v8484 = vunpack.c.l.b16 %v8439
  %v8485 = vunpack.c.h.b16 %v8439
  %v8486 = vunpack.c.l.b16 %v8440
  %v8487 = vunpack.c.h.b16 %v8440
  %v8488 = vunpack.c.l.b16 %v8441
  %v8489 = vunpack.c.h.b16 %v8441
  %v8490 = vpack.c.b16 %v8462, %v8458
  %v8491 = vpack.c.b16 %v8463, %v8459
  %v8492 = vpack.c.b16 %v8464, %v8460
  %v8493 = vpack.c.b16 %v8465, %v8461
  %v8494 = vpack.c.b16 %v8470, %v8466
  %v8495 = vpack.c.b16 %v8471, %v8467
  %v8496 = vpack.c.b16 %v8472, %v8468
  %v8497 = vpack.c.b16 %v8473, %v8469
  %v8498 = vpack.c.b16 %v8478, %v8474
  %v8499 = vpack.c.b16 %v8479, %v8475
  %v8500 = vpack.c.b16 %v8480, %v8476
  %v8501 = vpack.c.b16 %v8481, %v8477
  %v8502 = vpack.c.b16 %v8486, %v8482
  %v8503 = vpack.c.b16 %v8487, %v8483
  %v8504 = vpack.c.b16 %v8488, %v8484
  %v8505 = vpack.c.b16 %v8489, %v8485
  %8522 = vmatpush.bf16.msra.mxu0 0
  %8523 = vmatpush.bf16.msra.mxu0 0
  %8524 = vmatpush.bf16.msra.mxu0 0
  %8525 = vmatpush.bf16.msra.mxu0 0
  %8526 = vmatpush.bf16.msra.mxu0 %v8502
  %8527 = vmatpush.bf16.msra.mxu0 %v8498
  %8528 = vmatpush.bf16.msra.mxu0 %v8494
  %8529 = vmatpush.bf16.msra.mxu0 %v8490
  %8530 = vmatmul.bf16.gmra.mxu0 %v1835
  %v8531 = vpop.f32.mrf.mxu0
  %v8532 = vadd.f32 0.0, %v8531
  %v8533 = vpop.f32.mrf.mxu0
  %v8534 = vadd.f32 0.0, %v8533
  %8535 = vmatmul.bf16.gmra.mxu0 %v1838
  %v8536 = vpop.f32.mrf.mxu0
  %v8537 = vadd.f32 0.0, %v8536
  %v8538 = vpop.f32.mrf.mxu0
  %v8539 = vadd.f32 0.0, %v8538
  %8540 = vmatmul.bf16.gmra.mxu0 %v1841
  %v8541 = vpop.f32.mrf.mxu0
  %v8542 = vadd.f32 0.0, %v8541
  %v8543 = vpop.f32.mrf.mxu0
  %v8544 = vadd.f32 0.0, %v8543
  %8545 = vmatmul.bf16.gmra.mxu0 %v1844
  %v8546 = vpop.f32.mrf.mxu0
  %v8547 = vadd.f32 0.0, %v8546
  %v8548 = vpop.f32.mrf.mxu0
  %v8549 = vadd.f32 0.0, %v8548
  %8550 = vmatmul.bf16.gmra.mxu0 %v1847
  %v8551 = vpop.f32.mrf.mxu0
  %v8552 = vadd.f32 0.0, %v8551
  %v8553 = vpop.f32.mrf.mxu0
  %v8554 = vadd.f32 0.0, %v8553
  %8555 = vmatmul.bf16.gmra.mxu0 %v1850
  %v8556 = vpop.f32.mrf.mxu0
  %v8557 = vadd.f32 0.0, %v8556
  %v8558 = vpop.f32.mrf.mxu0
  %v8559 = vadd.f32 0.0, %v8558
  %8560 = vmatmul.bf16.gmra.mxu0 %v1853
  %v8561 = vpop.f32.mrf.mxu0
  %v8562 = vadd.f32 0.0, %v8561
  %v8563 = vpop.f32.mrf.mxu0
  %v8564 = vadd.f32 0.0, %v8563
  %8565 = vmatmul.bf16.gmra.mxu0 %v1856
  %v8566 = vpop.f32.mrf.mxu0
  %v8567 = vadd.f32 0.0, %v8566
  %v8568 = vpop.f32.mrf.mxu0
  %v8569 = vadd.f32 0.0, %v8568
  %8570 = vmatmul.bf16.gmra.mxu0 %v1859
  %v8571 = vpop.f32.mrf.mxu0
  %v8572 = vadd.f32 0.0, %v8571
  %v8573 = vpop.f32.mrf.mxu0
  %v8574 = vadd.f32 0.0, %v8573
  %8575 = vmatmul.bf16.gmra.mxu0 %v1862
  %v8576 = vpop.f32.mrf.mxu0
  %v8577 = vadd.f32 0.0, %v8576
  %v8578 = vpop.f32.mrf.mxu0
  %v8579 = vadd.f32 0.0, %v8578
  %8580 = vmatmul.bf16.gmra.mxu0 %v1865
  %v8581 = vpop.f32.mrf.mxu0
  %v8582 = vadd.f32 0.0, %v8581
  %v8583 = vpop.f32.mrf.mxu0
  %v8584 = vadd.f32 0.0, %v8583
  %8585 = vmatmul.bf16.gmra.mxu0 %v1868
  %v8586 = vpop.f32.mrf.mxu0
  %v8587 = vadd.f32 0.0, %v8586
  %v8588 = vpop.f32.mrf.mxu0
  %v8589 = vadd.f32 0.0, %v8588
  %8590 = vmatmul.bf16.gmra.mxu0 %v1871
  %v8591 = vpop.f32.mrf.mxu0
  %v8592 = vadd.f32 0.0, %v8591
  %v8593 = vpop.f32.mrf.mxu0
  %v8594 = vadd.f32 0.0, %v8593
  %8595 = vmatmul.bf16.gmra.mxu0 %v1874
  %v8596 = vpop.f32.mrf.mxu0
  %v8597 = vadd.f32 0.0, %v8596
  %v8598 = vpop.f32.mrf.mxu0
  %v8599 = vadd.f32 0.0, %v8598
  %8600 = vmatmul.bf16.gmra.mxu0 %v1877
  %v8601 = vpop.f32.mrf.mxu0
  %v8602 = vadd.f32 0.0, %v8601
  %v8603 = vpop.f32.mrf.mxu0
  %v8604 = vadd.f32 0.0, %v8603
  %8605 = vmatmul.bf16.gmra.mxu0 %v1880
  %v8606 = vpop.f32.mrf.mxu0
  %v8607 = vadd.f32 0.0, %v8606
  %v8608 = vpop.f32.mrf.mxu0
  %v8609 = vadd.f32 0.0, %v8608
  %8610 = vdwg.mxu0
  %8611 = vmatpush.bf16.msra.mxu0 0
  %8612 = vmatpush.bf16.msra.mxu0 0
  %8613 = vmatpush.bf16.msra.mxu0 0
  %8614 = vmatpush.bf16.msra.mxu0 0
  %8615 = vmatpush.bf16.msra.mxu0 %v8503
  %8616 = vmatpush.bf16.msra.mxu0 %v8499
  %8617 = vmatpush.bf16.msra.mxu0 %v8495
  %8618 = vmatpush.bf16.msra.mxu0 %v8491
  %8619 = vmatmul.bf16.gmra.mxu0 %v1835
  %v8620 = vpop.f32.mrf.mxu0
  %v8621 = vadd.f32 0.0, %v8620
  %v8622 = vpop.f32.mrf.mxu0
  %v8623 = vadd.f32 0.0, %v8622
  %8624 = vmatmul.bf16.gmra.mxu0 %v1838
  %v8625 = vpop.f32.mrf.mxu0
  %v8626 = vadd.f32 0.0, %v8625
  %v8627 = vpop.f32.mrf.mxu0
  %v8628 = vadd.f32 0.0, %v8627
  %8629 = vmatmul.bf16.gmra.mxu0 %v1841
  %v8630 = vpop.f32.mrf.mxu0
  %v8631 = vadd.f32 0.0, %v8630
  %v8632 = vpop.f32.mrf.mxu0
  %v8633 = vadd.f32 0.0, %v8632
  %8634 = vmatmul.bf16.gmra.mxu0 %v1844
  %v8635 = vpop.f32.mrf.mxu0
  %v8636 = vadd.f32 0.0, %v8635
  %v8637 = vpop.f32.mrf.mxu0
  %v8638 = vadd.f32 0.0, %v8637
  %8639 = vmatmul.bf16.gmra.mxu0 %v1847
  %v8640 = vpop.f32.mrf.mxu0
  %v8641 = vadd.f32 0.0, %v8640
  %v8642 = vpop.f32.mrf.mxu0
  %v8643 = vadd.f32 0.0, %v8642
  %8644 = vmatmul.bf16.gmra.mxu0 %v1850
  %v8645 = vpop.f32.mrf.mxu0
  %v8646 = vadd.f32 0.0, %v8645
  %v8647 = vpop.f32.mrf.mxu0
  %v8648 = vadd.f32 0.0, %v8647
  %8649 = vmatmul.bf16.gmra.mxu0 %v1853
  %v8650 = vpop.f32.mrf.mxu0
  %v8651 = vadd.f32 0.0, %v8650
  %v8652 = vpop.f32.mrf.mxu0
  %v8653 = vadd.f32 0.0, %v8652
  %8654 = vmatmul.bf16.gmra.mxu0 %v1856
  %v8655 = vpop.f32.mrf.mxu0
  %v8656 = vadd.f32 0.0, %v8655
  %v8657 = vpop.f32.mrf.mxu0
  %v8658 = vadd.f32 0.0, %v8657
  %8659 = vmatmul.bf16.gmra.mxu0 %v1859
  %v8660 = vpop.f32.mrf.mxu0
  %v8661 = vadd.f32 0.0, %v8660
  %v8662 = vpop.f32.mrf.mxu0
  %v8663 = vadd.f32 0.0, %v8662
  %8664 = vmatmul.bf16.gmra.mxu0 %v1862
  %v8665 = vpop.f32.mrf.mxu0
  %v8666 = vadd.f32 0.0, %v8665
  %v8667 = vpop.f32.mrf.mxu0
  %v8668 = vadd.f32 0.0, %v8667
  %8669 = vmatmul.bf16.gmra.mxu0 %v1865
  %v8670 = vpop.f32.mrf.mxu0
  %v8671 = vadd.f32 0.0, %v8670
  %v8672 = vpop.f32.mrf.mxu0
  %v8673 = vadd.f32 0.0, %v8672
  %8674 = vmatmul.bf16.gmra.mxu0 %v1868
  %v8675 = vpop.f32.mrf.mxu0
  %v8676 = vadd.f32 0.0, %v8675
  %v8677 = vpop.f32.mrf.mxu0
  %v8678 = vadd.f32 0.0, %v8677
  %8679 = vmatmul.bf16.gmra.mxu0 %v1871
  %v8680 = vpop.f32.mrf.mxu0
  %v8681 = vadd.f32 0.0, %v8680
  %v8682 = vpop.f32.mrf.mxu0
  %v8683 = vadd.f32 0.0, %v8682
  %8684 = vmatmul.bf16.gmra.mxu0 %v1874
  %v8685 = vpop.f32.mrf.mxu0
  %v8686 = vadd.f32 0.0, %v8685
  %v8687 = vpop.f32.mrf.mxu0
  %v8688 = vadd.f32 0.0, %v8687
  %8689 = vmatmul.bf16.gmra.mxu0 %v1877
  %v8690 = vpop.f32.mrf.mxu0
  %v8691 = vadd.f32 0.0, %v8690
  %v8692 = vpop.f32.mrf.mxu0
  %v8693 = vadd.f32 0.0, %v8692
  %8694 = vmatmul.bf16.gmra.mxu0 %v1880
  %v8695 = vpop.f32.mrf.mxu0
  %v8696 = vadd.f32 0.0, %v8695
  %v8697 = vpop.f32.mrf.mxu0
  %v8698 = vadd.f32 0.0, %v8697
  %8699 = vdwg.mxu0
  %8700 = vmatpush.bf16.msra.mxu0 0
  %8701 = vmatpush.bf16.msra.mxu0 0
  %8702 = vmatpush.bf16.msra.mxu0 0
  %8703 = vmatpush.bf16.msra.mxu0 0
  %8704 = vmatpush.bf16.msra.mxu0 %v8504
  %8705 = vmatpush.bf16.msra.mxu0 %v8500
  %8706 = vmatpush.bf16.msra.mxu0 %v8496
  %8707 = vmatpush.bf16.msra.mxu0 %v8492
  %8708 = vmatmul.bf16.gmra.mxu0 %v1835
  %v8709 = vpop.f32.mrf.mxu0
  %v8710 = vadd.f32 0.0, %v8709
  %v8711 = vpop.f32.mrf.mxu0
  %v8712 = vadd.f32 0.0, %v8711
  %8713 = vmatmul.bf16.gmra.mxu0 %v1838
  %v8714 = vpop.f32.mrf.mxu0
  %v8715 = vadd.f32 0.0, %v8714
  %v8716 = vpop.f32.mrf.mxu0
  %v8717 = vadd.f32 0.0, %v8716
  %8718 = vmatmul.bf16.gmra.mxu0 %v1841
  %v8719 = vpop.f32.mrf.mxu0
  %v8720 = vadd.f32 0.0, %v8719
  %v8721 = vpop.f32.mrf.mxu0
  %v8722 = vadd.f32 0.0, %v8721
  %8723 = vmatmul.bf16.gmra.mxu0 %v1844
  %v8724 = vpop.f32.mrf.mxu0
  %v8725 = vadd.f32 0.0, %v8724
  %v8726 = vpop.f32.mrf.mxu0
  %v8727 = vadd.f32 0.0, %v8726
  %8728 = vmatmul.bf16.gmra.mxu0 %v1847
  %v8729 = vpop.f32.mrf.mxu0
  %v8730 = vadd.f32 0.0, %v8729
  %v8731 = vpop.f32.mrf.mxu0
  %v8732 = vadd.f32 0.0, %v8731
  %8733 = vmatmul.bf16.gmra.mxu0 %v1850
  %v8734 = vpop.f32.mrf.mxu0
  %v8735 = vadd.f32 0.0, %v8734
  %v8736 = vpop.f32.mrf.mxu0
  %v8737 = vadd.f32 0.0, %v8736
  %8738 = vmatmul.bf16.gmra.mxu0 %v1853
  %v8739 = vpop.f32.mrf.mxu0
  %v8740 = vadd.f32 0.0, %v8739
  %v8741 = vpop.f32.mrf.mxu0
  %v8742 = vadd.f32 0.0, %v8741
  %8743 = vmatmul.bf16.gmra.mxu0 %v1856
  %v8744 = vpop.f32.mrf.mxu0
  %v8745 = vadd.f32 0.0, %v8744
  %v8746 = vpop.f32.mrf.mxu0
  %v8747 = vadd.f32 0.0, %v8746
  %8748 = vmatmul.bf16.gmra.mxu0 %v1859
  %v8749 = vpop.f32.mrf.mxu0
  %v8750 = vadd.f32 0.0, %v8749
  %v8751 = vpop.f32.mrf.mxu0
  %v8752 = vadd.f32 0.0, %v8751
  %8753 = vmatmul.bf16.gmra.mxu0 %v1862
  %v8754 = vpop.f32.mrf.mxu0
  %v8755 = vadd.f32 0.0, %v8754
  %v8756 = vpop.f32.mrf.mxu0
  %v8757 = vadd.f32 0.0, %v8756
  %8758 = vmatmul.bf16.gmra.mxu0 %v1865
  %v8759 = vpop.f32.mrf.mxu0
  %v8760 = vadd.f32 0.0, %v8759
  %v8761 = vpop.f32.mrf.mxu0
  %v8762 = vadd.f32 0.0, %v8761
  %8763 = vmatmul.bf16.gmra.mxu0 %v1868
  %v8764 = vpop.f32.mrf.mxu0
  %v8765 = vadd.f32 0.0, %v8764
  %v8766 = vpop.f32.mrf.mxu0
  %v8767 = vadd.f32 0.0, %v8766
  %8768 = vmatmul.bf16.gmra.mxu0 %v1871
  %v8769 = vpop.f32.mrf.mxu0
  %v8770 = vadd.f32 0.0, %v8769
  %v8771 = vpop.f32.mrf.mxu0
  %v8772 = vadd.f32 0.0, %v8771
  %8773 = vmatmul.bf16.gmra.mxu0 %v1874
  %v8774 = vpop.f32.mrf.mxu0
  %v8775 = vadd.f32 0.0, %v8774
  %v8776 = vpop.f32.mrf.mxu0
  %v8777 = vadd.f32 0.0, %v8776
  %8778 = vmatmul.bf16.gmra.mxu0 %v1877
  %v8779 = vpop.f32.mrf.mxu0
  %v8780 = vadd.f32 0.0, %v8779
  %v8781 = vpop.f32.mrf.mxu0
  %v8782 = vadd.f32 0.0, %v8781
  %8783 = vmatmul.bf16.gmra.mxu0 %v1880
  %v8784 = vpop.f32.mrf.mxu0
  %v8785 = vadd.f32 0.0, %v8784
  %v8786 = vpop.f32.mrf.mxu0
  %v8787 = vadd.f32 0.0, %v8786
  %8788 = vdwg.mxu0
  %8789 = vmatpush.bf16.msra.mxu0 0
  %8790 = vmatpush.bf16.msra.mxu0 0
  %8791 = vmatpush.bf16.msra.mxu0 0
  %8792 = vmatpush.bf16.msra.mxu0 0
  %8793 = vmatpush.bf16.msra.mxu0 %v8505
  %8794 = vmatpush.bf16.msra.mxu0 %v8501
  %8795 = vmatpush.bf16.msra.mxu0 %v8497
  %8796 = vmatpush.bf16.msra.mxu0 %v8493
  %8797 = vmatmul.bf16.gmra.mxu0 %v1835
  %v8798 = vpop.f32.mrf.mxu0
  %v8799 = vadd.f32 0.0, %v8798
  %v8800 = vpop.f32.mrf.mxu0
  %v8801 = vadd.f32 0.0, %v8800
  %8802 = vmatmul.bf16.gmra.mxu0 %v1838
  %v8803 = vpop.f32.mrf.mxu0
  %v8804 = vadd.f32 0.0, %v8803
  %v8805 = vpop.f32.mrf.mxu0
  %v8806 = vadd.f32 0.0, %v8805
  %8807 = vmatmul.bf16.gmra.mxu0 %v1841
  %v8808 = vpop.f32.mrf.mxu0
  %v8809 = vadd.f32 0.0, %v8808
  %v8810 = vpop.f32.mrf.mxu0
  %v8811 = vadd.f32 0.0, %v8810
  %8812 = vmatmul.bf16.gmra.mxu0 %v1844
  %v8813 = vpop.f32.mrf.mxu0
  %v8814 = vadd.f32 0.0, %v8813
  %v8815 = vpop.f32.mrf.mxu0
  %v8816 = vadd.f32 0.0, %v8815
  %8817 = vmatmul.bf16.gmra.mxu0 %v1847
  %v8818 = vpop.f32.mrf.mxu0
  %v8819 = vadd.f32 0.0, %v8818
  %v8820 = vpop.f32.mrf.mxu0
  %v8821 = vadd.f32 0.0, %v8820
  %8822 = vmatmul.bf16.gmra.mxu0 %v1850
  %v8823 = vpop.f32.mrf.mxu0
  %v8824 = vadd.f32 0.0, %v8823
  %v8825 = vpop.f32.mrf.mxu0
  %v8826 = vadd.f32 0.0, %v8825
  %8827 = vmatmul.bf16.gmra.mxu0 %v1853
  %v8828 = vpop.f32.mrf.mxu0
  %v8829 = vadd.f32 0.0, %v8828
  %v8830 = vpop.f32.mrf.mxu0
  %v8831 = vadd.f32 0.0, %v8830
  %8832 = vmatmul.bf16.gmra.mxu0 %v1856
  %v8833 = vpop.f32.mrf.mxu0
  %v8834 = vadd.f32 0.0, %v8833
  %v8835 = vpop.f32.mrf.mxu0
  %v8836 = vadd.f32 0.0, %v8835
  %8837 = vmatmul.bf16.gmra.mxu0 %v1859
  %v8838 = vpop.f32.mrf.mxu0
  %v8839 = vadd.f32 0.0, %v8838
  %v8840 = vpop.f32.mrf.mxu0
  %v8841 = vadd.f32 0.0, %v8840
  %8842 = vmatmul.bf16.gmra.mxu0 %v1862
  %v8843 = vpop.f32.mrf.mxu0
  %v8844 = vadd.f32 0.0, %v8843
  %v8845 = vpop.f32.mrf.mxu0
  %v8846 = vadd.f32 0.0, %v8845
  %8847 = vmatmul.bf16.gmra.mxu0 %v1865
  %v8848 = vpop.f32.mrf.mxu0
  %v8849 = vadd.f32 0.0, %v8848
  %v8850 = vpop.f32.mrf.mxu0
  %v8851 = vadd.f32 0.0, %v8850
  %8852 = vmatmul.bf16.gmra.mxu0 %v1868
  %v8853 = vpop.f32.mrf.mxu0
  %v8854 = vadd.f32 0.0, %v8853
  %v8855 = vpop.f32.mrf.mxu0
  %v8856 = vadd.f32 0.0, %v8855
  %8857 = vmatmul.bf16.gmra.mxu0 %v1871
  %v8858 = vpop.f32.mrf.mxu0
  %v8859 = vadd.f32 0.0, %v8858
  %v8860 = vpop.f32.mrf.mxu0
  %v8861 = vadd.f32 0.0, %v8860
  %8862 = vmatmul.bf16.gmra.mxu0 %v1874
  %v8863 = vpop.f32.mrf.mxu0
  %v8864 = vadd.f32 0.0, %v8863
  %v8865 = vpop.f32.mrf.mxu0
  %v8866 = vadd.f32 0.0, %v8865
  %8867 = vmatmul.bf16.gmra.mxu0 %v1877
  %v8868 = vpop.f32.mrf.mxu0
  %v8869 = vadd.f32 0.0, %v8868
  %v8870 = vpop.f32.mrf.mxu0
  %v8871 = vadd.f32 0.0, %v8870
  %8872 = vmatmul.bf16.gmra.mxu0 %v1880
  %v8873 = vpop.f32.mrf.mxu0
  %v8874 = vadd.f32 0.0, %v8873
  %v8875 = vpop.f32.mrf.mxu0
  %v8876 = vadd.f32 0.0, %v8875
  %8877 = vdwg.mxu0
  %v8882 = vrot.slane %v7955, 7
  %v8883 = vrot.slane %v8189, 6
  %v8884 = vrot.slane %v8423, 5
  %v8885 = vsel %vm1454, %v7721, %v8882
  %vm8886 = vcmask 1042434
  %v8887 = vsel %vm8886, %v8883, %v8884
  %v8888 = vsel %vm1455, %v8885, %v8887
  %v8889 = vsel %vm3957, %v7721, %v8882
  %vm8890 = vcmask 1043459
  %v8891 = vsel %vm8890, %v8883, %v8884
  %vm8892 = vcmask 1042433
  %v8893 = vsel %vm8892, %v8889, %v8891
  %v8894 = vrot.slane %v8893, 1
  %v8895 = vperm.slane %v8888, 0
  %v8896 = vperm.slane %v8888, 1
  %v8897 = vperm.slane %v8888, 2
  %v8898 = vperm.slane %v8888, 3
  %v8899 = vperm.slane %v8894, 0
  %v8900 = vperm.slane %v8894, 1
  %v8901 = vperm.slane %v8894, 2
  %v8902 = vperm.slane %v8894, 3
  %v8911 = vadd.f32 %v8532, %v8895
  %v8912 = vadd.f32 %v8621, %v8896
  %v8913 = vadd.f32 %v8710, %v8897
  %v8914 = vadd.f32 %v8799, %v8898
  %v8915 = vadd.f32 %v8534, %v8895
  %v8916 = vadd.f32 %v8623, %v8896
  %v8917 = vadd.f32 %v8712, %v8897
  %v8918 = vadd.f32 %v8801, %v8898
  %v8919 = vadd.f32 %v8537, %v8895
  %v8920 = vadd.f32 %v8626, %v8896
  %v8921 = vadd.f32 %v8715, %v8897
  %v8922 = vadd.f32 %v8804, %v8898
  %v8923 = vadd.f32 %v8539, %v8895
  %v8924 = vadd.f32 %v8628, %v8896
  %v8925 = vadd.f32 %v8717, %v8897
  %v8926 = vadd.f32 %v8806, %v8898
  %v8927 = vadd.f32 %v8542, %v8895
  %v8928 = vadd.f32 %v8631, %v8896
  %v8929 = vadd.f32 %v8720, %v8897
  %v8930 = vadd.f32 %v8809, %v8898
  %v8931 = vadd.f32 %v8544, %v8895
  %v8932 = vadd.f32 %v8633, %v8896
  %v8933 = vadd.f32 %v8722, %v8897
  %v8934 = vadd.f32 %v8811, %v8898
  %v8935 = vadd.f32 %v8547, %v8895
  %v8936 = vadd.f32 %v8636, %v8896
  %v8937 = vadd.f32 %v8725, %v8897
  %v8938 = vadd.f32 %v8814, %v8898
  %v8939 = vadd.f32 %v8549, %v8895
  %v8940 = vadd.f32 %v8638, %v8896
  %v8941 = vadd.f32 %v8727, %v8897
  %v8942 = vadd.f32 %v8816, %v8898
  %v8943 = vadd.f32 %v8552, %v8895
  %v8944 = vadd.f32 %v8641, %v8896
  %v8945 = vadd.f32 %v8730, %v8897
  %v8946 = vadd.f32 %v8819, %v8898
  %v8947 = vadd.f32 %v8554, %v8895
  %v8948 = vadd.f32 %v8643, %v8896
  %v8949 = vadd.f32 %v8732, %v8897
  %v8950 = vadd.f32 %v8821, %v8898
  %v8951 = vadd.f32 %v8557, %v8895
  %v8952 = vadd.f32 %v8646, %v8896
  %v8953 = vadd.f32 %v8735, %v8897
  %v8954 = vadd.f32 %v8824, %v8898
  %v8955 = vadd.f32 %v8559, %v8895
  %v8956 = vadd.f32 %v8648, %v8896
  %v8957 = vadd.f32 %v8737, %v8897
  %v8958 = vadd.f32 %v8826, %v8898
  %v8959 = vadd.f32 %v8562, %v8895
  %v8960 = vadd.f32 %v8651, %v8896
  %v8961 = vadd.f32 %v8740, %v8897
  %v8962 = vadd.f32 %v8829, %v8898
  %v8963 = vadd.f32 %v8564, %v8895
  %v8964 = vadd.f32 %v8653, %v8896
  %v8965 = vadd.f32 %v8742, %v8897
  %v8966 = vadd.f32 %v8831, %v8898
  %v8967 = vadd.f32 %v8567, %v8895
  %v8968 = vadd.f32 %v8656, %v8896
  %v8969 = vadd.f32 %v8745, %v8897
  %v8970 = vadd.f32 %v8834, %v8898
  %v8971 = vadd.f32 %v8569, %v8895
  %v8972 = vadd.f32 %v8658, %v8896
  %v8973 = vadd.f32 %v8747, %v8897
  %v8974 = vadd.f32 %v8836, %v8898
  %v8975 = vadd.f32 %v8572, %v8899
  %v8976 = vadd.f32 %v8661, %v8900
  %v8977 = vadd.f32 %v8750, %v8901
  %v8978 = vadd.f32 %v8839, %v8902
  %v8979 = vadd.f32 %v8574, %v8899
  %v8980 = vadd.f32 %v8663, %v8900
  %v8981 = vadd.f32 %v8752, %v8901
  %v8982 = vadd.f32 %v8841, %v8902
  %v8983 = vadd.f32 %v8577, %v8899
  %v8984 = vadd.f32 %v8666, %v8900
  %v8985 = vadd.f32 %v8755, %v8901
  %v8986 = vadd.f32 %v8844, %v8902
  %v8987 = vadd.f32 %v8579, %v8899
  %v8988 = vadd.f32 %v8668, %v8900
  %v8989 = vadd.f32 %v8757, %v8901
  %v8990 = vadd.f32 %v8846, %v8902
  %v8991 = vadd.f32 %v8582, %v8899
  %v8992 = vadd.f32 %v8671, %v8900
  %v8993 = vadd.f32 %v8760, %v8901
  %v8994 = vadd.f32 %v8849, %v8902
  %v8995 = vadd.f32 %v8584, %v8899
  %v8996 = vadd.f32 %v8673, %v8900
  %v8997 = vadd.f32 %v8762, %v8901
  %v8998 = vadd.f32 %v8851, %v8902
  %v8999 = vadd.f32 %v8587, %v8899
  %v9000 = vadd.f32 %v8676, %v8900
  %v9001 = vadd.f32 %v8765, %v8901
  %v9002 = vadd.f32 %v8854, %v8902
  %v9003 = vadd.f32 %v8589, %v8899
  %v9004 = vadd.f32 %v8678, %v8900
  %v9005 = vadd.f32 %v8767, %v8901
  %v9006 = vadd.f32 %v8856, %v8902
  %v9007 = vadd.f32 %v8592, %v8899
  %v9008 = vadd.f32 %v8681, %v8900
  %v9009 = vadd.f32 %v8770, %v8901
  %v9010 = vadd.f32 %v8859, %v8902
  %v9011 = vadd.f32 %v8594, %v8899
  %v9012 = vadd.f32 %v8683, %v8900
  %v9013 = vadd.f32 %v8772, %v8901
  %v9014 = vadd.f32 %v8861, %v8902
  %v9015 = vadd.f32 %v8597, %v8899
  %v9016 = vadd.f32 %v8686, %v8900
  %v9017 = vadd.f32 %v8775, %v8901
  %v9018 = vadd.f32 %v8864, %v8902
  %v9019 = vadd.f32 %v8599, %v8899
  %v9020 = vadd.f32 %v8688, %v8900
  %v9021 = vadd.f32 %v8777, %v8901
  %v9022 = vadd.f32 %v8866, %v8902
  %v9023 = vadd.f32 %v8602, %v8899
  %v9024 = vadd.f32 %v8691, %v8900
  %v9025 = vadd.f32 %v8780, %v8901
  %v9026 = vadd.f32 %v8869, %v8902
  %v9027 = vadd.f32 %v8604, %v8899
  %v9028 = vadd.f32 %v8693, %v8900
  %v9029 = vadd.f32 %v8782, %v8901
  %v9030 = vadd.f32 %v8871, %v8902
  %v9031 = vadd.f32 %v8607, %v8899
  %v9032 = vadd.f32 %v8696, %v8900
  %v9033 = vadd.f32 %v8785, %v8901
  %v9034 = vadd.f32 %v8874, %v8902
  %v9035 = vadd.f32 %v8609, %v8899
  %v9036 = vadd.f32 %v8698, %v8900
  %v9037 = vadd.f32 %v8787, %v8901
  %v9038 = vadd.f32 %v8876, %v8902
  %v9039 = vmax.f32 %v8911, 0.0
  %v9040 = vmax.f32 %v8912, 0.0
  %v9041 = vmax.f32 %v8913, 0.0
  %v9042 = vmax.f32 %v8914, 0.0
  %v9043 = vmax.f32 %v8915, 0.0
  %v9044 = vmax.f32 %v8916, 0.0
  %v9045 = vmax.f32 %v8917, 0.0
  %v9046 = vmax.f32 %v8918, 0.0
  %v9047 = vmax.f32 %v8919, 0.0
  %v9048 = vmax.f32 %v8920, 0.0
  %v9049 = vmax.f32 %v8921, 0.0
  %v9050 = vmax.f32 %v8922, 0.0
  %v9051 = vmax.f32 %v8923, 0.0
  %v9052 = vmax.f32 %v8924, 0.0
  %v9053 = vmax.f32 %v8925, 0.0
  %v9054 = vmax.f32 %v8926, 0.0
  %v9055 = vmax.f32 %v8927, 0.0
  %v9056 = vmax.f32 %v8928, 0.0
  %v9057 = vmax.f32 %v8929, 0.0
  %v9058 = vmax.f32 %v8930, 0.0
  %v9059 = vmax.f32 %v8931, 0.0
  %v9060 = vmax.f32 %v8932, 0.0
  %v9061 = vmax.f32 %v8933, 0.0
  %v9062 = vmax.f32 %v8934, 0.0
  %v9063 = vmax.f32 %v8935, 0.0
  %v9064 = vmax.f32 %v8936, 0.0
  %v9065 = vmax.f32 %v8937, 0.0
  %v9066 = vmax.f32 %v8938, 0.0
  %v9067 = vmax.f32 %v8939, 0.0
  %v9068 = vmax.f32 %v8940, 0.0
  %v9069 = vmax.f32 %v8941, 0.0
  %v9070 = vmax.f32 %v8942, 0.0
  %v9071 = vmax.f32 %v8943, 0.0
  %v9072 = vmax.f32 %v8944, 0.0
  %v9073 = vmax.f32 %v8945, 0.0
  %v9074 = vmax.f32 %v8946, 0.0
  %v9075 = vmax.f32 %v8947, 0.0
  %v9076 = vmax.f32 %v8948, 0.0
  %v9077 = vmax.f32 %v8949, 0.0
  %v9078 = vmax.f32 %v8950, 0.0
  %v9079 = vmax.f32 %v8951, 0.0
  %v9080 = vmax.f32 %v8952, 0.0
  %v9081 = vmax.f32 %v8953, 0.0
  %v9082 = vmax.f32 %v8954, 0.0
  %v9083 = vmax.f32 %v8955, 0.0
  %v9084 = vmax.f32 %v8956, 0.0
  %v9085 = vmax.f32 %v8957, 0.0
  %v9086 = vmax.f32 %v8958, 0.0
  %v9087 = vmax.f32 %v8959, 0.0
  %v9088 = vmax.f32 %v8960, 0.0
  %v9089 = vmax.f32 %v8961, 0.0
  %v9090 = vmax.f32 %v8962, 0.0
  %v9091 = vmax.f32 %v8963, 0.0
  %v9092 = vmax.f32 %v8964, 0.0
  %v9093 = vmax.f32 %v8965, 0.0
  %v9094 = vmax.f32 %v8966, 0.0
  %v9095 = vmax.f32 %v8967, 0.0
  %v9096 = vmax.f32 %v8968, 0.0
  %v9097 = vmax.f32 %v8969, 0.0
  %v9098 = vmax.f32 %v8970, 0.0
  %v9099 = vmax.f32 %v8971, 0.0
  %v9100 = vmax.f32 %v8972, 0.0
  %v9101 = vmax.f32 %v8973, 0.0
  %v9102 = vmax.f32 %v8974, 0.0
  %v9103 = vmax.f32 %v8975, 0.0
  %v9104 = vmax.f32 %v8976, 0.0
  %v9105 = vmax.f32 %v8977, 0.0
  %v9106 = vmax.f32 %v8978, 0.0
  %v9107 = vmax.f32 %v8979, 0.0
  %v9108 = vmax.f32 %v8980, 0.0
  %v9109 = vmax.f32 %v8981, 0.0
  %v9110 = vmax.f32 %v8982, 0.0
  %v9111 = vmax.f32 %v8983, 0.0
  %v9112 = vmax.f32 %v8984, 0.0
  %v9113 = vmax.f32 %v8985, 0.0
  %v9114 = vmax.f32 %v8986, 0.0
  %v9115 = vmax.f32 %v8987, 0.0
  %v9116 = vmax.f32 %v8988, 0.0
  %v9117 = vmax.f32 %v8989, 0.0
  %v9118 = vmax.f32 %v8990, 0.0
  %v9119 = vmax.f32 %v8991, 0.0
  %v9120 = vmax.f32 %v8992, 0.0
  %v9121 = vmax.f32 %v8993, 0.0
  %v9122 = vmax.f32 %v8994, 0.0
  %v9123 = vmax.f32 %v8995, 0.0
  %v9124 = vmax.f32 %v8996, 0.0
  %v9125 = vmax.f32 %v8997, 0.0
  %v9126 = vmax.f32 %v8998, 0.0
  %v9127 = vmax.f32 %v8999, 0.0
  %v9128 = vmax.f32 %v9000, 0.0
  %v9129 = vmax.f32 %v9001, 0.0
  %v9130 = vmax.f32 %v9002, 0.0
  %v9131 = vmax.f32 %v9003, 0.0
  %v9132 = vmax.f32 %v9004, 0.0
  %v9133 = vmax.f32 %v9005, 0.0
  %v9134 = vmax.f32 %v9006, 0.0
  %v9135 = vmax.f32 %v9007, 0.0
  %v9136 = vmax.f32 %v9008, 0.0
  %v9137 = vmax.f32 %v9009, 0.0
  %v9138 = vmax.f32 %v9010, 0.0
  %v9139 = vmax.f32 %v9011, 0.0
  %v9140 = vmax.f32 %v9012, 0.0
  %v9141 = vmax.f32 %v9013, 0.0
  %v9142 = vmax.f32 %v9014, 0.0
  %v9143 = vmax.f32 %v9015, 0.0
  %v9144 = vmax.f32 %v9016, 0.0
  %v9145 = vmax.f32 %v9017, 0.0
  %v9146 = vmax.f32 %v9018, 0.0
  %v9147 = vmax.f32 %v9019, 0.0
  %v9148 = vmax.f32 %v9020, 0.0
  %v9149 = vmax.f32 %v9021, 0.0
  %v9150 = vmax.f32 %v9022, 0.0
  %v9151 = vmax.f32 %v9023, 0.0
  %v9152 = vmax.f32 %v9024, 0.0
  %v9153 = vmax.f32 %v9025, 0.0
  %v9154 = vmax.f32 %v9026, 0.0
  %v9155 = vmax.f32 %v9027, 0.0
  %v9156 = vmax.f32 %v9028, 0.0
  %v9157 = vmax.f32 %v9029, 0.0
  %v9158 = vmax.f32 %v9030, 0.0
  %v9159 = vmax.f32 %v9031, 0.0
  %v9160 = vmax.f32 %v9032, 0.0
  %v9161 = vmax.f32 %v9033, 0.0
  %v9162 = vmax.f32 %v9034, 0.0
  %v9163 = vmax.f32 %v9035, 0.0
  %v9164 = vmax.f32 %v9036, 0.0
  %v9165 = vmax.f32 %v9037, 0.0
  %v9166 = vmax.f32 %v9038, 0.0
  %s9167 = smul.u32 4, 64
  %s9168 = smul.u32 %s9167, 2
  %s9169 = sshll.u32 %s9168, 4
  %9170 = dma.done %s1200, %s9169
  %v9171 = vld [vmem:[#allocation3] sm:$0xff]
  %v9172 = vld [vmem:[#allocation3 + $0x8] sm:$0xff]
  %v9173 = vld [vmem:[#allocation3 + $0x10] sm:$0xff]
  %v9174 = vld [vmem:[#allocation3 + $0x18] sm:$0xff]
  %v9175 = vld [vmem:[#allocation3 + $0x20] sm:$0xff]
  %v9176 = vld [vmem:[#allocation3 + $0x28] sm:$0xff]
  %v9177 = vld [vmem:[#allocation3 + $0x30] sm:$0xff]
  %v9178 = vld [vmem:[#allocation3 + $0x38] sm:$0xff]
  %v9179 = vld [vmem:[#allocation3 + $0x40] sm:$0xff]
  %v9180 = vld [vmem:[#allocation3 + $0x48] sm:$0xff]
  %v9181 = vld [vmem:[#allocation3 + $0x50] sm:$0xff]
  %v9182 = vld [vmem:[#allocation3 + $0x58] sm:$0xff]
  %v9183 = vld [vmem:[#allocation3 + $0x60] sm:$0xff]
  %v9184 = vld [vmem:[#allocation3 + $0x68] sm:$0xff]
  %v9185 = vld [vmem:[#allocation3 + $0x70] sm:$0xff]
  %v9186 = vld [vmem:[#allocation3 + $0x78] sm:$0xff]
  %v9187 = vld [vmem:[#allocation3 + $0x80] sm:$0xff]
  %v9188 = vld [vmem:[#allocation3 + $0x88] sm:$0xff]
  %v9189 = vld [vmem:[#allocation3 + $0x90] sm:$0xff]
  %v9190 = vld [vmem:[#allocation3 + $0x98] sm:$0xff]
  %v9191 = vld [vmem:[#allocation3 + $0xa0] sm:$0xff]
  %v9192 = vld [vmem:[#allocation3 + $0xa8] sm:$0xff]
  %v9193 = vld [vmem:[#allocation3 + $0xb0] sm:$0xff]
  %v9194 = vld [vmem:[#allocation3 + $0xb8] sm:$0xff]
  %v9195 = vld [vmem:[#allocation3 + $0xc0] sm:$0xff]
  %v9196 = vld [vmem:[#allocation3 + $0xc8] sm:$0xff]
  %v9197 = vld [vmem:[#allocation3 + $0xd0] sm:$0xff]
  %v9198 = vld [vmem:[#allocation3 + $0xd8] sm:$0xff]
  %v9199 = vld [vmem:[#allocation3 + $0xe0] sm:$0xff]
  %v9200 = vld [vmem:[#allocation3 + $0xe8] sm:$0xff]
  %v9201 = vld [vmem:[#allocation3 + $0xf0] sm:$0xff]
  %v9202 = vld [vmem:[#allocation3 + $0xf8] sm:$0xff]
  %v9203 = vld [vmem:[#allocation3 + $0x100] sm:$0xff]
  %v9204 = vld [vmem:[#allocation3 + $0x108] sm:$0xff]
  %v9205 = vld [vmem:[#allocation3 + $0x110] sm:$0xff]
  %v9206 = vld [vmem:[#allocation3 + $0x118] sm:$0xff]
  %v9207 = vld [vmem:[#allocation3 + $0x120] sm:$0xff]
  %v9208 = vld [vmem:[#allocation3 + $0x128] sm:$0xff]
  %v9209 = vld [vmem:[#allocation3 + $0x130] sm:$0xff]
  %v9210 = vld [vmem:[#allocation3 + $0x138] sm:$0xff]
  %v9211 = vld [vmem:[#allocation3 + $0x140] sm:$0xff]
  %v9212 = vld [vmem:[#allocation3 + $0x148] sm:$0xff]
  %v9213 = vld [vmem:[#allocation3 + $0x150] sm:$0xff]
  %v9214 = vld [vmem:[#allocation3 + $0x158] sm:$0xff]
  %v9215 = vld [vmem:[#allocation3 + $0x160] sm:$0xff]
  %v9216 = vld [vmem:[#allocation3 + $0x168] sm:$0xff]
  %v9217 = vld [vmem:[#allocation3 + $0x170] sm:$0xff]
  %v9218 = vld [vmem:[#allocation3 + $0x178] sm:$0xff]
  %v9219 = vld [vmem:[#allocation3 + $0x180] sm:$0xff]
  %v9220 = vld [vmem:[#allocation3 + $0x188] sm:$0xff]
  %v9221 = vld [vmem:[#allocation3 + $0x190] sm:$0xff]
  %v9222 = vld [vmem:[#allocation3 + $0x198] sm:$0xff]
  %v9223 = vld [vmem:[#allocation3 + $0x1a0] sm:$0xff]
  %v9224 = vld [vmem:[#allocation3 + $0x1a8] sm:$0xff]
  %v9225 = vld [vmem:[#allocation3 + $0x1b0] sm:$0xff]
  %v9226 = vld [vmem:[#allocation3 + $0x1b8] sm:$0xff]
  %v9227 = vld [vmem:[#allocation3 + $0x1c0] sm:$0xff]
  %v9228 = vld [vmem:[#allocation3 + $0x1c8] sm:$0xff]
  %v9229 = vld [vmem:[#allocation3 + $0x1d0] sm:$0xff]
  %v9230 = vld [vmem:[#allocation3 + $0x1d8] sm:$0xff]
  %v9231 = vld [vmem:[#allocation3 + $0x1e0] sm:$0xff]
  %v9232 = vld [vmem:[#allocation3 + $0x1e8] sm:$0xff]
  %v9233 = vld [vmem:[#allocation3 + $0x1f0] sm:$0xff]
  %v9234 = vld [vmem:[#allocation3 + $0x1f8] sm:$0xff]
  %v9235 = vpack.c.bf16 %v9043, %v9039
  %v9236 = vpack.c.bf16 %v9044, %v9040
  %v9237 = vpack.c.bf16 %v9045, %v9041
  %v9238 = vpack.c.bf16 %v9046, %v9042
  %v9239 = vpack.c.bf16 %v9051, %v9047
  %v9240 = vpack.c.bf16 %v9052, %v9048
  %v9241 = vpack.c.bf16 %v9053, %v9049
  %v9242 = vpack.c.bf16 %v9054, %v9050
  %v9243 = vpack.c.bf16 %v9059, %v9055
  %v9244 = vpack.c.bf16 %v9060, %v9056
  %v9245 = vpack.c.bf16 %v9061, %v9057
  %v9246 = vpack.c.bf16 %v9062, %v9058
  %v9247 = vpack.c.bf16 %v9067, %v9063
  %v9248 = vpack.c.bf16 %v9068, %v9064
  %v9249 = vpack.c.bf16 %v9069, %v9065
  %v9250 = vpack.c.bf16 %v9070, %v9066
  %v9251 = vpack.c.bf16 %v9075, %v9071
  %v9252 = vpack.c.bf16 %v9076, %v9072
  %v9253 = vpack.c.bf16 %v9077, %v9073
  %v9254 = vpack.c.bf16 %v9078, %v9074
  %v9255 = vpack.c.bf16 %v9083, %v9079
  %v9256 = vpack.c.bf16 %v9084, %v9080
  %v9257 = vpack.c.bf16 %v9085, %v9081
  %v9258 = vpack.c.bf16 %v9086, %v9082
  %v9259 = vpack.c.bf16 %v9091, %v9087
  %v9260 = vpack.c.bf16 %v9092, %v9088
  %v9261 = vpack.c.bf16 %v9093, %v9089
  %v9262 = vpack.c.bf16 %v9094, %v9090
  %v9263 = vpack.c.bf16 %v9099, %v9095
  %v9264 = vpack.c.bf16 %v9100, %v9096
  %v9265 = vpack.c.bf16 %v9101, %v9097
  %v9266 = vpack.c.bf16 %v9102, %v9098
  %v9267 = vpack.c.bf16 %v9107, %v9103
  %v9268 = vpack.c.bf16 %v9108, %v9104
  %v9269 = vpack.c.bf16 %v9109, %v9105
  %v9270 = vpack.c.bf16 %v9110, %v9106
  %v9271 = vpack.c.bf16 %v9115, %v9111
  %v9272 = vpack.c.bf16 %v9116, %v9112
  %v9273 = vpack.c.bf16 %v9117, %v9113
  %v9274 = vpack.c.bf16 %v9118, %v9114
  %v9275 = vpack.c.bf16 %v9123, %v9119
  %v9276 = vpack.c.bf16 %v9124, %v9120
  %v9277 = vpack.c.bf16 %v9125, %v9121
  %v9278 = vpack.c.bf16 %v9126, %v9122
  %v9279 = vpack.c.bf16 %v9131, %v9127
  %v9280 = vpack.c.bf16 %v9132, %v9128
  %v9281 = vpack.c.bf16 %v9133, %v9129
  %v9282 = vpack.c.bf16 %v9134, %v9130
  %v9283 = vpack.c.bf16 %v9139, %v9135
  %v9284 = vpack.c.bf16 %v9140, %v9136
  %v9285 = vpack.c.bf16 %v9141, %v9137
  %v9286 = vpack.c.bf16 %v9142, %v9138
  %v9287 = vpack.c.bf16 %v9147, %v9143
  %v9288 = vpack.c.bf16 %v9148, %v9144
  %v9289 = vpack.c.bf16 %v9149, %v9145
  %v9290 = vpack.c.bf16 %v9150, %v9146
  %v9291 = vpack.c.bf16 %v9155, %v9151
  %v9292 = vpack.c.bf16 %v9156, %v9152
  %v9293 = vpack.c.bf16 %v9157, %v9153
  %v9294 = vpack.c.bf16 %v9158, %v9154
  %v9295 = vpack.c.bf16 %v9163, %v9159
  %v9296 = vpack.c.bf16 %v9164, %v9160
  %v9297 = vpack.c.bf16 %v9165, %v9161
  %v9298 = vpack.c.bf16 %v9166, %v9162
  %s9299 = scalar_lea.vmem %s9, 6
  %v9300 = vld [vmem:[%s9299] ss:$8 sm:$0x3]
  %v9302 = vperm.slane %v9300, 0
  %v9303 = vperm.slane %v9300, 1
  %v9370 = vunpack.c.l.b16 %v9171
  %v9371 = vunpack.c.h.b16 %v9171
  %v9372 = vunpack.c.l.b16 %v9172
  %v9373 = vunpack.c.h.b16 %v9172
  %v9374 = vunpack.c.l.b16 %v9173
  %v9375 = vunpack.c.h.b16 %v9173
  %v9376 = vunpack.c.l.b16 %v9174
  %v9377 = vunpack.c.h.b16 %v9174
  %v9378 = vunpack.c.l.b16 %v9175
  %v9379 = vunpack.c.h.b16 %v9175
  %v9380 = vunpack.c.l.b16 %v9176
  %v9381 = vunpack.c.h.b16 %v9176
  %v9382 = vunpack.c.l.b16 %v9177
  %v9383 = vunpack.c.h.b16 %v9177
  %v9384 = vunpack.c.l.b16 %v9178
  %v9385 = vunpack.c.h.b16 %v9178
  %v9386 = vunpack.c.l.b16 %v9179
  %v9387 = vunpack.c.h.b16 %v9179
  %v9388 = vunpack.c.l.b16 %v9180
  %v9389 = vunpack.c.h.b16 %v9180
  %v9390 = vunpack.c.l.b16 %v9181
  %v9391 = vunpack.c.h.b16 %v9181
  %v9392 = vunpack.c.l.b16 %v9182
  %v9393 = vunpack.c.h.b16 %v9182
  %v9394 = vunpack.c.l.b16 %v9183
  %v9395 = vunpack.c.h.b16 %v9183
  %v9396 = vunpack.c.l.b16 %v9184
  %v9397 = vunpack.c.h.b16 %v9184
  %v9398 = vunpack.c.l.b16 %v9185
  %v9399 = vunpack.c.h.b16 %v9185
  %v9400 = vunpack.c.l.b16 %v9186
  %v9401 = vunpack.c.h.b16 %v9186
  %v9402 = vunpack.c.l.b16 %v9187
  %v9403 = vunpack.c.h.b16 %v9187
  %v9404 = vunpack.c.l.b16 %v9188
  %v9405 = vunpack.c.h.b16 %v9188
  %v9406 = vunpack.c.l.b16 %v9189
  %v9407 = vunpack.c.h.b16 %v9189
  %v9408 = vunpack.c.l.b16 %v9190
  %v9409 = vunpack.c.h.b16 %v9190
  %v9410 = vunpack.c.l.b16 %v9191
  %v9411 = vunpack.c.h.b16 %v9191
  %v9412 = vunpack.c.l.b16 %v9192
  %v9413 = vunpack.c.h.b16 %v9192
  %v9414 = vunpack.c.l.b16 %v9193
  %v9415 = vunpack.c.h.b16 %v9193
  %v9416 = vunpack.c.l.b16 %v9194
  %v9417 = vunpack.c.h.b16 %v9194
  %v9418 = vunpack.c.l.b16 %v9195
  %v9419 = vunpack.c.h.b16 %v9195
  %v9420 = vunpack.c.l.b16 %v9196
  %v9421 = vunpack.c.h.b16 %v9196
  %v9422 = vunpack.c.l.b16 %v9197
  %v9423 = vunpack.c.h.b16 %v9197
  %v9424 = vunpack.c.l.b16 %v9198
  %v9425 = vunpack.c.h.b16 %v9198
  %v9426 = vunpack.c.l.b16 %v9199
  %v9427 = vunpack.c.h.b16 %v9199
  %v9428 = vunpack.c.l.b16 %v9200
  %v9429 = vunpack.c.h.b16 %v9200
  %v9430 = vunpack.c.l.b16 %v9201
  %v9431 = vunpack.c.h.b16 %v9201
  %v9432 = vunpack.c.l.b16 %v9202
  %v9433 = vunpack.c.h.b16 %v9202
  %v9434 = vunpack.c.l.b16 %v9203
  %v9435 = vunpack.c.h.b16 %v9203
  %v9436 = vunpack.c.l.b16 %v9204
  %v9437 = vunpack.c.h.b16 %v9204
  %v9438 = vunpack.c.l.b16 %v9205
  %v9439 = vunpack.c.h.b16 %v9205
  %v9440 = vunpack.c.l.b16 %v9206
  %v9441 = vunpack.c.h.b16 %v9206
  %v9442 = vunpack.c.l.b16 %v9207
  %v9443 = vunpack.c.h.b16 %v9207
  %v9444 = vunpack.c.l.b16 %v9208
  %v9445 = vunpack.c.h.b16 %v9208
  %v9446 = vunpack.c.l.b16 %v9209
  %v9447 = vunpack.c.h.b16 %v9209
  %v9448 = vunpack.c.l.b16 %v9210
  %v9449 = vunpack.c.h.b16 %v9210
  %v9450 = vunpack.c.l.b16 %v9211
  %v9451 = vunpack.c.h.b16 %v9211
  %v9452 = vunpack.c.l.b16 %v9212
  %v9453 = vunpack.c.h.b16 %v9212
  %v9454 = vunpack.c.l.b16 %v9213
  %v9455 = vunpack.c.h.b16 %v9213
  %v9456 = vunpack.c.l.b16 %v9214
  %v9457 = vunpack.c.h.b16 %v9214
  %v9458 = vunpack.c.l.b16 %v9215
  %v9459 = vunpack.c.h.b16 %v9215
  %v9460 = vunpack.c.l.b16 %v9216
  %v9461 = vunpack.c.h.b16 %v9216
  %v9462 = vunpack.c.l.b16 %v9217
  %v9463 = vunpack.c.h.b16 %v9217
  %v9464 = vunpack.c.l.b16 %v9218
  %v9465 = vunpack.c.h.b16 %v9218
  %v9466 = vunpack.c.l.b16 %v9219
  %v9467 = vunpack.c.h.b16 %v9219
  %v9468 = vunpack.c.l.b16 %v9220
  %v9469 = vunpack.c.h.b16 %v9220
  %v9470 = vunpack.c.l.b16 %v9221
  %v9471 = vunpack.c.h.b16 %v9221
  %v9472 = vunpack.c.l.b16 %v9222
  %v9473 = vunpack.c.h.b16 %v9222
  %v9474 = vunpack.c.l.b16 %v9223
  %v9475 = vunpack.c.h.b16 %v9223
  %v9476 = vunpack.c.l.b16 %v9224
  %v9477 = vunpack.c.h.b16 %v9224
  %v9478 = vunpack.c.l.b16 %v9225
  %v9479 = vunpack.c.h.b16 %v9225
  %v9480 = vunpack.c.l.b16 %v9226
  %v9481 = vunpack.c.h.b16 %v9226
  %v9482 = vunpack.c.l.b16 %v9227
  %v9483 = vunpack.c.h.b16 %v9227
  %v9484 = vunpack.c.l.b16 %v9228
  %v9485 = vunpack.c.h.b16 %v9228
  %v9486 = vunpack.c.l.b16 %v9229
  %v9487 = vunpack.c.h.b16 %v9229
  %v9488 = vunpack.c.l.b16 %v9230
  %v9489 = vunpack.c.h.b16 %v9230
  %v9490 = vunpack.c.l.b16 %v9231
  %v9491 = vunpack.c.h.b16 %v9231
  %v9492 = vunpack.c.l.b16 %v9232
  %v9493 = vunpack.c.h.b16 %v9232
  %v9494 = vunpack.c.l.b16 %v9233
  %v9495 = vunpack.c.h.b16 %v9233
  %v9496 = vunpack.c.l.b16 %v9234
  %v9497 = vunpack.c.h.b16 %v9234
  %v9498 = vpack.c.b16 %v9372, %v9370
  %v9499 = vpack.c.b16 %v9373, %v9371
  %v9500 = vpack.c.b16 %v9376, %v9374
  %v9501 = vpack.c.b16 %v9377, %v9375
  %v9502 = vpack.c.b16 %v9380, %v9378
  %v9503 = vpack.c.b16 %v9381, %v9379
  %v9504 = vpack.c.b16 %v9384, %v9382
  %v9505 = vpack.c.b16 %v9385, %v9383
  %v9506 = vpack.c.b16 %v9388, %v9386
  %v9507 = vpack.c.b16 %v9389, %v9387
  %v9508 = vpack.c.b16 %v9392, %v9390
  %v9509 = vpack.c.b16 %v9393, %v9391
  %v9510 = vpack.c.b16 %v9396, %v9394
  %v9511 = vpack.c.b16 %v9397, %v9395
  %v9512 = vpack.c.b16 %v9400, %v9398
  %v9513 = vpack.c.b16 %v9401, %v9399
  %v9514 = vpack.c.b16 %v9404, %v9402
  %v9515 = vpack.c.b16 %v9405, %v9403
  %v9516 = vpack.c.b16 %v9408, %v9406
  %v9517 = vpack.c.b16 %v9409, %v9407
  %v9518 = vpack.c.b16 %v9412, %v9410
  %v9519 = vpack.c.b16 %v9413, %v9411
  %v9520 = vpack.c.b16 %v9416, %v9414
  %v9521 = vpack.c.b16 %v9417, %v9415
  %v9522 = vpack.c.b16 %v9420, %v9418
  %v9523 = vpack.c.b16 %v9421, %v9419
  %v9524 = vpack.c.b16 %v9424, %v9422
  %v9525 = vpack.c.b16 %v9425, %v9423
  %v9526 = vpack.c.b16 %v9428, %v9426
  %v9527 = vpack.c.b16 %v9429, %v9427
  %v9528 = vpack.c.b16 %v9432, %v9430
  %v9529 = vpack.c.b16 %v9433, %v9431
  %v9530 = vpack.c.b16 %v9436, %v9434
  %v9531 = vpack.c.b16 %v9437, %v9435
  %v9532 = vpack.c.b16 %v9440, %v9438
  %v9533 = vpack.c.b16 %v9441, %v9439
  %v9534 = vpack.c.b16 %v9444, %v9442
  %v9535 = vpack.c.b16 %v9445, %v9443
  %v9536 = vpack.c.b16 %v9448, %v9446
  %v9537 = vpack.c.b16 %v9449, %v9447
  %v9538 = vpack.c.b16 %v9452, %v9450
  %v9539 = vpack.c.b16 %v9453, %v9451
  %v9540 = vpack.c.b16 %v9456, %v9454
  %v9541 = vpack.c.b16 %v9457, %v9455
  %v9542 = vpack.c.b16 %v9460, %v9458
  %v9543 = vpack.c.b16 %v9461, %v9459
  %v9544 = vpack.c.b16 %v9464, %v9462
  %v9545 = vpack.c.b16 %v9465, %v9463
  %v9546 = vpack.c.b16 %v9468, %v9466
  %v9547 = vpack.c.b16 %v9469, %v9467
  %v9548 = vpack.c.b16 %v9472, %v9470
  %v9549 = vpack.c.b16 %v9473, %v9471
  %v9550 = vpack.c.b16 %v9476, %v9474
  %v9551 = vpack.c.b16 %v9477, %v9475
  %v9552 = vpack.c.b16 %v9480, %v9478
  %v9553 = vpack.c.b16 %v9481, %v9479
  %v9554 = vpack.c.b16 %v9484, %v9482
  %v9555 = vpack.c.b16 %v9485, %v9483
  %v9556 = vpack.c.b16 %v9488, %v9486
  %v9557 = vpack.c.b16 %v9489, %v9487
  %v9558 = vpack.c.b16 %v9492, %v9490
  %v9559 = vpack.c.b16 %v9493, %v9491
  %v9560 = vpack.c.b16 %v9496, %v9494
  %v9561 = vpack.c.b16 %v9497, %v9495
  %9626 = vmatpush.bf16.msra.mxu0 %v9512
  %9627 = vmatpush.bf16.msra.mxu0 %v9510
  %9628 = vmatpush.bf16.msra.mxu0 %v9508
  %9629 = vmatpush.bf16.msra.mxu0 %v9506
  %9630 = vmatpush.bf16.msra.mxu0 %v9504
  %9631 = vmatpush.bf16.msra.mxu0 %v9502
  %9632 = vmatpush.bf16.msra.mxu0 %v9500
  %9633 = vmatpush.bf16.msra.mxu0 %v9498
  %9634 = vmatmul.bf16.gmra.mxu0 %v9235
  %v9635 = vpop.f32.mrf.mxu0
  %v9636 = vadd.f32 %v9302, %v9635
  %v9637 = vpop.f32.mrf.mxu0
  %v9638 = vadd.f32 %v9302, %v9637
  %9639 = vmatmul.bf16.gmra.mxu0 %v9239
  %v9640 = vpop.f32.mrf.mxu0
  %v9641 = vadd.f32 %v9302, %v9640
  %v9642 = vpop.f32.mrf.mxu0
  %v9643 = vadd.f32 %v9302, %v9642
  %9644 = vmatmul.bf16.gmra.mxu0 %v9243
  %v9645 = vpop.f32.mrf.mxu0
  %v9646 = vadd.f32 %v9302, %v9645
  %v9647 = vpop.f32.mrf.mxu0
  %v9648 = vadd.f32 %v9302, %v9647
  %9649 = vmatmul.bf16.gmra.mxu0 %v9247
  %v9650 = vpop.f32.mrf.mxu0
  %v9651 = vadd.f32 %v9302, %v9650
  %v9652 = vpop.f32.mrf.mxu0
  %v9653 = vadd.f32 %v9302, %v9652
  %9654 = vmatmul.bf16.gmra.mxu0 %v9251
  %v9655 = vpop.f32.mrf.mxu0
  %v9656 = vadd.f32 %v9302, %v9655
  %v9657 = vpop.f32.mrf.mxu0
  %v9658 = vadd.f32 %v9302, %v9657
  %9659 = vmatmul.bf16.gmra.mxu0 %v9255
  %v9660 = vpop.f32.mrf.mxu0
  %v9661 = vadd.f32 %v9302, %v9660
  %v9662 = vpop.f32.mrf.mxu0
  %v9663 = vadd.f32 %v9302, %v9662
  %9664 = vmatmul.bf16.gmra.mxu0 %v9259
  %v9665 = vpop.f32.mrf.mxu0
  %v9666 = vadd.f32 %v9302, %v9665
  %v9667 = vpop.f32.mrf.mxu0
  %v9668 = vadd.f32 %v9302, %v9667
  %9669 = vmatmul.bf16.gmra.mxu0 %v9263
  %v9670 = vpop.f32.mrf.mxu0
  %v9671 = vadd.f32 %v9302, %v9670
  %v9672 = vpop.f32.mrf.mxu0
  %v9673 = vadd.f32 %v9302, %v9672
  %9674 = vmatmul.bf16.gmra.mxu0 %v9267
  %v9675 = vpop.f32.mrf.mxu0
  %v9676 = vadd.f32 %v9302, %v9675
  %v9677 = vpop.f32.mrf.mxu0
  %v9678 = vadd.f32 %v9302, %v9677
  %9679 = vmatmul.bf16.gmra.mxu0 %v9271
  %v9680 = vpop.f32.mrf.mxu0
  %v9681 = vadd.f32 %v9302, %v9680
  %v9682 = vpop.f32.mrf.mxu0
  %v9683 = vadd.f32 %v9302, %v9682
  %9684 = vmatmul.bf16.gmra.mxu0 %v9275
  %v9685 = vpop.f32.mrf.mxu0
  %v9686 = vadd.f32 %v9302, %v9685
  %v9687 = vpop.f32.mrf.mxu0
  %v9688 = vadd.f32 %v9302, %v9687
  %9689 = vmatmul.bf16.gmra.mxu0 %v9279
  %v9690 = vpop.f32.mrf.mxu0
  %v9691 = vadd.f32 %v9302, %v9690
  %v9692 = vpop.f32.mrf.mxu0
  %v9693 = vadd.f32 %v9302, %v9692
  %9694 = vmatmul.bf16.gmra.mxu0 %v9283
  %v9695 = vpop.f32.mrf.mxu0
  %v9696 = vadd.f32 %v9302, %v9695
  %v9697 = vpop.f32.mrf.mxu0
  %v9698 = vadd.f32 %v9302, %v9697
  %9699 = vmatmul.bf16.gmra.mxu0 %v9287
  %v9700 = vpop.f32.mrf.mxu0
  %v9701 = vadd.f32 %v9302, %v9700
  %v9702 = vpop.f32.mrf.mxu0
  %v9703 = vadd.f32 %v9302, %v9702
  %9704 = vmatmul.bf16.gmra.mxu0 %v9291
  %v9705 = vpop.f32.mrf.mxu0
  %v9706 = vadd.f32 %v9302, %v9705
  %v9707 = vpop.f32.mrf.mxu0
  %v9708 = vadd.f32 %v9302, %v9707
  %9709 = vmatmul.bf16.gmra.mxu0 %v9295
  %v9710 = vpop.f32.mrf.mxu0
  %v9711 = vadd.f32 %v9302, %v9710
  %v9712 = vpop.f32.mrf.mxu0
  %v9713 = vadd.f32 %v9302, %v9712
  %9714 = vdwg.mxu0
  %9715 = vmatpush.bf16.msra.mxu0 %v9528
  %9716 = vmatpush.bf16.msra.mxu0 %v9526
  %9717 = vmatpush.bf16.msra.mxu0 %v9524
  %9718 = vmatpush.bf16.msra.mxu0 %v9522
  %9719 = vmatpush.bf16.msra.mxu0 %v9520
  %9720 = vmatpush.bf16.msra.mxu0 %v9518
  %9721 = vmatpush.bf16.msra.mxu0 %v9516
  %9722 = vmatpush.bf16.msra.mxu0 %v9514
  %9723 = vmatmul.bf16.gmra.mxu0 %v9236
  %v9724 = vpop.f32.mrf.mxu0
  %v9725 = vadd.f32 %v9636, %v9724
  %v9726 = vpop.f32.mrf.mxu0
  %v9727 = vadd.f32 %v9638, %v9726
  %9728 = vmatmul.bf16.gmra.mxu0 %v9240
  %v9729 = vpop.f32.mrf.mxu0
  %v9730 = vadd.f32 %v9641, %v9729
  %v9731 = vpop.f32.mrf.mxu0
  %v9732 = vadd.f32 %v9643, %v9731
  %9733 = vmatmul.bf16.gmra.mxu0 %v9244
  %v9734 = vpop.f32.mrf.mxu0
  %v9735 = vadd.f32 %v9646, %v9734
  %v9736 = vpop.f32.mrf.mxu0
  %v9737 = vadd.f32 %v9648, %v9736
  %9738 = vmatmul.bf16.gmra.mxu0 %v9248
  %v9739 = vpop.f32.mrf.mxu0
  %v9740 = vadd.f32 %v9651, %v9739
  %v9741 = vpop.f32.mrf.mxu0
  %v9742 = vadd.f32 %v9653, %v9741
  %9743 = vmatmul.bf16.gmra.mxu0 %v9252
  %v9744 = vpop.f32.mrf.mxu0
  %v9745 = vadd.f32 %v9656, %v9744
  %v9746 = vpop.f32.mrf.mxu0
  %v9747 = vadd.f32 %v9658, %v9746
  %9748 = vmatmul.bf16.gmra.mxu0 %v9256
  %v9749 = vpop.f32.mrf.mxu0
  %v9750 = vadd.f32 %v9661, %v9749
  %v9751 = vpop.f32.mrf.mxu0
  %v9752 = vadd.f32 %v9663, %v9751
  %9753 = vmatmul.bf16.gmra.mxu0 %v9260
  %v9754 = vpop.f32.mrf.mxu0
  %v9755 = vadd.f32 %v9666, %v9754
  %v9756 = vpop.f32.mrf.mxu0
  %v9757 = vadd.f32 %v9668, %v9756
  %9758 = vmatmul.bf16.gmra.mxu0 %v9264
  %v9759 = vpop.f32.mrf.mxu0
  %v9760 = vadd.f32 %v9671, %v9759
  %v9761 = vpop.f32.mrf.mxu0
  %v9762 = vadd.f32 %v9673, %v9761
  %9763 = vmatmul.bf16.gmra.mxu0 %v9268
  %v9764 = vpop.f32.mrf.mxu0
  %v9765 = vadd.f32 %v9676, %v9764
  %v9766 = vpop.f32.mrf.mxu0
  %v9767 = vadd.f32 %v9678, %v9766
  %9768 = vmatmul.bf16.gmra.mxu0 %v9272
  %v9769 = vpop.f32.mrf.mxu0
  %v9770 = vadd.f32 %v9681, %v9769
  %v9771 = vpop.f32.mrf.mxu0
  %v9772 = vadd.f32 %v9683, %v9771
  %9773 = vmatmul.bf16.gmra.mxu0 %v9276
  %v9774 = vpop.f32.mrf.mxu0
  %v9775 = vadd.f32 %v9686, %v9774
  %v9776 = vpop.f32.mrf.mxu0
  %v9777 = vadd.f32 %v9688, %v9776
  %9778 = vmatmul.bf16.gmra.mxu0 %v9280
  %v9779 = vpop.f32.mrf.mxu0
  %v9780 = vadd.f32 %v9691, %v9779
  %v9781 = vpop.f32.mrf.mxu0
  %v9782 = vadd.f32 %v9693, %v9781
  %9783 = vmatmul.bf16.gmra.mxu0 %v9284
  %v9784 = vpop.f32.mrf.mxu0
  %v9785 = vadd.f32 %v9696, %v9784
  %v9786 = vpop.f32.mrf.mxu0
  %v9787 = vadd.f32 %v9698, %v9786
  %9788 = vmatmul.bf16.gmra.mxu0 %v9288
  %v9789 = vpop.f32.mrf.mxu0
  %v9790 = vadd.f32 %v9701, %v9789
  %v9791 = vpop.f32.mrf.mxu0
  %v9792 = vadd.f32 %v9703, %v9791
  %9793 = vmatmul.bf16.gmra.mxu0 %v9292
  %v9794 = vpop.f32.mrf.mxu0
  %v9795 = vadd.f32 %v9706, %v9794
  %v9796 = vpop.f32.mrf.mxu0
  %v9797 = vadd.f32 %v9708, %v9796
  %9798 = vmatmul.bf16.gmra.mxu0 %v9296
  %v9799 = vpop.f32.mrf.mxu0
  %v9800 = vadd.f32 %v9711, %v9799
  %v9801 = vpop.f32.mrf.mxu0
  %v9802 = vadd.f32 %v9713, %v9801
  %9803 = vdwg.mxu0
  %9804 = vmatpush.bf16.msra.mxu0 %v9544
  %9805 = vmatpush.bf16.msra.mxu0 %v9542
  %9806 = vmatpush.bf16.msra.mxu0 %v9540
  %9807 = vmatpush.bf16.msra.mxu0 %v9538
  %9808 = vmatpush.bf16.msra.mxu0 %v9536
  %9809 = vmatpush.bf16.msra.mxu0 %v9534
  %9810 = vmatpush.bf16.msra.mxu0 %v9532
  %9811 = vmatpush.bf16.msra.mxu0 %v9530
  %9812 = vmatmul.bf16.gmra.mxu0 %v9237
  %v9813 = vpop.f32.mrf.mxu0
  %v9814 = vadd.f32 %v9725, %v9813
  %v9815 = vpop.f32.mrf.mxu0
  %v9816 = vadd.f32 %v9727, %v9815
  %9817 = vmatmul.bf16.gmra.mxu0 %v9241
  %v9818 = vpop.f32.mrf.mxu0
  %v9819 = vadd.f32 %v9730, %v9818
  %v9820 = vpop.f32.mrf.mxu0
  %v9821 = vadd.f32 %v9732, %v9820
  %9822 = vmatmul.bf16.gmra.mxu0 %v9245
  %v9823 = vpop.f32.mrf.mxu0
  %v9824 = vadd.f32 %v9735, %v9823
  %v9825 = vpop.f32.mrf.mxu0
  %v9826 = vadd.f32 %v9737, %v9825
  %9827 = vmatmul.bf16.gmra.mxu0 %v9249
  %v9828 = vpop.f32.mrf.mxu0
  %v9829 = vadd.f32 %v9740, %v9828
  %v9830 = vpop.f32.mrf.mxu0
  %v9831 = vadd.f32 %v9742, %v9830
  %9832 = vmatmul.bf16.gmra.mxu0 %v9253
  %v9833 = vpop.f32.mrf.mxu0
  %v9834 = vadd.f32 %v9745, %v9833
  %v9835 = vpop.f32.mrf.mxu0
  %v9836 = vadd.f32 %v9747, %v9835
  %9837 = vmatmul.bf16.gmra.mxu0 %v9257
  %v9838 = vpop.f32.mrf.mxu0
  %v9839 = vadd.f32 %v9750, %v9838
  %v9840 = vpop.f32.mrf.mxu0
  %v9841 = vadd.f32 %v9752, %v9840
  %9842 = vmatmul.bf16.gmra.mxu0 %v9261
  %v9843 = vpop.f32.mrf.mxu0
  %v9844 = vadd.f32 %v9755, %v9843
  %v9845 = vpop.f32.mrf.mxu0
  %v9846 = vadd.f32 %v9757, %v9845
  %9847 = vmatmul.bf16.gmra.mxu0 %v9265
  %v9848 = vpop.f32.mrf.mxu0
  %v9849 = vadd.f32 %v9760, %v9848
  %v9850 = vpop.f32.mrf.mxu0
  %v9851 = vadd.f32 %v9762, %v9850
  %9852 = vmatmul.bf16.gmra.mxu0 %v9269
  %v9853 = vpop.f32.mrf.mxu0
  %v9854 = vadd.f32 %v9765, %v9853
  %v9855 = vpop.f32.mrf.mxu0
  %v9856 = vadd.f32 %v9767, %v9855
  %9857 = vmatmul.bf16.gmra.mxu0 %v9273
  %v9858 = vpop.f32.mrf.mxu0
  %v9859 = vadd.f32 %v9770, %v9858
  %v9860 = vpop.f32.mrf.mxu0
  %v9861 = vadd.f32 %v9772, %v9860
  %9862 = vmatmul.bf16.gmra.mxu0 %v9277
  %v9863 = vpop.f32.mrf.mxu0
  %v9864 = vadd.f32 %v9775, %v9863
  %v9865 = vpop.f32.mrf.mxu0
  %v9866 = vadd.f32 %v9777, %v9865
  %9867 = vmatmul.bf16.gmra.mxu0 %v9281
  %v9868 = vpop.f32.mrf.mxu0
  %v9869 = vadd.f32 %v9780, %v9868
  %v9870 = vpop.f32.mrf.mxu0
  %v9871 = vadd.f32 %v9782, %v9870
  %9872 = vmatmul.bf16.gmra.mxu0 %v9285
  %v9873 = vpop.f32.mrf.mxu0
  %v9874 = vadd.f32 %v9785, %v9873
  %v9875 = vpop.f32.mrf.mxu0
  %v9876 = vadd.f32 %v9787, %v9875
  %9877 = vmatmul.bf16.gmra.mxu0 %v9289
  %v9878 = vpop.f32.mrf.mxu0
  %v9879 = vadd.f32 %v9790, %v9878
  %v9880 = vpop.f32.mrf.mxu0
  %v9881 = vadd.f32 %v9792, %v9880
  %9882 = vmatmul.bf16.gmra.mxu0 %v9293
  %v9883 = vpop.f32.mrf.mxu0
  %v9884 = vadd.f32 %v9795, %v9883
  %v9885 = vpop.f32.mrf.mxu0
  %v9886 = vadd.f32 %v9797, %v9885
  %9887 = vmatmul.bf16.gmra.mxu0 %v9297
  %v9888 = vpop.f32.mrf.mxu0
  %v9889 = vadd.f32 %v9800, %v9888
  %v9890 = vpop.f32.mrf.mxu0
  %v9891 = vadd.f32 %v9802, %v9890
  %9892 = vdwg.mxu0
  %9893 = vmatpush.bf16.msra.mxu0 %v9560
  %9894 = vmatpush.bf16.msra.mxu0 %v9558
  %9895 = vmatpush.bf16.msra.mxu0 %v9556
  %9896 = vmatpush.bf16.msra.mxu0 %v9554
  %9897 = vmatpush.bf16.msra.mxu0 %v9552
  %9898 = vmatpush.bf16.msra.mxu0 %v9550
  %9899 = vmatpush.bf16.msra.mxu0 %v9548
  %9900 = vmatpush.bf16.msra.mxu0 %v9546
  %9901 = vmatmul.bf16.gmra.mxu0 %v9238
  %v9902 = vpop.f32.mrf.mxu0
  %v9903 = vadd.f32 %v9814, %v9902
  %v9904 = vpop.f32.mrf.mxu0
  %v9905 = vadd.f32 %v9816, %v9904
  %9906 = vmatmul.bf16.gmra.mxu0 %v9242
  %v9907 = vpop.f32.mrf.mxu0
  %v9908 = vadd.f32 %v9819, %v9907
  %v9909 = vpop.f32.mrf.mxu0
  %v9910 = vadd.f32 %v9821, %v9909
  %9911 = vmatmul.bf16.gmra.mxu0 %v9246
  %v9912 = vpop.f32.mrf.mxu0
  %v9913 = vadd.f32 %v9824, %v9912
  %v9914 = vpop.f32.mrf.mxu0
  %v9915 = vadd.f32 %v9826, %v9914
  %9916 = vmatmul.bf16.gmra.mxu0 %v9250
  %v9917 = vpop.f32.mrf.mxu0
  %v9918 = vadd.f32 %v9829, %v9917
  %v9919 = vpop.f32.mrf.mxu0
  %v9920 = vadd.f32 %v9831, %v9919
  %9921 = vmatmul.bf16.gmra.mxu0 %v9254
  %v9922 = vpop.f32.mrf.mxu0
  %v9923 = vadd.f32 %v9834, %v9922
  %v9924 = vpop.f32.mrf.mxu0
  %v9925 = vadd.f32 %v9836, %v9924
  %9926 = vmatmul.bf16.gmra.mxu0 %v9258
  %v9927 = vpop.f32.mrf.mxu0
  %v9928 = vadd.f32 %v9839, %v9927
  %v9929 = vpop.f32.mrf.mxu0
  %v9930 = vadd.f32 %v9841, %v9929
  %9931 = vmatmul.bf16.gmra.mxu0 %v9262
  %v9932 = vpop.f32.mrf.mxu0
  %v9933 = vadd.f32 %v9844, %v9932
  %v9934 = vpop.f32.mrf.mxu0
  %v9935 = vadd.f32 %v9846, %v9934
  %9936 = vmatmul.bf16.gmra.mxu0 %v9266
  %v9937 = vpop.f32.mrf.mxu0
  %v9938 = vadd.f32 %v9849, %v9937
  %v9939 = vpop.f32.mrf.mxu0
  %v9940 = vadd.f32 %v9851, %v9939
  %9941 = vmatmul.bf16.gmra.mxu0 %v9270
  %v9942 = vpop.f32.mrf.mxu0
  %v9943 = vadd.f32 %v9854, %v9942
  %v9944 = vpop.f32.mrf.mxu0
  %v9945 = vadd.f32 %v9856, %v9944
  %9946 = vmatmul.bf16.gmra.mxu0 %v9274
  %v9947 = vpop.f32.mrf.mxu0
  %v9948 = vadd.f32 %v9859, %v9947
  %v9949 = vpop.f32.mrf.mxu0
  %v9950 = vadd.f32 %v9861, %v9949
  %9951 = vmatmul.bf16.gmra.mxu0 %v9278
  %v9952 = vpop.f32.mrf.mxu0
  %v9953 = vadd.f32 %v9864, %v9952
  %v9954 = vpop.f32.mrf.mxu0
  %v9955 = vadd.f32 %v9866, %v9954
  %9956 = vmatmul.bf16.gmra.mxu0 %v9282
  %v9957 = vpop.f32.mrf.mxu0
  %v9958 = vadd.f32 %v9869, %v9957
  %v9959 = vpop.f32.mrf.mxu0
  %v9960 = vadd.f32 %v9871, %v9959
  %9961 = vmatmul.bf16.gmra.mxu0 %v9286
  %v9962 = vpop.f32.mrf.mxu0
  %v9963 = vadd.f32 %v9874, %v9962
  %v9964 = vpop.f32.mrf.mxu0
  %v9965 = vadd.f32 %v9876, %v9964
  %9966 = vmatmul.bf16.gmra.mxu0 %v9290
  %v9967 = vpop.f32.mrf.mxu0
  %v9968 = vadd.f32 %v9879, %v9967
  %v9969 = vpop.f32.mrf.mxu0
  %v9970 = vadd.f32 %v9881, %v9969
  %9971 = vmatmul.bf16.gmra.mxu0 %v9294
  %v9972 = vpop.f32.mrf.mxu0
  %v9973 = vadd.f32 %v9884, %v9972
  %v9974 = vpop.f32.mrf.mxu0
  %v9975 = vadd.f32 %v9886, %v9974
  %9976 = vmatmul.bf16.gmra.mxu0 %v9298
  %v9977 = vpop.f32.mrf.mxu0
  %v9978 = vadd.f32 %v9889, %v9977
  %v9979 = vpop.f32.mrf.mxu0
  %v9980 = vadd.f32 %v9891, %v9979
  %9981 = vdwg.mxu0
  %9982 = vmatpush.bf16.msra.mxu0 %v9513
  %9983 = vmatpush.bf16.msra.mxu0 %v9511
  %9984 = vmatpush.bf16.msra.mxu0 %v9509
  %9985 = vmatpush.bf16.msra.mxu0 %v9507
  %9986 = vmatpush.bf16.msra.mxu0 %v9505
  %9987 = vmatpush.bf16.msra.mxu0 %v9503
  %9988 = vmatpush.bf16.msra.mxu0 %v9501
  %9989 = vmatpush.bf16.msra.mxu0 %v9499
  %9990 = vmatmul.bf16.gmra.mxu0 %v9235
  %v9991 = vpop.f32.mrf.mxu0
  %v9992 = vadd.f32 %v9303, %v9991
  %v9993 = vpop.f32.mrf.mxu0
  %v9994 = vadd.f32 %v9303, %v9993
  %9995 = vmatmul.bf16.gmra.mxu0 %v9239
  %v9996 = vpop.f32.mrf.mxu0
  %v9997 = vadd.f32 %v9303, %v9996
  %v9998 = vpop.f32.mrf.mxu0
  %v9999 = vadd.f32 %v9303, %v9998
  %10000 = vmatmul.bf16.gmra.mxu0 %v9243
  %v10001 = vpop.f32.mrf.mxu0
  %v10002 = vadd.f32 %v9303, %v10001
  %v10003 = vpop.f32.mrf.mxu0
  %v10004 = vadd.f32 %v9303, %v10003
  %10005 = vmatmul.bf16.gmra.mxu0 %v9247
  %v10006 = vpop.f32.mrf.mxu0
  %v10007 = vadd.f32 %v9303, %v10006
  %v10008 = vpop.f32.mrf.mxu0
  %v10009 = vadd.f32 %v9303, %v10008
  %10010 = vmatmul.bf16.gmra.mxu0 %v9251
  %v10011 = vpop.f32.mrf.mxu0
  %v10012 = vadd.f32 %v9303, %v10011
  %v10013 = vpop.f32.mrf.mxu0
  %v10014 = vadd.f32 %v9303, %v10013
  %10015 = vmatmul.bf16.gmra.mxu0 %v9255
  %v10016 = vpop.f32.mrf.mxu0
  %v10017 = vadd.f32 %v9303, %v10016
  %v10018 = vpop.f32.mrf.mxu0
  %v10019 = vadd.f32 %v9303, %v10018
  %10020 = vmatmul.bf16.gmra.mxu0 %v9259
  %v10021 = vpop.f32.mrf.mxu0
  %v10022 = vadd.f32 %v9303, %v10021
  %v10023 = vpop.f32.mrf.mxu0
  %v10024 = vadd.f32 %v9303, %v10023
  %10025 = vmatmul.bf16.gmra.mxu0 %v9263
  %v10026 = vpop.f32.mrf.mxu0
  %v10027 = vadd.f32 %v9303, %v10026
  %v10028 = vpop.f32.mrf.mxu0
  %v10029 = vadd.f32 %v9303, %v10028
  %10030 = vmatmul.bf16.gmra.mxu0 %v9267
  %v10031 = vpop.f32.mrf.mxu0
  %v10032 = vadd.f32 %v9303, %v10031
  %v10033 = vpop.f32.mrf.mxu0
  %v10034 = vadd.f32 %v9303, %v10033
  %10035 = vmatmul.bf16.gmra.mxu0 %v9271
  %v10036 = vpop.f32.mrf.mxu0
  %v10037 = vadd.f32 %v9303, %v10036
  %v10038 = vpop.f32.mrf.mxu0
  %v10039 = vadd.f32 %v9303, %v10038
  %10040 = vmatmul.bf16.gmra.mxu0 %v9275
  %v10041 = vpop.f32.mrf.mxu0
  %v10042 = vadd.f32 %v9303, %v10041
  %v10043 = vpop.f32.mrf.mxu0
  %v10044 = vadd.f32 %v9303, %v10043
  %10045 = vmatmul.bf16.gmra.mxu0 %v9279
  %v10046 = vpop.f32.mrf.mxu0
  %v10047 = vadd.f32 %v9303, %v10046
  %v10048 = vpop.f32.mrf.mxu0
  %v10049 = vadd.f32 %v9303, %v10048
  %10050 = vmatmul.bf16.gmra.mxu0 %v9283
  %v10051 = vpop.f32.mrf.mxu0
  %v10052 = vadd.f32 %v9303, %v10051
  %v10053 = vpop.f32.mrf.mxu0
  %v10054 = vadd.f32 %v9303, %v10053
  %10055 = vmatmul.bf16.gmra.mxu0 %v9287
  %v10056 = vpop.f32.mrf.mxu0
  %v10057 = vadd.f32 %v9303, %v10056
  %v10058 = vpop.f32.mrf.mxu0
  %v10059 = vadd.f32 %v9303, %v10058
  %10060 = vmatmul.bf16.gmra.mxu0 %v9291
  %v10061 = vpop.f32.mrf.mxu0
  %v10062 = vadd.f32 %v9303, %v10061
  %v10063 = vpop.f32.mrf.mxu0
  %v10064 = vadd.f32 %v9303, %v10063
  %10065 = vmatmul.bf16.gmra.mxu0 %v9295
  %v10066 = vpop.f32.mrf.mxu0
  %v10067 = vadd.f32 %v9303, %v10066
  %v10068 = vpop.f32.mrf.mxu0
  %v10069 = vadd.f32 %v9303, %v10068
  %10070 = vdwg.mxu0
  %10071 = vmatpush.bf16.msra.mxu0 %v9529
  %10072 = vmatpush.bf16.msra.mxu0 %v9527
  %10073 = vmatpush.bf16.msra.mxu0 %v9525
  %10074 = vmatpush.bf16.msra.mxu0 %v9523
  %10075 = vmatpush.bf16.msra.mxu0 %v9521
  %10076 = vmatpush.bf16.msra.mxu0 %v9519
  %10077 = vmatpush.bf16.msra.mxu0 %v9517
  %10078 = vmatpush.bf16.msra.mxu0 %v9515
  %10079 = vmatmul.bf16.gmra.mxu0 %v9236
  %v10080 = vpop.f32.mrf.mxu0
  %v10081 = vadd.f32 %v9992, %v10080
  %v10082 = vpop.f32.mrf.mxu0
  %v10083 = vadd.f32 %v9994, %v10082
  %10084 = vmatmul.bf16.gmra.mxu0 %v9240
  %v10085 = vpop.f32.mrf.mxu0
  %v10086 = vadd.f32 %v9997, %v10085
  %v10087 = vpop.f32.mrf.mxu0
  %v10088 = vadd.f32 %v9999, %v10087
  %10089 = vmatmul.bf16.gmra.mxu0 %v9244
  %v10090 = vpop.f32.mrf.mxu0
  %v10091 = vadd.f32 %v10002, %v10090
  %v10092 = vpop.f32.mrf.mxu0
  %v10093 = vadd.f32 %v10004, %v10092
  %10094 = vmatmul.bf16.gmra.mxu0 %v9248
  %v10095 = vpop.f32.mrf.mxu0
  %v10096 = vadd.f32 %v10007, %v10095
  %v10097 = vpop.f32.mrf.mxu0
  %v10098 = vadd.f32 %v10009, %v10097
  %10099 = vmatmul.bf16.gmra.mxu0 %v9252
  %v10100 = vpop.f32.mrf.mxu0
  %v10101 = vadd.f32 %v10012, %v10100
  %v10102 = vpop.f32.mrf.mxu0
  %v10103 = vadd.f32 %v10014, %v10102
  %10104 = vmatmul.bf16.gmra.mxu0 %v9256
  %v10105 = vpop.f32.mrf.mxu0
  %v10106 = vadd.f32 %v10017, %v10105
  %v10107 = vpop.f32.mrf.mxu0
  %v10108 = vadd.f32 %v10019, %v10107
  %10109 = vmatmul.bf16.gmra.mxu0 %v9260
  %v10110 = vpop.f32.mrf.mxu0
  %v10111 = vadd.f32 %v10022, %v10110
  %v10112 = vpop.f32.mrf.mxu0
  %v10113 = vadd.f32 %v10024, %v10112
  %10114 = vmatmul.bf16.gmra.mxu0 %v9264
  %v10115 = vpop.f32.mrf.mxu0
  %v10116 = vadd.f32 %v10027, %v10115
  %v10117 = vpop.f32.mrf.mxu0
  %v10118 = vadd.f32 %v10029, %v10117
  %10119 = vmatmul.bf16.gmra.mxu0 %v9268
  %v10120 = vpop.f32.mrf.mxu0
  %v10121 = vadd.f32 %v10032, %v10120
  %v10122 = vpop.f32.mrf.mxu0
  %v10123 = vadd.f32 %v10034, %v10122
  %10124 = vmatmul.bf16.gmra.mxu0 %v9272
  %v10125 = vpop.f32.mrf.mxu0
  %v10126 = vadd.f32 %v10037, %v10125
  %v10127 = vpop.f32.mrf.mxu0
  %v10128 = vadd.f32 %v10039, %v10127
  %10129 = vmatmul.bf16.gmra.mxu0 %v9276
  %v10130 = vpop.f32.mrf.mxu0
  %v10131 = vadd.f32 %v10042, %v10130
  %v10132 = vpop.f32.mrf.mxu0
  %v10133 = vadd.f32 %v10044, %v10132
  %10134 = vmatmul.bf16.gmra.mxu0 %v9280
  %v10135 = vpop.f32.mrf.mxu0
  %v10136 = vadd.f32 %v10047, %v10135
  %v10137 = vpop.f32.mrf.mxu0
  %v10138 = vadd.f32 %v10049, %v10137
  %10139 = vmatmul.bf16.gmra.mxu0 %v9284
  %v10140 = vpop.f32.mrf.mxu0
  %v10141 = vadd.f32 %v10052, %v10140
  %v10142 = vpop.f32.mrf.mxu0
  %v10143 = vadd.f32 %v10054, %v10142
  %10144 = vmatmul.bf16.gmra.mxu0 %v9288
  %v10145 = vpop.f32.mrf.mxu0
  %v10146 = vadd.f32 %v10057, %v10145
  %v10147 = vpop.f32.mrf.mxu0
  %v10148 = vadd.f32 %v10059, %v10147
  %10149 = vmatmul.bf16.gmra.mxu0 %v9292
  %v10150 = vpop.f32.mrf.mxu0
  %v10151 = vadd.f32 %v10062, %v10150
  %v10152 = vpop.f32.mrf.mxu0
  %v10153 = vadd.f32 %v10064, %v10152
  %10154 = vmatmul.bf16.gmra.mxu0 %v9296
  %v10155 = vpop.f32.mrf.mxu0
  %v10156 = vadd.f32 %v10067, %v10155
  %v10157 = vpop.f32.mrf.mxu0
  %v10158 = vadd.f32 %v10069, %v10157
  %10159 = vdwg.mxu0
  %10160 = vmatpush.bf16.msra.mxu0 %v9545
  %10161 = vmatpush.bf16.msra.mxu0 %v9543
  %10162 = vmatpush.bf16.msra.mxu0 %v9541
  %10163 = vmatpush.bf16.msra.mxu0 %v9539
  %10164 = vmatpush.bf16.msra.mxu0 %v9537
  %10165 = vmatpush.bf16.msra.mxu0 %v9535
  %10166 = vmatpush.bf16.msra.mxu0 %v9533
  %10167 = vmatpush.bf16.msra.mxu0 %v9531
  %10168 = vmatmul.bf16.gmra.mxu0 %v9237
  %v10169 = vpop.f32.mrf.mxu0
  %v10170 = vadd.f32 %v10081, %v10169
  %v10171 = vpop.f32.mrf.mxu0
  %v10172 = vadd.f32 %v10083, %v10171
  %10173 = vmatmul.bf16.gmra.mxu0 %v9241
  %v10174 = vpop.f32.mrf.mxu0
  %v10175 = vadd.f32 %v10086, %v10174
  %v10176 = vpop.f32.mrf.mxu0
  %v10177 = vadd.f32 %v10088, %v10176
  %10178 = vmatmul.bf16.gmra.mxu0 %v9245
  %v10179 = vpop.f32.mrf.mxu0
  %v10180 = vadd.f32 %v10091, %v10179
  %v10181 = vpop.f32.mrf.mxu0
  %v10182 = vadd.f32 %v10093, %v10181
  %10183 = vmatmul.bf16.gmra.mxu0 %v9249
  %v10184 = vpop.f32.mrf.mxu0
  %v10185 = vadd.f32 %v10096, %v10184
  %v10186 = vpop.f32.mrf.mxu0
  %v10187 = vadd.f32 %v10098, %v10186
  %10188 = vmatmul.bf16.gmra.mxu0 %v9253
  %v10189 = vpop.f32.mrf.mxu0
  %v10190 = vadd.f32 %v10101, %v10189
  %v10191 = vpop.f32.mrf.mxu0
  %v10192 = vadd.f32 %v10103, %v10191
  %10193 = vmatmul.bf16.gmra.mxu0 %v9257
  %v10194 = vpop.f32.mrf.mxu0
  %v10195 = vadd.f32 %v10106, %v10194
  %v10196 = vpop.f32.mrf.mxu0
  %v10197 = vadd.f32 %v10108, %v10196
  %10198 = vmatmul.bf16.gmra.mxu0 %v9261
  %v10199 = vpop.f32.mrf.mxu0
  %v10200 = vadd.f32 %v10111, %v10199
  %v10201 = vpop.f32.mrf.mxu0
  %v10202 = vadd.f32 %v10113, %v10201
  %10203 = vmatmul.bf16.gmra.mxu0 %v9265
  %v10204 = vpop.f32.mrf.mxu0
  %v10205 = vadd.f32 %v10116, %v10204
  %v10206 = vpop.f32.mrf.mxu0
  %v10207 = vadd.f32 %v10118, %v10206
  %10208 = vmatmul.bf16.gmra.mxu0 %v9269
  %v10209 = vpop.f32.mrf.mxu0
  %v10210 = vadd.f32 %v10121, %v10209
  %v10211 = vpop.f32.mrf.mxu0
  %v10212 = vadd.f32 %v10123, %v10211
  %10213 = vmatmul.bf16.gmra.mxu0 %v9273
  %v10214 = vpop.f32.mrf.mxu0
  %v10215 = vadd.f32 %v10126, %v10214
  %v10216 = vpop.f32.mrf.mxu0
  %v10217 = vadd.f32 %v10128, %v10216
  %10218 = vmatmul.bf16.gmra.mxu0 %v9277
  %v10219 = vpop.f32.mrf.mxu0
  %v10220 = vadd.f32 %v10131, %v10219
  %v10221 = vpop.f32.mrf.mxu0
  %v10222 = vadd.f32 %v10133, %v10221
  %10223 = vmatmul.bf16.gmra.mxu0 %v9281
  %v10224 = vpop.f32.mrf.mxu0
  %v10225 = vadd.f32 %v10136, %v10224
  %v10226 = vpop.f32.mrf.mxu0
  %v10227 = vadd.f32 %v10138, %v10226
  %10228 = vmatmul.bf16.gmra.mxu0 %v9285
  %v10229 = vpop.f32.mrf.mxu0
  %v10230 = vadd.f32 %v10141, %v10229
  %v10231 = vpop.f32.mrf.mxu0
  %v10232 = vadd.f32 %v10143, %v10231
  %10233 = vmatmul.bf16.gmra.mxu0 %v9289
  %v10234 = vpop.f32.mrf.mxu0
  %v10235 = vadd.f32 %v10146, %v10234
  %v10236 = vpop.f32.mrf.mxu0
  %v10237 = vadd.f32 %v10148, %v10236
  %10238 = vmatmul.bf16.gmra.mxu0 %v9293
  %v10239 = vpop.f32.mrf.mxu0
  %v10240 = vadd.f32 %v10151, %v10239
  %v10241 = vpop.f32.mrf.mxu0
  %v10242 = vadd.f32 %v10153, %v10241
  %10243 = vmatmul.bf16.gmra.mxu0 %v9297
  %v10244 = vpop.f32.mrf.mxu0
  %v10245 = vadd.f32 %v10156, %v10244
  %v10246 = vpop.f32.mrf.mxu0
  %v10247 = vadd.f32 %v10158, %v10246
  %10248 = vdwg.mxu0
  %10249 = vmatpush.bf16.msra.mxu0 %v9561
  %10250 = vmatpush.bf16.msra.mxu0 %v9559
  %10251 = vmatpush.bf16.msra.mxu0 %v9557
  %10252 = vmatpush.bf16.msra.mxu0 %v9555
  %10253 = vmatpush.bf16.msra.mxu0 %v9553
  %10254 = vmatpush.bf16.msra.mxu0 %v9551
  %10255 = vmatpush.bf16.msra.mxu0 %v9549
  %10256 = vmatpush.bf16.msra.mxu0 %v9547
  %10257 = vmatmul.bf16.gmra.mxu0 %v9238
  %v10258 = vpop.f32.mrf.mxu0
  %v10259 = vadd.f32 %v10170, %v10258
  %v10260 = vpop.f32.mrf.mxu0
  %v10261 = vadd.f32 %v10172, %v10260
  %10262 = vmatmul.bf16.gmra.mxu0 %v9242
  %v10263 = vpop.f32.mrf.mxu0
  %v10264 = vadd.f32 %v10175, %v10263
  %v10265 = vpop.f32.mrf.mxu0
  %v10266 = vadd.f32 %v10177, %v10265
  %10267 = vmatmul.bf16.gmra.mxu0 %v9246
  %v10268 = vpop.f32.mrf.mxu0
  %v10269 = vadd.f32 %v10180, %v10268
  %v10270 = vpop.f32.mrf.mxu0
  %v10271 = vadd.f32 %v10182, %v10270
  %10272 = vmatmul.bf16.gmra.mxu0 %v9250
  %v10273 = vpop.f32.mrf.mxu0
  %v10274 = vadd.f32 %v10185, %v10273
  %v10275 = vpop.f32.mrf.mxu0
  %v10276 = vadd.f32 %v10187, %v10275
  %10277 = vmatmul.bf16.gmra.mxu0 %v9254
  %v10278 = vpop.f32.mrf.mxu0
  %v10279 = vadd.f32 %v10190, %v10278
  %v10280 = vpop.f32.mrf.mxu0
  %v10281 = vadd.f32 %v10192, %v10280
  %10282 = vmatmul.bf16.gmra.mxu0 %v9258
  %v10283 = vpop.f32.mrf.mxu0
  %v10284 = vadd.f32 %v10195, %v10283
  %v10285 = vpop.f32.mrf.mxu0
  %v10286 = vadd.f32 %v10197, %v10285
  %10287 = vmatmul.bf16.gmra.mxu0 %v9262
  %v10288 = vpop.f32.mrf.mxu0
  %v10289 = vadd.f32 %v10200, %v10288
  %v10290 = vpop.f32.mrf.mxu0
  %v10291 = vadd.f32 %v10202, %v10290
  %10292 = vmatmul.bf16.gmra.mxu0 %v9266
  %v10293 = vpop.f32.mrf.mxu0
  %v10294 = vadd.f32 %v10205, %v10293
  %v10295 = vpop.f32.mrf.mxu0
  %v10296 = vadd.f32 %v10207, %v10295
  %10297 = vmatmul.bf16.gmra.mxu0 %v9270
  %v10298 = vpop.f32.mrf.mxu0
  %v10299 = vadd.f32 %v10210, %v10298
  %v10300 = vpop.f32.mrf.mxu0
  %v10301 = vadd.f32 %v10212, %v10300
  %10302 = vmatmul.bf16.gmra.mxu0 %v9274
  %v10303 = vpop.f32.mrf.mxu0
  %v10304 = vadd.f32 %v10215, %v10303
  %v10305 = vpop.f32.mrf.mxu0
  %v10306 = vadd.f32 %v10217, %v10305
  %10307 = vmatmul.bf16.gmra.mxu0 %v9278
  %v10308 = vpop.f32.mrf.mxu0
  %v10309 = vadd.f32 %v10220, %v10308
  %v10310 = vpop.f32.mrf.mxu0
  %v10311 = vadd.f32 %v10222, %v10310
  %10312 = vmatmul.bf16.gmra.mxu0 %v9282
  %v10313 = vpop.f32.mrf.mxu0
  %v10314 = vadd.f32 %v10225, %v10313
  %v10315 = vpop.f32.mrf.mxu0
  %v10316 = vadd.f32 %v10227, %v10315
  %10317 = vmatmul.bf16.gmra.mxu0 %v9286
  %v10318 = vpop.f32.mrf.mxu0
  %v10319 = vadd.f32 %v10230, %v10318
  %v10320 = vpop.f32.mrf.mxu0
  %v10321 = vadd.f32 %v10232, %v10320
  %10322 = vmatmul.bf16.gmra.mxu0 %v9290
  %v10323 = vpop.f32.mrf.mxu0
  %v10324 = vadd.f32 %v10235, %v10323
  %v10325 = vpop.f32.mrf.mxu0
  %v10326 = vadd.f32 %v10237, %v10325
  %10327 = vmatmul.bf16.gmra.mxu0 %v9294
  %v10328 = vpop.f32.mrf.mxu0
  %v10329 = vadd.f32 %v10240, %v10328
  %v10330 = vpop.f32.mrf.mxu0
  %v10331 = vadd.f32 %v10242, %v10330
  %10332 = vmatmul.bf16.gmra.mxu0 %v9298
  %v10333 = vpop.f32.mrf.mxu0
  %v10334 = vadd.f32 %v10245, %v10333
  %v10335 = vpop.f32.mrf.mxu0
  %v10336 = vadd.f32 %v10247, %v10335
  %10337 = vdwg.mxu0
  %v10338 = vmax.f32 %v9903, 0.0
  %v10339 = vmax.f32 %v10259, 0.0
  %v10340 = vmax.f32 %v9905, 0.0
  %v10341 = vmax.f32 %v10261, 0.0
  %v10342 = vmax.f32 %v9908, 0.0
  %v10343 = vmax.f32 %v10264, 0.0
  %v10344 = vmax.f32 %v9910, 0.0
  %v10345 = vmax.f32 %v10266, 0.0
  %v10346 = vmax.f32 %v9913, 0.0
  %v10347 = vmax.f32 %v10269, 0.0
  %v10348 = vmax.f32 %v9915, 0.0
  %v10349 = vmax.f32 %v10271, 0.0
  %v10350 = vmax.f32 %v9918, 0.0
  %v10351 = vmax.f32 %v10274, 0.0
  %v10352 = vmax.f32 %v9920, 0.0
  %v10353 = vmax.f32 %v10276, 0.0
  %v10354 = vmax.f32 %v9923, 0.0
  %v10355 = vmax.f32 %v10279, 0.0
  %v10356 = vmax.f32 %v9925, 0.0
  %v10357 = vmax.f32 %v10281, 0.0
  %v10358 = vmax.f32 %v9928, 0.0
  %v10359 = vmax.f32 %v10284, 0.0
  %v10360 = vmax.f32 %v9930, 0.0
  %v10361 = vmax.f32 %v10286, 0.0
  %v10362 = vmax.f32 %v9933, 0.0
  %v10363 = vmax.f32 %v10289, 0.0
  %v10364 = vmax.f32 %v9935, 0.0
  %v10365 = vmax.f32 %v10291, 0.0
  %v10366 = vmax.f32 %v9938, 0.0
  %v10367 = vmax.f32 %v10294, 0.0
  %v10368 = vmax.f32 %v9940, 0.0
  %v10369 = vmax.f32 %v10296, 0.0
  %v10370 = vmax.f32 %v9943, 0.0
  %v10371 = vmax.f32 %v10299, 0.0
  %v10372 = vmax.f32 %v9945, 0.0
  %v10373 = vmax.f32 %v10301, 0.0
  %v10374 = vmax.f32 %v9948, 0.0
  %v10375 = vmax.f32 %v10304, 0.0
  %v10376 = vmax.f32 %v9950, 0.0
  %v10377 = vmax.f32 %v10306, 0.0
  %v10378 = vmax.f32 %v9953, 0.0
  %v10379 = vmax.f32 %v10309, 0.0
  %v10380 = vmax.f32 %v9955, 0.0
  %v10381 = vmax.f32 %v10311, 0.0
  %v10382 = vmax.f32 %v9958, 0.0
  %v10383 = vmax.f32 %v10314, 0.0
  %v10384 = vmax.f32 %v9960, 0.0
  %v10385 = vmax.f32 %v10316, 0.0
  %v10386 = vmax.f32 %v9963, 0.0
  %v10387 = vmax.f32 %v10319, 0.0
  %v10388 = vmax.f32 %v9965, 0.0
  %v10389 = vmax.f32 %v10321, 0.0
  %v10390 = vmax.f32 %v9968, 0.0
  %v10391 = vmax.f32 %v10324, 0.0
  %v10392 = vmax.f32 %v9970, 0.0
  %v10393 = vmax.f32 %v10326, 0.0
  %v10394 = vmax.f32 %v9973, 0.0
  %v10395 = vmax.f32 %v10329, 0.0
  %v10396 = vmax.f32 %v9975, 0.0
  %v10397 = vmax.f32 %v10331, 0.0
  %v10398 = vmax.f32 %v9978, 0.0
  %v10399 = vmax.f32 %v10334, 0.0
  %v10400 = vmax.f32 %v9980, 0.0
  %v10401 = vmax.f32 %v10336, 0.0
  %v10402 = vld [vmem:[%s7] sm:$0xf]
  %v10403 = vld [vmem:[%s7 + $0x4] sm:$0xf]
  %v10404 = vld [vmem:[%s7 + $0x8] sm:$0xf]
  %v10405 = vld [vmem:[%s7 + $0xc] sm:$0xf]
  %v10406 = vld [vmem:[%s7 + $0x10] sm:$0xf]
  %v10407 = vld [vmem:[%s7 + $0x14] sm:$0xf]
  %v10408 = vld [vmem:[%s7 + $0x18] sm:$0xf]
  %v10409 = vld [vmem:[%s7 + $0x1c] sm:$0xf]
  %v10410 = vld [vmem:[%s7 + $0x20] sm:$0xf]
  %v10411 = vld [vmem:[%s7 + $0x24] sm:$0xf]
  %v10412 = vld [vmem:[%s7 + $0x28] sm:$0xf]
  %v10413 = vld [vmem:[%s7 + $0x2c] sm:$0xf]
  %v10414 = vld [vmem:[%s7 + $0x30] sm:$0xf]
  %v10415 = vld [vmem:[%s7 + $0x34] sm:$0xf]
  %v10416 = vld [vmem:[%s7 + $0x38] sm:$0xf]
  %v10417 = vld [vmem:[%s7 + $0x3c] sm:$0xf]
  %v10418 = vld [vmem:[%s7 + $0x40] sm:$0xf]
  %v10419 = vld [vmem:[%s7 + $0x44] sm:$0xf]
  %v10420 = vld [vmem:[%s7 + $0x48] sm:$0xf]
  %v10421 = vld [vmem:[%s7 + $0x4c] sm:$0xf]
  %v10422 = vld [vmem:[%s7 + $0x50] sm:$0xf]
  %v10423 = vld [vmem:[%s7 + $0x54] sm:$0xf]
  %v10424 = vld [vmem:[%s7 + $0x58] sm:$0xf]
  %v10425 = vld [vmem:[%s7 + $0x5c] sm:$0xf]
  %v10426 = vld [vmem:[%s7 + $0x60] sm:$0xf]
  %v10427 = vld [vmem:[%s7 + $0x64] sm:$0xf]
  %v10428 = vld [vmem:[%s7 + $0x68] sm:$0xf]
  %v10429 = vld [vmem:[%s7 + $0x6c] sm:$0xf]
  %v10430 = vld [vmem:[%s7 + $0x70] sm:$0xf]
  %v10431 = vld [vmem:[%s7 + $0x74] sm:$0xf]
  %v10432 = vld [vmem:[%s7 + $0x78] sm:$0xf]
  %v10433 = vld [vmem:[%s7 + $0x7c] sm:$0xf]
  %v10434 = vpack.c.bf16 %v10340, %v10338
  %v10435 = vpack.c.bf16 %v10341, %v10339
  %v10436 = vpack.c.bf16 %v10344, %v10342
  %v10437 = vpack.c.bf16 %v10345, %v10343
  %v10438 = vpack.c.bf16 %v10348, %v10346
  %v10439 = vpack.c.bf16 %v10349, %v10347
  %v10440 = vpack.c.bf16 %v10352, %v10350
  %v10441 = vpack.c.bf16 %v10353, %v10351
  %v10442 = vpack.c.bf16 %v10356, %v10354
  %v10443 = vpack.c.bf16 %v10357, %v10355
  %v10444 = vpack.c.bf16 %v10360, %v10358
  %v10445 = vpack.c.bf16 %v10361, %v10359
  %v10446 = vpack.c.bf16 %v10364, %v10362
  %v10447 = vpack.c.bf16 %v10365, %v10363
  %v10448 = vpack.c.bf16 %v10368, %v10366
  %v10449 = vpack.c.bf16 %v10369, %v10367
  %v10450 = vpack.c.bf16 %v10372, %v10370
  %v10451 = vpack.c.bf16 %v10373, %v10371
  %v10452 = vpack.c.bf16 %v10376, %v10374
  %v10453 = vpack.c.bf16 %v10377, %v10375
  %v10454 = vpack.c.bf16 %v10380, %v10378
  %v10455 = vpack.c.bf16 %v10381, %v10379
  %v10456 = vpack.c.bf16 %v10384, %v10382
  %v10457 = vpack.c.bf16 %v10385, %v10383
  %v10458 = vpack.c.bf16 %v10388, %v10386
  %v10459 = vpack.c.bf16 %v10389, %v10387
  %v10460 = vpack.c.bf16 %v10392, %v10390
  %v10461 = vpack.c.bf16 %v10393, %v10391
  %v10462 = vpack.c.bf16 %v10396, %v10394
  %v10463 = vpack.c.bf16 %v10397, %v10395
  %v10464 = vpack.c.bf16 %v10400, %v10398
  %v10465 = vpack.c.bf16 %v10401, %v10399
  %v10466 = vld [vmem:[%s9 + $0x7] ss:$0 sm:$0xff]
  %v10499 = vunpack.c.l.b16 %v10402
  %v10500 = vunpack.c.l.b16 %v10403
  %v10501 = vunpack.c.l.b16 %v10404
  %v10502 = vunpack.c.l.b16 %v10405
  %v10503 = vunpack.c.l.b16 %v10406
  %v10504 = vunpack.c.l.b16 %v10407
  %v10505 = vunpack.c.l.b16 %v10408
  %v10506 = vunpack.c.l.b16 %v10409
  %v10507 = vunpack.c.l.b16 %v10410
  %v10508 = vunpack.c.l.b16 %v10411
  %v10509 = vunpack.c.l.b16 %v10412
  %v10510 = vunpack.c.l.b16 %v10413
  %v10511 = vunpack.c.l.b16 %v10414
  %v10512 = vunpack.c.l.b16 %v10415
  %v10513 = vunpack.c.l.b16 %v10416
  %v10514 = vunpack.c.l.b16 %v10417
  %v10515 = vunpack.c.l.b16 %v10418
  %v10516 = vunpack.c.l.b16 %v10419
  %v10517 = vunpack.c.l.b16 %v10420
  %v10518 = vunpack.c.l.b16 %v10421
  %v10519 = vunpack.c.l.b16 %v10422
  %v10520 = vunpack.c.l.b16 %v10423
  %v10521 = vunpack.c.l.b16 %v10424
  %v10522 = vunpack.c.l.b16 %v10425
  %v10523 = vunpack.c.l.b16 %v10426
  %v10524 = vunpack.c.l.b16 %v10427
  %v10525 = vunpack.c.l.b16 %v10428
  %v10526 = vunpack.c.l.b16 %v10429
  %v10527 = vunpack.c.l.b16 %v10430
  %v10528 = vunpack.c.l.b16 %v10431
  %v10529 = vunpack.c.l.b16 %v10432
  %v10530 = vunpack.c.l.b16 %v10433
  %v10531 = vpack.c.b16 %v10500, %v10499
  %v10532 = vpack.c.b16 %v10502, %v10501
  %v10533 = vpack.c.b16 %v10504, %v10503
  %v10534 = vpack.c.b16 %v10506, %v10505
  %v10535 = vpack.c.b16 %v10508, %v10507
  %v10536 = vpack.c.b16 %v10510, %v10509
  %v10537 = vpack.c.b16 %v10512, %v10511
  %v10538 = vpack.c.b16 %v10514, %v10513
  %v10539 = vpack.c.b16 %v10516, %v10515
  %v10540 = vpack.c.b16 %v10518, %v10517
  %v10541 = vpack.c.b16 %v10520, %v10519
  %v10542 = vpack.c.b16 %v10522, %v10521
  %v10543 = vpack.c.b16 %v10524, %v10523
  %v10544 = vpack.c.b16 %v10526, %v10525
  %v10545 = vpack.c.b16 %v10528, %v10527
  %v10546 = vpack.c.b16 %v10530, %v10529
  %10563 = vmatpush.bf16.msra.mxu0 %v10538
  %10564 = vmatpush.bf16.msra.mxu0 %v10537
  %10565 = vmatpush.bf16.msra.mxu0 %v10536
  %10566 = vmatpush.bf16.msra.mxu0 %v10535
  %10567 = vmatpush.bf16.msra.mxu0 %v10534
  %10568 = vmatpush.bf16.msra.mxu0 %v10533
  %10569 = vmatpush.bf16.msra.mxu0 %v10532
  %10570 = vmatpush.bf16.msra.mxu0 %v10531
  %10571 = vmatmul.bf16.gmra.mxu0 %v10434
  %v10572 = vpop.f32.mrf.mxu0
  %v10573 = vadd.f32 %v10466, %v10572
  %v10574 = vpop.f32.mrf.mxu0
  %v10575 = vadd.f32 %v10466, %v10574
  %10576 = vmatmul.bf16.gmra.mxu0 %v10436
  %v10577 = vpop.f32.mrf.mxu0
  %v10578 = vadd.f32 %v10466, %v10577
  %v10579 = vpop.f32.mrf.mxu0
  %v10580 = vadd.f32 %v10466, %v10579
  %10581 = vmatmul.bf16.gmra.mxu0 %v10438
  %v10582 = vpop.f32.mrf.mxu0
  %v10583 = vadd.f32 %v10466, %v10582
  %v10584 = vpop.f32.mrf.mxu0
  %v10585 = vadd.f32 %v10466, %v10584
  %10586 = vmatmul.bf16.gmra.mxu0 %v10440
  %v10587 = vpop.f32.mrf.mxu0
  %v10588 = vadd.f32 %v10466, %v10587
  %v10589 = vpop.f32.mrf.mxu0
  %v10590 = vadd.f32 %v10466, %v10589
  %10591 = vmatmul.bf16.gmra.mxu0 %v10442
  %v10592 = vpop.f32.mrf.mxu0
  %v10593 = vadd.f32 %v10466, %v10592
  %v10594 = vpop.f32.mrf.mxu0
  %v10595 = vadd.f32 %v10466, %v10594
  %10596 = vmatmul.bf16.gmra.mxu0 %v10444
  %v10597 = vpop.f32.mrf.mxu0
  %v10598 = vadd.f32 %v10466, %v10597
  %v10599 = vpop.f32.mrf.mxu0
  %v10600 = vadd.f32 %v10466, %v10599
  %10601 = vmatmul.bf16.gmra.mxu0 %v10446
  %v10602 = vpop.f32.mrf.mxu0
  %v10603 = vadd.f32 %v10466, %v10602
  %v10604 = vpop.f32.mrf.mxu0
  %v10605 = vadd.f32 %v10466, %v10604
  %10606 = vmatmul.bf16.gmra.mxu0 %v10448
  %v10607 = vpop.f32.mrf.mxu0
  %v10608 = vadd.f32 %v10466, %v10607
  %v10609 = vpop.f32.mrf.mxu0
  %v10610 = vadd.f32 %v10466, %v10609
  %10611 = vmatmul.bf16.gmra.mxu0 %v10450
  %v10612 = vpop.f32.mrf.mxu0
  %v10613 = vadd.f32 %v10466, %v10612
  %v10614 = vpop.f32.mrf.mxu0
  %v10615 = vadd.f32 %v10466, %v10614
  %10616 = vmatmul.bf16.gmra.mxu0 %v10452
  %v10617 = vpop.f32.mrf.mxu0
  %v10618 = vadd.f32 %v10466, %v10617
  %v10619 = vpop.f32.mrf.mxu0
  %v10620 = vadd.f32 %v10466, %v10619
  %10621 = vmatmul.bf16.gmra.mxu0 %v10454
  %v10622 = vpop.f32.mrf.mxu0
  %v10623 = vadd.f32 %v10466, %v10622
  %v10624 = vpop.f32.mrf.mxu0
  %v10625 = vadd.f32 %v10466, %v10624
  %10626 = vmatmul.bf16.gmra.mxu0 %v10456
  %v10627 = vpop.f32.mrf.mxu0
  %v10628 = vadd.f32 %v10466, %v10627
  %v10629 = vpop.f32.mrf.mxu0
  %v10630 = vadd.f32 %v10466, %v10629
  %10631 = vmatmul.bf16.gmra.mxu0 %v10458
  %v10632 = vpop.f32.mrf.mxu0
  %v10633 = vadd.f32 %v10466, %v10632
  %v10634 = vpop.f32.mrf.mxu0
  %v10635 = vadd.f32 %v10466, %v10634
  %10636 = vmatmul.bf16.gmra.mxu0 %v10460
  %v10637 = vpop.f32.mrf.mxu0
  %v10638 = vadd.f32 %v10466, %v10637
  %v10639 = vpop.f32.mrf.mxu0
  %v10640 = vadd.f32 %v10466, %v10639
  %10641 = vmatmul.bf16.gmra.mxu0 %v10462
  %v10642 = vpop.f32.mrf.mxu0
  %v10643 = vadd.f32 %v10466, %v10642
  %v10644 = vpop.f32.mrf.mxu0
  %v10645 = vadd.f32 %v10466, %v10644
  %10646 = vmatmul.bf16.gmra.mxu0 %v10464
  %v10647 = vpop.f32.mrf.mxu0
  %v10648 = vadd.f32 %v10466, %v10647
  %v10649 = vpop.f32.mrf.mxu0
  %v10650 = vadd.f32 %v10466, %v10649
  %10651 = vdwg.mxu0
  %10652 = vmatpush.bf16.msra.mxu0 %v10546
  %10653 = vmatpush.bf16.msra.mxu0 %v10545
  %10654 = vmatpush.bf16.msra.mxu0 %v10544
  %10655 = vmatpush.bf16.msra.mxu0 %v10543
  %10656 = vmatpush.bf16.msra.mxu0 %v10542
  %10657 = vmatpush.bf16.msra.mxu0 %v10541
  %10658 = vmatpush.bf16.msra.mxu0 %v10540
  %10659 = vmatpush.bf16.msra.mxu0 %v10539
  %10660 = vmatmul.bf16.gmra.mxu0 %v10435
  %v10661 = vpop.f32.mrf.mxu0
  %v10662 = vadd.f32 %v10573, %v10661
  %v10663 = vpop.f32.mrf.mxu0
  %v10664 = vadd.f32 %v10575, %v10663
  %10665 = vmatmul.bf16.gmra.mxu0 %v10437
  %v10666 = vpop.f32.mrf.mxu0
  %v10667 = vadd.f32 %v10578, %v10666
  %v10668 = vpop.f32.mrf.mxu0
  %v10669 = vadd.f32 %v10580, %v10668
  %10670 = vmatmul.bf16.gmra.mxu0 %v10439
  %v10671 = vpop.f32.mrf.mxu0
  %v10672 = vadd.f32 %v10583, %v10671
  %v10673 = vpop.f32.mrf.mxu0
  %v10674 = vadd.f32 %v10585, %v10673
  %10675 = vmatmul.bf16.gmra.mxu0 %v10441
  %v10676 = vpop.f32.mrf.mxu0
  %v10677 = vadd.f32 %v10588, %v10676
  %v10678 = vpop.f32.mrf.mxu0
  %v10679 = vadd.f32 %v10590, %v10678
  %10680 = vmatmul.bf16.gmra.mxu0 %v10443
  %v10681 = vpop.f32.mrf.mxu0
  %v10682 = vadd.f32 %v10593, %v10681
  %v10683 = vpop.f32.mrf.mxu0
  %v10684 = vadd.f32 %v10595, %v10683
  %10685 = vmatmul.bf16.gmra.mxu0 %v10445
  %v10686 = vpop.f32.mrf.mxu0
  %v10687 = vadd.f32 %v10598, %v10686
  %v10688 = vpop.f32.mrf.mxu0
  %v10689 = vadd.f32 %v10600, %v10688
  %10690 = vmatmul.bf16.gmra.mxu0 %v10447
  %v10691 = vpop.f32.mrf.mxu0
  %v10692 = vadd.f32 %v10603, %v10691
  %v10693 = vpop.f32.mrf.mxu0
  %v10694 = vadd.f32 %v10605, %v10693
  %10695 = vmatmul.bf16.gmra.mxu0 %v10449
  %v10696 = vpop.f32.mrf.mxu0
  %v10697 = vadd.f32 %v10608, %v10696
  %v10698 = vpop.f32.mrf.mxu0
  %v10699 = vadd.f32 %v10610, %v10698
  %10700 = vmatmul.bf16.gmra.mxu0 %v10451
  %v10701 = vpop.f32.mrf.mxu0
  %v10702 = vadd.f32 %v10613, %v10701
  %v10703 = vpop.f32.mrf.mxu0
  %v10704 = vadd.f32 %v10615, %v10703
  %10705 = vmatmul.bf16.gmra.mxu0 %v10453
  %v10706 = vpop.f32.mrf.mxu0
  %v10707 = vadd.f32 %v10618, %v10706
  %v10708 = vpop.f32.mrf.mxu0
  %v10709 = vadd.f32 %v10620, %v10708
  %10710 = vmatmul.bf16.gmra.mxu0 %v10455
  %v10711 = vpop.f32.mrf.mxu0
  %v10712 = vadd.f32 %v10623, %v10711
  %v10713 = vpop.f32.mrf.mxu0
  %v10714 = vadd.f32 %v10625, %v10713
  %10715 = vmatmul.bf16.gmra.mxu0 %v10457
  %v10716 = vpop.f32.mrf.mxu0
  %v10717 = vadd.f32 %v10628, %v10716
  %v10718 = vpop.f32.mrf.mxu0
  %v10719 = vadd.f32 %v10630, %v10718
  %10720 = vmatmul.bf16.gmra.mxu0 %v10459
  %v10721 = vpop.f32.mrf.mxu0
  %v10722 = vadd.f32 %v10633, %v10721
  %v10723 = vpop.f32.mrf.mxu0
  %v10724 = vadd.f32 %v10635, %v10723
  %10725 = vmatmul.bf16.gmra.mxu0 %v10461
  %v10726 = vpop.f32.mrf.mxu0
  %v10727 = vadd.f32 %v10638, %v10726
  %v10728 = vpop.f32.mrf.mxu0
  %v10729 = vadd.f32 %v10640, %v10728
  %10730 = vmatmul.bf16.gmra.mxu0 %v10463
  %v10731 = vpop.f32.mrf.mxu0
  %v10732 = vadd.f32 %v10643, %v10731
  %v10733 = vpop.f32.mrf.mxu0
  %v10734 = vadd.f32 %v10645, %v10733
  %10735 = vmatmul.bf16.gmra.mxu0 %v10465
  %v10736 = vpop.f32.mrf.mxu0
  %v10737 = vadd.f32 %v10648, %v10736
  %v10738 = vpop.f32.mrf.mxu0
  %v10739 = vadd.f32 %v10650, %v10738
  %10740 = vdwg.mxu0
  %v10741 = vmax.f32 %v10662, 0.0
  %v10742 = vmax.f32 %v10664, 0.0
  %v10743 = vmax.f32 %v10667, 0.0
  %v10744 = vmax.f32 %v10669, 0.0
  %v10745 = vmax.f32 %v10672, 0.0
  %v10746 = vmax.f32 %v10674, 0.0
  %v10747 = vmax.f32 %v10677, 0.0
  %v10748 = vmax.f32 %v10679, 0.0
  %v10749 = vmax.f32 %v10682, 0.0
  %v10750 = vmax.f32 %v10684, 0.0
  %v10751 = vmax.f32 %v10687, 0.0
  %v10752 = vmax.f32 %v10689, 0.0
  %v10753 = vmax.f32 %v10692, 0.0
  %v10754 = vmax.f32 %v10694, 0.0
  %v10755 = vmax.f32 %v10697, 0.0
  %v10756 = vmax.f32 %v10699, 0.0
  %v10757 = vmax.f32 %v10702, 0.0
  %v10758 = vmax.f32 %v10704, 0.0
  %v10759 = vmax.f32 %v10707, 0.0
  %v10760 = vmax.f32 %v10709, 0.0
  %v10761 = vmax.f32 %v10712, 0.0
  %v10762 = vmax.f32 %v10714, 0.0
  %v10763 = vmax.f32 %v10717, 0.0
  %v10764 = vmax.f32 %v10719, 0.0
  %v10765 = vmax.f32 %v10722, 0.0
  %v10766 = vmax.f32 %v10724, 0.0
  %v10767 = vmax.f32 %v10727, 0.0
  %v10768 = vmax.f32 %v10729, 0.0
  %v10769 = vmax.f32 %v10732, 0.0
  %v10770 = vmax.f32 %v10734, 0.0
  %v10771 = vmax.f32 %v10737, 0.0
  %v10772 = vmax.f32 %v10739, 0.0
  %v10773 = vpack.c.bf16 %v10742, %v10741
  %v10774 = vpack.c.bf16 %v10744, %v10743
  %v10775 = vpack.c.bf16 %v10746, %v10745
  %v10776 = vpack.c.bf16 %v10748, %v10747
  %v10777 = vpack.c.bf16 %v10750, %v10749
  %v10778 = vpack.c.bf16 %v10752, %v10751
  %v10779 = vpack.c.bf16 %v10754, %v10753
  %v10780 = vpack.c.bf16 %v10756, %v10755
  %v10781 = vpack.c.bf16 %v10758, %v10757
  %v10782 = vpack.c.bf16 %v10760, %v10759
  %v10783 = vpack.c.bf16 %v10762, %v10761
  %v10784 = vpack.c.bf16 %v10764, %v10763
  %v10785 = vpack.c.bf16 %v10766, %v10765
  %v10786 = vpack.c.bf16 %v10768, %v10767
  %v10787 = vpack.c.bf16 %v10770, %v10769
  %v10788 = vpack.c.bf16 %v10772, %v10771
  %v10789 = vld [vmem:[%s8] sm:$0x7]
  %10791 = vset.pattern.permute.xlu0 0
  %10792 = vperm.xlu0 %10791, %v10789
  %v10793 = vpop.permute.xlu0 %10792
  %10795 = vmatpush.bf16.xpose.msra.mxu0 %v10780
  %10796 = vmatpush.bf16.xpose.msra.mxu0 %v10779
  %10797 = vmatpush.bf16.xpose.msra.mxu0 %v10778
  %10798 = vmatpush.bf16.xpose.msra.mxu0 %v10777
  %10799 = vmatpush.bf16.xpose.msra.mxu0 %v10776
  %10800 = vmatpush.bf16.xpose.msra.mxu0 %v10775
  %10801 = vmatpush.bf16.xpose.msra.mxu0 %v10774
  %10802 = vmatpush.bf16.xpose.msra.mxu0 %v10773
  %10803 = vmatmul.bf16.gmra.mxu0 %v1370
  %v10804 = vpop.f32.mrf.mxu0
  %v10805 = vadd.f32 %v10793, %v10804
  %v10806 = vpop.f32.mrf.mxu0
  %10807 = vdwg.mxu0
  %10808 = vmatpush.bf16.xpose.msra.mxu0 %v10788
  %10809 = vmatpush.bf16.xpose.msra.mxu0 %v10787
  %10810 = vmatpush.bf16.xpose.msra.mxu0 %v10786
  %10811 = vmatpush.bf16.xpose.msra.mxu0 %v10785
  %10812 = vmatpush.bf16.xpose.msra.mxu0 %v10784
  %10813 = vmatpush.bf16.xpose.msra.mxu0 %v10783
  %10814 = vmatpush.bf16.xpose.msra.mxu0 %v10782
  %10815 = vmatpush.bf16.xpose.msra.mxu0 %v10781
  %10816 = vmatmul.bf16.gmra.mxu0 %v1370
  %v10817 = vpop.f32.mrf.mxu0
  %v10818 = vadd.f32 %v10793, %v10817
  %v10819 = vpop.f32.mrf.mxu0
  %10820 = vdwg.mxu0
  %v10821 = vxor.u32 %v10805, 2147483648
  %v10822 = vxor.u32 %v10818, 2147483648
  %v10823 = vmul.f32 %v10821, 1.442695
  %v10824 = vpow.pop %v10823
  %v10825 = vmul.f32 %v10822, 1.442695
  %v10826 = vpow.pop %v10825
  %v10827 = vadd.f32 %v10824, 1.0
  %v10828 = vadd.f32 %v10826, 1.0
  %v10829 = vrcp.pop %v10827
  %v10830 = vmul.f32 %v10827, %v10829
  %v10831 = vsub.f32 1.0, %v10830
  %v10832 = vmul.f32 %v10829, %v10831
  %v10833 = vadd.f32 %v10829, %v10832
  %vm10834 = vweird.f32 %v10827
  %vm10835 = vweird.f32 %v10829
  %vm10836 = vmor %vm10834, %vm10835
  %v10837 = vsel %vm10836, %v10829, %v10833
  %v10838 = vand.u32 2147483647, %v10827
  %vm10839 = vcmp.eq.f32.partialorder %v10838, 8.507059e+37
  %v10840 = vand.u32 %v10827, 2147483648
  %v10841 = vor.u32 1.1754944e-38, %v10840
  %v10842 = vsel %vm10839, %v10841, %v10837
  %v10843 = vmul.f32 1.0, %v10842
  %v10844 = vrcp.pop %v10828
  %v10845 = vmul.f32 %v10828, %v10844
  %v10846 = vsub.f32 1.0, %v10845
  %v10847 = vmul.f32 %v10844, %v10846
  %v10848 = vadd.f32 %v10844, %v10847
  %vm10849 = vweird.f32 %v10828
  %vm10850 = vweird.f32 %v10844
  %vm10851 = vmor %vm10849, %vm10850
  %v10852 = vsel %vm10851, %v10844, %v10848
  %v10853 = vand.u32 2147483647, %v10828
  %vm10854 = vcmp.eq.f32.partialorder %v10853, 8.507059e+37
  %v10855 = vand.u32 %v10828, 2147483648
  %v10856 = vor.u32 1.1754944e-38, %v10855
  %v10857 = vsel %vm10854, %v10856, %v10852
  %v10858 = vmul.f32 1.0, %v10857
  %10859 = vst [vmem:[%s10] sm:$0x7] %v10843
  %s10860 = scalar_lea.vmem %s10, 4
  %10861 = vst [vmem:[%s10860] sm:$0x7] %v10858
  // Predicated region
  $region72: #{mlp_for_forward.1} parent=0 // pred_check
    _
  $region73: #{mlp_for_forward.1} parent=0 // pred_check_branch
    %10863 = sbr.rel (0) target = $region75
  $region74: #{mlp_for_forward.1} parent=0 // pred_region
    _
  $region75: #{mlp_for_forward.1} parent=0 // pred_fallthru
    _
  // Predicated region
  $region76: #{mlp_for_forward.1} parent=0 // pred_check
    _
  $region77: #{mlp_for_forward.1} parent=0 // pred_check_branch
    %10865 = sbr.rel (0) target = $region79
  $region78: #{mlp_for_forward.1} parent=0 // pred_region
    _
  $region79: #{mlp_for_forward.1} parent=0 // pred_fallthru
    _
  %10866 = vsyncmov [#allocation4]
  %s10867 = vpop.sfrf %10866
  %p10868 = scmp.eq.s32.totalorder %s10867, 0
  %p10869 = pneg %p10868
  %10871 = shalt.err (%p10869)
  %s10872 = scalar_lea.sflag [#allocation4], 1
  %10873 = vsyncmov %s10872
  %s10874 = vpop.sfrf %10873
  %p10875 = scmp.eq.s32.totalorder %s10874, 0
  %p10876 = pneg %p10875
  %10878 = shalt.err (%p10876)

</llo_original>
